<compile_context>
chip_gen: v7x
topology: tpu7x:2x2x1
jax: 0.10.0
libtpu: 0.0.40
codegen_flags: <defaults>
</compile_context>

<pallas_src>
import functools
import math

import jax
import jax.numpy as jnp
from jax import lax
from jax.experimental import pallas as pl
from jax.experimental.pallas import tpu as pltpu

# ----------------------------- configuration (small, consistent with module) ----------
INPUT_DIM = 7
SUBJECT_DIM = 9
LATENT = 32
NHEAD = 4
HEAD_DIM = LATENT // NHEAD
NUM_ENC_LAYERS = 2
NUM_DEC_LAYERS = 2
DIM_FF = 64
SEQ_LEN = 8
BATCH = 2
CINEMATOGRAPHY_STRUCT_SIZE = 3
SIMULATION_STRUCT_SIZE = 5
NQ = CINEMATOGRAPHY_STRUCT_SIZE + SIMULATION_STRUCT_SIZE   # num_query_tokens = 8
LN_EPS = 1e-5
SLAB_LANES = 64        # >= widest packed tensor (DIM_FF = 64)
NEG_INF = -1e30


# ------------------------------- the single fused kernel -------------------------------
def _fused_model_kernel(w_ref, v_ref, src_ref, subj_ref, emb_ref, rec_ref, cls_ref,
                        *, woff, voff, batch, seq):
    B, S = batch, seq
    D, H, Dh = LATENT, NHEAD, HEAD_DIM
    Le = NQ + S
    scale = 1.0 / math.sqrt(Dh)

    # One load of every bias / LayerNorm row (the whole vector slab is a few vregs).
    vall = v_ref[...]

    def W(name):                                   # matrix block: static 8-aligned slice
        off, r, c = woff[name]
        return w_ref[off:off + r, 0:c]

    def V(name):                                   # (1, c) row vector from the slab value
        i, c = voff[name]
        return vall[i:i + 1, 0:c]

    # ---------------- constants (hoisted: built once, reused across layers) -----------
    lane = lax.broadcasted_iota(jnp.int32, (1, D), 1)
    head_masks = [((lane >= h * Dh) & (lane < (h + 1) * Dh)).astype(jnp.float32)
                  for h in range(H)]

    def block_diag_mask(n_rows, blk):              # 0 on own-batch block, -inf elsewhere
        shift = int(round(math.log2(blk)))
        assert (1 << shift) == blk
        r = lax.broadcasted_iota(jnp.int32, (n_rows, n_rows), 0) >> shift
        c = lax.broadcasted_iota(jnp.int32, (n_rows, n_rows), 1) >> shift
        return jnp.where(r == c, jnp.float32(0.0), jnp.float32(NEG_INF))

    enc_mask = block_diag_mask(B * Le, Le)
    dec_mask = block_diag_mask(B * S, S)

    # ------------------------------ in-kernel building blocks -------------------------
    def layer_norm(x, g, b):
        mu = jnp.mean(x, axis=-1, keepdims=True)
        xc = x - mu
        var = jnp.mean(xc * xc, axis=-1, keepdims=True)
        return xc * lax.rsqrt(var + LN_EPS) * g + b

    def mha_self(x, wqkv, bq, bk, bv, wo, bo, mask):
        # x: (B*L, D).  Batch folding via the block-diagonal mask; head folding via lane
        # masks (no lane slicing / concatenation of activations).
        q = jnp.dot(x, wqkv[0:D, :], preferred_element_type=jnp.float32) + bq
        k = jnp.dot(x, wqkv[D:2 * D, :], preferred_element_type=jnp.float32) + bk
        v = jnp.dot(x, wqkv[2 * D:3 * D, :], preferred_element_type=jnp.float32) + bv
        ctx = None
        for hm in head_masks:
            s = lax.dot_general(q, k * hm, (((1,), (1,)), ((), ())),
                                preferred_element_type=jnp.float32) * scale + mask
            s = s - jnp.max(s, axis=-1, keepdims=True)
            e = jnp.exp(s)
            p = e * pl.reciprocal(jnp.sum(e, axis=-1, keepdims=True), approx=True)
            o = jnp.dot(p, v * hm, preferred_element_type=jnp.float32)   # head h lanes only
            ctx = o if ctx is None else ctx + o                          # == concat of heads
        return jnp.dot(ctx, wo, preferred_element_type=jnp.float32) + bo

    def ffn(x, pre):
        hid = jnp.maximum(jnp.dot(x, W(pre + "_ff1_w"),
                                  preferred_element_type=jnp.float32) + V(pre + "_ff1_b"), 0.0)
        return jnp.dot(hid, W(pre + "_ff2_w"),
                       preferred_element_type=jnp.float32) + V(pre + "_ff2_b")

    # ------------------ subject projection + encoder input embedding ------------------
    src = src_ref[...]                                                     # (B*S, 7)
    subj = subj_ref[...]                                                   # (B*S, 9)
    subj_emb = jnp.dot(subj, W("subj_w"),
                       preferred_element_type=jnp.float32) + V("subj_b")   # (B*S, D)
    enc_in = jnp.dot(src, W("embed_w"),
                     preferred_element_type=jnp.float32) + V("embed_b") + subj_emb

    # -------------------------------------- encoder -----------------------------------
    qtok = W("query_tokens")                                               # (NQ, D)
    pieces = []
    for b in range(B):
        pieces.append(qtok)
        pieces.append(enc_in[b * S:(b + 1) * S])
    h = jnp.concatenate(pieces, axis=0)                                    # (B*Le, D)
    for i in range(NUM_ENC_LAYERS):                                        # post-norm, ReLU
        pre = f"enc{i}"
        attn = mha_self(h, W(pre + "_wqkv"), V(pre + "_bq"), V(pre + "_bk"),
                        V(pre + "_bv"), W(pre + "_wo"), V(pre + "_bo"), enc_mask)
        h = layer_norm(h + attn, V(pre + "_ln1_g"), V(pre + "_ln1_b"))
        h = layer_norm(h + ffn(h, pre), V(pre + "_ln2_g"), V(pre + "_ln2_b"))

    # ---------------- camera embeddings + merged memory (cls embedding) ---------------
    for b in range(B):
        emb_ref[b] = h[b * Le:b * Le + NQ]                                 # (NQ, D)

    w1 = W("merge_w1")                                                     # (NQ*D, D)
    acc = None
    for t in range(NQ):                                                    # both batches per token
        lhs = jnp.concatenate([h[t:t + 1, :], h[Le + t:Le + t + 1, :]], axis=0)   # (B, D)
        c = jnp.dot(lhs, w1[t * D:(t + 1) * D, :], preferred_element_type=jnp.float32)
        acc = c if acc is None else acc + c
    m = jnp.maximum(acc + V("merge_b1"), 0.0)
    memory = jnp.dot(m, W("merge_w2"),
                     preferred_element_type=jnp.float32) + V("merge_b2")   # (B, D)
    cls_ref[...] = memory

    # -------------------------------------- decoder -----------------------------------
    hd = W("pos_tiled") + subj_emb                                         # (B*S, D)
    for i in range(NUM_DEC_LAYERS):                                        # post-norm, ReLU
        pre = f"dec{i}"
        attn = mha_self(hd, W(pre + "_sa_wqkv"), V(pre + "_sa_bq"), V(pre + "_sa_bk"),
                        V(pre + "_sa_bv"), W(pre + "_sa_wo"), V(pre + "_sa_bo"), dec_mask)
        hd = layer_norm(hd + attn, V(pre + "_ln1_g"), V(pre + "_ln1_b"))
        # Cross-attention over ONE merged-memory token per batch: softmax == 1 exactly,
        # so the output is (memory @ Wv) @ Wo + bo, constant over the query positions.
        ca_wqkv = W(pre + "_ca_wqkv")
        vtok = jnp.dot(memory, ca_wqkv[2 * D:3 * D, :],
                       preferred_element_type=jnp.float32) + V(pre + "_ca_bv")    # (B, D)
        cb = jnp.dot(vtok, W(pre + "_ca_wo"),
                     preferred_element_type=jnp.float32) + V(pre + "_ca_bo")       # (B, D)
        cross = jnp.concatenate(
            [jnp.broadcast_to(cb[b:b + 1, :], (S, D)) for b in range(B)], axis=0)  # (B*S, D)
        hd = layer_norm(hd + cross, V(pre + "_ln2_g"), V(pre + "_ln2_b"))
        hd = layer_norm(hd + ffn(hd, pre), V(pre + "_ln3_g"), V(pre + "_ln3_b"))

    out = jnp.dot(hd, W("out_w"), preferred_element_type=jnp.float32) + V("out_b")  # (B*S, 7)
    for b in range(B):
        rec_ref[b] = out[b * S:(b + 1) * S]


# ------------------------------------- forward wrapper ---------------------------------
def multitask_autoencoder_forward(wslab, vslab, src, subject_trajectory, *,
                                  woff, voff,
                                  teacher_forcing_ratio=0.5, mask_memory_prob=0.0):
    # Mirrors MultiTaskAutoencoder.forward with caption_embedding=None, target=None,
    # use_merged_memory=True, decode_mode='single_step' (eval mode).
    # TODO(synk): dropout / teacher forcing / memory masking are eval-mode no-ops here.
    del teacher_forcing_ratio, mask_memory_prob
    B, S, _ = src.shape
    kernel = functools.partial(_fused_model_kernel, woff=woff, voff=voff, batch=B, seq=S)
    vmem = pl.BlockSpec(memory_space=pltpu.MemorySpace.VMEM)
    out_shape = (
        jax.ShapeDtypeStruct((B, NQ, LATENT), jnp.float32),      # embeddings (batch-first)
        jax.ShapeDtypeStruct((B, S, INPUT_DIM), jnp.float32),    # reconstructed
        jax.ShapeDtypeStruct((B, LATENT), jnp.float32),          # cls / merged memory
    )
    emb_bf, reconstructed, cls = pl.pallas_call(
        kernel,
        out_shape=out_shape,
        in_specs=[vmem] * 4,
        out_specs=(vmem, vmem, vmem),
    )(wslab, vslab,
      src.reshape(B * S, INPUT_DIM),
      subject_trajectory.reshape(B * S, SUBJECT_DIM))
    return {"embeddings": jnp.transpose(emb_bf, (1, 0, 2)),      # (NQ, B, D) like PyTorch
            "reconstructed": reconstructed,
            "cls_embedding": cls}


# ----------------------------------- host-side packing ---------------------------------
def _pad_lanes(a):
    r, c = a.shape
    assert c <= SLAB_LANES
    if c < SLAB_LANES:
        a = jnp.pad(a, ((0, 0), (0, SLAB_LANES - c)))
    return a.astype(jnp.float32)


def pack_params(p):
    """Pack all parameters into one matrix slab (8-row-aligned blocks) and one vector slab."""
    mats, vecs = [], []

    mats += [("embed_w", p["encoder"]["embed_w"]),
             ("subj_w", p["subj_w"]),
             ("query_tokens", p["encoder"]["query_tokens"]),
             ("pos_tiled", jnp.tile(p["decoder"]["pos_embed"], (BATCH, 1))),
             ("merge_w1", p["merge_w1"]),
             ("merge_w2", p["merge_w2"]),
             ("out_w", p["decoder"]["out_w"])]
    vecs += [("embed_b", p["encoder"]["embed_b"]), ("subj_b", p["subj_b"]),
             ("merge_b1", p["merge_b1"]), ("merge_b2", p["merge_b2"]),
             ("out_b", p["decoder"]["out_b"])]

    for i, lp in enumerate(p["encoder"]["layers"]):
        pre, a = f"enc{i}", lp["attn"]
        mats += [(pre + "_wqkv", jnp.concatenate([a["wq"], a["wk"], a["wv"]], axis=0)),
                 (pre + "_wo", a["wo"]),
                 (pre + "_ff1_w", lp["ff1_w"]), (pre + "_ff2_w", lp["ff2_w"])]
        vecs += [(pre + "_bq", a["bq"]), (pre + "_bk", a["bk"]), (pre + "_bv", a["bv"]),
                 (pre + "_bo", a["bo"]),
                 (pre + "_ff1_b", lp["ff1_b"]), (pre + "_ff2_b", lp["ff2_b"]),
                 (pre + "_ln1_g", lp["ln1_g"]), (pre + "_ln1_b", lp["ln1_b"]),
                 (pre + "_ln2_g", lp["ln2_g"]), (pre + "_ln2_b", lp["ln2_b"])]

    for i, lp in enumerate(p["decoder"]["layers"]):
        pre, sa, ca = f"dec{i}", lp["self_attn"], lp["cross_attn"]
        mats += [(pre + "_sa_wqkv", jnp.concatenate([sa["wq"], sa["wk"], sa["wv"]], axis=0)),
                 (pre + "_sa_wo", sa["wo"]),
                 (pre + "_ca_wqkv", jnp.concatenate([ca["wq"], ca["wk"], ca["wv"]], axis=0)),
                 (pre + "_ca_wo", ca["wo"]),
                 (pre + "_ff1_w", lp["ff1_w"]), (pre + "_ff2_w", lp["ff2_w"])]
        vecs += [(pre + "_sa_bq", sa["bq"]), (pre + "_sa_bk", sa["bk"]),
                 (pre + "_sa_bv", sa["bv"]), (pre + "_sa_bo", sa["bo"]),
                 (pre + "_ca_bv", ca["bv"]), (pre + "_ca_bo", ca["bo"]),
                 (pre + "_ff1_b", lp["ff1_b"]), (pre + "_ff2_b", lp["ff2_b"]),
                 (pre + "_ln1_g", lp["ln1_g"]), (pre + "_ln1_b", lp["ln1_b"]),
                 (pre + "_ln2_g", lp["ln2_g"]), (pre + "_ln2_b", lp["ln2_b"]),
                 (pre + "_ln3_g", lp["ln3_g"]), (pre + "_ln3_b", lp["ln3_b"])]

    # matrix slab: blocks start at multiples of 8 rows
    woff, rows, cur = {}, [], 0
    for name, a in mats:
        r, c = a.shape
        woff[name] = (cur, r, c)
        rows.append(_pad_lanes(a))
        pad = (-r) % 8
        if pad:
            rows.append(jnp.zeros((pad, SLAB_LANES), jnp.float32))
        cur += r + pad
    wslab = jnp.concatenate(rows, axis=0)

    # vector slab: one row per bias / LayerNorm vector
    voff, vrows = {}, []
    for idx, (name, a) in enumerate(vecs):
        a2 = a.reshape(1, -1)
        voff[name] = (idx, a2.shape[1])
        vrows.append(_pad_lanes(a2))
    pad = (-len(vrows)) % 8
    if pad:
        vrows.append(jnp.zeros((pad, SLAB_LANES), jnp.float32))
    vslab = jnp.concatenate(vrows, axis=0)
    return wslab, vslab, woff, voff


# -------------------------------- deterministic parameters -----------------------------
def _w(key, shape, scale=0.02):
    return scale * jax.random.normal(key, shape, dtype=jnp.float32)


def _zeros(shape):
    return jnp.zeros(shape, dtype=jnp.float32)


def _ones(shape):
    return jnp.ones(shape, dtype=jnp.float32)


def _init_attn(key):
    # Head h uses columns [h*HEAD_DIM, (h+1)*HEAD_DIM) of wq/wk/wv and the matching rows
    # of wo (equivalent to a split of nn.MultiheadAttention's fused in_proj / out_proj).
    ks = jax.random.split(key, 4)
    return dict(wq=_w(ks[0], (LATENT, LATENT)), wk=_w(ks[1], (LATENT, LATENT)),
                wv=_w(ks[2], (LATENT, LATENT)), wo=_w(ks[3], (LATENT, LATENT)),
                bq=_zeros((1, LATENT)), bk=_zeros((1, LATENT)),
                bv=_zeros((1, LATENT)), bo=_zeros((1, LATENT)))


def _init_enc_layer(key):
    ks = jax.random.split(key, 3)
    return dict(attn=_init_attn(ks[0]),
                ff1_w=_w(ks[1], (LATENT, DIM_FF)), ff1_b=_zeros((1, DIM_FF)),
                ff2_w=_w(ks[2], (DIM_FF, LATENT)), ff2_b=_zeros((1, LATENT)),
                ln1_g=_ones((1, LATENT)), ln1_b=_zeros((1, LATENT)),
                ln2_g=_ones((1, LATENT)), ln2_b=_zeros((1, LATENT)))


def _init_dec_layer(key):
    ks = jax.random.split(key, 4)
    return dict(self_attn=_init_attn(ks[0]),
                cross_attn=_init_attn(ks[1]),
                ff1_w=_w(ks[2], (LATENT, DIM_FF)), ff1_b=_zeros((1, DIM_FF)),
                ff2_w=_w(ks[3], (DIM_FF, LATENT)), ff2_b=_zeros((1, LATENT)),
                ln1_g=_ones((1, LATENT)), ln1_b=_zeros((1, LATENT)),
                ln2_g=_ones((1, LATENT)), ln2_b=_zeros((1, LATENT)),
                ln3_g=_ones((1, LATENT)), ln3_b=_zeros((1, LATENT)))


def init_params(key):
    keys = jax.random.split(key, 9)
    enc_keys = jax.random.split(keys[3], NUM_ENC_LAYERS)
    dec_keys = jax.random.split(keys[4], NUM_DEC_LAYERS)
    return dict(
        subj_w=_w(keys[0], (SUBJECT_DIM, LATENT)), subj_b=_zeros((1, LATENT)),
        merge_w1=_w(keys[1], (NQ * LATENT, LATENT)), merge_b1=_zeros((1, LATENT)),
        merge_w2=_w(keys[2], (LATENT, LATENT)), merge_b2=_zeros((1, LATENT)),
        encoder=dict(
            embed_w=_w(keys[5], (INPUT_DIM, LATENT)), embed_b=_zeros((1, LATENT)),
            query_tokens=_w(keys[6], (NQ, LATENT)),
            layers=[_init_enc_layer(k) for k in enc_keys]),
        decoder=dict(
            pos_embed=_w(keys[7], (SEQ_LEN, LATENT)),
            out_w=_w(keys[8], (LATENT, INPUT_DIM)), out_b=_zeros((1, INPUT_DIM)),
            layers=[_init_dec_layer(k) for k in dec_keys]),
    )


# ---------------------------------------- main ------------------------------------------
if __name__ == "__main__":
    key = jax.random.PRNGKey(0)
    k_param, k_src, k_subj = jax.random.split(key, 3)

    params = init_params(k_param)
    wslab, vslab, woff, voff = pack_params(params)

    src = jax.random.normal(k_src, (BATCH, SEQ_LEN, INPUT_DIM), dtype=jnp.float32)
    subject_trajectory = jax.random.normal(k_subj, (BATCH, SEQ_LEN, SUBJECT_DIM),
                                           dtype=jnp.float32)

    fwd = jax.jit(functools.partial(multitask_autoencoder_forward, woff=woff, voff=voff))
    out = fwd(wslab, vslab, src, subject_trajectory)
    out = jax.block_until_ready(out)

    assert out["embeddings"].shape == (NQ, BATCH, LATENT)
    assert out["reconstructed"].shape == (BATCH, SEQ_LEN, INPUT_DIM)
    assert out["cls_embedding"].shape == (BATCH, LATENT)
    print("KERNEL_OK")
</pallas_src>

<mosaic_0001>
module attributes {stable_mosaic.version = 11 : i64} {
  func.func @_fused_model_kernel(%arg0: memref<1520x64xf32, #tpu.memory_space<vmem>>, %arg1: memref<56x64xf32, #tpu.memory_space<vmem>>, %arg2: memref<16x7xf32, #tpu.memory_space<vmem>>, %arg3: memref<16x9xf32, #tpu.memory_space<vmem>>, %arg4: memref<2x8x32xf32, #tpu.memory_space<vmem>>, %arg5: memref<2x8x7xf32, #tpu.memory_space<vmem>>, %arg6: memref<2x32xf32, #tpu.memory_space<vmem>>) attributes {dimension_semantics = [], scalar_prefetch = 0 : i64, scratch_operands = 0 : i64, tpu.core_type = #tpu.core_type<tc>} {
    %c0 = arith.constant 0 : index
    %c0_0 = arith.constant 0 : index
    %0 = vector.load %arg1[%c0, %c0_0] : memref<56x64xf32, #tpu.memory_space<vmem>>, vector<56x64xf32>
    %1 = tpu.iota {dimensions = array<i32: 1>} : vector<1x32xi32>
    %c0_i32 = arith.constant 0 : i32
    %2 = vector.broadcast %c0_i32 : i32 to vector<1x32xi32>
    %3 = arith.cmpi sge, %1, %2 : vector<1x32xi32>
    %c8_i32 = arith.constant 8 : i32
    %4 = vector.broadcast %c8_i32 : i32 to vector<1x32xi32>
    %5 = arith.cmpi slt, %1, %4 : vector<1x32xi32>
    %6 = arith.andi %3, %5 : vector<1x32xi1>
    %7 = arith.extui %6 : vector<1x32xi1> to vector<1x32xi32>
    %8 = arith.sitofp %7 : vector<1x32xi32> to vector<1x32xf32>
    %c8_i32_1 = arith.constant 8 : i32
    %9 = vector.broadcast %c8_i32_1 : i32 to vector<1x32xi32>
    %10 = arith.cmpi sge, %1, %9 : vector<1x32xi32>
    %c16_i32 = arith.constant 16 : i32
    %11 = vector.broadcast %c16_i32 : i32 to vector<1x32xi32>
    %12 = arith.cmpi slt, %1, %11 : vector<1x32xi32>
    %13 = arith.andi %10, %12 : vector<1x32xi1>
    %14 = arith.extui %13 : vector<1x32xi1> to vector<1x32xi32>
    %15 = arith.sitofp %14 : vector<1x32xi32> to vector<1x32xf32>
    %c16_i32_2 = arith.constant 16 : i32
    %16 = vector.broadcast %c16_i32_2 : i32 to vector<1x32xi32>
    %17 = arith.cmpi sge, %1, %16 : vector<1x32xi32>
    %c24_i32 = arith.constant 24 : i32
    %18 = vector.broadcast %c24_i32 : i32 to vector<1x32xi32>
    %19 = arith.cmpi slt, %1, %18 : vector<1x32xi32>
    %20 = arith.andi %17, %19 : vector<1x32xi1>
    %21 = arith.extui %20 : vector<1x32xi1> to vector<1x32xi32>
    %22 = arith.sitofp %21 : vector<1x32xi32> to vector<1x32xf32>
    %c24_i32_3 = arith.constant 24 : i32
    %23 = vector.broadcast %c24_i32_3 : i32 to vector<1x32xi32>
    %24 = arith.cmpi sge, %1, %23 : vector<1x32xi32>
    %c32_i32 = arith.constant 32 : i32
    %25 = vector.broadcast %c32_i32 : i32 to vector<1x32xi32>
    %26 = arith.cmpi slt, %1, %25 : vector<1x32xi32>
    %27 = arith.andi %24, %26 : vector<1x32xi1>
    %28 = arith.extui %27 : vector<1x32xi1> to vector<1x32xi32>
    %29 = arith.sitofp %28 : vector<1x32xi32> to vector<1x32xf32>
    %30 = tpu.iota {dimensions = array<i32: 0>} : vector<32x32xi32>
    %c4_i32 = arith.constant 4 : i32
    %31 = vector.broadcast %c4_i32 : i32 to vector<32x32xi32>
    %32 = arith.shrsi %30, %31 : vector<32x32xi32>
    %33 = tpu.iota {dimensions = array<i32: 1>} : vector<32x32xi32>
    %c4_i32_4 = arith.constant 4 : i32
    %34 = vector.broadcast %c4_i32_4 : i32 to vector<32x32xi32>
    %35 = arith.shrsi %33, %34 : vector<32x32xi32>
    %36 = arith.cmpi eq, %32, %35 : vector<32x32xi32>
    %cst = arith.constant 0.000000e+00 : f32
    %cst_5 = arith.constant -1.000000e+30 : f32
    %37 = vector.broadcast %cst : f32 to vector<32x32xf32>
    %38 = vector.broadcast %cst_5 : f32 to vector<32x32xf32>
    %39 = arith.select %36, %37, %38 : vector<32x32xi1>, vector<32x32xf32>
    %40 = tpu.iota {dimensions = array<i32: 0>} : vector<16x16xi32>
    %c3_i32 = arith.constant 3 : i32
    %41 = vector.broadcast %c3_i32 : i32 to vector<16x16xi32>
    %42 = arith.shrsi %40, %41 : vector<16x16xi32>
    %43 = tpu.iota {dimensions = array<i32: 1>} : vector<16x16xi32>
    %c3_i32_6 = arith.constant 3 : i32
    %44 = vector.broadcast %c3_i32_6 : i32 to vector<16x16xi32>
    %45 = arith.shrsi %43, %44 : vector<16x16xi32>
    %46 = arith.cmpi eq, %42, %45 : vector<16x16xi32>
    %cst_7 = arith.constant 0.000000e+00 : f32
    %cst_8 = arith.constant -1.000000e+30 : f32
    %47 = vector.broadcast %cst_7 : f32 to vector<16x16xf32>
    %48 = vector.broadcast %cst_8 : f32 to vector<16x16xf32>
    %49 = arith.select %46, %47, %48 : vector<16x16xi1>, vector<16x16xf32>
    %c0_9 = arith.constant 0 : index
    %c0_10 = arith.constant 0 : index
    %50 = vector.load %arg2[%c0_9, %c0_10] : memref<16x7xf32, #tpu.memory_space<vmem>>, vector<16x7xf32>
    %c0_11 = arith.constant 0 : index
    %c0_12 = arith.constant 0 : index
    %51 = vector.load %arg3[%c0_11, %c0_12] : memref<16x9xf32, #tpu.memory_space<vmem>>, vector<16x9xf32>
    %c8 = arith.constant 8 : index
    %c0_13 = arith.constant 0 : index
    %52 = vector.load %arg0[%c8, %c0_13] : memref<1520x64xf32, #tpu.memory_space<vmem>>, vector<9x32xf32>
    %cst_14 = arith.constant dense<0.000000e+00> : vector<16x32xf32>
    %53 = tpu.matmul %51, %52, %cst_14 {dimension_numbers = #tpu.dot_dimension_numbers<[1], [0], [0], [1], [0, 0, 1, 1], [], []>} : vector<16x9xf32>, vector<9x32xf32>, vector<16x32xf32> -> vector<16x32xf32>
    %54 = vector.extract_strided_slice %0 {offsets = [1, 0], sizes = [1, 32], strides = [1, 1]} : vector<56x64xf32> to vector<1x32xf32>
    %55 = vector.broadcast %54 : vector<1x32xf32> to vector<16x32xf32>
    %56 = arith.addf %53, %55 : vector<16x32xf32>
    %c0_15 = arith.constant 0 : index
    %c0_16 = arith.constant 0 : index
    %57 = vector.load %arg0[%c0_15, %c0_16] : memref<1520x64xf32, #tpu.memory_space<vmem>>, vector<7x32xf32>
    %cst_17 = arith.constant dense<0.000000e+00> : vector<16x32xf32>
    %58 = tpu.matmul %50, %57, %cst_17 {dimension_numbers = #tpu.dot_dimension_numbers<[1], [0], [0], [1], [0, 0, 1, 1], [], []>} : vector<16x7xf32>, vector<7x32xf32>, vector<16x32xf32> -> vector<16x32xf32>
    %59 = vector.extract_strided_slice %0 {offsets = [0, 0], sizes = [1, 32], strides = [1, 1]} : vector<56x64xf32> to vector<1x32xf32>
    %60 = vector.broadcast %59 : vector<1x32xf32> to vector<16x32xf32>
    %61 = arith.addf %58, %60 : vector<16x32xf32>
    %62 = arith.addf %61, %56 : vector<16x32xf32>
    %c24 = arith.constant 24 : index
    %c0_18 = arith.constant 0 : index
    %63 = vector.load %arg0[%c24, %c0_18] : memref<1520x64xf32, #tpu.memory_space<vmem>>, vector<8x32xf32>
    %64 = vector.extract_strided_slice %62 {offsets = [0, 0], sizes = [8, 32], strides = [1, 1]} : vector<16x32xf32> to vector<8x32xf32>
    %65 = vector.extract_strided_slice %62 {offsets = [8, 0], sizes = [8, 32], strides = [1, 1]} : vector<16x32xf32> to vector<8x32xf32>
    %66 = tpu.concatenate %63, %64, %63, %65 in 0 : vector<8x32xf32>, vector<8x32xf32>, vector<8x32xf32>, vector<8x32xf32> -> vector<32x32xf32>
    %c368 = arith.constant 368 : index
    %c0_19 = arith.constant 0 : index
    %67 = vector.load %arg0[%c368, %c0_19] : memref<1520x64xf32, #tpu.memory_space<vmem>>, vector<96x32xf32>
    %68 = vector.extract_strided_slice %0 {offsets = [5, 0], sizes = [1, 32], strides = [1, 1]} : vector<56x64xf32> to vector<1x32xf32>
    %69 = vector.extract_strided_slice %0 {offsets = [6, 0], sizes = [1, 32], strides = [1, 1]} : vector<56x64xf32> to vector<1x32xf32>
    %70 = vector.extract_strided_slice %0 {offsets = [7, 0], sizes = [1, 32], strides = [1, 1]} : vector<56x64xf32> to vector<1x32xf32>
    %c464 = arith.constant 464 : index
    %c0_20 = arith.constant 0 : index
    %71 = vector.load %arg0[%c464, %c0_20] : memref<1520x64xf32, #tpu.memory_space<vmem>>, vector<32x32xf32>
    %72 = vector.extract_strided_slice %0 {offsets = [8, 0], sizes = [1, 32], strides = [1, 1]} : vector<56x64xf32> to vector<1x32xf32>
    %73 = vector.extract_strided_slice %67 {offsets = [0, 0], sizes = [32, 32], strides = [1, 1]} : vector<96x32xf32> to vector<32x32xf32>
    %cst_21 = arith.constant dense<0.000000e+00> : vector<32x32xf32>
    %74 = tpu.matmul %66, %73, %cst_21 {dimension_numbers = #tpu.dot_dimension_numbers<[1], [0], [0], [1], [0, 0, 1, 1], [], []>} : vector<32x32xf32>, vector<32x32xf32>, vector<32x32xf32> -> vector<32x32xf32>
    %75 = vector.broadcast %68 : vector<1x32xf32> to vector<32x32xf32>
    %76 = arith.addf %74, %75 : vector<32x32xf32>
    %77 = vector.extract_strided_slice %67 {offsets = [32, 0], sizes = [32, 32], strides = [1, 1]} : vector<96x32xf32> to vector<32x32xf32>
    %cst_22 = arith.constant dense<0.000000e+00> : vector<32x32xf32>
    %78 = tpu.matmul %66, %77, %cst_22 {dimension_numbers = #tpu.dot_dimension_numbers<[1], [0], [0], [1], [0, 0, 1, 1], [], []>} : vector<32x32xf32>, vector<32x32xf32>, vector<32x32xf32> -> vector<32x32xf32>
    %79 = vector.broadcast %69 : vector<1x32xf32> to vector<32x32xf32>
    %80 = arith.addf %78, %79 : vector<32x32xf32>
    %81 = vector.extract_strided_slice %67 {offsets = [64, 0], sizes = [32, 32], strides = [1, 1]} : vector<96x32xf32> to vector<32x32xf32>
    %cst_23 = arith.constant dense<0.000000e+00> : vector<32x32xf32>
    %82 = tpu.matmul %66, %81, %cst_23 {dimension_numbers = #tpu.dot_dimension_numbers<[1], [0], [0], [1], [0, 0, 1, 1], [], []>} : vector<32x32xf32>, vector<32x32xf32>, vector<32x32xf32> -> vector<32x32xf32>
    %83 = vector.broadcast %70 : vector<1x32xf32> to vector<32x32xf32>
    %84 = arith.addf %82, %83 : vector<32x32xf32>
    %85 = vector.broadcast %8 : vector<1x32xf32> to vector<32x32xf32>
    %86 = arith.mulf %80, %85 : vector<32x32xf32>
    %cst_24 = arith.constant dense<0.000000e+00> : vector<32x32xf32>
    %87 = tpu.matmul %76, %86, %cst_24 {dimension_numbers = #tpu.dot_dimension_numbers<[1], [1], [0], [0], [0, 0, 1, 0], [], []>} : vector<32x32xf32>, vector<32x32xf32>, vector<32x32xf32> -> vector<32x32xf32>
    %cst_25 = arith.constant 0.353553385 : f32
    %88 = vector.broadcast %cst_25 : f32 to vector<32x32xf32>
    %89 = arith.mulf %87, %88 : vector<32x32xf32>
    %90 = arith.addf %89, %39 : vector<32x32xf32>
    %cst_26 = arith.constant dense<0xFF800000> : vector<32xf32>
    %91 = vector.multi_reduction <maximumf>, %90, %cst_26 [1] : vector<32x32xf32> to vector<32xf32>
    %92 = vector.shape_cast %91 : vector<32xf32> to vector<32x1xf32>
    %93 = vector.broadcast %92 : vector<32x1xf32> to vector<32x32xf32>
    %94 = arith.subf %90, %93 : vector<32x32xf32>
    %95 = math.exp %94 : vector<32x32xf32>
    %cst_27 = arith.constant dense<0.000000e+00> : vector<32xf32>
    %96 = vector.multi_reduction <add>, %95, %cst_27 [1] : vector<32x32xf32> to vector<32xf32>
    %97 = vector.shape_cast %96 : vector<32xf32> to vector<32x1xf32>
    %98 = tpu.reciprocal %97 {approx = true} : vector<32x1xf32> -> vector<32x1xf32>
    %99 = vector.broadcast %98 : vector<32x1xf32> to vector<32x32xf32>
    %100 = arith.mulf %95, %99 : vector<32x32xf32>
    %101 = vector.broadcast %8 : vector<1x32xf32> to vector<32x32xf32>
    %102 = arith.mulf %84, %101 : vector<32x32xf32>
    %cst_28 = arith.constant dense<0.000000e+00> : vector<32x32xf32>
    %103 = tpu.matmul %100, %102, %cst_28 {dimension_numbers = #tpu.dot_dimension_numbers<[1], [0], [0], [1], [0, 0, 1, 1], [], []>} : vector<32x32xf32>, vector<32x32xf32>, vector<32x32xf32> -> vector<32x32xf32>
    %104 = vector.broadcast %15 : vector<1x32xf32> to vector<32x32xf32>
    %105 = arith.mulf %80, %104 : vector<32x32xf32>
    %cst_29 = arith.constant dense<0.000000e+00> : vector<32x32xf32>
    %106 = tpu.matmul %76, %105, %cst_29 {dimension_numbers = #tpu.dot_dimension_numbers<[1], [1], [0], [0], [0, 0, 1, 0], [], []>} : vector<32x32xf32>, vector<32x32xf32>, vector<32x32xf32> -> vector<32x32xf32>
    %cst_30 = arith.constant 0.353553385 : f32
    %107 = vector.broadcast %cst_30 : f32 to vector<32x32xf32>
    %108 = arith.mulf %106, %107 : vector<32x32xf32>
    %109 = arith.addf %108, %39 : vector<32x32xf32>
    %cst_31 = arith.constant dense<0xFF800000> : vector<32xf32>
    %110 = vector.multi_reduction <maximumf>, %109, %cst_31 [1] : vector<32x32xf32> to vector<32xf32>
    %111 = vector.shape_cast %110 : vector<32xf32> to vector<32x1xf32>
    %112 = vector.broadcast %111 : vector<32x1xf32> to vector<32x32xf32>
    %113 = arith.subf %109, %112 : vector<32x32xf32>
    %114 = math.exp %113 : vector<32x32xf32>
    %cst_32 = arith.constant dense<0.000000e+00> : vector<32xf32>
    %115 = vector.multi_reduction <add>, %114, %cst_32 [1] : vector<32x32xf32> to vector<32xf32>
    %116 = vector.shape_cast %115 : vector<32xf32> to vector<32x1xf32>
    %117 = tpu.reciprocal %116 {approx = true} : vector<32x1xf32> -> vector<32x1xf32>
    %118 = vector.broadcast %117 : vector<32x1xf32> to vector<32x32xf32>
    %119 = arith.mulf %114, %118 : vector<32x32xf32>
    %120 = vector.broadcast %15 : vector<1x32xf32> to vector<32x32xf32>
    %121 = arith.mulf %84, %120 : vector<32x32xf32>
    %cst_33 = arith.constant dense<0.000000e+00> : vector<32x32xf32>
    %122 = tpu.matmul %119, %121, %cst_33 {dimension_numbers = #tpu.dot_dimension_numbers<[1], [0], [0], [1], [0, 0, 1, 1], [], []>} : vector<32x32xf32>, vector<32x32xf32>, vector<32x32xf32> -> vector<32x32xf32>
    %123 = arith.addf %103, %122 : vector<32x32xf32>
    %124 = vector.broadcast %22 : vector<1x32xf32> to vector<32x32xf32>
    %125 = arith.mulf %80, %124 : vector<32x32xf32>
    %cst_34 = arith.constant dense<0.000000e+00> : vector<32x32xf32>
    %126 = tpu.matmul %76, %125, %cst_34 {dimension_numbers = #tpu.dot_dimension_numbers<[1], [1], [0], [0], [0, 0, 1, 0], [], []>} : vector<32x32xf32>, vector<32x32xf32>, vector<32x32xf32> -> vector<32x32xf32>
    %cst_35 = arith.constant 0.353553385 : f32
    %127 = vector.broadcast %cst_35 : f32 to vector<32x32xf32>
    %128 = arith.mulf %126, %127 : vector<32x32xf32>
    %129 = arith.addf %128, %39 : vector<32x32xf32>
    %cst_36 = arith.constant dense<0xFF800000> : vector<32xf32>
    %130 = vector.multi_reduction <maximumf>, %129, %cst_36 [1] : vector<32x32xf32> to vector<32xf32>
    %131 = vector.shape_cast %130 : vector<32xf32> to vector<32x1xf32>
    %132 = vector.broadcast %131 : vector<32x1xf32> to vector<32x32xf32>
    %133 = arith.subf %129, %132 : vector<32x32xf32>
    %134 = math.exp %133 : vector<32x32xf32>
    %cst_37 = arith.constant dense<0.000000e+00> : vector<32xf32>
    %135 = vector.multi_reduction <add>, %134, %cst_37 [1] : vector<32x32xf32> to vector<32xf32>
    %136 = vector.shape_cast %135 : vector<32xf32> to vector<32x1xf32>
    %137 = tpu.reciprocal %136 {approx = true} : vector<32x1xf32> -> vector<32x1xf32>
    %138 = vector.broadcast %137 : vector<32x1xf32> to vector<32x32xf32>
    %139 = arith.mulf %134, %138 : vector<32x32xf32>
    %140 = vector.broadcast %22 : vector<1x32xf32> to vector<32x32xf32>
    %141 = arith.mulf %84, %140 : vector<32x32xf32>
    %cst_38 = arith.constant dense<0.000000e+00> : vector<32x32xf32>
    %142 = tpu.matmul %139, %141, %cst_38 {dimension_numbers = #tpu.dot_dimension_numbers<[1], [0], [0], [1], [0, 0, 1, 1], [], []>} : vector<32x32xf32>, vector<32x32xf32>, vector<32x32xf32> -> vector<32x32xf32>
    %143 = arith.addf %123, %142 : vector<32x32xf32>
    %144 = vector.broadcast %29 : vector<1x32xf32> to vector<32x32xf32>
    %145 = arith.mulf %80, %144 : vector<32x32xf32>
    %cst_39 = arith.constant dense<0.000000e+00> : vector<32x32xf32>
    %146 = tpu.matmul %76, %145, %cst_39 {dimension_numbers = #tpu.dot_dimension_numbers<[1], [1], [0], [0], [0, 0, 1, 0], [], []>} : vector<32x32xf32>, vector<32x32xf32>, vector<32x32xf32> -> vector<32x32xf32>
    %cst_40 = arith.constant 0.353553385 : f32
    %147 = vector.broadcast %cst_40 : f32 to vector<32x32xf32>
    %148 = arith.mulf %146, %147 : vector<32x32xf32>
    %149 = arith.addf %148, %39 : vector<32x32xf32>
    %cst_41 = arith.constant dense<0xFF800000> : vector<32xf32>
    %150 = vector.multi_reduction <maximumf>, %149, %cst_41 [1] : vector<32x32xf32> to vector<32xf32>
    %151 = vector.shape_cast %150 : vector<32xf32> to vector<32x1xf32>
    %152 = vector.broadcast %151 : vector<32x1xf32> to vector<32x32xf32>
    %153 = arith.subf %149, %152 : vector<32x32xf32>
    %154 = math.exp %153 : vector<32x32xf32>
    %cst_42 = arith.constant dense<0.000000e+00> : vector<32xf32>
    %155 = vector.multi_reduction <add>, %154, %cst_42 [1] : vector<32x32xf32> to vector<32xf32>
    %156 = vector.shape_cast %155 : vector<32xf32> to vector<32x1xf32>
    %157 = tpu.reciprocal %156 {approx = true} : vector<32x1xf32> -> vector<32x1xf32>
    %158 = vector.broadcast %157 : vector<32x1xf32> to vector<32x32xf32>
    %159 = arith.mulf %154, %158 : vector<32x32xf32>
    %160 = vector.broadcast %29 : vector<1x32xf32> to vector<32x32xf32>
    %161 = arith.mulf %84, %160 : vector<32x32xf32>
    %cst_43 = arith.constant dense<0.000000e+00> : vector<32x32xf32>
    %162 = tpu.matmul %159, %161, %cst_43 {dimension_numbers = #tpu.dot_dimension_numbers<[1], [0], [0], [1], [0, 0, 1, 1], [], []>} : vector<32x32xf32>, vector<32x32xf32>, vector<32x32xf32> -> vector<32x32xf32>
    %163 = arith.addf %143, %162 : vector<32x32xf32>
    %cst_44 = arith.constant dense<0.000000e+00> : vector<32x32xf32>
    %164 = tpu.matmul %163, %71, %cst_44 {dimension_numbers = #tpu.dot_dimension_numbers<[1], [0], [0], [1], [0, 0, 1, 1], [], []>} : vector<32x32xf32>, vector<32x32xf32>, vector<32x32xf32> -> vector<32x32xf32>
    %165 = vector.broadcast %72 : vector<1x32xf32> to vector<32x32xf32>
    %166 = arith.addf %164, %165 : vector<32x32xf32>
    %167 = arith.addf %66, %166 : vector<32x32xf32>
    %168 = vector.extract_strided_slice %0 {offsets = [11, 0], sizes = [1, 32], strides = [1, 1]} : vector<56x64xf32> to vector<1x32xf32>
    %169 = vector.extract_strided_slice %0 {offsets = [12, 0], sizes = [1, 32], strides = [1, 1]} : vector<56x64xf32> to vector<1x32xf32>
    %cst_45 = arith.constant dense<0.000000e+00> : vector<32xf32>
    %170 = vector.multi_reduction <add>, %167, %cst_45 [1] : vector<32x32xf32> to vector<32xf32>
    %171 = vector.shape_cast %170 : vector<32xf32> to vector<32x1xf32>
    %cst_46 = arith.constant 3.200000e+01 : f32
    %172 = vector.broadcast %cst_46 : f32 to vector<32x1xf32>
    %173 = arith.divf %171, %172 : vector<32x1xf32>
    %174 = vector.broadcast %173 : vector<32x1xf32> to vector<32x32xf32>
    %175 = arith.subf %167, %174 : vector<32x32xf32>
    %176 = arith.mulf %175, %175 : vector<32x32xf32>
    %cst_47 = arith.constant dense<0.000000e+00> : vector<32xf32>
    %177 = vector.multi_reduction <add>, %176, %cst_47 [1] : vector<32x32xf32> to vector<32xf32>
    %178 = vector.shape_cast %177 : vector<32xf32> to vector<32x1xf32>
    %cst_48 = arith.constant 3.200000e+01 : f32
    %179 = vector.broadcast %cst_48 : f32 to vector<32x1xf32>
    %180 = arith.divf %178, %179 : vector<32x1xf32>
    %cst_49 = arith.constant 9.99999974E-6 : f32
    %181 = vector.broadcast %cst_49 : f32 to vector<32x1xf32>
    %182 = arith.addf %180, %181 : vector<32x1xf32>
    %183 = math.rsqrt %182 : vector<32x1xf32>
    %184 = vector.broadcast %183 : vector<32x1xf32> to vector<32x32xf32>
    %185 = arith.mulf %175, %184 : vector<32x32xf32>
    %186 = vector.broadcast %168 : vector<1x32xf32> to vector<32x32xf32>
    %187 = arith.mulf %185, %186 : vector<32x32xf32>
    %188 = vector.broadcast %169 : vector<1x32xf32> to vector<32x32xf32>
    %189 = arith.addf %187, %188 : vector<32x32xf32>
    %c496 = arith.constant 496 : index
    %c0_50 = arith.constant 0 : index
    %190 = vector.load %arg0[%c496, %c0_50] : memref<1520x64xf32, #tpu.memory_space<vmem>>, vector<32x64xf32>
    %cst_51 = arith.constant dense<0.000000e+00> : vector<32x64xf32>
    %191 = tpu.matmul %189, %190, %cst_51 {dimension_numbers = #tpu.dot_dimension_numbers<[1], [0], [0], [1], [0, 0, 1, 1], [], []>} : vector<32x32xf32>, vector<32x64xf32>, vector<32x64xf32> -> vector<32x64xf32>
    %192 = vector.extract_strided_slice %0 {offsets = [9, 0], sizes = [1, 64], strides = [1, 1]} : vector<56x64xf32> to vector<1x64xf32>
    %193 = vector.broadcast %192 : vector<1x64xf32> to vector<32x64xf32>
    %194 = arith.addf %191, %193 : vector<32x64xf32>
    %cst_52 = arith.constant 0.000000e+00 : f32
    %195 = vector.broadcast %cst_52 : f32 to vector<32x64xf32>
    %196 = arith.maximumf %194, %195 : vector<32x64xf32>
    %c528 = arith.constant 528 : index
    %c0_53 = arith.constant 0 : index
    %197 = vector.load %arg0[%c528, %c0_53] : memref<1520x64xf32, #tpu.memory_space<vmem>>, vector<64x32xf32>
    %cst_54 = arith.constant dense<0.000000e+00> : vector<32x32xf32>
    %198 = tpu.matmul %196, %197, %cst_54 {dimension_numbers = #tpu.dot_dimension_numbers<[1], [0], [0], [1], [0, 0, 1, 1], [], []>} : vector<32x64xf32>, vector<64x32xf32>, vector<32x32xf32> -> vector<32x32xf32>
    %199 = vector.extract_strided_slice %0 {offsets = [10, 0], sizes = [1, 32], strides = [1, 1]} : vector<56x64xf32> to vector<1x32xf32>
    %200 = vector.broadcast %199 : vector<1x32xf32> to vector<32x32xf32>
    %201 = arith.addf %198, %200 : vector<32x32xf32>
    %202 = arith.addf %189, %201 : vector<32x32xf32>
    %203 = vector.extract_strided_slice %0 {offsets = [13, 0], sizes = [1, 32], strides = [1, 1]} : vector<56x64xf32> to vector<1x32xf32>
    %204 = vector.extract_strided_slice %0 {offsets = [14, 0], sizes = [1, 32], strides = [1, 1]} : vector<56x64xf32> to vector<1x32xf32>
    %cst_55 = arith.constant dense<0.000000e+00> : vector<32xf32>
    %205 = vector.multi_reduction <add>, %202, %cst_55 [1] : vector<32x32xf32> to vector<32xf32>
    %206 = vector.shape_cast %205 : vector<32xf32> to vector<32x1xf32>
    %cst_56 = arith.constant 3.200000e+01 : f32
    %207 = vector.broadcast %cst_56 : f32 to vector<32x1xf32>
    %208 = arith.divf %206, %207 : vector<32x1xf32>
    %209 = vector.broadcast %208 : vector<32x1xf32> to vector<32x32xf32>
    %210 = arith.subf %202, %209 : vector<32x32xf32>
    %211 = arith.mulf %210, %210 : vector<32x32xf32>
    %cst_57 = arith.constant dense<0.000000e+00> : vector<32xf32>
    %212 = vector.multi_reduction <add>, %211, %cst_57 [1] : vector<32x32xf32> to vector<32xf32>
    %213 = vector.shape_cast %212 : vector<32xf32> to vector<32x1xf32>
    %cst_58 = arith.constant 3.200000e+01 : f32
    %214 = vector.broadcast %cst_58 : f32 to vector<32x1xf32>
    %215 = arith.divf %213, %214 : vector<32x1xf32>
    %cst_59 = arith.constant 9.99999974E-6 : f32
    %216 = vector.broadcast %cst_59 : f32 to vector<32x1xf32>
    %217 = arith.addf %215, %216 : vector<32x1xf32>
    %218 = math.rsqrt %217 : vector<32x1xf32>
    %219 = vector.broadcast %218 : vector<32x1xf32> to vector<32x32xf32>
    %220 = arith.mulf %210, %219 : vector<32x32xf32>
    %221 = vector.broadcast %203 : vector<1x32xf32> to vector<32x32xf32>
    %222 = arith.mulf %220, %221 : vector<32x32xf32>
    %223 = vector.broadcast %204 : vector<1x32xf32> to vector<32x32xf32>
    %224 = arith.addf %222, %223 : vector<32x32xf32>
    %c592 = arith.constant 592 : index
    %c0_60 = arith.constant 0 : index
    %225 = vector.load %arg0[%c592, %c0_60] : memref<1520x64xf32, #tpu.memory_space<vmem>>, vector<96x32xf32>
    %226 = vector.extract_strided_slice %0 {offsets = [15, 0], sizes = [1, 32], strides = [1, 1]} : vector<56x64xf32> to vector<1x32xf32>
    %227 = vector.extract_strided_slice %0 {offsets = [16, 0], sizes = [1, 32], strides = [1, 1]} : vector<56x64xf32> to vector<1x32xf32>
    %228 = vector.extract_strided_slice %0 {offsets = [17, 0], sizes = [1, 32], strides = [1, 1]} : vector<56x64xf32> to vector<1x32xf32>
    %c688 = arith.constant 688 : index
    %c0_61 = arith.constant 0 : index
    %229 = vector.load %arg0[%c688, %c0_61] : memref<1520x64xf32, #tpu.memory_space<vmem>>, vector<32x32xf32>
    %230 = vector.extract_strided_slice %0 {offsets = [18, 0], sizes = [1, 32], strides = [1, 1]} : vector<56x64xf32> to vector<1x32xf32>
    %231 = vector.extract_strided_slice %225 {offsets = [0, 0], sizes = [32, 32], strides = [1, 1]} : vector<96x32xf32> to vector<32x32xf32>
    %cst_62 = arith.constant dense<0.000000e+00> : vector<32x32xf32>
    %232 = tpu.matmul %224, %231, %cst_62 {dimension_numbers = #tpu.dot_dimension_numbers<[1], [0], [0], [1], [0, 0, 1, 1], [], []>} : vector<32x32xf32>, vector<32x32xf32>, vector<32x32xf32> -> vector<32x32xf32>
    %233 = vector.broadcast %226 : vector<1x32xf32> to vector<32x32xf32>
    %234 = arith.addf %232, %233 : vector<32x32xf32>
    %235 = vector.extract_strided_slice %225 {offsets = [32, 0], sizes = [32, 32], strides = [1, 1]} : vector<96x32xf32> to vector<32x32xf32>
    %cst_63 = arith.constant dense<0.000000e+00> : vector<32x32xf32>
    %236 = tpu.matmul %224, %235, %cst_63 {dimension_numbers = #tpu.dot_dimension_numbers<[1], [0], [0], [1], [0, 0, 1, 1], [], []>} : vector<32x32xf32>, vector<32x32xf32>, vector<32x32xf32> -> vector<32x32xf32>
    %237 = vector.broadcast %227 : vector<1x32xf32> to vector<32x32xf32>
    %238 = arith.addf %236, %237 : vector<32x32xf32>
    %239 = vector.extract_strided_slice %225 {offsets = [64, 0], sizes = [32, 32], strides = [1, 1]} : vector<96x32xf32> to vector<32x32xf32>
    %cst_64 = arith.constant dense<0.000000e+00> : vector<32x32xf32>
    %240 = tpu.matmul %224, %239, %cst_64 {dimension_numbers = #tpu.dot_dimension_numbers<[1], [0], [0], [1], [0, 0, 1, 1], [], []>} : vector<32x32xf32>, vector<32x32xf32>, vector<32x32xf32> -> vector<32x32xf32>
    %241 = vector.broadcast %228 : vector<1x32xf32> to vector<32x32xf32>
    %242 = arith.addf %240, %241 : vector<32x32xf32>
    %243 = vector.broadcast %8 : vector<1x32xf32> to vector<32x32xf32>
    %244 = arith.mulf %238, %243 : vector<32x32xf32>
    %cst_65 = arith.constant dense<0.000000e+00> : vector<32x32xf32>
    %245 = tpu.matmul %234, %244, %cst_65 {dimension_numbers = #tpu.dot_dimension_numbers<[1], [1], [0], [0], [0, 0, 1, 0], [], []>} : vector<32x32xf32>, vector<32x32xf32>, vector<32x32xf32> -> vector<32x32xf32>
    %cst_66 = arith.constant 0.353553385 : f32
    %246 = vector.broadcast %cst_66 : f32 to vector<32x32xf32>
    %247 = arith.mulf %245, %246 : vector<32x32xf32>
    %248 = arith.addf %247, %39 : vector<32x32xf32>
    %cst_67 = arith.constant dense<0xFF800000> : vector<32xf32>
    %249 = vector.multi_reduction <maximumf>, %248, %cst_67 [1] : vector<32x32xf32> to vector<32xf32>
    %250 = vector.shape_cast %249 : vector<32xf32> to vector<32x1xf32>
    %251 = vector.broadcast %250 : vector<32x1xf32> to vector<32x32xf32>
    %252 = arith.subf %248, %251 : vector<32x32xf32>
    %253 = math.exp %252 : vector<32x32xf32>
    %cst_68 = arith.constant dense<0.000000e+00> : vector<32xf32>
    %254 = vector.multi_reduction <add>, %253, %cst_68 [1] : vector<32x32xf32> to vector<32xf32>
    %255 = vector.shape_cast %254 : vector<32xf32> to vector<32x1xf32>
    %256 = tpu.reciprocal %255 {approx = true} : vector<32x1xf32> -> vector<32x1xf32>
    %257 = vector.broadcast %256 : vector<32x1xf32> to vector<32x32xf32>
    %258 = arith.mulf %253, %257 : vector<32x32xf32>
    %259 = vector.broadcast %8 : vector<1x32xf32> to vector<32x32xf32>
    %260 = arith.mulf %242, %259 : vector<32x32xf32>
    %cst_69 = arith.constant dense<0.000000e+00> : vector<32x32xf32>
    %261 = tpu.matmul %258, %260, %cst_69 {dimension_numbers = #tpu.dot_dimension_numbers<[1], [0], [0], [1], [0, 0, 1, 1], [], []>} : vector<32x32xf32>, vector<32x32xf32>, vector<32x32xf32> -> vector<32x32xf32>
    %262 = vector.broadcast %15 : vector<1x32xf32> to vector<32x32xf32>
    %263 = arith.mulf %238, %262 : vector<32x32xf32>
    %cst_70 = arith.constant dense<0.000000e+00> : vector<32x32xf32>
    %264 = tpu.matmul %234, %263, %cst_70 {dimension_numbers = #tpu.dot_dimension_numbers<[1], [1], [0], [0], [0, 0, 1, 0], [], []>} : vector<32x32xf32>, vector<32x32xf32>, vector<32x32xf32> -> vector<32x32xf32>
    %cst_71 = arith.constant 0.353553385 : f32
    %265 = vector.broadcast %cst_71 : f32 to vector<32x32xf32>
    %266 = arith.mulf %264, %265 : vector<32x32xf32>
    %267 = arith.addf %266, %39 : vector<32x32xf32>
    %cst_72 = arith.constant dense<0xFF800000> : vector<32xf32>
    %268 = vector.multi_reduction <maximumf>, %267, %cst_72 [1] : vector<32x32xf32> to vector<32xf32>
    %269 = vector.shape_cast %268 : vector<32xf32> to vector<32x1xf32>
    %270 = vector.broadcast %269 : vector<32x1xf32> to vector<32x32xf32>
    %271 = arith.subf %267, %270 : vector<32x32xf32>
    %272 = math.exp %271 : vector<32x32xf32>
    %cst_73 = arith.constant dense<0.000000e+00> : vector<32xf32>
    %273 = vector.multi_reduction <add>, %272, %cst_73 [1] : vector<32x32xf32> to vector<32xf32>
    %274 = vector.shape_cast %273 : vector<32xf32> to vector<32x1xf32>
    %275 = tpu.reciprocal %274 {approx = true} : vector<32x1xf32> -> vector<32x1xf32>
    %276 = vector.broadcast %275 : vector<32x1xf32> to vector<32x32xf32>
    %277 = arith.mulf %272, %276 : vector<32x32xf32>
    %278 = vector.broadcast %15 : vector<1x32xf32> to vector<32x32xf32>
    %279 = arith.mulf %242, %278 : vector<32x32xf32>
    %cst_74 = arith.constant dense<0.000000e+00> : vector<32x32xf32>
    %280 = tpu.matmul %277, %279, %cst_74 {dimension_numbers = #tpu.dot_dimension_numbers<[1], [0], [0], [1], [0, 0, 1, 1], [], []>} : vector<32x32xf32>, vector<32x32xf32>, vector<32x32xf32> -> vector<32x32xf32>
    %281 = arith.addf %261, %280 : vector<32x32xf32>
    %282 = vector.broadcast %22 : vector<1x32xf32> to vector<32x32xf32>
    %283 = arith.mulf %238, %282 : vector<32x32xf32>
    %cst_75 = arith.constant dense<0.000000e+00> : vector<32x32xf32>
    %284 = tpu.matmul %234, %283, %cst_75 {dimension_numbers = #tpu.dot_dimension_numbers<[1], [1], [0], [0], [0, 0, 1, 0], [], []>} : vector<32x32xf32>, vector<32x32xf32>, vector<32x32xf32> -> vector<32x32xf32>
    %cst_76 = arith.constant 0.353553385 : f32
    %285 = vector.broadcast %cst_76 : f32 to vector<32x32xf32>
    %286 = arith.mulf %284, %285 : vector<32x32xf32>
    %287 = arith.addf %286, %39 : vector<32x32xf32>
    %cst_77 = arith.constant dense<0xFF800000> : vector<32xf32>
    %288 = vector.multi_reduction <maximumf>, %287, %cst_77 [1] : vector<32x32xf32> to vector<32xf32>
    %289 = vector.shape_cast %288 : vector<32xf32> to vector<32x1xf32>
    %290 = vector.broadcast %289 : vector<32x1xf32> to vector<32x32xf32>
    %291 = arith.subf %287, %290 : vector<32x32xf32>
    %292 = math.exp %291 : vector<32x32xf32>
    %cst_78 = arith.constant dense<0.000000e+00> : vector<32xf32>
    %293 = vector.multi_reduction <add>, %292, %cst_78 [1] : vector<32x32xf32> to vector<32xf32>
    %294 = vector.shape_cast %293 : vector<32xf32> to vector<32x1xf32>
    %295 = tpu.reciprocal %294 {approx = true} : vector<32x1xf32> -> vector<32x1xf32>
    %296 = vector.broadcast %295 : vector<32x1xf32> to vector<32x32xf32>
    %297 = arith.mulf %292, %296 : vector<32x32xf32>
    %298 = vector.broadcast %22 : vector<1x32xf32> to vector<32x32xf32>
    %299 = arith.mulf %242, %298 : vector<32x32xf32>
    %cst_79 = arith.constant dense<0.000000e+00> : vector<32x32xf32>
    %300 = tpu.matmul %297, %299, %cst_79 {dimension_numbers = #tpu.dot_dimension_numbers<[1], [0], [0], [1], [0, 0, 1, 1], [], []>} : vector<32x32xf32>, vector<32x32xf32>, vector<32x32xf32> -> vector<32x32xf32>
    %301 = arith.addf %281, %300 : vector<32x32xf32>
    %302 = vector.broadcast %29 : vector<1x32xf32> to vector<32x32xf32>
    %303 = arith.mulf %238, %302 : vector<32x32xf32>
    %cst_80 = arith.constant dense<0.000000e+00> : vector<32x32xf32>
    %304 = tpu.matmul %234, %303, %cst_80 {dimension_numbers = #tpu.dot_dimension_numbers<[1], [1], [0], [0], [0, 0, 1, 0], [], []>} : vector<32x32xf32>, vector<32x32xf32>, vector<32x32xf32> -> vector<32x32xf32>
    %cst_81 = arith.constant 0.353553385 : f32
    %305 = vector.broadcast %cst_81 : f32 to vector<32x32xf32>
    %306 = arith.mulf %304, %305 : vector<32x32xf32>
    %307 = arith.addf %306, %39 : vector<32x32xf32>
    %cst_82 = arith.constant dense<0xFF800000> : vector<32xf32>
    %308 = vector.multi_reduction <maximumf>, %307, %cst_82 [1] : vector<32x32xf32> to vector<32xf32>
    %309 = vector.shape_cast %308 : vector<32xf32> to vector<32x1xf32>
    %310 = vector.broadcast %309 : vector<32x1xf32> to vector<32x32xf32>
    %311 = arith.subf %307, %310 : vector<32x32xf32>
    %312 = math.exp %311 : vector<32x32xf32>
    %cst_83 = arith.constant dense<0.000000e+00> : vector<32xf32>
    %313 = vector.multi_reduction <add>, %312, %cst_83 [1] : vector<32x32xf32> to vector<32xf32>
    %314 = vector.shape_cast %313 : vector<32xf32> to vector<32x1xf32>
    %315 = tpu.reciprocal %314 {approx = true} : vector<32x1xf32> -> vector<32x1xf32>
    %316 = vector.broadcast %315 : vector<32x1xf32> to vector<32x32xf32>
    %317 = arith.mulf %312, %316 : vector<32x32xf32>
    %318 = vector.broadcast %29 : vector<1x32xf32> to vector<32x32xf32>
    %319 = arith.mulf %242, %318 : vector<32x32xf32>
    %cst_84 = arith.constant dense<0.000000e+00> : vector<32x32xf32>
    %320 = tpu.matmul %317, %319, %cst_84 {dimension_numbers = #tpu.dot_dimension_numbers<[1], [0], [0], [1], [0, 0, 1, 1], [], []>} : vector<32x32xf32>, vector<32x32xf32>, vector<32x32xf32> -> vector<32x32xf32>
    %321 = arith.addf %301, %320 : vector<32x32xf32>
    %cst_85 = arith.constant dense<0.000000e+00> : vector<32x32xf32>
    %322 = tpu.matmul %321, %229, %cst_85 {dimension_numbers = #tpu.dot_dimension_numbers<[1], [0], [0], [1], [0, 0, 1, 1], [], []>} : vector<32x32xf32>, vector<32x32xf32>, vector<32x32xf32> -> vector<32x32xf32>
    %323 = vector.broadcast %230 : vector<1x32xf32> to vector<32x32xf32>
    %324 = arith.addf %322, %323 : vector<32x32xf32>
    %325 = arith.addf %224, %324 : vector<32x32xf32>
    %326 = vector.extract_strided_slice %0 {offsets = [21, 0], sizes = [1, 32], strides = [1, 1]} : vector<56x64xf32> to vector<1x32xf32>
    %327 = vector.extract_strided_slice %0 {offsets = [22, 0], sizes = [1, 32], strides = [1, 1]} : vector<56x64xf32> to vector<1x32xf32>
    %cst_86 = arith.constant dense<0.000000e+00> : vector<32xf32>
    %328 = vector.multi_reduction <add>, %325, %cst_86 [1] : vector<32x32xf32> to vector<32xf32>
    %329 = vector.shape_cast %328 : vector<32xf32> to vector<32x1xf32>
    %cst_87 = arith.constant 3.200000e+01 : f32
    %330 = vector.broadcast %cst_87 : f32 to vector<32x1xf32>
    %331 = arith.divf %329, %330 : vector<32x1xf32>
    %332 = vector.broadcast %331 : vector<32x1xf32> to vector<32x32xf32>
    %333 = arith.subf %325, %332 : vector<32x32xf32>
    %334 = arith.mulf %333, %333 : vector<32x32xf32>
    %cst_88 = arith.constant dense<0.000000e+00> : vector<32xf32>
    %335 = vector.multi_reduction <add>, %334, %cst_88 [1] : vector<32x32xf32> to vector<32xf32>
    %336 = vector.shape_cast %335 : vector<32xf32> to vector<32x1xf32>
    %cst_89 = arith.constant 3.200000e+01 : f32
    %337 = vector.broadcast %cst_89 : f32 to vector<32x1xf32>
    %338 = arith.divf %336, %337 : vector<32x1xf32>
    %cst_90 = arith.constant 9.99999974E-6 : f32
    %339 = vector.broadcast %cst_90 : f32 to vector<32x1xf32>
    %340 = arith.addf %338, %339 : vector<32x1xf32>
    %341 = math.rsqrt %340 : vector<32x1xf32>
    %342 = vector.broadcast %341 : vector<32x1xf32> to vector<32x32xf32>
    %343 = arith.mulf %333, %342 : vector<32x32xf32>
    %344 = vector.broadcast %326 : vector<1x32xf32> to vector<32x32xf32>
    %345 = arith.mulf %343, %344 : vector<32x32xf32>
    %346 = vector.broadcast %327 : vector<1x32xf32> to vector<32x32xf32>
    %347 = arith.addf %345, %346 : vector<32x32xf32>
    %c720 = arith.constant 720 : index
    %c0_91 = arith.constant 0 : index
    %348 = vector.load %arg0[%c720, %c0_91] : memref<1520x64xf32, #tpu.memory_space<vmem>>, vector<32x64xf32>
    %cst_92 = arith.constant dense<0.000000e+00> : vector<32x64xf32>
    %349 = tpu.matmul %347, %348, %cst_92 {dimension_numbers = #tpu.dot_dimension_numbers<[1], [0], [0], [1], [0, 0, 1, 1], [], []>} : vector<32x32xf32>, vector<32x64xf32>, vector<32x64xf32> -> vector<32x64xf32>
    %350 = vector.extract_strided_slice %0 {offsets = [19, 0], sizes = [1, 64], strides = [1, 1]} : vector<56x64xf32> to vector<1x64xf32>
    %351 = vector.broadcast %350 : vector<1x64xf32> to vector<32x64xf32>
    %352 = arith.addf %349, %351 : vector<32x64xf32>
    %cst_93 = arith.constant 0.000000e+00 : f32
    %353 = vector.broadcast %cst_93 : f32 to vector<32x64xf32>
    %354 = arith.maximumf %352, %353 : vector<32x64xf32>
    %c752 = arith.constant 752 : index
    %c0_94 = arith.constant 0 : index
    %355 = vector.load %arg0[%c752, %c0_94] : memref<1520x64xf32, #tpu.memory_space<vmem>>, vector<64x32xf32>
    %cst_95 = arith.constant dense<0.000000e+00> : vector<32x32xf32>
    %356 = tpu.matmul %354, %355, %cst_95 {dimension_numbers = #tpu.dot_dimension_numbers<[1], [0], [0], [1], [0, 0, 1, 1], [], []>} : vector<32x64xf32>, vector<64x32xf32>, vector<32x32xf32> -> vector<32x32xf32>
    %357 = vector.extract_strided_slice %0 {offsets = [20, 0], sizes = [1, 32], strides = [1, 1]} : vector<56x64xf32> to vector<1x32xf32>
    %358 = vector.broadcast %357 : vector<1x32xf32> to vector<32x32xf32>
    %359 = arith.addf %356, %358 : vector<32x32xf32>
    %360 = arith.addf %347, %359 : vector<32x32xf32>
    %361 = vector.extract_strided_slice %0 {offsets = [23, 0], sizes = [1, 32], strides = [1, 1]} : vector<56x64xf32> to vector<1x32xf32>
    %362 = vector.extract_strided_slice %0 {offsets = [24, 0], sizes = [1, 32], strides = [1, 1]} : vector<56x64xf32> to vector<1x32xf32>
    %cst_96 = arith.constant dense<0.000000e+00> : vector<32xf32>
    %363 = vector.multi_reduction <add>, %360, %cst_96 [1] : vector<32x32xf32> to vector<32xf32>
    %364 = vector.shape_cast %363 : vector<32xf32> to vector<32x1xf32>
    %cst_97 = arith.constant 3.200000e+01 : f32
    %365 = vector.broadcast %cst_97 : f32 to vector<32x1xf32>
    %366 = arith.divf %364, %365 : vector<32x1xf32>
    %367 = vector.broadcast %366 : vector<32x1xf32> to vector<32x32xf32>
    %368 = arith.subf %360, %367 : vector<32x32xf32>
    %369 = arith.mulf %368, %368 : vector<32x32xf32>
    %cst_98 = arith.constant dense<0.000000e+00> : vector<32xf32>
    %370 = vector.multi_reduction <add>, %369, %cst_98 [1] : vector<32x32xf32> to vector<32xf32>
    %371 = vector.shape_cast %370 : vector<32xf32> to vector<32x1xf32>
    %cst_99 = arith.constant 3.200000e+01 : f32
    %372 = vector.broadcast %cst_99 : f32 to vector<32x1xf32>
    %373 = arith.divf %371, %372 : vector<32x1xf32>
    %cst_100 = arith.constant 9.99999974E-6 : f32
    %374 = vector.broadcast %cst_100 : f32 to vector<32x1xf32>
    %375 = arith.addf %373, %374 : vector<32x1xf32>
    %376 = math.rsqrt %375 : vector<32x1xf32>
    %377 = vector.broadcast %376 : vector<32x1xf32> to vector<32x32xf32>
    %378 = arith.mulf %368, %377 : vector<32x32xf32>
    %379 = vector.broadcast %361 : vector<1x32xf32> to vector<32x32xf32>
    %380 = arith.mulf %378, %379 : vector<32x32xf32>
    %381 = vector.broadcast %362 : vector<1x32xf32> to vector<32x32xf32>
    %382 = arith.addf %380, %381 : vector<32x32xf32>
    %383 = vector.extract_strided_slice %382 {offsets = [0, 0], sizes = [8, 32], strides = [1, 1]} : vector<32x32xf32> to vector<8x32xf32>
    %c0_101 = arith.constant 0 : index
    %c0_102 = arith.constant 0 : index
    %c0_103 = arith.constant 0 : index
    %384 = vector.load %arg4[%c0_101, %c0_102, %c0_103] : memref<2x8x32xf32, #tpu.memory_space<vmem>>, vector<1x8x32xf32>
    %385 = vector.shape_cast %384 : vector<1x8x32xf32> to vector<8x32xf32>
    %386 = vector.shape_cast %383 : vector<8x32xf32> to vector<1x8x32xf32>
    tpu.vector_store %arg4[%c0_101, %c0_102, %c0_103], %386 {strides = array<i32>} : memref<2x8x32xf32, #tpu.memory_space<vmem>>, vector<1x8x32xf32>,
    %387 = vector.extract_strided_slice %382 {offsets = [16, 0], sizes = [8, 32], strides = [1, 1]} : vector<32x32xf32> to vector<8x32xf32>
    %c1 = arith.constant 1 : index
    %c0_104 = arith.constant 0 : index
    %c0_105 = arith.constant 0 : index
    %388 = vector.load %arg4[%c1, %c0_104, %c0_105] : memref<2x8x32xf32, #tpu.memory_space<vmem>>, vector<1x8x32xf32>
    %389 = vector.shape_cast %388 : vector<1x8x32xf32> to vector<8x32xf32>
    %390 = vector.shape_cast %387 : vector<8x32xf32> to vector<1x8x32xf32>
    tpu.vector_store %arg4[%c1, %c0_104, %c0_105], %390 {strides = array<i32>} : memref<2x8x32xf32, #tpu.memory_space<vmem>>, vector<1x8x32xf32>,
    %c48 = arith.constant 48 : index
    %c0_106 = arith.constant 0 : index
    %391 = vector.load %arg0[%c48, %c0_106] : memref<1520x64xf32, #tpu.memory_space<vmem>>, vector<256x32xf32>
    %392 = vector.extract_strided_slice %382 {offsets = [0, 0], sizes = [1, 32], strides = [1, 1]} : vector<32x32xf32> to vector<1x32xf32>
    %393 = vector.extract_strided_slice %382 {offsets = [16, 0], sizes = [1, 32], strides = [1, 1]} : vector<32x32xf32> to vector<1x32xf32>
    %394 = tpu.concatenate %392, %393 in 0 : vector<1x32xf32>, vector<1x32xf32> -> vector<2x32xf32>
    %395 = vector.extract_strided_slice %391 {offsets = [0, 0], sizes = [32, 32], strides = [1, 1]} : vector<256x32xf32> to vector<32x32xf32>
    %cst_107 = arith.constant dense<0.000000e+00> : vector<2x32xf32>
    %396 = tpu.matmul %394, %395, %cst_107 {dimension_numbers = #tpu.dot_dimension_numbers<[1], [0], [0], [1], [0, 0, 1, 1], [], []>} : vector<2x32xf32>, vector<32x32xf32>, vector<2x32xf32> -> vector<2x32xf32>
    %397 = vector.extract_strided_slice %382 {offsets = [1, 0], sizes = [1, 32], strides = [1, 1]} : vector<32x32xf32> to vector<1x32xf32>
    %398 = vector.extract_strided_slice %382 {offsets = [17, 0], sizes = [1, 32], strides = [1, 1]} : vector<32x32xf32> to vector<1x32xf32>
    %399 = tpu.concatenate %397, %398 in 0 : vector<1x32xf32>, vector<1x32xf32> -> vector<2x32xf32>
    %400 = vector.extract_strided_slice %391 {offsets = [32, 0], sizes = [32, 32], strides = [1, 1]} : vector<256x32xf32> to vector<32x32xf32>
    %cst_108 = arith.constant dense<0.000000e+00> : vector<2x32xf32>
    %401 = tpu.matmul %399, %400, %cst_108 {dimension_numbers = #tpu.dot_dimension_numbers<[1], [0], [0], [1], [0, 0, 1, 1], [], []>} : vector<2x32xf32>, vector<32x32xf32>, vector<2x32xf32> -> vector<2x32xf32>
    %402 = arith.addf %396, %401 : vector<2x32xf32>
    %403 = vector.extract_strided_slice %382 {offsets = [2, 0], sizes = [1, 32], strides = [1, 1]} : vector<32x32xf32> to vector<1x32xf32>
    %404 = vector.extract_strided_slice %382 {offsets = [18, 0], sizes = [1, 32], strides = [1, 1]} : vector<32x32xf32> to vector<1x32xf32>
    %405 = tpu.concatenate %403, %404 in 0 : vector<1x32xf32>, vector<1x32xf32> -> vector<2x32xf32>
    %406 = vector.extract_strided_slice %391 {offsets = [64, 0], sizes = [32, 32], strides = [1, 1]} : vector<256x32xf32> to vector<32x32xf32>
    %cst_109 = arith.constant dense<0.000000e+00> : vector<2x32xf32>
    %407 = tpu.matmul %405, %406, %cst_109 {dimension_numbers = #tpu.dot_dimension_numbers<[1], [0], [0], [1], [0, 0, 1, 1], [], []>} : vector<2x32xf32>, vector<32x32xf32>, vector<2x32xf32> -> vector<2x32xf32>
    %408 = arith.addf %402, %407 : vector<2x32xf32>
    %409 = vector.extract_strided_slice %382 {offsets = [3, 0], sizes = [1, 32], strides = [1, 1]} : vector<32x32xf32> to vector<1x32xf32>
    %410 = vector.extract_strided_slice %382 {offsets = [19, 0], sizes = [1, 32], strides = [1, 1]} : vector<32x32xf32> to vector<1x32xf32>
    %411 = tpu.concatenate %409, %410 in 0 : vector<1x32xf32>, vector<1x32xf32> -> vector<2x32xf32>
    %412 = vector.extract_strided_slice %391 {offsets = [96, 0], sizes = [32, 32], strides = [1, 1]} : vector<256x32xf32> to vector<32x32xf32>
    %cst_110 = arith.constant dense<0.000000e+00> : vector<2x32xf32>
    %413 = tpu.matmul %411, %412, %cst_110 {dimension_numbers = #tpu.dot_dimension_numbers<[1], [0], [0], [1], [0, 0, 1, 1], [], []>} : vector<2x32xf32>, vector<32x32xf32>, vector<2x32xf32> -> vector<2x32xf32>
    %414 = arith.addf %408, %413 : vector<2x32xf32>
    %415 = vector.extract_strided_slice %382 {offsets = [4, 0], sizes = [1, 32], strides = [1, 1]} : vector<32x32xf32> to vector<1x32xf32>
    %416 = vector.extract_strided_slice %382 {offsets = [20, 0], sizes = [1, 32], strides = [1, 1]} : vector<32x32xf32> to vector<1x32xf32>
    %417 = tpu.concatenate %415, %416 in 0 : vector<1x32xf32>, vector<1x32xf32> -> vector<2x32xf32>
    %418 = vector.extract_strided_slice %391 {offsets = [128, 0], sizes = [32, 32], strides = [1, 1]} : vector<256x32xf32> to vector<32x32xf32>
    %cst_111 = arith.constant dense<0.000000e+00> : vector<2x32xf32>
    %419 = tpu.matmul %417, %418, %cst_111 {dimension_numbers = #tpu.dot_dimension_numbers<[1], [0], [0], [1], [0, 0, 1, 1], [], []>} : vector<2x32xf32>, vector<32x32xf32>, vector<2x32xf32> -> vector<2x32xf32>
    %420 = arith.addf %414, %419 : vector<2x32xf32>
    %421 = vector.extract_strided_slice %382 {offsets = [5, 0], sizes = [1, 32], strides = [1, 1]} : vector<32x32xf32> to vector<1x32xf32>
    %422 = vector.extract_strided_slice %382 {offsets = [21, 0], sizes = [1, 32], strides = [1, 1]} : vector<32x32xf32> to vector<1x32xf32>
    %423 = tpu.concatenate %421, %422 in 0 : vector<1x32xf32>, vector<1x32xf32> -> vector<2x32xf32>
    %424 = vector.extract_strided_slice %391 {offsets = [160, 0], sizes = [32, 32], strides = [1, 1]} : vector<256x32xf32> to vector<32x32xf32>
    %cst_112 = arith.constant dense<0.000000e+00> : vector<2x32xf32>
    %425 = tpu.matmul %423, %424, %cst_112 {dimension_numbers = #tpu.dot_dimension_numbers<[1], [0], [0], [1], [0, 0, 1, 1], [], []>} : vector<2x32xf32>, vector<32x32xf32>, vector<2x32xf32> -> vector<2x32xf32>
    %426 = arith.addf %420, %425 : vector<2x32xf32>
    %427 = vector.extract_strided_slice %382 {offsets = [6, 0], sizes = [1, 32], strides = [1, 1]} : vector<32x32xf32> to vector<1x32xf32>
    %428 = vector.extract_strided_slice %382 {offsets = [22, 0], sizes = [1, 32], strides = [1, 1]} : vector<32x32xf32> to vector<1x32xf32>
    %429 = tpu.concatenate %427, %428 in 0 : vector<1x32xf32>, vector<1x32xf32> -> vector<2x32xf32>
    %430 = vector.extract_strided_slice %391 {offsets = [192, 0], sizes = [32, 32], strides = [1, 1]} : vector<256x32xf32> to vector<32x32xf32>
    %cst_113 = arith.constant dense<0.000000e+00> : vector<2x32xf32>
    %431 = tpu.matmul %429, %430, %cst_113 {dimension_numbers = #tpu.dot_dimension_numbers<[1], [0], [0], [1], [0, 0, 1, 1], [], []>} : vector<2x32xf32>, vector<32x32xf32>, vector<2x32xf32> -> vector<2x32xf32>
    %432 = arith.addf %426, %431 : vector<2x32xf32>
    %433 = vector.extract_strided_slice %382 {offsets = [7, 0], sizes = [1, 32], strides = [1, 1]} : vector<32x32xf32> to vector<1x32xf32>
    %434 = vector.extract_strided_slice %382 {offsets = [23, 0], sizes = [1, 32], strides = [1, 1]} : vector<32x32xf32> to vector<1x32xf32>
    %435 = tpu.concatenate %433, %434 in 0 : vector<1x32xf32>, vector<1x32xf32> -> vector<2x32xf32>
    %436 = vector.extract_strided_slice %391 {offsets = [224, 0], sizes = [32, 32], strides = [1, 1]} : vector<256x32xf32> to vector<32x32xf32>
    %cst_114 = arith.constant dense<0.000000e+00> : vector<2x32xf32>
    %437 = tpu.matmul %435, %436, %cst_114 {dimension_numbers = #tpu.dot_dimension_numbers<[1], [0], [0], [1], [0, 0, 1, 1], [], []>} : vector<2x32xf32>, vector<32x32xf32>, vector<2x32xf32> -> vector<2x32xf32>
    %438 = arith.addf %432, %437 : vector<2x32xf32>
    %439 = vector.extract_strided_slice %0 {offsets = [2, 0], sizes = [1, 32], strides = [1, 1]} : vector<56x64xf32> to vector<1x32xf32>
    %440 = vector.broadcast %439 : vector<1x32xf32> to vector<2x32xf32>
    %441 = arith.addf %438, %440 : vector<2x32xf32>
    %cst_115 = arith.constant 0.000000e+00 : f32
    %442 = vector.broadcast %cst_115 : f32 to vector<2x32xf32>
    %443 = arith.maximumf %441, %442 : vector<2x32xf32>
    %c304 = arith.constant 304 : index
    %c0_116 = arith.constant 0 : index
    %444 = vector.load %arg0[%c304, %c0_116] : memref<1520x64xf32, #tpu.memory_space<vmem>>, vector<32x32xf32>
    %cst_117 = arith.constant dense<0.000000e+00> : vector<2x32xf32>
    %445 = tpu.matmul %443, %444, %cst_117 {dimension_numbers = #tpu.dot_dimension_numbers<[1], [0], [0], [1], [0, 0, 1, 1], [], []>} : vector<2x32xf32>, vector<32x32xf32>, vector<2x32xf32> -> vector<2x32xf32>
    %446 = vector.extract_strided_slice %0 {offsets = [3, 0], sizes = [1, 32], strides = [1, 1]} : vector<56x64xf32> to vector<1x32xf32>
    %447 = vector.broadcast %446 : vector<1x32xf32> to vector<2x32xf32>
    %448 = arith.addf %445, %447 : vector<2x32xf32>
    %c0_118 = arith.constant 0 : index
    %c0_119 = arith.constant 0 : index
    %449 = vector.load %arg6[%c0_118, %c0_119] : memref<2x32xf32, #tpu.memory_space<vmem>>, vector<2x32xf32>
    tpu.vector_store %arg6[%c0_118, %c0_119], %448 {strides = array<i32>} : memref<2x32xf32, #tpu.memory_space<vmem>>, vector<2x32xf32>,
    %c32 = arith.constant 32 : index
    %c0_120 = arith.constant 0 : index
    %450 = vector.load %arg0[%c32, %c0_120] : memref<1520x64xf32, #tpu.memory_space<vmem>>, vector<16x32xf32>
    %451 = arith.addf %450, %56 : vector<16x32xf32>
    %c816 = arith.constant 816 : index
    %c0_121 = arith.constant 0 : index
    %452 = vector.load %arg0[%c816, %c0_121] : memref<1520x64xf32, #tpu.memory_space<vmem>>, vector<96x32xf32>
    %453 = vector.extract_strided_slice %0 {offsets = [25, 0], sizes = [1, 32], strides = [1, 1]} : vector<56x64xf32> to vector<1x32xf32>
    %454 = vector.extract_strided_slice %0 {offsets = [26, 0], sizes = [1, 32], strides = [1, 1]} : vector<56x64xf32> to vector<1x32xf32>
    %455 = vector.extract_strided_slice %0 {offsets = [27, 0], sizes = [1, 32], strides = [1, 1]} : vector<56x64xf32> to vector<1x32xf32>
    %c912 = arith.constant 912 : index
    %c0_122 = arith.constant 0 : index
    %456 = vector.load %arg0[%c912, %c0_122] : memref<1520x64xf32, #tpu.memory_space<vmem>>, vector<32x32xf32>
    %457 = vector.extract_strided_slice %0 {offsets = [28, 0], sizes = [1, 32], strides = [1, 1]} : vector<56x64xf32> to vector<1x32xf32>
    %458 = vector.extract_strided_slice %452 {offsets = [0, 0], sizes = [32, 32], strides = [1, 1]} : vector<96x32xf32> to vector<32x32xf32>
    %cst_123 = arith.constant dense<0.000000e+00> : vector<16x32xf32>
    %459 = tpu.matmul %451, %458, %cst_123 {dimension_numbers = #tpu.dot_dimension_numbers<[1], [0], [0], [1], [0, 0, 1, 1], [], []>} : vector<16x32xf32>, vector<32x32xf32>, vector<16x32xf32> -> vector<16x32xf32>
    %460 = vector.broadcast %453 : vector<1x32xf32> to vector<16x32xf32>
    %461 = arith.addf %459, %460 : vector<16x32xf32>
    %462 = vector.extract_strided_slice %452 {offsets = [32, 0], sizes = [32, 32], strides = [1, 1]} : vector<96x32xf32> to vector<32x32xf32>
    %cst_124 = arith.constant dense<0.000000e+00> : vector<16x32xf32>
    %463 = tpu.matmul %451, %462, %cst_124 {dimension_numbers = #tpu.dot_dimension_numbers<[1], [0], [0], [1], [0, 0, 1, 1], [], []>} : vector<16x32xf32>, vector<32x32xf32>, vector<16x32xf32> -> vector<16x32xf32>
    %464 = vector.broadcast %454 : vector<1x32xf32> to vector<16x32xf32>
    %465 = arith.addf %463, %464 : vector<16x32xf32>
    %466 = vector.extract_strided_slice %452 {offsets = [64, 0], sizes = [32, 32], strides = [1, 1]} : vector<96x32xf32> to vector<32x32xf32>
    %cst_125 = arith.constant dense<0.000000e+00> : vector<16x32xf32>
    %467 = tpu.matmul %451, %466, %cst_125 {dimension_numbers = #tpu.dot_dimension_numbers<[1], [0], [0], [1], [0, 0, 1, 1], [], []>} : vector<16x32xf32>, vector<32x32xf32>, vector<16x32xf32> -> vector<16x32xf32>
    %468 = vector.broadcast %455 : vector<1x32xf32> to vector<16x32xf32>
    %469 = arith.addf %467, %468 : vector<16x32xf32>
    %470 = vector.broadcast %8 : vector<1x32xf32> to vector<16x32xf32>
    %471 = arith.mulf %465, %470 : vector<16x32xf32>
    %cst_126 = arith.constant dense<0.000000e+00> : vector<16x16xf32>
    %472 = tpu.matmul %461, %471, %cst_126 {dimension_numbers = #tpu.dot_dimension_numbers<[1], [1], [0], [0], [0, 0, 1, 0], [], []>} : vector<16x32xf32>, vector<16x32xf32>, vector<16x16xf32> -> vector<16x16xf32>
    %cst_127 = arith.constant 0.353553385 : f32
    %473 = vector.broadcast %cst_127 : f32 to vector<16x16xf32>
    %474 = arith.mulf %472, %473 : vector<16x16xf32>
    %475 = arith.addf %474, %49 : vector<16x16xf32>
    %cst_128 = arith.constant dense<0xFF800000> : vector<16xf32>
    %476 = vector.multi_reduction <maximumf>, %475, %cst_128 [1] : vector<16x16xf32> to vector<16xf32>
    %477 = vector.shape_cast %476 : vector<16xf32> to vector<16x1xf32>
    %478 = vector.broadcast %477 : vector<16x1xf32> to vector<16x16xf32>
    %479 = arith.subf %475, %478 : vector<16x16xf32>
    %480 = math.exp %479 : vector<16x16xf32>
    %cst_129 = arith.constant dense<0.000000e+00> : vector<16xf32>
    %481 = vector.multi_reduction <add>, %480, %cst_129 [1] : vector<16x16xf32> to vector<16xf32>
    %482 = vector.shape_cast %481 : vector<16xf32> to vector<16x1xf32>
    %483 = tpu.reciprocal %482 {approx = true} : vector<16x1xf32> -> vector<16x1xf32>
    %484 = vector.broadcast %483 : vector<16x1xf32> to vector<16x16xf32>
    %485 = arith.mulf %480, %484 : vector<16x16xf32>
    %486 = vector.broadcast %8 : vector<1x32xf32> to vector<16x32xf32>
    %487 = arith.mulf %469, %486 : vector<16x32xf32>
    %cst_130 = arith.constant dense<0.000000e+00> : vector<16x32xf32>
    %488 = tpu.matmul %485, %487, %cst_130 {dimension_numbers = #tpu.dot_dimension_numbers<[1], [0], [0], [1], [0, 0, 1, 1], [], []>} : vector<16x16xf32>, vector<16x32xf32>, vector<16x32xf32> -> vector<16x32xf32>
    %489 = vector.broadcast %15 : vector<1x32xf32> to vector<16x32xf32>
    %490 = arith.mulf %465, %489 : vector<16x32xf32>
    %cst_131 = arith.constant dense<0.000000e+00> : vector<16x16xf32>
    %491 = tpu.matmul %461, %490, %cst_131 {dimension_numbers = #tpu.dot_dimension_numbers<[1], [1], [0], [0], [0, 0, 1, 0], [], []>} : vector<16x32xf32>, vector<16x32xf32>, vector<16x16xf32> -> vector<16x16xf32>
    %cst_132 = arith.constant 0.353553385 : f32
    %492 = vector.broadcast %cst_132 : f32 to vector<16x16xf32>
    %493 = arith.mulf %491, %492 : vector<16x16xf32>
    %494 = arith.addf %493, %49 : vector<16x16xf32>
    %cst_133 = arith.constant dense<0xFF800000> : vector<16xf32>
    %495 = vector.multi_reduction <maximumf>, %494, %cst_133 [1] : vector<16x16xf32> to vector<16xf32>
    %496 = vector.shape_cast %495 : vector<16xf32> to vector<16x1xf32>
    %497 = vector.broadcast %496 : vector<16x1xf32> to vector<16x16xf32>
    %498 = arith.subf %494, %497 : vector<16x16xf32>
    %499 = math.exp %498 : vector<16x16xf32>
    %cst_134 = arith.constant dense<0.000000e+00> : vector<16xf32>
    %500 = vector.multi_reduction <add>, %499, %cst_134 [1] : vector<16x16xf32> to vector<16xf32>
    %501 = vector.shape_cast %500 : vector<16xf32> to vector<16x1xf32>
    %502 = tpu.reciprocal %501 {approx = true} : vector<16x1xf32> -> vector<16x1xf32>
    %503 = vector.broadcast %502 : vector<16x1xf32> to vector<16x16xf32>
    %504 = arith.mulf %499, %503 : vector<16x16xf32>
    %505 = vector.broadcast %15 : vector<1x32xf32> to vector<16x32xf32>
    %506 = arith.mulf %469, %505 : vector<16x32xf32>
    %cst_135 = arith.constant dense<0.000000e+00> : vector<16x32xf32>
    %507 = tpu.matmul %504, %506, %cst_135 {dimension_numbers = #tpu.dot_dimension_numbers<[1], [0], [0], [1], [0, 0, 1, 1], [], []>} : vector<16x16xf32>, vector<16x32xf32>, vector<16x32xf32> -> vector<16x32xf32>
    %508 = arith.addf %488, %507 : vector<16x32xf32>
    %509 = vector.broadcast %22 : vector<1x32xf32> to vector<16x32xf32>
    %510 = arith.mulf %465, %509 : vector<16x32xf32>
    %cst_136 = arith.constant dense<0.000000e+00> : vector<16x16xf32>
    %511 = tpu.matmul %461, %510, %cst_136 {dimension_numbers = #tpu.dot_dimension_numbers<[1], [1], [0], [0], [0, 0, 1, 0], [], []>} : vector<16x32xf32>, vector<16x32xf32>, vector<16x16xf32> -> vector<16x16xf32>
    %cst_137 = arith.constant 0.353553385 : f32
    %512 = vector.broadcast %cst_137 : f32 to vector<16x16xf32>
    %513 = arith.mulf %511, %512 : vector<16x16xf32>
    %514 = arith.addf %513, %49 : vector<16x16xf32>
    %cst_138 = arith.constant dense<0xFF800000> : vector<16xf32>
    %515 = vector.multi_reduction <maximumf>, %514, %cst_138 [1] : vector<16x16xf32> to vector<16xf32>
    %516 = vector.shape_cast %515 : vector<16xf32> to vector<16x1xf32>
    %517 = vector.broadcast %516 : vector<16x1xf32> to vector<16x16xf32>
    %518 = arith.subf %514, %517 : vector<16x16xf32>
    %519 = math.exp %518 : vector<16x16xf32>
    %cst_139 = arith.constant dense<0.000000e+00> : vector<16xf32>
    %520 = vector.multi_reduction <add>, %519, %cst_139 [1] : vector<16x16xf32> to vector<16xf32>
    %521 = vector.shape_cast %520 : vector<16xf32> to vector<16x1xf32>
    %522 = tpu.reciprocal %521 {approx = true} : vector<16x1xf32> -> vector<16x1xf32>
    %523 = vector.broadcast %522 : vector<16x1xf32> to vector<16x16xf32>
    %524 = arith.mulf %519, %523 : vector<16x16xf32>
    %525 = vector.broadcast %22 : vector<1x32xf32> to vector<16x32xf32>
    %526 = arith.mulf %469, %525 : vector<16x32xf32>
    %cst_140 = arith.constant dense<0.000000e+00> : vector<16x32xf32>
    %527 = tpu.matmul %524, %526, %cst_140 {dimension_numbers = #tpu.dot_dimension_numbers<[1], [0], [0], [1], [0, 0, 1, 1], [], []>} : vector<16x16xf32>, vector<16x32xf32>, vector<16x32xf32> -> vector<16x32xf32>
    %528 = arith.addf %508, %527 : vector<16x32xf32>
    %529 = vector.broadcast %29 : vector<1x32xf32> to vector<16x32xf32>
    %530 = arith.mulf %465, %529 : vector<16x32xf32>
    %cst_141 = arith.constant dense<0.000000e+00> : vector<16x16xf32>
    %531 = tpu.matmul %461, %530, %cst_141 {dimension_numbers = #tpu.dot_dimension_numbers<[1], [1], [0], [0], [0, 0, 1, 0], [], []>} : vector<16x32xf32>, vector<16x32xf32>, vector<16x16xf32> -> vector<16x16xf32>
    %cst_142 = arith.constant 0.353553385 : f32
    %532 = vector.broadcast %cst_142 : f32 to vector<16x16xf32>
    %533 = arith.mulf %531, %532 : vector<16x16xf32>
    %534 = arith.addf %533, %49 : vector<16x16xf32>
    %cst_143 = arith.constant dense<0xFF800000> : vector<16xf32>
    %535 = vector.multi_reduction <maximumf>, %534, %cst_143 [1] : vector<16x16xf32> to vector<16xf32>
    %536 = vector.shape_cast %535 : vector<16xf32> to vector<16x1xf32>
    %537 = vector.broadcast %536 : vector<16x1xf32> to vector<16x16xf32>
    %538 = arith.subf %534, %537 : vector<16x16xf32>
    %539 = math.exp %538 : vector<16x16xf32>
    %cst_144 = arith.constant dense<0.000000e+00> : vector<16xf32>
    %540 = vector.multi_reduction <add>, %539, %cst_144 [1] : vector<16x16xf32> to vector<16xf32>
    %541 = vector.shape_cast %540 : vector<16xf32> to vector<16x1xf32>
    %542 = tpu.reciprocal %541 {approx = true} : vector<16x1xf32> -> vector<16x1xf32>
    %543 = vector.broadcast %542 : vector<16x1xf32> to vector<16x16xf32>
    %544 = arith.mulf %539, %543 : vector<16x16xf32>
    %545 = vector.broadcast %29 : vector<1x32xf32> to vector<16x32xf32>
    %546 = arith.mulf %469, %545 : vector<16x32xf32>
    %cst_145 = arith.constant dense<0.000000e+00> : vector<16x32xf32>
    %547 = tpu.matmul %544, %546, %cst_145 {dimension_numbers = #tpu.dot_dimension_numbers<[1], [0], [0], [1], [0, 0, 1, 1], [], []>} : vector<16x16xf32>, vector<16x32xf32>, vector<16x32xf32> -> vector<16x32xf32>
    %548 = arith.addf %528, %547 : vector<16x32xf32>
    %cst_146 = arith.constant dense<0.000000e+00> : vector<16x32xf32>
    %549 = tpu.matmul %548, %456, %cst_146 {dimension_numbers = #tpu.dot_dimension_numbers<[1], [0], [0], [1], [0, 0, 1, 1], [], []>} : vector<16x32xf32>, vector<32x32xf32>, vector<16x32xf32> -> vector<16x32xf32>
    %550 = vector.broadcast %457 : vector<1x32xf32> to vector<16x32xf32>
    %551 = arith.addf %549, %550 : vector<16x32xf32>
    %552 = arith.addf %451, %551 : vector<16x32xf32>
    %553 = vector.extract_strided_slice %0 {offsets = [33, 0], sizes = [1, 32], strides = [1, 1]} : vector<56x64xf32> to vector<1x32xf32>
    %554 = vector.extract_strided_slice %0 {offsets = [34, 0], sizes = [1, 32], strides = [1, 1]} : vector<56x64xf32> to vector<1x32xf32>
    %cst_147 = arith.constant dense<0.000000e+00> : vector<16xf32>
    %555 = vector.multi_reduction <add>, %552, %cst_147 [1] : vector<16x32xf32> to vector<16xf32>
    %556 = vector.shape_cast %555 : vector<16xf32> to vector<16x1xf32>
    %cst_148 = arith.constant 3.200000e+01 : f32
    %557 = vector.broadcast %cst_148 : f32 to vector<16x1xf32>
    %558 = arith.divf %556, %557 : vector<16x1xf32>
    %559 = vector.broadcast %558 : vector<16x1xf32> to vector<16x32xf32>
    %560 = arith.subf %552, %559 : vector<16x32xf32>
    %561 = arith.mulf %560, %560 : vector<16x32xf32>
    %cst_149 = arith.constant dense<0.000000e+00> : vector<16xf32>
    %562 = vector.multi_reduction <add>, %561, %cst_149 [1] : vector<16x32xf32> to vector<16xf32>
    %563 = vector.shape_cast %562 : vector<16xf32> to vector<16x1xf32>
    %cst_150 = arith.constant 3.200000e+01 : f32
    %564 = vector.broadcast %cst_150 : f32 to vector<16x1xf32>
    %565 = arith.divf %563, %564 : vector<16x1xf32>
    %cst_151 = arith.constant 9.99999974E-6 : f32
    %566 = vector.broadcast %cst_151 : f32 to vector<16x1xf32>
    %567 = arith.addf %565, %566 : vector<16x1xf32>
    %568 = math.rsqrt %567 : vector<16x1xf32>
    %569 = vector.broadcast %568 : vector<16x1xf32> to vector<16x32xf32>
    %570 = arith.mulf %560, %569 : vector<16x32xf32>
    %571 = vector.broadcast %553 : vector<1x32xf32> to vector<16x32xf32>
    %572 = arith.mulf %570, %571 : vector<16x32xf32>
    %573 = vector.broadcast %554 : vector<1x32xf32> to vector<16x32xf32>
    %574 = arith.addf %572, %573 : vector<16x32xf32>
    %c944 = arith.constant 944 : index
    %c0_152 = arith.constant 0 : index
    %575 = vector.load %arg0[%c944, %c0_152] : memref<1520x64xf32, #tpu.memory_space<vmem>>, vector<96x32xf32>
    %576 = vector.extract_strided_slice %575 {offsets = [64, 0], sizes = [32, 32], strides = [1, 1]} : vector<96x32xf32> to vector<32x32xf32>
    %cst_153 = arith.constant dense<0.000000e+00> : vector<2x32xf32>
    %577 = tpu.matmul %448, %576, %cst_153 {dimension_numbers = #tpu.dot_dimension_numbers<[1], [0], [0], [1], [0, 0, 1, 1], [], []>} : vector<2x32xf32>, vector<32x32xf32>, vector<2x32xf32> -> vector<2x32xf32>
    %578 = vector.extract_strided_slice %0 {offsets = [29, 0], sizes = [1, 32], strides = [1, 1]} : vector<56x64xf32> to vector<1x32xf32>
    %579 = vector.broadcast %578 : vector<1x32xf32> to vector<2x32xf32>
    %580 = arith.addf %577, %579 : vector<2x32xf32>
    %c1040 = arith.constant 1040 : index
    %c0_154 = arith.constant 0 : index
    %581 = vector.load %arg0[%c1040, %c0_154] : memref<1520x64xf32, #tpu.memory_space<vmem>>, vector<32x32xf32>
    %cst_155 = arith.constant dense<0.000000e+00> : vector<2x32xf32>
    %582 = tpu.matmul %580, %581, %cst_155 {dimension_numbers = #tpu.dot_dimension_numbers<[1], [0], [0], [1], [0, 0, 1, 1], [], []>} : vector<2x32xf32>, vector<32x32xf32>, vector<2x32xf32> -> vector<2x32xf32>
    %583 = vector.extract_strided_slice %0 {offsets = [30, 0], sizes = [1, 32], strides = [1, 1]} : vector<56x64xf32> to vector<1x32xf32>
    %584 = vector.broadcast %583 : vector<1x32xf32> to vector<2x32xf32>
    %585 = arith.addf %582, %584 : vector<2x32xf32>
    %586 = vector.extract_strided_slice %585 {offsets = [0, 0], sizes = [1, 32], strides = [1, 1]} : vector<2x32xf32> to vector<1x32xf32>
    %587 = vector.shape_cast %586 : vector<1x32xf32> to vector<1x32xf32>
    %588 = vector.broadcast %587 : vector<1x32xf32> to vector<8x32xf32>
    %589 = vector.extract_strided_slice %585 {offsets = [1, 0], sizes = [1, 32], strides = [1, 1]} : vector<2x32xf32> to vector<1x32xf32>
    %590 = vector.shape_cast %589 : vector<1x32xf32> to vector<1x32xf32>
    %591 = vector.broadcast %590 : vector<1x32xf32> to vector<8x32xf32>
    %592 = tpu.concatenate %588, %591 in 0 : vector<8x32xf32>, vector<8x32xf32> -> vector<16x32xf32>
    %593 = arith.addf %574, %592 : vector<16x32xf32>
    %594 = vector.extract_strided_slice %0 {offsets = [35, 0], sizes = [1, 32], strides = [1, 1]} : vector<56x64xf32> to vector<1x32xf32>
    %595 = vector.extract_strided_slice %0 {offsets = [36, 0], sizes = [1, 32], strides = [1, 1]} : vector<56x64xf32> to vector<1x32xf32>
    %cst_156 = arith.constant dense<0.000000e+00> : vector<16xf32>
    %596 = vector.multi_reduction <add>, %593, %cst_156 [1] : vector<16x32xf32> to vector<16xf32>
    %597 = vector.shape_cast %596 : vector<16xf32> to vector<16x1xf32>
    %cst_157 = arith.constant 3.200000e+01 : f32
    %598 = vector.broadcast %cst_157 : f32 to vector<16x1xf32>
    %599 = arith.divf %597, %598 : vector<16x1xf32>
    %600 = vector.broadcast %599 : vector<16x1xf32> to vector<16x32xf32>
    %601 = arith.subf %593, %600 : vector<16x32xf32>
    %602 = arith.mulf %601, %601 : vector<16x32xf32>
    %cst_158 = arith.constant dense<0.000000e+00> : vector<16xf32>
    %603 = vector.multi_reduction <add>, %602, %cst_158 [1] : vector<16x32xf32> to vector<16xf32>
    %604 = vector.shape_cast %603 : vector<16xf32> to vector<16x1xf32>
    %cst_159 = arith.constant 3.200000e+01 : f32
    %605 = vector.broadcast %cst_159 : f32 to vector<16x1xf32>
    %606 = arith.divf %604, %605 : vector<16x1xf32>
    %cst_160 = arith.constant 9.99999974E-6 : f32
    %607 = vector.broadcast %cst_160 : f32 to vector<16x1xf32>
    %608 = arith.addf %606, %607 : vector<16x1xf32>
    %609 = math.rsqrt %608 : vector<16x1xf32>
    %610 = vector.broadcast %609 : vector<16x1xf32> to vector<16x32xf32>
    %611 = arith.mulf %601, %610 : vector<16x32xf32>
    %612 = vector.broadcast %594 : vector<1x32xf32> to vector<16x32xf32>
    %613 = arith.mulf %611, %612 : vector<16x32xf32>
    %614 = vector.broadcast %595 : vector<1x32xf32> to vector<16x32xf32>
    %615 = arith.addf %613, %614 : vector<16x32xf32>
    %c1072 = arith.constant 1072 : index
    %c0_161 = arith.constant 0 : index
    %616 = vector.load %arg0[%c1072, %c0_161] : memref<1520x64xf32, #tpu.memory_space<vmem>>, vector<32x64xf32>
    %cst_162 = arith.constant dense<0.000000e+00> : vector<16x64xf32>
    %617 = tpu.matmul %615, %616, %cst_162 {dimension_numbers = #tpu.dot_dimension_numbers<[1], [0], [0], [1], [0, 0, 1, 1], [], []>} : vector<16x32xf32>, vector<32x64xf32>, vector<16x64xf32> -> vector<16x64xf32>
    %618 = vector.extract_strided_slice %0 {offsets = [31, 0], sizes = [1, 64], strides = [1, 1]} : vector<56x64xf32> to vector<1x64xf32>
    %619 = vector.broadcast %618 : vector<1x64xf32> to vector<16x64xf32>
    %620 = arith.addf %617, %619 : vector<16x64xf32>
    %cst_163 = arith.constant 0.000000e+00 : f32
    %621 = vector.broadcast %cst_163 : f32 to vector<16x64xf32>
    %622 = arith.maximumf %620, %621 : vector<16x64xf32>
    %c1104 = arith.constant 1104 : index
    %c0_164 = arith.constant 0 : index
    %623 = vector.load %arg0[%c1104, %c0_164] : memref<1520x64xf32, #tpu.memory_space<vmem>>, vector<64x32xf32>
    %cst_165 = arith.constant dense<0.000000e+00> : vector<16x32xf32>
    %624 = tpu.matmul %622, %623, %cst_165 {dimension_numbers = #tpu.dot_dimension_numbers<[1], [0], [0], [1], [0, 0, 1, 1], [], []>} : vector<16x64xf32>, vector<64x32xf32>, vector<16x32xf32> -> vector<16x32xf32>
    %625 = vector.extract_strided_slice %0 {offsets = [32, 0], sizes = [1, 32], strides = [1, 1]} : vector<56x64xf32> to vector<1x32xf32>
    %626 = vector.broadcast %625 : vector<1x32xf32> to vector<16x32xf32>
    %627 = arith.addf %624, %626 : vector<16x32xf32>
    %628 = arith.addf %615, %627 : vector<16x32xf32>
    %629 = vector.extract_strided_slice %0 {offsets = [37, 0], sizes = [1, 32], strides = [1, 1]} : vector<56x64xf32> to vector<1x32xf32>
    %630 = vector.extract_strided_slice %0 {offsets = [38, 0], sizes = [1, 32], strides = [1, 1]} : vector<56x64xf32> to vector<1x32xf32>
    %cst_166 = arith.constant dense<0.000000e+00> : vector<16xf32>
    %631 = vector.multi_reduction <add>, %628, %cst_166 [1] : vector<16x32xf32> to vector<16xf32>
    %632 = vector.shape_cast %631 : vector<16xf32> to vector<16x1xf32>
    %cst_167 = arith.constant 3.200000e+01 : f32
    %633 = vector.broadcast %cst_167 : f32 to vector<16x1xf32>
    %634 = arith.divf %632, %633 : vector<16x1xf32>
    %635 = vector.broadcast %634 : vector<16x1xf32> to vector<16x32xf32>
    %636 = arith.subf %628, %635 : vector<16x32xf32>
    %637 = arith.mulf %636, %636 : vector<16x32xf32>
    %cst_168 = arith.constant dense<0.000000e+00> : vector<16xf32>
    %638 = vector.multi_reduction <add>, %637, %cst_168 [1] : vector<16x32xf32> to vector<16xf32>
    %639 = vector.shape_cast %638 : vector<16xf32> to vector<16x1xf32>
    %cst_169 = arith.constant 3.200000e+01 : f32
    %640 = vector.broadcast %cst_169 : f32 to vector<16x1xf32>
    %641 = arith.divf %639, %640 : vector<16x1xf32>
    %cst_170 = arith.constant 9.99999974E-6 : f32
    %642 = vector.broadcast %cst_170 : f32 to vector<16x1xf32>
    %643 = arith.addf %641, %642 : vector<16x1xf32>
    %644 = math.rsqrt %643 : vector<16x1xf32>
    %645 = vector.broadcast %644 : vector<16x1xf32> to vector<16x32xf32>
    %646 = arith.mulf %636, %645 : vector<16x32xf32>
    %647 = vector.broadcast %629 : vector<1x32xf32> to vector<16x32xf32>
    %648 = arith.mulf %646, %647 : vector<16x32xf32>
    %649 = vector.broadcast %630 : vector<1x32xf32> to vector<16x32xf32>
    %650 = arith.addf %648, %649 : vector<16x32xf32>
    %c1168 = arith.constant 1168 : index
    %c0_171 = arith.constant 0 : index
    %651 = vector.load %arg0[%c1168, %c0_171] : memref<1520x64xf32, #tpu.memory_space<vmem>>, vector<96x32xf32>
    %652 = vector.extract_strided_slice %0 {offsets = [39, 0], sizes = [1, 32], strides = [1, 1]} : vector<56x64xf32> to vector<1x32xf32>
    %653 = vector.extract_strided_slice %0 {offsets = [40, 0], sizes = [1, 32], strides = [1, 1]} : vector<56x64xf32> to vector<1x32xf32>
    %654 = vector.extract_strided_slice %0 {offsets = [41, 0], sizes = [1, 32], strides = [1, 1]} : vector<56x64xf32> to vector<1x32xf32>
    %c1264 = arith.constant 1264 : index
    %c0_172 = arith.constant 0 : index
    %655 = vector.load %arg0[%c1264, %c0_172] : memref<1520x64xf32, #tpu.memory_space<vmem>>, vector<32x32xf32>
    %656 = vector.extract_strided_slice %0 {offsets = [42, 0], sizes = [1, 32], strides = [1, 1]} : vector<56x64xf32> to vector<1x32xf32>
    %657 = vector.extract_strided_slice %651 {offsets = [0, 0], sizes = [32, 32], strides = [1, 1]} : vector<96x32xf32> to vector<32x32xf32>
    %cst_173 = arith.constant dense<0.000000e+00> : vector<16x32xf32>
    %658 = tpu.matmul %650, %657, %cst_173 {dimension_numbers = #tpu.dot_dimension_numbers<[1], [0], [0], [1], [0, 0, 1, 1], [], []>} : vector<16x32xf32>, vector<32x32xf32>, vector<16x32xf32> -> vector<16x32xf32>
    %659 = vector.broadcast %652 : vector<1x32xf32> to vector<16x32xf32>
    %660 = arith.addf %658, %659 : vector<16x32xf32>
    %661 = vector.extract_strided_slice %651 {offsets = [32, 0], sizes = [32, 32], strides = [1, 1]} : vector<96x32xf32> to vector<32x32xf32>
    %cst_174 = arith.constant dense<0.000000e+00> : vector<16x32xf32>
    %662 = tpu.matmul %650, %661, %cst_174 {dimension_numbers = #tpu.dot_dimension_numbers<[1], [0], [0], [1], [0, 0, 1, 1], [], []>} : vector<16x32xf32>, vector<32x32xf32>, vector<16x32xf32> -> vector<16x32xf32>
    %663 = vector.broadcast %653 : vector<1x32xf32> to vector<16x32xf32>
    %664 = arith.addf %662, %663 : vector<16x32xf32>
    %665 = vector.extract_strided_slice %651 {offsets = [64, 0], sizes = [32, 32], strides = [1, 1]} : vector<96x32xf32> to vector<32x32xf32>
    %cst_175 = arith.constant dense<0.000000e+00> : vector<16x32xf32>
    %666 = tpu.matmul %650, %665, %cst_175 {dimension_numbers = #tpu.dot_dimension_numbers<[1], [0], [0], [1], [0, 0, 1, 1], [], []>} : vector<16x32xf32>, vector<32x32xf32>, vector<16x32xf32> -> vector<16x32xf32>
    %667 = vector.broadcast %654 : vector<1x32xf32> to vector<16x32xf32>
    %668 = arith.addf %666, %667 : vector<16x32xf32>
    %669 = vector.broadcast %8 : vector<1x32xf32> to vector<16x32xf32>
    %670 = arith.mulf %664, %669 : vector<16x32xf32>
    %cst_176 = arith.constant dense<0.000000e+00> : vector<16x16xf32>
    %671 = tpu.matmul %660, %670, %cst_176 {dimension_numbers = #tpu.dot_dimension_numbers<[1], [1], [0], [0], [0, 0, 1, 0], [], []>} : vector<16x32xf32>, vector<16x32xf32>, vector<16x16xf32> -> vector<16x16xf32>
    %cst_177 = arith.constant 0.353553385 : f32
    %672 = vector.broadcast %cst_177 : f32 to vector<16x16xf32>
    %673 = arith.mulf %671, %672 : vector<16x16xf32>
    %674 = arith.addf %673, %49 : vector<16x16xf32>
    %cst_178 = arith.constant dense<0xFF800000> : vector<16xf32>
    %675 = vector.multi_reduction <maximumf>, %674, %cst_178 [1] : vector<16x16xf32> to vector<16xf32>
    %676 = vector.shape_cast %675 : vector<16xf32> to vector<16x1xf32>
    %677 = vector.broadcast %676 : vector<16x1xf32> to vector<16x16xf32>
    %678 = arith.subf %674, %677 : vector<16x16xf32>
    %679 = math.exp %678 : vector<16x16xf32>
    %cst_179 = arith.constant dense<0.000000e+00> : vector<16xf32>
    %680 = vector.multi_reduction <add>, %679, %cst_179 [1] : vector<16x16xf32> to vector<16xf32>
    %681 = vector.shape_cast %680 : vector<16xf32> to vector<16x1xf32>
    %682 = tpu.reciprocal %681 {approx = true} : vector<16x1xf32> -> vector<16x1xf32>
    %683 = vector.broadcast %682 : vector<16x1xf32> to vector<16x16xf32>
    %684 = arith.mulf %679, %683 : vector<16x16xf32>
    %685 = vector.broadcast %8 : vector<1x32xf32> to vector<16x32xf32>
    %686 = arith.mulf %668, %685 : vector<16x32xf32>
    %cst_180 = arith.constant dense<0.000000e+00> : vector<16x32xf32>
    %687 = tpu.matmul %684, %686, %cst_180 {dimension_numbers = #tpu.dot_dimension_numbers<[1], [0], [0], [1], [0, 0, 1, 1], [], []>} : vector<16x16xf32>, vector<16x32xf32>, vector<16x32xf32> -> vector<16x32xf32>
    %688 = vector.broadcast %15 : vector<1x32xf32> to vector<16x32xf32>
    %689 = arith.mulf %664, %688 : vector<16x32xf32>
    %cst_181 = arith.constant dense<0.000000e+00> : vector<16x16xf32>
    %690 = tpu.matmul %660, %689, %cst_181 {dimension_numbers = #tpu.dot_dimension_numbers<[1], [1], [0], [0], [0, 0, 1, 0], [], []>} : vector<16x32xf32>, vector<16x32xf32>, vector<16x16xf32> -> vector<16x16xf32>
    %cst_182 = arith.constant 0.353553385 : f32
    %691 = vector.broadcast %cst_182 : f32 to vector<16x16xf32>
    %692 = arith.mulf %690, %691 : vector<16x16xf32>
    %693 = arith.addf %692, %49 : vector<16x16xf32>
    %cst_183 = arith.constant dense<0xFF800000> : vector<16xf32>
    %694 = vector.multi_reduction <maximumf>, %693, %cst_183 [1] : vector<16x16xf32> to vector<16xf32>
    %695 = vector.shape_cast %694 : vector<16xf32> to vector<16x1xf32>
    %696 = vector.broadcast %695 : vector<16x1xf32> to vector<16x16xf32>
    %697 = arith.subf %693, %696 : vector<16x16xf32>
    %698 = math.exp %697 : vector<16x16xf32>
    %cst_184 = arith.constant dense<0.000000e+00> : vector<16xf32>
    %699 = vector.multi_reduction <add>, %698, %cst_184 [1] : vector<16x16xf32> to vector<16xf32>
    %700 = vector.shape_cast %699 : vector<16xf32> to vector<16x1xf32>
    %701 = tpu.reciprocal %700 {approx = true} : vector<16x1xf32> -> vector<16x1xf32>
    %702 = vector.broadcast %701 : vector<16x1xf32> to vector<16x16xf32>
    %703 = arith.mulf %698, %702 : vector<16x16xf32>
    %704 = vector.broadcast %15 : vector<1x32xf32> to vector<16x32xf32>
    %705 = arith.mulf %668, %704 : vector<16x32xf32>
    %cst_185 = arith.constant dense<0.000000e+00> : vector<16x32xf32>
    %706 = tpu.matmul %703, %705, %cst_185 {dimension_numbers = #tpu.dot_dimension_numbers<[1], [0], [0], [1], [0, 0, 1, 1], [], []>} : vector<16x16xf32>, vector<16x32xf32>, vector<16x32xf32> -> vector<16x32xf32>
    %707 = arith.addf %687, %706 : vector<16x32xf32>
    %708 = vector.broadcast %22 : vector<1x32xf32> to vector<16x32xf32>
    %709 = arith.mulf %664, %708 : vector<16x32xf32>
    %cst_186 = arith.constant dense<0.000000e+00> : vector<16x16xf32>
    %710 = tpu.matmul %660, %709, %cst_186 {dimension_numbers = #tpu.dot_dimension_numbers<[1], [1], [0], [0], [0, 0, 1, 0], [], []>} : vector<16x32xf32>, vector<16x32xf32>, vector<16x16xf32> -> vector<16x16xf32>
    %cst_187 = arith.constant 0.353553385 : f32
    %711 = vector.broadcast %cst_187 : f32 to vector<16x16xf32>
    %712 = arith.mulf %710, %711 : vector<16x16xf32>
    %713 = arith.addf %712, %49 : vector<16x16xf32>
    %cst_188 = arith.constant dense<0xFF800000> : vector<16xf32>
    %714 = vector.multi_reduction <maximumf>, %713, %cst_188 [1] : vector<16x16xf32> to vector<16xf32>
    %715 = vector.shape_cast %714 : vector<16xf32> to vector<16x1xf32>
    %716 = vector.broadcast %715 : vector<16x1xf32> to vector<16x16xf32>
    %717 = arith.subf %713, %716 : vector<16x16xf32>
    %718 = math.exp %717 : vector<16x16xf32>
    %cst_189 = arith.constant dense<0.000000e+00> : vector<16xf32>
    %719 = vector.multi_reduction <add>, %718, %cst_189 [1] : vector<16x16xf32> to vector<16xf32>
    %720 = vector.shape_cast %719 : vector<16xf32> to vector<16x1xf32>
    %721 = tpu.reciprocal %720 {approx = true} : vector<16x1xf32> -> vector<16x1xf32>
    %722 = vector.broadcast %721 : vector<16x1xf32> to vector<16x16xf32>
    %723 = arith.mulf %718, %722 : vector<16x16xf32>
    %724 = vector.broadcast %22 : vector<1x32xf32> to vector<16x32xf32>
    %725 = arith.mulf %668, %724 : vector<16x32xf32>
    %cst_190 = arith.constant dense<0.000000e+00> : vector<16x32xf32>
    %726 = tpu.matmul %723, %725, %cst_190 {dimension_numbers = #tpu.dot_dimension_numbers<[1], [0], [0], [1], [0, 0, 1, 1], [], []>} : vector<16x16xf32>, vector<16x32xf32>, vector<16x32xf32> -> vector<16x32xf32>
    %727 = arith.addf %707, %726 : vector<16x32xf32>
    %728 = vector.broadcast %29 : vector<1x32xf32> to vector<16x32xf32>
    %729 = arith.mulf %664, %728 : vector<16x32xf32>
    %cst_191 = arith.constant dense<0.000000e+00> : vector<16x16xf32>
    %730 = tpu.matmul %660, %729, %cst_191 {dimension_numbers = #tpu.dot_dimension_numbers<[1], [1], [0], [0], [0, 0, 1, 0], [], []>} : vector<16x32xf32>, vector<16x32xf32>, vector<16x16xf32> -> vector<16x16xf32>
    %cst_192 = arith.constant 0.353553385 : f32
    %731 = vector.broadcast %cst_192 : f32 to vector<16x16xf32>
    %732 = arith.mulf %730, %731 : vector<16x16xf32>
    %733 = arith.addf %732, %49 : vector<16x16xf32>
    %cst_193 = arith.constant dense<0xFF800000> : vector<16xf32>
    %734 = vector.multi_reduction <maximumf>, %733, %cst_193 [1] : vector<16x16xf32> to vector<16xf32>
    %735 = vector.shape_cast %734 : vector<16xf32> to vector<16x1xf32>
    %736 = vector.broadcast %735 : vector<16x1xf32> to vector<16x16xf32>
    %737 = arith.subf %733, %736 : vector<16x16xf32>
    %738 = math.exp %737 : vector<16x16xf32>
    %cst_194 = arith.constant dense<0.000000e+00> : vector<16xf32>
    %739 = vector.multi_reduction <add>, %738, %cst_194 [1] : vector<16x16xf32> to vector<16xf32>
    %740 = vector.shape_cast %739 : vector<16xf32> to vector<16x1xf32>
    %741 = tpu.reciprocal %740 {approx = true} : vector<16x1xf32> -> vector<16x1xf32>
    %742 = vector.broadcast %741 : vector<16x1xf32> to vector<16x16xf32>
    %743 = arith.mulf %738, %742 : vector<16x16xf32>
    %744 = vector.broadcast %29 : vector<1x32xf32> to vector<16x32xf32>
    %745 = arith.mulf %668, %744 : vector<16x32xf32>
    %cst_195 = arith.constant dense<0.000000e+00> : vector<16x32xf32>
    %746 = tpu.matmul %743, %745, %cst_195 {dimension_numbers = #tpu.dot_dimension_numbers<[1], [0], [0], [1], [0, 0, 1, 1], [], []>} : vector<16x16xf32>, vector<16x32xf32>, vector<16x32xf32> -> vector<16x32xf32>
    %747 = arith.addf %727, %746 : vector<16x32xf32>
    %cst_196 = arith.constant dense<0.000000e+00> : vector<16x32xf32>
    %748 = tpu.matmul %747, %655, %cst_196 {dimension_numbers = #tpu.dot_dimension_numbers<[1], [0], [0], [1], [0, 0, 1, 1], [], []>} : vector<16x32xf32>, vector<32x32xf32>, vector<16x32xf32> -> vector<16x32xf32>
    %749 = vector.broadcast %656 : vector<1x32xf32> to vector<16x32xf32>
    %750 = arith.addf %748, %749 : vector<16x32xf32>
    %751 = arith.addf %650, %750 : vector<16x32xf32>
    %752 = vector.extract_strided_slice %0 {offsets = [47, 0], sizes = [1, 32], strides = [1, 1]} : vector<56x64xf32> to vector<1x32xf32>
    %753 = vector.extract_strided_slice %0 {offsets = [48, 0], sizes = [1, 32], strides = [1, 1]} : vector<56x64xf32> to vector<1x32xf32>
    %cst_197 = arith.constant dense<0.000000e+00> : vector<16xf32>
    %754 = vector.multi_reduction <add>, %751, %cst_197 [1] : vector<16x32xf32> to vector<16xf32>
    %755 = vector.shape_cast %754 : vector<16xf32> to vector<16x1xf32>
    %cst_198 = arith.constant 3.200000e+01 : f32
    %756 = vector.broadcast %cst_198 : f32 to vector<16x1xf32>
    %757 = arith.divf %755, %756 : vector<16x1xf32>
    %758 = vector.broadcast %757 : vector<16x1xf32> to vector<16x32xf32>
    %759 = arith.subf %751, %758 : vector<16x32xf32>
    %760 = arith.mulf %759, %759 : vector<16x32xf32>
    %cst_199 = arith.constant dense<0.000000e+00> : vector<16xf32>
    %761 = vector.multi_reduction <add>, %760, %cst_199 [1] : vector<16x32xf32> to vector<16xf32>
    %762 = vector.shape_cast %761 : vector<16xf32> to vector<16x1xf32>
    %cst_200 = arith.constant 3.200000e+01 : f32
    %763 = vector.broadcast %cst_200 : f32 to vector<16x1xf32>
    %764 = arith.divf %762, %763 : vector<16x1xf32>
    %cst_201 = arith.constant 9.99999974E-6 : f32
    %765 = vector.broadcast %cst_201 : f32 to vector<16x1xf32>
    %766 = arith.addf %764, %765 : vector<16x1xf32>
    %767 = math.rsqrt %766 : vector<16x1xf32>
    %768 = vector.broadcast %767 : vector<16x1xf32> to vector<16x32xf32>
    %769 = arith.mulf %759, %768 : vector<16x32xf32>
    %770 = vector.broadcast %752 : vector<1x32xf32> to vector<16x32xf32>
    %771 = arith.mulf %769, %770 : vector<16x32xf32>
    %772 = vector.broadcast %753 : vector<1x32xf32> to vector<16x32xf32>
    %773 = arith.addf %771, %772 : vector<16x32xf32>
    %c1296 = arith.constant 1296 : index
    %c0_202 = arith.constant 0 : index
    %774 = vector.load %arg0[%c1296, %c0_202] : memref<1520x64xf32, #tpu.memory_space<vmem>>, vector<96x32xf32>
    %775 = vector.extract_strided_slice %774 {offsets = [64, 0], sizes = [32, 32], strides = [1, 1]} : vector<96x32xf32> to vector<32x32xf32>
    %cst_203 = arith.constant dense<0.000000e+00> : vector<2x32xf32>
    %776 = tpu.matmul %448, %775, %cst_203 {dimension_numbers = #tpu.dot_dimension_numbers<[1], [0], [0], [1], [0, 0, 1, 1], [], []>} : vector<2x32xf32>, vector<32x32xf32>, vector<2x32xf32> -> vector<2x32xf32>
    %777 = vector.extract_strided_slice %0 {offsets = [43, 0], sizes = [1, 32], strides = [1, 1]} : vector<56x64xf32> to vector<1x32xf32>
    %778 = vector.broadcast %777 : vector<1x32xf32> to vector<2x32xf32>
    %779 = arith.addf %776, %778 : vector<2x32xf32>
    %c1392 = arith.constant 1392 : index
    %c0_204 = arith.constant 0 : index
    %780 = vector.load %arg0[%c1392, %c0_204] : memref<1520x64xf32, #tpu.memory_space<vmem>>, vector<32x32xf32>
    %cst_205 = arith.constant dense<0.000000e+00> : vector<2x32xf32>
    %781 = tpu.matmul %779, %780, %cst_205 {dimension_numbers = #tpu.dot_dimension_numbers<[1], [0], [0], [1], [0, 0, 1, 1], [], []>} : vector<2x32xf32>, vector<32x32xf32>, vector<2x32xf32> -> vector<2x32xf32>
    %782 = vector.extract_strided_slice %0 {offsets = [44, 0], sizes = [1, 32], strides = [1, 1]} : vector<56x64xf32> to vector<1x32xf32>
    %783 = vector.broadcast %782 : vector<1x32xf32> to vector<2x32xf32>
    %784 = arith.addf %781, %783 : vector<2x32xf32>
    %785 = vector.extract_strided_slice %784 {offsets = [0, 0], sizes = [1, 32], strides = [1, 1]} : vector<2x32xf32> to vector<1x32xf32>
    %786 = vector.shape_cast %785 : vector<1x32xf32> to vector<1x32xf32>
    %787 = vector.broadcast %786 : vector<1x32xf32> to vector<8x32xf32>
    %788 = vector.extract_strided_slice %784 {offsets = [1, 0], sizes = [1, 32], strides = [1, 1]} : vector<2x32xf32> to vector<1x32xf32>
    %789 = vector.shape_cast %788 : vector<1x32xf32> to vector<1x32xf32>
    %790 = vector.broadcast %789 : vector<1x32xf32> to vector<8x32xf32>
    %791 = tpu.concatenate %787, %790 in 0 : vector<8x32xf32>, vector<8x32xf32> -> vector<16x32xf32>
    %792 = arith.addf %773, %791 : vector<16x32xf32>
    %793 = vector.extract_strided_slice %0 {offsets = [49, 0], sizes = [1, 32], strides = [1, 1]} : vector<56x64xf32> to vector<1x32xf32>
    %794 = vector.extract_strided_slice %0 {offsets = [50, 0], sizes = [1, 32], strides = [1, 1]} : vector<56x64xf32> to vector<1x32xf32>
    %cst_206 = arith.constant dense<0.000000e+00> : vector<16xf32>
    %795 = vector.multi_reduction <add>, %792, %cst_206 [1] : vector<16x32xf32> to vector<16xf32>
    %796 = vector.shape_cast %795 : vector<16xf32> to vector<16x1xf32>
    %cst_207 = arith.constant 3.200000e+01 : f32
    %797 = vector.broadcast %cst_207 : f32 to vector<16x1xf32>
    %798 = arith.divf %796, %797 : vector<16x1xf32>
    %799 = vector.broadcast %798 : vector<16x1xf32> to vector<16x32xf32>
    %800 = arith.subf %792, %799 : vector<16x32xf32>
    %801 = arith.mulf %800, %800 : vector<16x32xf32>
    %cst_208 = arith.constant dense<0.000000e+00> : vector<16xf32>
    %802 = vector.multi_reduction <add>, %801, %cst_208 [1] : vector<16x32xf32> to vector<16xf32>
    %803 = vector.shape_cast %802 : vector<16xf32> to vector<16x1xf32>
    %cst_209 = arith.constant 3.200000e+01 : f32
    %804 = vector.broadcast %cst_209 : f32 to vector<16x1xf32>
    %805 = arith.divf %803, %804 : vector<16x1xf32>
    %cst_210 = arith.constant 9.99999974E-6 : f32
    %806 = vector.broadcast %cst_210 : f32 to vector<16x1xf32>
    %807 = arith.addf %805, %806 : vector<16x1xf32>
    %808 = math.rsqrt %807 : vector<16x1xf32>
    %809 = vector.broadcast %808 : vector<16x1xf32> to vector<16x32xf32>
    %810 = arith.mulf %800, %809 : vector<16x32xf32>
    %811 = vector.broadcast %793 : vector<1x32xf32> to vector<16x32xf32>
    %812 = arith.mulf %810, %811 : vector<16x32xf32>
    %813 = vector.broadcast %794 : vector<1x32xf32> to vector<16x32xf32>
    %814 = arith.addf %812, %813 : vector<16x32xf32>
    %c1424 = arith.constant 1424 : index
    %c0_211 = arith.constant 0 : index
    %815 = vector.load %arg0[%c1424, %c0_211] : memref<1520x64xf32, #tpu.memory_space<vmem>>, vector<32x64xf32>
    %cst_212 = arith.constant dense<0.000000e+00> : vector<16x64xf32>
    %816 = tpu.matmul %814, %815, %cst_212 {dimension_numbers = #tpu.dot_dimension_numbers<[1], [0], [0], [1], [0, 0, 1, 1], [], []>} : vector<16x32xf32>, vector<32x64xf32>, vector<16x64xf32> -> vector<16x64xf32>
    %817 = vector.extract_strided_slice %0 {offsets = [45, 0], sizes = [1, 64], strides = [1, 1]} : vector<56x64xf32> to vector<1x64xf32>
    %818 = vector.broadcast %817 : vector<1x64xf32> to vector<16x64xf32>
    %819 = arith.addf %816, %818 : vector<16x64xf32>
    %cst_213 = arith.constant 0.000000e+00 : f32
    %820 = vector.broadcast %cst_213 : f32 to vector<16x64xf32>
    %821 = arith.maximumf %819, %820 : vector<16x64xf32>
    %c1456 = arith.constant 1456 : index
    %c0_214 = arith.constant 0 : index
    %822 = vector.load %arg0[%c1456, %c0_214] : memref<1520x64xf32, #tpu.memory_space<vmem>>, vector<64x32xf32>
    %cst_215 = arith.constant dense<0.000000e+00> : vector<16x32xf32>
    %823 = tpu.matmul %821, %822, %cst_215 {dimension_numbers = #tpu.dot_dimension_numbers<[1], [0], [0], [1], [0, 0, 1, 1], [], []>} : vector<16x64xf32>, vector<64x32xf32>, vector<16x32xf32> -> vector<16x32xf32>
    %824 = vector.extract_strided_slice %0 {offsets = [46, 0], sizes = [1, 32], strides = [1, 1]} : vector<56x64xf32> to vector<1x32xf32>
    %825 = vector.broadcast %824 : vector<1x32xf32> to vector<16x32xf32>
    %826 = arith.addf %823, %825 : vector<16x32xf32>
    %827 = arith.addf %814, %826 : vector<16x32xf32>
    %828 = vector.extract_strided_slice %0 {offsets = [51, 0], sizes = [1, 32], strides = [1, 1]} : vector<56x64xf32> to vector<1x32xf32>
    %829 = vector.extract_strided_slice %0 {offsets = [52, 0], sizes = [1, 32], strides = [1, 1]} : vector<56x64xf32> to vector<1x32xf32>
    %cst_216 = arith.constant dense<0.000000e+00> : vector<16xf32>
    %830 = vector.multi_reduction <add>, %827, %cst_216 [1] : vector<16x32xf32> to vector<16xf32>
    %831 = vector.shape_cast %830 : vector<16xf32> to vector<16x1xf32>
    %cst_217 = arith.constant 3.200000e+01 : f32
    %832 = vector.broadcast %cst_217 : f32 to vector<16x1xf32>
    %833 = arith.divf %831, %832 : vector<16x1xf32>
    %834 = vector.broadcast %833 : vector<16x1xf32> to vector<16x32xf32>
    %835 = arith.subf %827, %834 : vector<16x32xf32>
    %836 = arith.mulf %835, %835 : vector<16x32xf32>
    %cst_218 = arith.constant dense<0.000000e+00> : vector<16xf32>
    %837 = vector.multi_reduction <add>, %836, %cst_218 [1] : vector<16x32xf32> to vector<16xf32>
    %838 = vector.shape_cast %837 : vector<16xf32> to vector<16x1xf32>
    %cst_219 = arith.constant 3.200000e+01 : f32
    %839 = vector.broadcast %cst_219 : f32 to vector<16x1xf32>
    %840 = arith.divf %838, %839 : vector<16x1xf32>
    %cst_220 = arith.constant 9.99999974E-6 : f32
    %841 = vector.broadcast %cst_220 : f32 to vector<16x1xf32>
    %842 = arith.addf %840, %841 : vector<16x1xf32>
    %843 = math.rsqrt %842 : vector<16x1xf32>
    %844 = vector.broadcast %843 : vector<16x1xf32> to vector<16x32xf32>
    %845 = arith.mulf %835, %844 : vector<16x32xf32>
    %846 = vector.broadcast %828 : vector<1x32xf32> to vector<16x32xf32>
    %847 = arith.mulf %845, %846 : vector<16x32xf32>
    %848 = vector.broadcast %829 : vector<1x32xf32> to vector<16x32xf32>
    %849 = arith.addf %847, %848 : vector<16x32xf32>
    %c336 = arith.constant 336 : index
    %c0_221 = arith.constant 0 : index
    %850 = vector.load %arg0[%c336, %c0_221] : memref<1520x64xf32, #tpu.memory_space<vmem>>, vector<32x7xf32>
    %cst_222 = arith.constant dense<0.000000e+00> : vector<16x7xf32>
    %851 = tpu.matmul %849, %850, %cst_222 {dimension_numbers = #tpu.dot_dimension_numbers<[1], [0], [0], [1], [0, 0, 1, 1], [], []>} : vector<16x32xf32>, vector<32x7xf32>, vector<16x7xf32> -> vector<16x7xf32>
    %852 = vector.extract_strided_slice %0 {offsets = [4, 0], sizes = [1, 7], strides = [1, 1]} : vector<56x64xf32> to vector<1x7xf32>
    %853 = vector.broadcast %852 : vector<1x7xf32> to vector<16x7xf32>
    %854 = arith.addf %851, %853 : vector<16x7xf32>
    %855 = vector.extract_strided_slice %854 {offsets = [0, 0], sizes = [8, 7], strides = [1, 1]} : vector<16x7xf32> to vector<8x7xf32>
    %c0_223 = arith.constant 0 : index
    %c0_224 = arith.constant 0 : index
    %c0_225 = arith.constant 0 : index
    %856 = vector.load %arg5[%c0_223, %c0_224, %c0_225] : memref<2x8x7xf32, #tpu.memory_space<vmem>>, vector<1x8x7xf32>
    %857 = vector.shape_cast %856 : vector<1x8x7xf32> to vector<8x7xf32>
    %858 = vector.shape_cast %855 : vector<8x7xf32> to vector<1x8x7xf32>
    tpu.vector_store %arg5[%c0_223, %c0_224, %c0_225], %858 {strides = array<i32>} : memref<2x8x7xf32, #tpu.memory_space<vmem>>, vector<1x8x7xf32>,
    %859 = vector.extract_strided_slice %854 {offsets = [8, 0], sizes = [8, 7], strides = [1, 1]} : vector<16x7xf32> to vector<8x7xf32>
    %c1_226 = arith.constant 1 : index
    %c0_227 = arith.constant 0 : index
    %c0_228 = arith.constant 0 : index
    %860 = vector.load %arg5[%c1_226, %c0_227, %c0_228] : memref<2x8x7xf32, #tpu.memory_space<vmem>>, vector<1x8x7xf32>
    %861 = vector.shape_cast %860 : vector<1x8x7xf32> to vector<8x7xf32>
    %862 = vector.shape_cast %859 : vector<8x7xf32> to vector<1x8x7xf32>
    tpu.vector_store %arg5[%c1_226, %c0_227, %c0_228], %862 {strides = array<i32>} : memref<2x8x7xf32, #tpu.memory_space<vmem>>, vector<1x8x7xf32>,
    return
  }
}

</mosaic_0001>

<llo_original>
// kernel: multitask_autoencoder_forward.1
$region0: #{multitask_autoencoder_forward.1}
  #allocation0 [shape = 'u32[]', space=smem, size = 0x4, offset = 0x4, fixed_abs, tag = 'smem constant byte address 0x4 - core index']
  #allocation1 [shape = 'u32[144,128]{1,0:T(1,128)}', space=vmem, size = 0x12000, scoped, tag = 'internal scratch']
  %s0 = inlined_call_operand.vmem [shape: f32[1520,64], index: 0, kind: input, shape index: {}]
  %s1 = inlined_call_operand.vmem [shape: f32[56,64], index: 1, kind: input, shape index: {}]
  %s2 = inlined_call_operand.vmem [shape: f32[16,7], index: 2, kind: input, shape index: {}]
  %s3 = inlined_call_operand.vmem [shape: f32[16,9], index: 3, kind: input, shape index: {}]
  %s4 = inlined_call_operand.vmem [shape: f32[2,8,32], index: 4, kind: output, shape index: {0}]
  %s5 = inlined_call_operand.vmem [shape: f32[2,8,7], index: 5, kind: output, shape index: {1}]
  %s6 = inlined_call_operand.hbm [shape: f32[2,32], index: 6, kind: output, shape index: {2}]
  %7 = xla_tuple %s4, %s5, %s6
  %s8 = sld [smem:[#allocation0]]
  $region42: #{multitask_autoencoder_forward.1} parent=0
    _
  %s10 = ssub.s32 1, %s8
  %s11 = scalar_select 0, %s10, %s8
  $region1: #{multitask_autoencoder_forward.1} parent=0
    #allocation2 [shape = 'u8[1024]{0}', space=vmem, size = 0x400, scoped, tag = 'output window, operand 2, single buffered']
    #allocation3 [shape = 's32[1]{0}', space=sflag, size = 0x4, scoped, tag = 'scoped memory for multitask_autoencoder_forward.1']
    %12 = vsyncpa [#allocation3], 0
    // Predicated region
    $region2: #{multitask_autoencoder_forward.1} parent=1 // pred_check
      _
    $region3: #{multitask_autoencoder_forward.1} parent=1 // pred_check_branch
      %14 = sbr.rel (0) target = $region5
    $region4: #{multitask_autoencoder_forward.1} parent=1 // pred_region
      _
    $region5: #{multitask_autoencoder_forward.1} parent=1 // pred_fallthru
      _
    // Predicated region
    $region6: #{multitask_autoencoder_forward.1} parent=1 // pred_check
      _
    $region7: #{multitask_autoencoder_forward.1} parent=1 // pred_check_branch
      %16 = sbr.rel (0) target = $region9
    $region8: #{multitask_autoencoder_forward.1} parent=1 // pred_region
      _
    $region9: #{multitask_autoencoder_forward.1} parent=1 // pred_fallthru
      _
    // Predicated region
    $region10: #{multitask_autoencoder_forward.1} parent=1 // pred_check
      _
    $region11: #{multitask_autoencoder_forward.1} parent=1 // pred_check_branch
      %18 = sbr.rel (0) target = $region13
    $region12: #{multitask_autoencoder_forward.1} parent=1 // pred_region
      _
    $region13: #{multitask_autoencoder_forward.1} parent=1 // pred_fallthru
      _
    // Predicated region
    $region14: #{multitask_autoencoder_forward.1} parent=1 // pred_check
      _
    $region15: #{multitask_autoencoder_forward.1} parent=1 // pred_check_branch
      %20 = sbr.rel (0) target = $region17
    $region16: #{multitask_autoencoder_forward.1} parent=1 // pred_region
      _
    $region17: #{multitask_autoencoder_forward.1} parent=1 // pred_fallthru
      _
    %v21 = vld [vmem:[%s1] sm:$0xff]
    %v22 = vld [vmem:[%s1 + $0x8] sm:$0xff]
    %v23 = vld [vmem:[%s1 + $0x10] sm:$0xff]
    %v24 = vld [vmem:[%s1 + $0x18] sm:$0xff]
    %v25 = vld [vmem:[%s1 + $0x20] sm:$0xff]
    %v26 = vld [vmem:[%s1 + $0x28] sm:$0xff]
    %v27 = vld [vmem:[%s1 + $0x30] sm:$0xff]
    %v28 = vlaneseq
    %v29 = vand.u32 %v28, 127
    %vm30 = vcmp.ge.s32.totalorder %v29, 0
    %vm31 = vcmp.lt.s32.totalorder %v29, 8
    %vm32 = vmand %vm30, %vm31
    %v33 = vsel %vm32, 1, 0
    %v34 = vcvt.s32.f32 %v33
    %vm35 = vcmp.ge.s32.totalorder %v29, 8
    %vm36 = vcmp.lt.s32.totalorder %v29, 16
    %vm37 = vmand %vm35, %vm36
    %v38 = vsel %vm37, 1, 0
    %v39 = vcvt.s32.f32 %v38
    %vm40 = vcmp.ge.s32.totalorder %v29, 16
    %vm41 = vcmp.lt.s32.totalorder %v29, 24
    %vm42 = vmand %vm40, %vm41
    %v43 = vsel %vm42, 1, 0
    %v44 = vcvt.s32.f32 %v43
    %vm45 = vcmp.ge.s32.totalorder %v29, 24
    %vm46 = vcmp.lt.s32.totalorder %v29, 32
    %vm47 = vmand %vm45, %vm46
    %v48 = vsel %vm47, 1, 0
    %v49 = vcvt.s32.f32 %v48
    %v50 = vlaneseq
    %v51 = vshrl.u32 %v50, 7
    %v52 = vadd.s32 %v51, 8
    %v53 = vadd.s32 %v51, 16
    %v54 = vadd.s32 %v51, 24
    %v55 = vshra.s32 %v51, 4
    %v56 = vshra.s32 %v52, 4
    %v57 = vshra.s32 %v53, 4
    %v58 = vshra.s32 %v54, 4
    %v59 = vshra.s32 %v29, 4
    %vm60 = vcmp.eq.s32.totalorder %v55, %v59
    %vm61 = vcmp.eq.s32.totalorder %v56, %v59
    %vm62 = vcmp.eq.s32.totalorder %v57, %v59
    %vm63 = vcmp.eq.s32.totalorder %v58, %v59
    %v64 = vsel %vm60, 0.0, -1e+30
    %v65 = vsel %vm61, 0.0, -1e+30
    %v66 = vsel %vm62, 0.0, -1e+30
    %v67 = vsel %vm63, 0.0, -1e+30
    %v68 = vshra.s32 %v51, 3
    %v69 = vshra.s32 %v52, 3
    %v70 = vshra.s32 %v29, 3
    %vm71 = vcmp.eq.s32.totalorder %v68, %v70
    %vm72 = vcmp.eq.s32.totalorder %v69, %v70
    %v73 = vsel %vm71, 0.0, -1e+30
    %v74 = vsel %vm72, 0.0, -1e+30
    %v75 = vld [vmem:[%s2] sm:$0xff]
    %v76 = vld [vmem:[%s2 + $0x8] sm:$0xff]
    %v77 = vld [vmem:[%s3] sm:$0xff]
    %v78 = vld [vmem:[%s3 + $0x8] sm:$0xff]
    %v79 = vld [vmem:[%s0 + $0x8] sm:$0xff]
    %v80 = vld [vmem:[%s0 + $0x10] sm:$0x1]
    %v81 = vlaneseq
    %v82 = vshrl.u32 %v81, 7
    %v83 = vsub.s32 1, %v82
    %v84 = vrot.slane %v21, %v83
    %vm85 = vcmask 72704
    %v87 = vsel %vm85, %v77, 0
    %v90 = vsel %vm85, %v78, 0
    %vm92 = vcmask 1040384
    %v94 = vsel %vm92, %v80, 0
    %96 = vmatprep.subr.mxu0 0.0
    %97 = vmatpush1.msra.mxu0 %v79
    %98 = vmatprep.subr.mxu0 0.0
    %99 = vmatpush1.msra.mxu0 %v94
    %100 = vmatprep.subr.mxu0 0.0
    %101 = vmatpush1.msra.mxu0 0.0
    %102 = vmatprep.subr.mxu0 0.0
    %103 = vmatpush1.msra.mxu0 0.0
    %104 = vmatprep.subr.mxu0 0.0
    %105 = vmatpush1.msra.mxu0 0.0
    %106 = vmatprep.subr.mxu0 0.0
    %107 = vmatpush1.msra.mxu0 0.0
    %108 = vmatprep.subr.mxu0 0.0
    %109 = vmatpush1.msra.mxu0 0.0
    %110 = vmatprep.subr.mxu0 0.0
    %111 = vmatpush1.msra.mxu0 0.0
    %112 = vmatprep.subr.mxu0 0.0
    %113 = vmatpush1.msra.mxu0 0.0
    %114 = vmatprep.subr.mxu0 0.0
    %115 = vmatpush1.msra.mxu0 0.0
    %116 = vmatprep.subr.mxu0 0.0
    %117 = vmatpush1.msra.mxu0 0.0
    %118 = vmatprep.subr.mxu0 0.0
    %119 = vmatpush1.msra.mxu0 0.0
    %120 = vmatprep.subr.mxu0 0.0
    %121 = vmatpush1.msra.mxu0 0.0
    %122 = vmatprep.subr.mxu0 0.0
    %123 = vmatpush1.msra.mxu0 0.0
    %124 = vmatprep.subr.mxu0 0.0
    %125 = vmatpush1.msra.mxu0 0.0
    %126 = vmatprep.subr.mxu0 0.0
    %127 = vmatpush1.msra.mxu0 0.0
    %128 = vmatprep.subr.mxu0 0.0
    %129 = vmatpush1.msra.mxu0 0.0
    %130 = vmatprep.subr.mxu0 0.0
    %131 = vmatpush1.msra.mxu0 0.0
    %132 = vmatprep.subr.mxu0 0.0
    %133 = vmatpush1.msra.mxu0 0.0
    %134 = vmatprep.subr.mxu0 0.0
    %135 = vmatpush1.msra.mxu0 0.0
    %136 = vmatprep.subr.mxu0 0.0
    %137 = vmatpush1.msra.mxu0 0.0
    %138 = vmatprep.subr.mxu0 0.0
    %139 = vmatpush1.msra.mxu0 0.0
    %140 = vmatprep.subr.mxu0 0.0
    %141 = vmatpush1.msra.mxu0 0.0
    %142 = vmatprep.subr.mxu0 0.0
    %143 = vmatpush1.msra.mxu0 0.0
    %144 = vmatprep.subr.mxu0 0.0
    %145 = vmatpush1.msra.mxu0 0.0
    %146 = vmatprep.subr.mxu0 0.0
    %147 = vmatpush1.msra.mxu0 0.0
    %148 = vmatprep.subr.mxu0 0.0
    %149 = vmatpush1.msra.mxu0 0.0
    %150 = vmatprep.subr.mxu0 0.0
    %151 = vmatpush1.msra.mxu0 0.0
    %152 = vmatprep.subr.mxu0 0.0
    %153 = vmatpush1.msra.mxu0 0.0
    %154 = vmatprep.subr.mxu0 0.0
    %155 = vmatpush1.msra.mxu0 0.0
    %156 = vmatprep.subr.mxu0 0.0
    %157 = vmatpush1.msra.mxu0 0.0
    %158 = vmatprep.subr.mxu0 0.0
    %159 = vmatpush1.msra.mxu0 0.0
    %160 = vmatprep.mubr.f32.mxu0 0.0
    %161 = vmatmul.mubr.f32.gmra.mrb[0].mxu0 %v87
    %v162 = vpop.f32.mrb[0].mxu0
    %v163 = vadd.f32 %v84, %v162
    %v164 = vpop.f32.mrb[0].mxu0
    %165 = vmatprep.mubr.f32.mxu0 0.0
    %166 = vmatmul.mubr.f32.gmra.mrb[0].mxu0 %v90
    %v167 = vpop.f32.mrb[0].mxu0
    %v168 = vadd.f32 %v84, %v167
    %v169 = vpop.f32.mrb[0].mxu0
    %170 = vdwg.mxu0
    %v171 = vld [vmem:[%s0] sm:$0x7f]
    %v172 = vlaneseq
    %v173 = vshrl.u32 %v172, 7
    %v174 = vsub.s32 0, %v173
    %v175 = vrot.slane %v21, %v174
    %vm176 = vcmask 56320
    %v178 = vsel %vm176, %v75, 0
    %v181 = vsel %vm176, %v76, 0
    %vm183 = vcmask 1046528
    %v185 = vsel %vm183, %v171, 0
    %187 = vmatprep.subr.mxu0 0.0
    %188 = vmatpush1.msra.mxu0 %v185
    %189 = vmatprep.subr.mxu0 0.0
    %190 = vmatpush1.msra.mxu0 0.0
    %191 = vmatprep.subr.mxu0 0.0
    %192 = vmatpush1.msra.mxu0 0.0
    %193 = vmatprep.subr.mxu0 0.0
    %194 = vmatpush1.msra.mxu0 0.0
    %195 = vmatprep.subr.mxu0 0.0
    %196 = vmatpush1.msra.mxu0 0.0
    %197 = vmatprep.subr.mxu0 0.0
    %198 = vmatpush1.msra.mxu0 0.0
    %199 = vmatprep.subr.mxu0 0.0
    %200 = vmatpush1.msra.mxu0 0.0
    %201 = vmatprep.subr.mxu0 0.0
    %202 = vmatpush1.msra.mxu0 0.0
    %203 = vmatprep.subr.mxu0 0.0
    %204 = vmatpush1.msra.mxu0 0.0
    %205 = vmatprep.subr.mxu0 0.0
    %206 = vmatpush1.msra.mxu0 0.0
    %207 = vmatprep.subr.mxu0 0.0
    %208 = vmatpush1.msra.mxu0 0.0
    %209 = vmatprep.subr.mxu0 0.0
    %210 = vmatpush1.msra.mxu0 0.0
    %211 = vmatprep.subr.mxu0 0.0
    %212 = vmatpush1.msra.mxu0 0.0
    %213 = vmatprep.subr.mxu0 0.0
    %214 = vmatpush1.msra.mxu0 0.0
    %215 = vmatprep.subr.mxu0 0.0
    %216 = vmatpush1.msra.mxu0 0.0
    %217 = vmatprep.subr.mxu0 0.0
    %218 = vmatpush1.msra.mxu0 0.0
    %219 = vmatprep.subr.mxu0 0.0
    %220 = vmatpush1.msra.mxu0 0.0
    %221 = vmatprep.subr.mxu0 0.0
    %222 = vmatpush1.msra.mxu0 0.0
    %223 = vmatprep.subr.mxu0 0.0
    %224 = vmatpush1.msra.mxu0 0.0
    %225 = vmatprep.subr.mxu0 0.0
    %226 = vmatpush1.msra.mxu0 0.0
    %227 = vmatprep.subr.mxu0 0.0
    %228 = vmatpush1.msra.mxu0 0.0
    %229 = vmatprep.subr.mxu0 0.0
    %230 = vmatpush1.msra.mxu0 0.0
    %231 = vmatprep.subr.mxu0 0.0
    %232 = vmatpush1.msra.mxu0 0.0
    %233 = vmatprep.subr.mxu0 0.0
    %234 = vmatpush1.msra.mxu0 0.0
    %235 = vmatprep.subr.mxu0 0.0
    %236 = vmatpush1.msra.mxu0 0.0
    %237 = vmatprep.subr.mxu0 0.0
    %238 = vmatpush1.msra.mxu0 0.0
    %239 = vmatprep.subr.mxu0 0.0
    %240 = vmatpush1.msra.mxu0 0.0
    %241 = vmatprep.subr.mxu0 0.0
    %242 = vmatpush1.msra.mxu0 0.0
    %243 = vmatprep.subr.mxu0 0.0
    %244 = vmatpush1.msra.mxu0 0.0
    %245 = vmatprep.subr.mxu0 0.0
    %246 = vmatpush1.msra.mxu0 0.0
    %247 = vmatprep.subr.mxu0 0.0
    %248 = vmatpush1.msra.mxu0 0.0
    %249 = vmatprep.subr.mxu0 0.0
    %250 = vmatpush1.msra.mxu0 0.0
    %251 = vmatprep.mubr.f32.mxu0 0.0
    %252 = vmatmul.mubr.f32.gmra.mrb[0].mxu0 %v178
    %v253 = vpop.f32.mrb[0].mxu0
    %v254 = vadd.f32 %v175, %v253
    %v255 = vpop.f32.mrb[0].mxu0
    %256 = vmatprep.mubr.f32.mxu0 0.0
    %257 = vmatmul.mubr.f32.gmra.mrb[0].mxu0 %v181
    %v258 = vpop.f32.mrb[0].mxu0
    %v259 = vadd.f32 %v175, %v258
    %v260 = vpop.f32.mrb[0].mxu0
    %261 = vdwg.mxu0
    %v262 = vadd.f32 %v254, %v163
    %v263 = vadd.f32 %v259, %v168
    %v264 = vld [vmem:[%s0 + $0x18] sm:$0xff]
    %v265 = vld [vmem:[%s0 + $0x170] sm:$0xff]
    %v266 = vld [vmem:[%s0 + $0x178] sm:$0xff]
    %v267 = vld [vmem:[%s0 + $0x180] sm:$0xff]
    %v268 = vld [vmem:[%s0 + $0x188] sm:$0xff]
    %v269 = vld [vmem:[%s0 + $0x190] sm:$0xff]
    %v270 = vld [vmem:[%s0 + $0x198] sm:$0xff]
    %v271 = vld [vmem:[%s0 + $0x1a0] sm:$0xff]
    %v272 = vld [vmem:[%s0 + $0x1a8] sm:$0xff]
    %v273 = vld [vmem:[%s0 + $0x1b0] sm:$0xff]
    %v274 = vld [vmem:[%s0 + $0x1b8] sm:$0xff]
    %v275 = vld [vmem:[%s0 + $0x1c0] sm:$0xff]
    %v276 = vld [vmem:[%s0 + $0x1c8] sm:$0xff]
    %v277 = vld [vmem:[%s0 + $0x1d0] sm:$0xff]
    %v278 = vld [vmem:[%s0 + $0x1d8] sm:$0xff]
    %v279 = vld [vmem:[%s0 + $0x1e0] sm:$0xff]
    %v280 = vld [vmem:[%s0 + $0x1e8] sm:$0xff]
    %v281 = vlaneseq
    %v282 = vshrl.u32 %v281, 7
    %v283 = vsub.s32 5, %v282
    %v284 = vrot.slane %v21, %v283
    %vm285 = vcmask 261120
    %v287 = vsel %vm285, %v264, 0
    %v290 = vsel %vm285, %v262, 0
    %v293 = vsel %vm285, %v263, 0
    %295 = vmatprep.subr.mxu0 0.0
    %296 = vmatpush1.msra.mxu0 %v265
    %297 = vmatprep.subr.mxu0 0.0
    %298 = vmatpush1.msra.mxu0 %v266
    %299 = vmatprep.subr.mxu0 0.0
    %300 = vmatpush1.msra.mxu0 %v267
    %301 = vmatprep.subr.mxu0 0.0
    %302 = vmatpush1.msra.mxu0 %v268
    %303 = vmatprep.subr.mxu0 0.0
    %304 = vmatpush1.msra.mxu0 0.0
    %305 = vmatprep.subr.mxu0 0.0
    %306 = vmatpush1.msra.mxu0 0.0
    %307 = vmatprep.subr.mxu0 0.0
    %308 = vmatpush1.msra.mxu0 0.0
    %309 = vmatprep.subr.mxu0 0.0
    %310 = vmatpush1.msra.mxu0 0.0
    %311 = vmatprep.subr.mxu0 0.0
    %312 = vmatpush1.msra.mxu0 0.0
    %313 = vmatprep.subr.mxu0 0.0
    %314 = vmatpush1.msra.mxu0 0.0
    %315 = vmatprep.subr.mxu0 0.0
    %316 = vmatpush1.msra.mxu0 0.0
    %317 = vmatprep.subr.mxu0 0.0
    %318 = vmatpush1.msra.mxu0 0.0
    %319 = vmatprep.subr.mxu0 0.0
    %320 = vmatpush1.msra.mxu0 0.0
    %321 = vmatprep.subr.mxu0 0.0
    %322 = vmatpush1.msra.mxu0 0.0
    %323 = vmatprep.subr.mxu0 0.0
    %324 = vmatpush1.msra.mxu0 0.0
    %325 = vmatprep.subr.mxu0 0.0
    %326 = vmatpush1.msra.mxu0 0.0
    %327 = vmatprep.subr.mxu0 0.0
    %328 = vmatpush1.msra.mxu0 0.0
    %329 = vmatprep.subr.mxu0 0.0
    %330 = vmatpush1.msra.mxu0 0.0
    %331 = vmatprep.subr.mxu0 0.0
    %332 = vmatpush1.msra.mxu0 0.0
    %333 = vmatprep.subr.mxu0 0.0
    %334 = vmatpush1.msra.mxu0 0.0
    %335 = vmatprep.subr.mxu0 0.0
    %336 = vmatpush1.msra.mxu0 0.0
    %337 = vmatprep.subr.mxu0 0.0
    %338 = vmatpush1.msra.mxu0 0.0
    %339 = vmatprep.subr.mxu0 0.0
    %340 = vmatpush1.msra.mxu0 0.0
    %341 = vmatprep.subr.mxu0 0.0
    %342 = vmatpush1.msra.mxu0 0.0
    %343 = vmatprep.subr.mxu0 0.0
    %344 = vmatpush1.msra.mxu0 0.0
    %345 = vmatprep.subr.mxu0 0.0
    %346 = vmatpush1.msra.mxu0 0.0
    %347 = vmatprep.subr.mxu0 0.0
    %348 = vmatpush1.msra.mxu0 0.0
    %349 = vmatprep.subr.mxu0 0.0
    %350 = vmatpush1.msra.mxu0 0.0
    %351 = vmatprep.subr.mxu0 0.0
    %352 = vmatpush1.msra.mxu0 0.0
    %353 = vmatprep.subr.mxu0 0.0
    %354 = vmatpush1.msra.mxu0 0.0
    %355 = vmatprep.subr.mxu0 0.0
    %356 = vmatpush1.msra.mxu0 0.0
    %357 = vmatprep.subr.mxu0 0.0
    %358 = vmatpush1.msra.mxu0 0.0
    %359 = vmatprep.mubr.f32.mxu0 0.0
    %360 = vmatmul.mubr.f32.gmra.mrb[0].mxu0 %v287
    %v361 = vpop.f32.mrb[0].mxu0
    %v362 = vadd.f32 %v284, %v361
    %v363 = vpop.f32.mrb[0].mxu0
    %364 = vmatprep.mubr.f32.mxu0 0.0
    %365 = vmatmul.mubr.f32.gmra.mrb[0].mxu0 %v290
    %v366 = vpop.f32.mrb[0].mxu0
    %v367 = vadd.f32 %v284, %v366
    %v368 = vpop.f32.mrb[0].mxu0
    %369 = vmatprep.mubr.f32.mxu0 0.0
    %370 = vmatmul.mubr.f32.gmra.mrb[0].mxu0 %v287
    %v371 = vpop.f32.mrb[0].mxu0
    %v372 = vadd.f32 %v284, %v371
    %v373 = vpop.f32.mrb[0].mxu0
    %374 = vmatprep.mubr.f32.mxu0 0.0
    %375 = vmatmul.mubr.f32.gmra.mrb[0].mxu0 %v293
    %v376 = vpop.f32.mrb[0].mxu0
    %v377 = vadd.f32 %v284, %v376
    %v378 = vpop.f32.mrb[0].mxu0
    %379 = vdwg.mxu0
    %v380 = vlaneseq
    %v381 = vshrl.u32 %v380, 7
    %v382 = vsub.s32 6, %v381
    %v383 = vrot.slane %v21, %v382
    %384 = vmatprep.subr.mxu0 0.0
    %385 = vmatpush1.msra.mxu0 %v269
    %386 = vmatprep.subr.mxu0 0.0
    %387 = vmatpush1.msra.mxu0 %v270
    %388 = vmatprep.subr.mxu0 0.0
    %389 = vmatpush1.msra.mxu0 %v271
    %390 = vmatprep.subr.mxu0 0.0
    %391 = vmatpush1.msra.mxu0 %v272
    %392 = vmatprep.subr.mxu0 0.0
    %393 = vmatpush1.msra.mxu0 0.0
    %394 = vmatprep.subr.mxu0 0.0
    %395 = vmatpush1.msra.mxu0 0.0
    %396 = vmatprep.subr.mxu0 0.0
    %397 = vmatpush1.msra.mxu0 0.0
    %398 = vmatprep.subr.mxu0 0.0
    %399 = vmatpush1.msra.mxu0 0.0
    %400 = vmatprep.subr.mxu0 0.0
    %401 = vmatpush1.msra.mxu0 0.0
    %402 = vmatprep.subr.mxu0 0.0
    %403 = vmatpush1.msra.mxu0 0.0
    %404 = vmatprep.subr.mxu0 0.0
    %405 = vmatpush1.msra.mxu0 0.0
    %406 = vmatprep.subr.mxu0 0.0
    %407 = vmatpush1.msra.mxu0 0.0
    %408 = vmatprep.subr.mxu0 0.0
    %409 = vmatpush1.msra.mxu0 0.0
    %410 = vmatprep.subr.mxu0 0.0
    %411 = vmatpush1.msra.mxu0 0.0
    %412 = vmatprep.subr.mxu0 0.0
    %413 = vmatpush1.msra.mxu0 0.0
    %414 = vmatprep.subr.mxu0 0.0
    %415 = vmatpush1.msra.mxu0 0.0
    %416 = vmatprep.subr.mxu0 0.0
    %417 = vmatpush1.msra.mxu0 0.0
    %418 = vmatprep.subr.mxu0 0.0
    %419 = vmatpush1.msra.mxu0 0.0
    %420 = vmatprep.subr.mxu0 0.0
    %421 = vmatpush1.msra.mxu0 0.0
    %422 = vmatprep.subr.mxu0 0.0
    %423 = vmatpush1.msra.mxu0 0.0
    %424 = vmatprep.subr.mxu0 0.0
    %425 = vmatpush1.msra.mxu0 0.0
    %426 = vmatprep.subr.mxu0 0.0
    %427 = vmatpush1.msra.mxu0 0.0
    %428 = vmatprep.subr.mxu0 0.0
    %429 = vmatpush1.msra.mxu0 0.0
    %430 = vmatprep.subr.mxu0 0.0
    %431 = vmatpush1.msra.mxu0 0.0
    %432 = vmatprep.subr.mxu0 0.0
    %433 = vmatpush1.msra.mxu0 0.0
    %434 = vmatprep.subr.mxu0 0.0
    %435 = vmatpush1.msra.mxu0 0.0
    %436 = vmatprep.subr.mxu0 0.0
    %437 = vmatpush1.msra.mxu0 0.0
    %438 = vmatprep.subr.mxu0 0.0
    %439 = vmatpush1.msra.mxu0 0.0
    %440 = vmatprep.subr.mxu0 0.0
    %441 = vmatpush1.msra.mxu0 0.0
    %442 = vmatprep.subr.mxu0 0.0
    %443 = vmatpush1.msra.mxu0 0.0
    %444 = vmatprep.subr.mxu0 0.0
    %445 = vmatpush1.msra.mxu0 0.0
    %446 = vmatprep.subr.mxu0 0.0
    %447 = vmatpush1.msra.mxu0 0.0
    %448 = vmatprep.mubr.f32.mxu0 0.0
    %449 = vmatmul.mubr.f32.gmra.mrb[0].mxu0 %v287
    %v450 = vpop.f32.mrb[0].mxu0
    %v451 = vadd.f32 %v383, %v450
    %v452 = vpop.f32.mrb[0].mxu0
    %453 = vmatprep.mubr.f32.mxu0 0.0
    %454 = vmatmul.mubr.f32.gmra.mrb[0].mxu0 %v290
    %v455 = vpop.f32.mrb[0].mxu0
    %v456 = vadd.f32 %v383, %v455
    %v457 = vpop.f32.mrb[0].mxu0
    %458 = vmatprep.mubr.f32.mxu0 0.0
    %459 = vmatmul.mubr.f32.gmra.mrb[0].mxu0 %v287
    %v460 = vpop.f32.mrb[0].mxu0
    %v461 = vadd.f32 %v383, %v460
    %v462 = vpop.f32.mrb[0].mxu0
    %463 = vmatprep.mubr.f32.mxu0 0.0
    %464 = vmatmul.mubr.f32.gmra.mrb[0].mxu0 %v293
    %v465 = vpop.f32.mrb[0].mxu0
    %v466 = vadd.f32 %v383, %v465
    %v467 = vpop.f32.mrb[0].mxu0
    %468 = vdwg.mxu0
    %v469 = vlaneseq
    %v470 = vshrl.u32 %v469, 7
    %v471 = vsub.s32 7, %v470
    %v472 = vrot.slane %v21, %v471
    %473 = vmatprep.subr.mxu0 0.0
    %474 = vmatpush1.msra.mxu0 %v273
    %475 = vmatprep.subr.mxu0 0.0
    %476 = vmatpush1.msra.mxu0 %v274
    %477 = vmatprep.subr.mxu0 0.0
    %478 = vmatpush1.msra.mxu0 %v275
    %479 = vmatprep.subr.mxu0 0.0
    %480 = vmatpush1.msra.mxu0 %v276
    %481 = vmatprep.subr.mxu0 0.0
    %482 = vmatpush1.msra.mxu0 0.0
    %483 = vmatprep.subr.mxu0 0.0
    %484 = vmatpush1.msra.mxu0 0.0
    %485 = vmatprep.subr.mxu0 0.0
    %486 = vmatpush1.msra.mxu0 0.0
    %487 = vmatprep.subr.mxu0 0.0
    %488 = vmatpush1.msra.mxu0 0.0
    %489 = vmatprep.subr.mxu0 0.0
    %490 = vmatpush1.msra.mxu0 0.0
    %491 = vmatprep.subr.mxu0 0.0
    %492 = vmatpush1.msra.mxu0 0.0
    %493 = vmatprep.subr.mxu0 0.0
    %494 = vmatpush1.msra.mxu0 0.0
    %495 = vmatprep.subr.mxu0 0.0
    %496 = vmatpush1.msra.mxu0 0.0
    %497 = vmatprep.subr.mxu0 0.0
    %498 = vmatpush1.msra.mxu0 0.0
    %499 = vmatprep.subr.mxu0 0.0
    %500 = vmatpush1.msra.mxu0 0.0
    %501 = vmatprep.subr.mxu0 0.0
    %502 = vmatpush1.msra.mxu0 0.0
    %503 = vmatprep.subr.mxu0 0.0
    %504 = vmatpush1.msra.mxu0 0.0
    %505 = vmatprep.subr.mxu0 0.0
    %506 = vmatpush1.msra.mxu0 0.0
    %507 = vmatprep.subr.mxu0 0.0
    %508 = vmatpush1.msra.mxu0 0.0
    %509 = vmatprep.subr.mxu0 0.0
    %510 = vmatpush1.msra.mxu0 0.0
    %511 = vmatprep.subr.mxu0 0.0
    %512 = vmatpush1.msra.mxu0 0.0
    %513 = vmatprep.subr.mxu0 0.0
    %514 = vmatpush1.msra.mxu0 0.0
    %515 = vmatprep.subr.mxu0 0.0
    %516 = vmatpush1.msra.mxu0 0.0
    %517 = vmatprep.subr.mxu0 0.0
    %518 = vmatpush1.msra.mxu0 0.0
    %519 = vmatprep.subr.mxu0 0.0
    %520 = vmatpush1.msra.mxu0 0.0
    %521 = vmatprep.subr.mxu0 0.0
    %522 = vmatpush1.msra.mxu0 0.0
    %523 = vmatprep.subr.mxu0 0.0
    %524 = vmatpush1.msra.mxu0 0.0
    %525 = vmatprep.subr.mxu0 0.0
    %526 = vmatpush1.msra.mxu0 0.0
    %527 = vmatprep.subr.mxu0 0.0
    %528 = vmatpush1.msra.mxu0 0.0
    %529 = vmatprep.subr.mxu0 0.0
    %530 = vmatpush1.msra.mxu0 0.0
    %531 = vmatprep.subr.mxu0 0.0
    %532 = vmatpush1.msra.mxu0 0.0
    %533 = vmatprep.subr.mxu0 0.0
    %534 = vmatpush1.msra.mxu0 0.0
    %535 = vmatprep.subr.mxu0 0.0
    %536 = vmatpush1.msra.mxu0 0.0
    %537 = vmatprep.mubr.f32.mxu0 0.0
    %538 = vmatmul.mubr.f32.gmra.mrb[0].mxu0 %v287
    %v539 = vpop.f32.mrb[0].mxu0
    %v540 = vadd.f32 %v472, %v539
    %v541 = vpop.f32.mrb[0].mxu0
    %542 = vmatprep.mubr.f32.mxu0 0.0
    %543 = vmatmul.mubr.f32.gmra.mrb[0].mxu0 %v290
    %v544 = vpop.f32.mrb[0].mxu0
    %v545 = vadd.f32 %v472, %v544
    %v546 = vpop.f32.mrb[0].mxu0
    %547 = vmatprep.mubr.f32.mxu0 0.0
    %548 = vmatmul.mubr.f32.gmra.mrb[0].mxu0 %v287
    %v549 = vpop.f32.mrb[0].mxu0
    %v550 = vadd.f32 %v472, %v549
    %v551 = vpop.f32.mrb[0].mxu0
    %552 = vmatprep.mubr.f32.mxu0 0.0
    %553 = vmatmul.mubr.f32.gmra.mrb[0].mxu0 %v293
    %v554 = vpop.f32.mrb[0].mxu0
    %v555 = vadd.f32 %v472, %v554
    %v556 = vpop.f32.mrb[0].mxu0
    %557 = vdwg.mxu0
    %v558 = vmul.f32 %v451, %v34
    %v559 = vmul.f32 %v456, %v34
    %v560 = vmul.f32 %v461, %v34
    %v561 = vmul.f32 %v466, %v34
    %v563 = vsel %vm285, %v362, 0
    %v566 = vsel %vm285, %v367, 0
    %v569 = vsel %vm285, %v372, 0
    %v572 = vsel %vm285, %v377, 0
    %v575 = vsel %vm285, %v558, 0
    %v578 = vsel %vm285, %v559, 0
    %v581 = vsel %vm285, %v560, 0
    %v584 = vsel %vm285, %v561, 0
    %586 = vmatprep.subr.mxu0 0.0
    %587 = vmatpush1.xpose.msra.mxu0 %v575
    %588 = vmatprep.subr.mxu0 0.0
    %589 = vmatpush1.xpose.msra.mxu0 %v578
    %590 = vmatprep.subr.mxu0 0.0
    %591 = vmatpush1.xpose.msra.mxu0 %v581
    %592 = vmatprep.subr.mxu0 0.0
    %593 = vmatpush1.xpose.msra.mxu0 %v584
    %594 = vmatprep.subr.mxu0 0.0
    %595 = vmatpush1.xpose.msra.mxu0 0.0
    %596 = vmatprep.subr.mxu0 0.0
    %597 = vmatpush1.xpose.msra.mxu0 0.0
    %598 = vmatprep.subr.mxu0 0.0
    %599 = vmatpush1.xpose.msra.mxu0 0.0
    %600 = vmatprep.subr.mxu0 0.0
    %601 = vmatpush1.xpose.msra.mxu0 0.0
    %602 = vmatprep.subr.mxu0 0.0
    %603 = vmatpush1.xpose.msra.mxu0 0.0
    %604 = vmatprep.subr.mxu0 0.0
    %605 = vmatpush1.xpose.msra.mxu0 0.0
    %606 = vmatprep.subr.mxu0 0.0
    %607 = vmatpush1.xpose.msra.mxu0 0.0
    %608 = vmatprep.subr.mxu0 0.0
    %609 = vmatpush1.xpose.msra.mxu0 0.0
    %610 = vmatprep.subr.mxu0 0.0
    %611 = vmatpush1.xpose.msra.mxu0 0.0
    %612 = vmatprep.subr.mxu0 0.0
    %613 = vmatpush1.xpose.msra.mxu0 0.0
    %614 = vmatprep.subr.mxu0 0.0
    %615 = vmatpush1.xpose.msra.mxu0 0.0
    %616 = vmatprep.subr.mxu0 0.0
    %617 = vmatpush1.xpose.msra.mxu0 0.0
    %618 = vmatprep.subr.mxu0 0.0
    %619 = vmatpush1.xpose.msra.mxu0 0.0
    %620 = vmatprep.subr.mxu0 0.0
    %621 = vmatpush1.xpose.msra.mxu0 0.0
    %622 = vmatprep.subr.mxu0 0.0
    %623 = vmatpush1.xpose.msra.mxu0 0.0
    %624 = vmatprep.subr.mxu0 0.0
    %625 = vmatpush1.xpose.msra.mxu0 0.0
    %626 = vmatprep.subr.mxu0 0.0
    %627 = vmatpush1.xpose.msra.mxu0 0.0
    %628 = vmatprep.subr.mxu0 0.0
    %629 = vmatpush1.xpose.msra.mxu0 0.0
    %630 = vmatprep.subr.mxu0 0.0
    %631 = vmatpush1.xpose.msra.mxu0 0.0
    %632 = vmatprep.subr.mxu0 0.0
    %633 = vmatpush1.xpose.msra.mxu0 0.0
    %634 = vmatprep.subr.mxu0 0.0
    %635 = vmatpush1.xpose.msra.mxu0 0.0
    %636 = vmatprep.subr.mxu0 0.0
    %637 = vmatpush1.xpose.msra.mxu0 0.0
    %638 = vmatprep.subr.mxu0 0.0
    %639 = vmatpush1.xpose.msra.mxu0 0.0
    %640 = vmatprep.subr.mxu0 0.0
    %641 = vmatpush1.xpose.msra.mxu0 0.0
    %642 = vmatprep.subr.mxu0 0.0
    %643 = vmatpush1.xpose.msra.mxu0 0.0
    %644 = vmatprep.subr.mxu0 0.0
    %645 = vmatpush1.xpose.msra.mxu0 0.0
    %646 = vmatprep.subr.mxu0 0.0
    %647 = vmatpush1.xpose.msra.mxu0 0.0
    %648 = vmatprep.subr.mxu0 0.0
    %649 = vmatpush1.xpose.msra.mxu0 0.0
    %650 = vmatprep.mubr.f32.mxu0 0.0
    %651 = vmatmul.mubr.f32.gmra.mrb[0].mxu0 %v563
    %v652 = vpop.f32.mrb[0].mxu0
    %v653 = vadd.f32 0.0, %v652
    %v654 = vpop.f32.mrb[0].mxu0
    %655 = vmatprep.mubr.f32.mxu0 0.0
    %656 = vmatmul.mubr.f32.gmra.mrb[0].mxu0 %v566
    %v657 = vpop.f32.mrb[0].mxu0
    %v658 = vadd.f32 0.0, %v657
    %v659 = vpop.f32.mrb[0].mxu0
    %660 = vmatprep.mubr.f32.mxu0 0.0
    %661 = vmatmul.mubr.f32.gmra.mrb[0].mxu0 %v569
    %v662 = vpop.f32.mrb[0].mxu0
    %v663 = vadd.f32 0.0, %v662
    %v664 = vpop.f32.mrb[0].mxu0
    %665 = vmatprep.mubr.f32.mxu0 0.0
    %666 = vmatmul.mubr.f32.gmra.mrb[0].mxu0 %v572
    %v667 = vpop.f32.mrb[0].mxu0
    %v668 = vadd.f32 0.0, %v667
    %v669 = vpop.f32.mrb[0].mxu0
    %670 = vdwg.mxu0
    %v671 = vmul.f32 %v653, 0.35355338
    %v672 = vmul.f32 %v658, 0.35355338
    %v673 = vmul.f32 %v663, 0.35355338
    %v674 = vmul.f32 %v668, 0.35355338
    %v675 = vadd.f32 %v671, %v64
    %v676 = vadd.f32 %v672, %v65
    %v677 = vadd.f32 %v673, %v66
    %v678 = vadd.f32 %v674, %v67
    %v679 = vsel %vm285, %v675, -inf
    %680 = vmax.xlane.f32.xlu0 %v679
    %v681 = vpop.xlane.xlu0 %680
    %v682 = vsel %vm285, %v676, -inf
    %683 = vmax.xlane.f32.xlu0 %v682
    %v684 = vpop.xlane.xlu0 %683
    %v685 = vsel %vm285, %v677, -inf
    %686 = vmax.xlane.f32.xlu0 %v685
    %v687 = vpop.xlane.xlu0 %686
    %v688 = vsel %vm285, %v678, -inf
    %689 = vmax.xlane.f32.xlu0 %v688
    %v690 = vpop.xlane.xlu0 %689
    %v691 = vsub.f32 %v675, %v681
    %v692 = vsub.f32 %v676, %v684
    %v693 = vsub.f32 %v677, %v687
    %v694 = vsub.f32 %v678, %v690
    %v695 = vmul.f32 %v691, 1.442695
    %v696 = vpow.pop %v695
    %v697 = vmul.f32 %v692, 1.442695
    %v698 = vpow.pop %v697
    %v699 = vmul.f32 %v693, 1.442695
    %v700 = vpow.pop %v699
    %v701 = vmul.f32 %v694, 1.442695
    %v702 = vpow.pop %v701
    %v703 = vsel %vm285, %v696, 0.0
    %704 = vadd.xlane.f32.xlu0 %v703
    %v705 = vpop.xlane.xlu0 %704
    %v706 = vsel %vm285, %v698, 0.0
    %707 = vadd.xlane.f32.xlu0 %v706
    %v708 = vpop.xlane.xlu0 %707
    %v709 = vsel %vm285, %v700, 0.0
    %710 = vadd.xlane.f32.xlu0 %v709
    %v711 = vpop.xlane.xlu0 %710
    %v712 = vsel %vm285, %v702, 0.0
    %713 = vadd.xlane.f32.xlu0 %v712
    %v714 = vpop.xlane.xlu0 %713
    %v715 = vrcp.pop %v705
    %v716 = vrcp.pop %v708
    %v717 = vrcp.pop %v711
    %v718 = vrcp.pop %v714
    %v719 = vmul.f32 %v696, %v715
    %v720 = vmul.f32 %v698, %v716
    %v721 = vmul.f32 %v700, %v717
    %v722 = vmul.f32 %v702, %v718
    %v723 = vmul.f32 %v540, %v34
    %v724 = vmul.f32 %v545, %v34
    %v725 = vmul.f32 %v550, %v34
    %v726 = vmul.f32 %v555, %v34
    %v727 = vmul.f32 %v451, %v39
    %v728 = vmul.f32 %v456, %v39
    %v729 = vmul.f32 %v461, %v39
    %v730 = vmul.f32 %v466, %v39
    %v732 = vsel %vm285, %v727, 0
    %v735 = vsel %vm285, %v728, 0
    %v738 = vsel %vm285, %v729, 0
    %v741 = vsel %vm285, %v730, 0
    %743 = vmatprep.subr.mxu0 0.0
    %744 = vmatpush1.xpose.msra.mxu0 %v732
    %745 = vmatprep.subr.mxu0 0.0
    %746 = vmatpush1.xpose.msra.mxu0 %v735
    %747 = vmatprep.subr.mxu0 0.0
    %748 = vmatpush1.xpose.msra.mxu0 %v738
    %749 = vmatprep.subr.mxu0 0.0
    %750 = vmatpush1.xpose.msra.mxu0 %v741
    %751 = vmatprep.subr.mxu0 0.0
    %752 = vmatpush1.xpose.msra.mxu0 0.0
    %753 = vmatprep.subr.mxu0 0.0
    %754 = vmatpush1.xpose.msra.mxu0 0.0
    %755 = vmatprep.subr.mxu0 0.0
    %756 = vmatpush1.xpose.msra.mxu0 0.0
    %757 = vmatprep.subr.mxu0 0.0
    %758 = vmatpush1.xpose.msra.mxu0 0.0
    %759 = vmatprep.subr.mxu0 0.0
    %760 = vmatpush1.xpose.msra.mxu0 0.0
    %761 = vmatprep.subr.mxu0 0.0
    %762 = vmatpush1.xpose.msra.mxu0 0.0
    %763 = vmatprep.subr.mxu0 0.0
    %764 = vmatpush1.xpose.msra.mxu0 0.0
    %765 = vmatprep.subr.mxu0 0.0
    %766 = vmatpush1.xpose.msra.mxu0 0.0
    %767 = vmatprep.subr.mxu0 0.0
    %768 = vmatpush1.xpose.msra.mxu0 0.0
    %769 = vmatprep.subr.mxu0 0.0
    %770 = vmatpush1.xpose.msra.mxu0 0.0
    %771 = vmatprep.subr.mxu0 0.0
    %772 = vmatpush1.xpose.msra.mxu0 0.0
    %773 = vmatprep.subr.mxu0 0.0
    %774 = vmatpush1.xpose.msra.mxu0 0.0
    %775 = vmatprep.subr.mxu0 0.0
    %776 = vmatpush1.xpose.msra.mxu0 0.0
    %777 = vmatprep.subr.mxu0 0.0
    %778 = vmatpush1.xpose.msra.mxu0 0.0
    %779 = vmatprep.subr.mxu0 0.0
    %780 = vmatpush1.xpose.msra.mxu0 0.0
    %781 = vmatprep.subr.mxu0 0.0
    %782 = vmatpush1.xpose.msra.mxu0 0.0
    %783 = vmatprep.subr.mxu0 0.0
    %784 = vmatpush1.xpose.msra.mxu0 0.0
    %785 = vmatprep.subr.mxu0 0.0
    %786 = vmatpush1.xpose.msra.mxu0 0.0
    %787 = vmatprep.subr.mxu0 0.0
    %788 = vmatpush1.xpose.msra.mxu0 0.0
    %789 = vmatprep.subr.mxu0 0.0
    %790 = vmatpush1.xpose.msra.mxu0 0.0
    %791 = vmatprep.subr.mxu0 0.0
    %792 = vmatpush1.xpose.msra.mxu0 0.0
    %793 = vmatprep.subr.mxu0 0.0
    %794 = vmatpush1.xpose.msra.mxu0 0.0
    %795 = vmatprep.subr.mxu0 0.0
    %796 = vmatpush1.xpose.msra.mxu0 0.0
    %797 = vmatprep.subr.mxu0 0.0
    %798 = vmatpush1.xpose.msra.mxu0 0.0
    %799 = vmatprep.subr.mxu0 0.0
    %800 = vmatpush1.xpose.msra.mxu0 0.0
    %801 = vmatprep.subr.mxu0 0.0
    %802 = vmatpush1.xpose.msra.mxu0 0.0
    %803 = vmatprep.subr.mxu0 0.0
    %804 = vmatpush1.xpose.msra.mxu0 0.0
    %805 = vmatprep.subr.mxu0 0.0
    %806 = vmatpush1.xpose.msra.mxu0 0.0
    %807 = vmatprep.mubr.f32.mxu0 0.0
    %808 = vmatmul.mubr.f32.gmra.mrb[0].mxu0 %v563
    %v809 = vpop.f32.mrb[0].mxu0
    %v810 = vadd.f32 0.0, %v809
    %v811 = vpop.f32.mrb[0].mxu0
    %812 = vmatprep.mubr.f32.mxu0 0.0
    %813 = vmatmul.mubr.f32.gmra.mrb[0].mxu0 %v566
    %v814 = vpop.f32.mrb[0].mxu0
    %v815 = vadd.f32 0.0, %v814
    %v816 = vpop.f32.mrb[0].mxu0
    %817 = vmatprep.mubr.f32.mxu0 0.0
    %818 = vmatmul.mubr.f32.gmra.mrb[0].mxu0 %v569
    %v819 = vpop.f32.mrb[0].mxu0
    %v820 = vadd.f32 0.0, %v819
    %v821 = vpop.f32.mrb[0].mxu0
    %822 = vmatprep.mubr.f32.mxu0 0.0
    %823 = vmatmul.mubr.f32.gmra.mrb[0].mxu0 %v572
    %v824 = vpop.f32.mrb[0].mxu0
    %v825 = vadd.f32 0.0, %v824
    %v826 = vpop.f32.mrb[0].mxu0
    %827 = vdwg.mxu0
    %v828 = vmul.f32 %v810, 0.35355338
    %v829 = vmul.f32 %v815, 0.35355338
    %v830 = vmul.f32 %v820, 0.35355338
    %v831 = vmul.f32 %v825, 0.35355338
    %v832 = vadd.f32 %v828, %v64
    %v833 = vadd.f32 %v829, %v65
    %v834 = vadd.f32 %v830, %v66
    %v835 = vadd.f32 %v831, %v67
    %v836 = vsel %vm285, %v832, -inf
    %837 = vmax.xlane.f32.xlu0 %v836
    %v838 = vpop.xlane.xlu0 %837
    %v839 = vsel %vm285, %v833, -inf
    %840 = vmax.xlane.f32.xlu0 %v839
    %v841 = vpop.xlane.xlu0 %840
    %v842 = vsel %vm285, %v834, -inf
    %843 = vmax.xlane.f32.xlu0 %v842
    %v844 = vpop.xlane.xlu0 %843
    %v845 = vsel %vm285, %v835, -inf
    %846 = vmax.xlane.f32.xlu0 %v845
    %v847 = vpop.xlane.xlu0 %846
    %v848 = vsub.f32 %v832, %v838
    %v849 = vsub.f32 %v833, %v841
    %v850 = vsub.f32 %v834, %v844
    %v851 = vsub.f32 %v835, %v847
    %v852 = vmul.f32 %v848, 1.442695
    %v853 = vpow.pop %v852
    %v854 = vmul.f32 %v849, 1.442695
    %v855 = vpow.pop %v854
    %v856 = vmul.f32 %v850, 1.442695
    %v857 = vpow.pop %v856
    %v858 = vmul.f32 %v851, 1.442695
    %v859 = vpow.pop %v858
    %v860 = vsel %vm285, %v853, 0.0
    %861 = vadd.xlane.f32.xlu0 %v860
    %v862 = vpop.xlane.xlu0 %861
    %v863 = vsel %vm285, %v855, 0.0
    %864 = vadd.xlane.f32.xlu0 %v863
    %v865 = vpop.xlane.xlu0 %864
    %v866 = vsel %vm285, %v857, 0.0
    %867 = vadd.xlane.f32.xlu0 %v866
    %v868 = vpop.xlane.xlu0 %867
    %v869 = vsel %vm285, %v859, 0.0
    %870 = vadd.xlane.f32.xlu0 %v869
    %v871 = vpop.xlane.xlu0 %870
    %v872 = vrcp.pop %v862
    %v873 = vrcp.pop %v865
    %v874 = vrcp.pop %v868
    %v875 = vrcp.pop %v871
    %v876 = vmul.f32 %v853, %v872
    %v877 = vmul.f32 %v855, %v873
    %v878 = vmul.f32 %v857, %v874
    %v879 = vmul.f32 %v859, %v875
    %v880 = vmul.f32 %v540, %v39
    %v881 = vmul.f32 %v545, %v39
    %v882 = vmul.f32 %v550, %v39
    %v883 = vmul.f32 %v555, %v39
    %v885 = vsel %vm285, %v876, 0
    %v888 = vsel %vm285, %v877, 0
    %v891 = vsel %vm285, %v878, 0
    %v894 = vsel %vm285, %v879, 0
    %896 = vmatprep.subr.mxu0 0.0
    %897 = vmatpush1.msra.mxu0 %v880
    %898 = vmatprep.subr.mxu0 0.0
    %899 = vmatpush1.msra.mxu0 %v881
    %900 = vmatprep.subr.mxu0 0.0
    %901 = vmatpush1.msra.mxu0 %v882
    %902 = vmatprep.subr.mxu0 0.0
    %903 = vmatpush1.msra.mxu0 %v883
    %904 = vmatprep.subr.mxu0 0.0
    %905 = vmatpush1.msra.mxu0 0.0
    %906 = vmatprep.subr.mxu0 0.0
    %907 = vmatpush1.msra.mxu0 0.0
    %908 = vmatprep.subr.mxu0 0.0
    %909 = vmatpush1.msra.mxu0 0.0
    %910 = vmatprep.subr.mxu0 0.0
    %911 = vmatpush1.msra.mxu0 0.0
    %912 = vmatprep.subr.mxu0 0.0
    %913 = vmatpush1.msra.mxu0 0.0
    %914 = vmatprep.subr.mxu0 0.0
    %915 = vmatpush1.msra.mxu0 0.0
    %916 = vmatprep.subr.mxu0 0.0
    %917 = vmatpush1.msra.mxu0 0.0
    %918 = vmatprep.subr.mxu0 0.0
    %919 = vmatpush1.msra.mxu0 0.0
    %920 = vmatprep.subr.mxu0 0.0
    %921 = vmatpush1.msra.mxu0 0.0
    %922 = vmatprep.subr.mxu0 0.0
    %923 = vmatpush1.msra.mxu0 0.0
    %924 = vmatprep.subr.mxu0 0.0
    %925 = vmatpush1.msra.mxu0 0.0
    %926 = vmatprep.subr.mxu0 0.0
    %927 = vmatpush1.msra.mxu0 0.0
    %928 = vmatprep.subr.mxu0 0.0
    %929 = vmatpush1.msra.mxu0 0.0
    %930 = vmatprep.subr.mxu0 0.0
    %931 = vmatpush1.msra.mxu0 0.0
    %932 = vmatprep.subr.mxu0 0.0
    %933 = vmatpush1.msra.mxu0 0.0
    %934 = vmatprep.subr.mxu0 0.0
    %935 = vmatpush1.msra.mxu0 0.0
    %936 = vmatprep.subr.mxu0 0.0
    %937 = vmatpush1.msra.mxu0 0.0
    %938 = vmatprep.subr.mxu0 0.0
    %939 = vmatpush1.msra.mxu0 0.0
    %940 = vmatprep.subr.mxu0 0.0
    %941 = vmatpush1.msra.mxu0 0.0
    %942 = vmatprep.subr.mxu0 0.0
    %943 = vmatpush1.msra.mxu0 0.0
    %944 = vmatprep.subr.mxu0 0.0
    %945 = vmatpush1.msra.mxu0 0.0
    %946 = vmatprep.subr.mxu0 0.0
    %947 = vmatpush1.msra.mxu0 0.0
    %948 = vmatprep.subr.mxu0 0.0
    %949 = vmatpush1.msra.mxu0 0.0
    %950 = vmatprep.subr.mxu0 0.0
    %951 = vmatpush1.msra.mxu0 0.0
    %952 = vmatprep.subr.mxu0 0.0
    %953 = vmatpush1.msra.mxu0 0.0
    %954 = vmatprep.subr.mxu0 0.0
    %955 = vmatpush1.msra.mxu0 0.0
    %956 = vmatprep.subr.mxu0 0.0
    %957 = vmatpush1.msra.mxu0 0.0
    %958 = vmatprep.subr.mxu0 0.0
    %959 = vmatpush1.msra.mxu0 0.0
    %960 = vmatprep.mubr.f32.mxu0 0.0
    %961 = vmatmul.mubr.f32.gmra.mrb[0].mxu0 %v885
    %v962 = vpop.f32.mrb[0].mxu0
    %v963 = vadd.f32 0.0, %v962
    %v964 = vpop.f32.mrb[0].mxu0
    %965 = vmatprep.mubr.f32.mxu0 0.0
    %966 = vmatmul.mubr.f32.gmra.mrb[0].mxu0 %v888
    %v967 = vpop.f32.mrb[0].mxu0
    %v968 = vadd.f32 0.0, %v967
    %v969 = vpop.f32.mrb[0].mxu0
    %970 = vmatprep.mubr.f32.mxu0 0.0
    %971 = vmatmul.mubr.f32.gmra.mrb[0].mxu0 %v891
    %v972 = vpop.f32.mrb[0].mxu0
    %v973 = vadd.f32 0.0, %v972
    %v974 = vpop.f32.mrb[0].mxu0
    %975 = vmatprep.mubr.f32.mxu0 0.0
    %976 = vmatmul.mubr.f32.gmra.mrb[0].mxu0 %v894
    %v977 = vpop.f32.mrb[0].mxu0
    %v978 = vadd.f32 0.0, %v977
    %v979 = vpop.f32.mrb[0].mxu0
    %980 = vdwg.mxu0
    %v982 = vsel %vm285, %v719, 0
    %v985 = vsel %vm285, %v720, 0
    %v988 = vsel %vm285, %v721, 0
    %v991 = vsel %vm285, %v722, 0
    %993 = vmatprep.subr.mxu0 0.0
    %994 = vmatpush1.msra.mxu0 %v723
    %995 = vmatprep.subr.mxu0 0.0
    %996 = vmatpush1.msra.mxu0 %v724
    %997 = vmatprep.subr.mxu0 0.0
    %998 = vmatpush1.msra.mxu0 %v725
    %999 = vmatprep.subr.mxu0 0.0
    %1000 = vmatpush1.msra.mxu0 %v726
    %1001 = vmatprep.subr.mxu0 0.0
    %1002 = vmatpush1.msra.mxu0 0.0
    %1003 = vmatprep.subr.mxu0 0.0
    %1004 = vmatpush1.msra.mxu0 0.0
    %1005 = vmatprep.subr.mxu0 0.0
    %1006 = vmatpush1.msra.mxu0 0.0
    %1007 = vmatprep.subr.mxu0 0.0
    %1008 = vmatpush1.msra.mxu0 0.0
    %1009 = vmatprep.subr.mxu0 0.0
    %1010 = vmatpush1.msra.mxu0 0.0
    %1011 = vmatprep.subr.mxu0 0.0
    %1012 = vmatpush1.msra.mxu0 0.0
    %1013 = vmatprep.subr.mxu0 0.0
    %1014 = vmatpush1.msra.mxu0 0.0
    %1015 = vmatprep.subr.mxu0 0.0
    %1016 = vmatpush1.msra.mxu0 0.0
    %1017 = vmatprep.subr.mxu0 0.0
    %1018 = vmatpush1.msra.mxu0 0.0
    %1019 = vmatprep.subr.mxu0 0.0
    %1020 = vmatpush1.msra.mxu0 0.0
    %1021 = vmatprep.subr.mxu0 0.0
    %1022 = vmatpush1.msra.mxu0 0.0
    %1023 = vmatprep.subr.mxu0 0.0
    %1024 = vmatpush1.msra.mxu0 0.0
    %1025 = vmatprep.subr.mxu0 0.0
    %1026 = vmatpush1.msra.mxu0 0.0
    %1027 = vmatprep.subr.mxu0 0.0
    %1028 = vmatpush1.msra.mxu0 0.0
    %1029 = vmatprep.subr.mxu0 0.0
    %1030 = vmatpush1.msra.mxu0 0.0
    %1031 = vmatprep.subr.mxu0 0.0
    %1032 = vmatpush1.msra.mxu0 0.0
    %1033 = vmatprep.subr.mxu0 0.0
    %1034 = vmatpush1.msra.mxu0 0.0
    %1035 = vmatprep.subr.mxu0 0.0
    %1036 = vmatpush1.msra.mxu0 0.0
    %1037 = vmatprep.subr.mxu0 0.0
    %1038 = vmatpush1.msra.mxu0 0.0
    %1039 = vmatprep.subr.mxu0 0.0
    %1040 = vmatpush1.msra.mxu0 0.0
    %1041 = vmatprep.subr.mxu0 0.0
    %1042 = vmatpush1.msra.mxu0 0.0
    %1043 = vmatprep.subr.mxu0 0.0
    %1044 = vmatpush1.msra.mxu0 0.0
    %1045 = vmatprep.subr.mxu0 0.0
    %1046 = vmatpush1.msra.mxu0 0.0
    %1047 = vmatprep.subr.mxu0 0.0
    %1048 = vmatpush1.msra.mxu0 0.0
    %1049 = vmatprep.subr.mxu0 0.0
    %1050 = vmatpush1.msra.mxu0 0.0
    %1051 = vmatprep.subr.mxu0 0.0
    %1052 = vmatpush1.msra.mxu0 0.0
    %1053 = vmatprep.subr.mxu0 0.0
    %1054 = vmatpush1.msra.mxu0 0.0
    %1055 = vmatprep.subr.mxu0 0.0
    %1056 = vmatpush1.msra.mxu0 0.0
    %1057 = vmatprep.mubr.f32.mxu0 0.0
    %1058 = vmatmul.mubr.f32.gmra.mrb[0].mxu0 %v982
    %v1059 = vpop.f32.mrb[0].mxu0
    %v1060 = vadd.f32 %v963, %v1059
    %v1061 = vpop.f32.mrb[0].mxu0
    %1062 = vmatprep.mubr.f32.mxu0 0.0
    %1063 = vmatmul.mubr.f32.gmra.mrb[0].mxu0 %v985
    %v1064 = vpop.f32.mrb[0].mxu0
    %v1065 = vadd.f32 %v968, %v1064
    %v1066 = vpop.f32.mrb[0].mxu0
    %1067 = vmatprep.mubr.f32.mxu0 0.0
    %1068 = vmatmul.mubr.f32.gmra.mrb[0].mxu0 %v988
    %v1069 = vpop.f32.mrb[0].mxu0
    %v1070 = vadd.f32 %v973, %v1069
    %v1071 = vpop.f32.mrb[0].mxu0
    %1072 = vmatprep.mubr.f32.mxu0 0.0
    %1073 = vmatmul.mubr.f32.gmra.mrb[0].mxu0 %v991
    %v1074 = vpop.f32.mrb[0].mxu0
    %v1075 = vadd.f32 %v978, %v1074
    %v1076 = vpop.f32.mrb[0].mxu0
    %1077 = vdwg.mxu0
    %v1078 = vmul.f32 %v451, %v44
    %v1079 = vmul.f32 %v456, %v44
    %v1080 = vmul.f32 %v461, %v44
    %v1081 = vmul.f32 %v466, %v44
    %v1083 = vsel %vm285, %v1078, 0
    %v1086 = vsel %vm285, %v1079, 0
    %v1089 = vsel %vm285, %v1080, 0
    %v1092 = vsel %vm285, %v1081, 0
    %1094 = vmatprep.subr.mxu0 0.0
    %1095 = vmatpush1.xpose.msra.mxu0 %v1083
    %1096 = vmatprep.subr.mxu0 0.0
    %1097 = vmatpush1.xpose.msra.mxu0 %v1086
    %1098 = vmatprep.subr.mxu0 0.0
    %1099 = vmatpush1.xpose.msra.mxu0 %v1089
    %1100 = vmatprep.subr.mxu0 0.0
    %1101 = vmatpush1.xpose.msra.mxu0 %v1092
    %1102 = vmatprep.subr.mxu0 0.0
    %1103 = vmatpush1.xpose.msra.mxu0 0.0
    %1104 = vmatprep.subr.mxu0 0.0
    %1105 = vmatpush1.xpose.msra.mxu0 0.0
    %1106 = vmatprep.subr.mxu0 0.0
    %1107 = vmatpush1.xpose.msra.mxu0 0.0
    %1108 = vmatprep.subr.mxu0 0.0
    %1109 = vmatpush1.xpose.msra.mxu0 0.0
    %1110 = vmatprep.subr.mxu0 0.0
    %1111 = vmatpush1.xpose.msra.mxu0 0.0
    %1112 = vmatprep.subr.mxu0 0.0
    %1113 = vmatpush1.xpose.msra.mxu0 0.0
    %1114 = vmatprep.subr.mxu0 0.0
    %1115 = vmatpush1.xpose.msra.mxu0 0.0
    %1116 = vmatprep.subr.mxu0 0.0
    %1117 = vmatpush1.xpose.msra.mxu0 0.0
    %1118 = vmatprep.subr.mxu0 0.0
    %1119 = vmatpush1.xpose.msra.mxu0 0.0
    %1120 = vmatprep.subr.mxu0 0.0
    %1121 = vmatpush1.xpose.msra.mxu0 0.0
    %1122 = vmatprep.subr.mxu0 0.0
    %1123 = vmatpush1.xpose.msra.mxu0 0.0
    %1124 = vmatprep.subr.mxu0 0.0
    %1125 = vmatpush1.xpose.msra.mxu0 0.0
    %1126 = vmatprep.subr.mxu0 0.0
    %1127 = vmatpush1.xpose.msra.mxu0 0.0
    %1128 = vmatprep.subr.mxu0 0.0
    %1129 = vmatpush1.xpose.msra.mxu0 0.0
    %1130 = vmatprep.subr.mxu0 0.0
    %1131 = vmatpush1.xpose.msra.mxu0 0.0
    %1132 = vmatprep.subr.mxu0 0.0
    %1133 = vmatpush1.xpose.msra.mxu0 0.0
    %1134 = vmatprep.subr.mxu0 0.0
    %1135 = vmatpush1.xpose.msra.mxu0 0.0
    %1136 = vmatprep.subr.mxu0 0.0
    %1137 = vmatpush1.xpose.msra.mxu0 0.0
    %1138 = vmatprep.subr.mxu0 0.0
    %1139 = vmatpush1.xpose.msra.mxu0 0.0
    %1140 = vmatprep.subr.mxu0 0.0
    %1141 = vmatpush1.xpose.msra.mxu0 0.0
    %1142 = vmatprep.subr.mxu0 0.0
    %1143 = vmatpush1.xpose.msra.mxu0 0.0
    %1144 = vmatprep.subr.mxu0 0.0
    %1145 = vmatpush1.xpose.msra.mxu0 0.0
    %1146 = vmatprep.subr.mxu0 0.0
    %1147 = vmatpush1.xpose.msra.mxu0 0.0
    %1148 = vmatprep.subr.mxu0 0.0
    %1149 = vmatpush1.xpose.msra.mxu0 0.0
    %1150 = vmatprep.subr.mxu0 0.0
    %1151 = vmatpush1.xpose.msra.mxu0 0.0
    %1152 = vmatprep.subr.mxu0 0.0
    %1153 = vmatpush1.xpose.msra.mxu0 0.0
    %1154 = vmatprep.subr.mxu0 0.0
    %1155 = vmatpush1.xpose.msra.mxu0 0.0
    %1156 = vmatprep.subr.mxu0 0.0
    %1157 = vmatpush1.xpose.msra.mxu0 0.0
    %1158 = vmatprep.mubr.f32.mxu0 0.0
    %1159 = vmatmul.mubr.f32.gmra.mrb[0].mxu0 %v563
    %v1160 = vpop.f32.mrb[0].mxu0
    %v1161 = vadd.f32 0.0, %v1160
    %v1162 = vpop.f32.mrb[0].mxu0
    %1163 = vmatprep.mubr.f32.mxu0 0.0
    %1164 = vmatmul.mubr.f32.gmra.mrb[0].mxu0 %v566
    %v1165 = vpop.f32.mrb[0].mxu0
    %v1166 = vadd.f32 0.0, %v1165
    %v1167 = vpop.f32.mrb[0].mxu0
    %1168 = vmatprep.mubr.f32.mxu0 0.0
    %1169 = vmatmul.mubr.f32.gmra.mrb[0].mxu0 %v569
    %v1170 = vpop.f32.mrb[0].mxu0
    %v1171 = vadd.f32 0.0, %v1170
    %v1172 = vpop.f32.mrb[0].mxu0
    %1173 = vmatprep.mubr.f32.mxu0 0.0
    %1174 = vmatmul.mubr.f32.gmra.mrb[0].mxu0 %v572
    %v1175 = vpop.f32.mrb[0].mxu0
    %v1176 = vadd.f32 0.0, %v1175
    %v1177 = vpop.f32.mrb[0].mxu0
    %1178 = vdwg.mxu0
    %v1179 = vmul.f32 %v1161, 0.35355338
    %v1180 = vmul.f32 %v1166, 0.35355338
    %v1181 = vmul.f32 %v1171, 0.35355338
    %v1182 = vmul.f32 %v1176, 0.35355338
    %v1183 = vadd.f32 %v1179, %v64
    %v1184 = vadd.f32 %v1180, %v65
    %v1185 = vadd.f32 %v1181, %v66
    %v1186 = vadd.f32 %v1182, %v67
    %v1187 = vsel %vm285, %v1183, -inf
    %1188 = vmax.xlane.f32.xlu0 %v1187
    %v1189 = vpop.xlane.xlu0 %1188
    %v1190 = vsel %vm285, %v1184, -inf
    %1191 = vmax.xlane.f32.xlu0 %v1190
    %v1192 = vpop.xlane.xlu0 %1191
    %v1193 = vsel %vm285, %v1185, -inf
    %1194 = vmax.xlane.f32.xlu0 %v1193
    %v1195 = vpop.xlane.xlu0 %1194
    %v1196 = vsel %vm285, %v1186, -inf
    %1197 = vmax.xlane.f32.xlu0 %v1196
    %v1198 = vpop.xlane.xlu0 %1197
    %v1199 = vsub.f32 %v1183, %v1189
    %v1200 = vsub.f32 %v1184, %v1192
    %v1201 = vsub.f32 %v1185, %v1195
    %v1202 = vsub.f32 %v1186, %v1198
    %v1203 = vmul.f32 %v1199, 1.442695
    %v1204 = vpow.pop %v1203
    %v1205 = vmul.f32 %v1200, 1.442695
    %v1206 = vpow.pop %v1205
    %v1207 = vmul.f32 %v1201, 1.442695
    %v1208 = vpow.pop %v1207
    %v1209 = vmul.f32 %v1202, 1.442695
    %v1210 = vpow.pop %v1209
    %v1211 = vsel %vm285, %v1204, 0.0
    %1212 = vadd.xlane.f32.xlu0 %v1211
    %v1213 = vpop.xlane.xlu0 %1212
    %v1214 = vsel %vm285, %v1206, 0.0
    %1215 = vadd.xlane.f32.xlu0 %v1214
    %v1216 = vpop.xlane.xlu0 %1215
    %v1217 = vsel %vm285, %v1208, 0.0
    %1218 = vadd.xlane.f32.xlu0 %v1217
    %v1219 = vpop.xlane.xlu0 %1218
    %v1220 = vsel %vm285, %v1210, 0.0
    %1221 = vadd.xlane.f32.xlu0 %v1220
    %v1222 = vpop.xlane.xlu0 %1221
    %v1223 = vrcp.pop %v1213
    %v1224 = vrcp.pop %v1216
    %v1225 = vrcp.pop %v1219
    %v1226 = vrcp.pop %v1222
    %v1227 = vmul.f32 %v1204, %v1223
    %v1228 = vmul.f32 %v1206, %v1224
    %v1229 = vmul.f32 %v1208, %v1225
    %v1230 = vmul.f32 %v1210, %v1226
    %v1231 = vmul.f32 %v540, %v44
    %v1232 = vmul.f32 %v545, %v44
    %v1233 = vmul.f32 %v550, %v44
    %v1234 = vmul.f32 %v555, %v44
    %v1236 = vsel %vm285, %v1227, 0
    %v1239 = vsel %vm285, %v1228, 0
    %v1242 = vsel %vm285, %v1229, 0
    %v1245 = vsel %vm285, %v1230, 0
    %1247 = vmatprep.subr.mxu0 0.0
    %1248 = vmatpush1.msra.mxu0 %v1231
    %1249 = vmatprep.subr.mxu0 0.0
    %1250 = vmatpush1.msra.mxu0 %v1232
    %1251 = vmatprep.subr.mxu0 0.0
    %1252 = vmatpush1.msra.mxu0 %v1233
    %1253 = vmatprep.subr.mxu0 0.0
    %1254 = vmatpush1.msra.mxu0 %v1234
    %1255 = vmatprep.subr.mxu0 0.0
    %1256 = vmatpush1.msra.mxu0 0.0
    %1257 = vmatprep.subr.mxu0 0.0
    %1258 = vmatpush1.msra.mxu0 0.0
    %1259 = vmatprep.subr.mxu0 0.0
    %1260 = vmatpush1.msra.mxu0 0.0
    %1261 = vmatprep.subr.mxu0 0.0
    %1262 = vmatpush1.msra.mxu0 0.0
    %1263 = vmatprep.subr.mxu0 0.0
    %1264 = vmatpush1.msra.mxu0 0.0
    %1265 = vmatprep.subr.mxu0 0.0
    %1266 = vmatpush1.msra.mxu0 0.0
    %1267 = vmatprep.subr.mxu0 0.0
    %1268 = vmatpush1.msra.mxu0 0.0
    %1269 = vmatprep.subr.mxu0 0.0
    %1270 = vmatpush1.msra.mxu0 0.0
    %1271 = vmatprep.subr.mxu0 0.0
    %1272 = vmatpush1.msra.mxu0 0.0
    %1273 = vmatprep.subr.mxu0 0.0
    %1274 = vmatpush1.msra.mxu0 0.0
    %1275 = vmatprep.subr.mxu0 0.0
    %1276 = vmatpush1.msra.mxu0 0.0
    %1277 = vmatprep.subr.mxu0 0.0
    %1278 = vmatpush1.msra.mxu0 0.0
    %1279 = vmatprep.subr.mxu0 0.0
    %1280 = vmatpush1.msra.mxu0 0.0
    %1281 = vmatprep.subr.mxu0 0.0
    %1282 = vmatpush1.msra.mxu0 0.0
    %1283 = vmatprep.subr.mxu0 0.0
    %1284 = vmatpush1.msra.mxu0 0.0
    %1285 = vmatprep.subr.mxu0 0.0
    %1286 = vmatpush1.msra.mxu0 0.0
    %1287 = vmatprep.subr.mxu0 0.0
    %1288 = vmatpush1.msra.mxu0 0.0
    %1289 = vmatprep.subr.mxu0 0.0
    %1290 = vmatpush1.msra.mxu0 0.0
    %1291 = vmatprep.subr.mxu0 0.0
    %1292 = vmatpush1.msra.mxu0 0.0
    %1293 = vmatprep.subr.mxu0 0.0
    %1294 = vmatpush1.msra.mxu0 0.0
    %1295 = vmatprep.subr.mxu0 0.0
    %1296 = vmatpush1.msra.mxu0 0.0
    %1297 = vmatprep.subr.mxu0 0.0
    %1298 = vmatpush1.msra.mxu0 0.0
    %1299 = vmatprep.subr.mxu0 0.0
    %1300 = vmatpush1.msra.mxu0 0.0
    %1301 = vmatprep.subr.mxu0 0.0
    %1302 = vmatpush1.msra.mxu0 0.0
    %1303 = vmatprep.subr.mxu0 0.0
    %1304 = vmatpush1.msra.mxu0 0.0
    %1305 = vmatprep.subr.mxu0 0.0
    %1306 = vmatpush1.msra.mxu0 0.0
    %1307 = vmatprep.subr.mxu0 0.0
    %1308 = vmatpush1.msra.mxu0 0.0
    %1309 = vmatprep.subr.mxu0 0.0
    %1310 = vmatpush1.msra.mxu0 0.0
    %1311 = vmatprep.mubr.f32.mxu0 0.0
    %1312 = vmatmul.mubr.f32.gmra.mrb[0].mxu0 %v1236
    %v1313 = vpop.f32.mrb[0].mxu0
    %v1314 = vadd.f32 0.0, %v1313
    %v1315 = vpop.f32.mrb[0].mxu0
    %1316 = vmatprep.mubr.f32.mxu0 0.0
    %1317 = vmatmul.mubr.f32.gmra.mrb[0].mxu0 %v1239
    %v1318 = vpop.f32.mrb[0].mxu0
    %v1319 = vadd.f32 0.0, %v1318
    %v1320 = vpop.f32.mrb[0].mxu0
    %1321 = vmatprep.mubr.f32.mxu0 0.0
    %1322 = vmatmul.mubr.f32.gmra.mrb[0].mxu0 %v1242
    %v1323 = vpop.f32.mrb[0].mxu0
    %v1324 = vadd.f32 0.0, %v1323
    %v1325 = vpop.f32.mrb[0].mxu0
    %1326 = vmatprep.mubr.f32.mxu0 0.0
    %1327 = vmatmul.mubr.f32.gmra.mrb[0].mxu0 %v1245
    %v1328 = vpop.f32.mrb[0].mxu0
    %v1329 = vadd.f32 0.0, %v1328
    %v1330 = vpop.f32.mrb[0].mxu0
    %1331 = vdwg.mxu0
    %v1332 = vadd.f32 %v1060, %v1314
    %v1333 = vadd.f32 %v1065, %v1319
    %v1334 = vadd.f32 %v1070, %v1324
    %v1335 = vadd.f32 %v1075, %v1329
    %v1336 = vmul.f32 %v451, %v49
    %v1337 = vmul.f32 %v456, %v49
    %v1338 = vmul.f32 %v461, %v49
    %v1339 = vmul.f32 %v466, %v49
    %v1341 = vsel %vm285, %v1336, 0
    %v1344 = vsel %vm285, %v1337, 0
    %v1347 = vsel %vm285, %v1338, 0
    %v1350 = vsel %vm285, %v1339, 0
    %1352 = vmatprep.subr.mxu0 0.0
    %1353 = vmatpush1.xpose.msra.mxu0 %v1341
    %1354 = vmatprep.subr.mxu0 0.0
    %1355 = vmatpush1.xpose.msra.mxu0 %v1344
    %1356 = vmatprep.subr.mxu0 0.0
    %1357 = vmatpush1.xpose.msra.mxu0 %v1347
    %1358 = vmatprep.subr.mxu0 0.0
    %1359 = vmatpush1.xpose.msra.mxu0 %v1350
    %1360 = vmatprep.subr.mxu0 0.0
    %1361 = vmatpush1.xpose.msra.mxu0 0.0
    %1362 = vmatprep.subr.mxu0 0.0
    %1363 = vmatpush1.xpose.msra.mxu0 0.0
    %1364 = vmatprep.subr.mxu0 0.0
    %1365 = vmatpush1.xpose.msra.mxu0 0.0
    %1366 = vmatprep.subr.mxu0 0.0
    %1367 = vmatpush1.xpose.msra.mxu0 0.0
    %1368 = vmatprep.subr.mxu0 0.0
    %1369 = vmatpush1.xpose.msra.mxu0 0.0
    %1370 = vmatprep.subr.mxu0 0.0
    %1371 = vmatpush1.xpose.msra.mxu0 0.0
    %1372 = vmatprep.subr.mxu0 0.0
    %1373 = vmatpush1.xpose.msra.mxu0 0.0
    %1374 = vmatprep.subr.mxu0 0.0
    %1375 = vmatpush1.xpose.msra.mxu0 0.0
    %1376 = vmatprep.subr.mxu0 0.0
    %1377 = vmatpush1.xpose.msra.mxu0 0.0
    %1378 = vmatprep.subr.mxu0 0.0
    %1379 = vmatpush1.xpose.msra.mxu0 0.0
    %1380 = vmatprep.subr.mxu0 0.0
    %1381 = vmatpush1.xpose.msra.mxu0 0.0
    %1382 = vmatprep.subr.mxu0 0.0
    %1383 = vmatpush1.xpose.msra.mxu0 0.0
    %1384 = vmatprep.subr.mxu0 0.0
    %1385 = vmatpush1.xpose.msra.mxu0 0.0
    %1386 = vmatprep.subr.mxu0 0.0
    %1387 = vmatpush1.xpose.msra.mxu0 0.0
    %1388 = vmatprep.subr.mxu0 0.0
    %1389 = vmatpush1.xpose.msra.mxu0 0.0
    %1390 = vmatprep.subr.mxu0 0.0
    %1391 = vmatpush1.xpose.msra.mxu0 0.0
    %1392 = vmatprep.subr.mxu0 0.0
    %1393 = vmatpush1.xpose.msra.mxu0 0.0
    %1394 = vmatprep.subr.mxu0 0.0
    %1395 = vmatpush1.xpose.msra.mxu0 0.0
    %1396 = vmatprep.subr.mxu0 0.0
    %1397 = vmatpush1.xpose.msra.mxu0 0.0
    %1398 = vmatprep.subr.mxu0 0.0
    %1399 = vmatpush1.xpose.msra.mxu0 0.0
    %1400 = vmatprep.subr.mxu0 0.0
    %1401 = vmatpush1.xpose.msra.mxu0 0.0
    %1402 = vmatprep.subr.mxu0 0.0
    %1403 = vmatpush1.xpose.msra.mxu0 0.0
    %1404 = vmatprep.subr.mxu0 0.0
    %1405 = vmatpush1.xpose.msra.mxu0 0.0
    %1406 = vmatprep.subr.mxu0 0.0
    %1407 = vmatpush1.xpose.msra.mxu0 0.0
    %1408 = vmatprep.subr.mxu0 0.0
    %1409 = vmatpush1.xpose.msra.mxu0 0.0
    %1410 = vmatprep.subr.mxu0 0.0
    %1411 = vmatpush1.xpose.msra.mxu0 0.0
    %1412 = vmatprep.subr.mxu0 0.0
    %1413 = vmatpush1.xpose.msra.mxu0 0.0
    %1414 = vmatprep.subr.mxu0 0.0
    %1415 = vmatpush1.xpose.msra.mxu0 0.0
    %1416 = vmatprep.mubr.f32.mxu0 0.0
    %1417 = vmatmul.mubr.f32.gmra.mrb[0].mxu0 %v563
    %v1418 = vpop.f32.mrb[0].mxu0
    %v1419 = vadd.f32 0.0, %v1418
    %v1420 = vpop.f32.mrb[0].mxu0
    %1421 = vmatprep.mubr.f32.mxu0 0.0
    %1422 = vmatmul.mubr.f32.gmra.mrb[0].mxu0 %v566
    %v1423 = vpop.f32.mrb[0].mxu0
    %v1424 = vadd.f32 0.0, %v1423
    %v1425 = vpop.f32.mrb[0].mxu0
    %1426 = vmatprep.mubr.f32.mxu0 0.0
    %1427 = vmatmul.mubr.f32.gmra.mrb[0].mxu0 %v569
    %v1428 = vpop.f32.mrb[0].mxu0
    %v1429 = vadd.f32 0.0, %v1428
    %v1430 = vpop.f32.mrb[0].mxu0
    %1431 = vmatprep.mubr.f32.mxu0 0.0
    %1432 = vmatmul.mubr.f32.gmra.mrb[0].mxu0 %v572
    %v1433 = vpop.f32.mrb[0].mxu0
    %v1434 = vadd.f32 0.0, %v1433
    %v1435 = vpop.f32.mrb[0].mxu0
    %1436 = vdwg.mxu0
    %v1437 = vmul.f32 %v1419, 0.35355338
    %v1438 = vmul.f32 %v1424, 0.35355338
    %v1439 = vmul.f32 %v1429, 0.35355338
    %v1440 = vmul.f32 %v1434, 0.35355338
    %v1441 = vadd.f32 %v1437, %v64
    %v1442 = vadd.f32 %v1438, %v65
    %v1443 = vadd.f32 %v1439, %v66
    %v1444 = vadd.f32 %v1440, %v67
    %v1445 = vsel %vm285, %v1441, -inf
    %1446 = vmax.xlane.f32.xlu0 %v1445
    %v1447 = vpop.xlane.xlu0 %1446
    %v1448 = vsel %vm285, %v1442, -inf
    %1449 = vmax.xlane.f32.xlu0 %v1448
    %v1450 = vpop.xlane.xlu0 %1449
    %v1451 = vsel %vm285, %v1443, -inf
    %1452 = vmax.xlane.f32.xlu0 %v1451
    %v1453 = vpop.xlane.xlu0 %1452
    %v1454 = vsel %vm285, %v1444, -inf
    %1455 = vmax.xlane.f32.xlu0 %v1454
    %v1456 = vpop.xlane.xlu0 %1455
    %v1457 = vsub.f32 %v1441, %v1447
    %v1458 = vsub.f32 %v1442, %v1450
    %v1459 = vsub.f32 %v1443, %v1453
    %v1460 = vsub.f32 %v1444, %v1456
    %v1461 = vmul.f32 %v1457, 1.442695
    %v1462 = vpow.pop %v1461
    %v1463 = vmul.f32 %v1458, 1.442695
    %v1464 = vpow.pop %v1463
    %v1465 = vmul.f32 %v1459, 1.442695
    %v1466 = vpow.pop %v1465
    %v1467 = vmul.f32 %v1460, 1.442695
    %v1468 = vpow.pop %v1467
    %v1469 = vsel %vm285, %v1462, 0.0
    %1470 = vadd.xlane.f32.xlu0 %v1469
    %v1471 = vpop.xlane.xlu0 %1470
    %v1472 = vsel %vm285, %v1464, 0.0
    %1473 = vadd.xlane.f32.xlu0 %v1472
    %v1474 = vpop.xlane.xlu0 %1473
    %v1475 = vsel %vm285, %v1466, 0.0
    %1476 = vadd.xlane.f32.xlu0 %v1475
    %v1477 = vpop.xlane.xlu0 %1476
    %v1478 = vsel %vm285, %v1468, 0.0
    %1479 = vadd.xlane.f32.xlu0 %v1478
    %v1480 = vpop.xlane.xlu0 %1479
    %v1481 = vrcp.pop %v1471
    %v1482 = vrcp.pop %v1474
    %v1483 = vrcp.pop %v1477
    %v1484 = vrcp.pop %v1480
    %v1485 = vmul.f32 %v1462, %v1481
    %v1486 = vmul.f32 %v1464, %v1482
    %v1487 = vmul.f32 %v1466, %v1483
    %v1488 = vmul.f32 %v1468, %v1484
    %v1489 = vmul.f32 %v540, %v49
    %v1490 = vmul.f32 %v545, %v49
    %v1491 = vmul.f32 %v550, %v49
    %v1492 = vmul.f32 %v555, %v49
    %v1494 = vsel %vm285, %v1485, 0
    %v1497 = vsel %vm285, %v1486, 0
    %v1500 = vsel %vm285, %v1487, 0
    %v1503 = vsel %vm285, %v1488, 0
    %1505 = vmatprep.subr.mxu0 0.0
    %1506 = vmatpush1.msra.mxu0 %v1489
    %1507 = vmatprep.subr.mxu0 0.0
    %1508 = vmatpush1.msra.mxu0 %v1490
    %1509 = vmatprep.subr.mxu0 0.0
    %1510 = vmatpush1.msra.mxu0 %v1491
    %1511 = vmatprep.subr.mxu0 0.0
    %1512 = vmatpush1.msra.mxu0 %v1492
    %1513 = vmatprep.subr.mxu0 0.0
    %1514 = vmatpush1.msra.mxu0 0.0
    %1515 = vmatprep.subr.mxu0 0.0
    %1516 = vmatpush1.msra.mxu0 0.0
    %1517 = vmatprep.subr.mxu0 0.0
    %1518 = vmatpush1.msra.mxu0 0.0
    %1519 = vmatprep.subr.mxu0 0.0
    %1520 = vmatpush1.msra.mxu0 0.0
    %1521 = vmatprep.subr.mxu0 0.0
    %1522 = vmatpush1.msra.mxu0 0.0
    %1523 = vmatprep.subr.mxu0 0.0
    %1524 = vmatpush1.msra.mxu0 0.0
    %1525 = vmatprep.subr.mxu0 0.0
    %1526 = vmatpush1.msra.mxu0 0.0
    %1527 = vmatprep.subr.mxu0 0.0
    %1528 = vmatpush1.msra.mxu0 0.0
    %1529 = vmatprep.subr.mxu0 0.0
    %1530 = vmatpush1.msra.mxu0 0.0
    %1531 = vmatprep.subr.mxu0 0.0
    %1532 = vmatpush1.msra.mxu0 0.0
    %1533 = vmatprep.subr.mxu0 0.0
    %1534 = vmatpush1.msra.mxu0 0.0
    %1535 = vmatprep.subr.mxu0 0.0
    %1536 = vmatpush1.msra.mxu0 0.0
    %1537 = vmatprep.subr.mxu0 0.0
    %1538 = vmatpush1.msra.mxu0 0.0
    %1539 = vmatprep.subr.mxu0 0.0
    %1540 = vmatpush1.msra.mxu0 0.0
    %1541 = vmatprep.subr.mxu0 0.0
    %1542 = vmatpush1.msra.mxu0 0.0
    %1543 = vmatprep.subr.mxu0 0.0
    %1544 = vmatpush1.msra.mxu0 0.0
    %1545 = vmatprep.subr.mxu0 0.0
    %1546 = vmatpush1.msra.mxu0 0.0
    %1547 = vmatprep.subr.mxu0 0.0
    %1548 = vmatpush1.msra.mxu0 0.0
    %1549 = vmatprep.subr.mxu0 0.0
    %1550 = vmatpush1.msra.mxu0 0.0
    %1551 = vmatprep.subr.mxu0 0.0
    %1552 = vmatpush1.msra.mxu0 0.0
    %1553 = vmatprep.subr.mxu0 0.0
    %1554 = vmatpush1.msra.mxu0 0.0
    %1555 = vmatprep.subr.mxu0 0.0
    %1556 = vmatpush1.msra.mxu0 0.0
    %1557 = vmatprep.subr.mxu0 0.0
    %1558 = vmatpush1.msra.mxu0 0.0
    %1559 = vmatprep.subr.mxu0 0.0
    %1560 = vmatpush1.msra.mxu0 0.0
    %1561 = vmatprep.subr.mxu0 0.0
    %1562 = vmatpush1.msra.mxu0 0.0
    %1563 = vmatprep.subr.mxu0 0.0
    %1564 = vmatpush1.msra.mxu0 0.0
    %1565 = vmatprep.subr.mxu0 0.0
    %1566 = vmatpush1.msra.mxu0 0.0
    %1567 = vmatprep.subr.mxu0 0.0
    %1568 = vmatpush1.msra.mxu0 0.0
    %1569 = vmatprep.mubr.f32.mxu0 0.0
    %1570 = vmatmul.mubr.f32.gmra.mrb[0].mxu0 %v1494
    %v1571 = vpop.f32.mrb[0].mxu0
    %v1572 = vadd.f32 0.0, %v1571
    %v1573 = vpop.f32.mrb[0].mxu0
    %1574 = vmatprep.mubr.f32.mxu0 0.0
    %1575 = vmatmul.mubr.f32.gmra.mrb[0].mxu0 %v1497
    %v1576 = vpop.f32.mrb[0].mxu0
    %v1577 = vadd.f32 0.0, %v1576
    %v1578 = vpop.f32.mrb[0].mxu0
    %1579 = vmatprep.mubr.f32.mxu0 0.0
    %1580 = vmatmul.mubr.f32.gmra.mrb[0].mxu0 %v1500
    %v1581 = vpop.f32.mrb[0].mxu0
    %v1582 = vadd.f32 0.0, %v1581
    %v1583 = vpop.f32.mrb[0].mxu0
    %1584 = vmatprep.mubr.f32.mxu0 0.0
    %1585 = vmatmul.mubr.f32.gmra.mrb[0].mxu0 %v1503
    %v1586 = vpop.f32.mrb[0].mxu0
    %v1587 = vadd.f32 0.0, %v1586
    %v1588 = vpop.f32.mrb[0].mxu0
    %1589 = vdwg.mxu0
    %v1590 = vadd.f32 %v1332, %v1572
    %v1591 = vadd.f32 %v1333, %v1577
    %v1592 = vadd.f32 %v1334, %v1582
    %v1593 = vadd.f32 %v1335, %v1587
    %v1594 = vlaneseq
    %v1595 = vshrl.u32 %v1594, 7
    %v1596 = vsub.s32 0, %v1595
    %v1597 = vrot.slane %v22, %v1596
    %v1599 = vsel %vm285, %v1590, 0
    %v1602 = vsel %vm285, %v1591, 0
    %v1605 = vsel %vm285, %v1592, 0
    %v1608 = vsel %vm285, %v1593, 0
    %1610 = vmatprep.subr.mxu0 0.0
    %1611 = vmatpush1.msra.mxu0 %v277
    %1612 = vmatprep.subr.mxu0 0.0
    %1613 = vmatpush1.msra.mxu0 %v278
    %1614 = vmatprep.subr.mxu0 0.0
    %1615 = vmatpush1.msra.mxu0 %v279
    %1616 = vmatprep.subr.mxu0 0.0
    %1617 = vmatpush1.msra.mxu0 %v280
    %1618 = vmatprep.subr.mxu0 0.0
    %1619 = vmatpush1.msra.mxu0 0.0
    %1620 = vmatprep.subr.mxu0 0.0
    %1621 = vmatpush1.msra.mxu0 0.0
    %1622 = vmatprep.subr.mxu0 0.0
    %1623 = vmatpush1.msra.mxu0 0.0
    %1624 = vmatprep.subr.mxu0 0.0
    %1625 = vmatpush1.msra.mxu0 0.0
    %1626 = vmatprep.subr.mxu0 0.0
    %1627 = vmatpush1.msra.mxu0 0.0
    %1628 = vmatprep.subr.mxu0 0.0
    %1629 = vmatpush1.msra.mxu0 0.0
    %1630 = vmatprep.subr.mxu0 0.0
    %1631 = vmatpush1.msra.mxu0 0.0
    %1632 = vmatprep.subr.mxu0 0.0
    %1633 = vmatpush1.msra.mxu0 0.0
    %1634 = vmatprep.subr.mxu0 0.0
    %1635 = vmatpush1.msra.mxu0 0.0
    %1636 = vmatprep.subr.mxu0 0.0
    %1637 = vmatpush1.msra.mxu0 0.0
    %1638 = vmatprep.subr.mxu0 0.0
    %1639 = vmatpush1.msra.mxu0 0.0
    %1640 = vmatprep.subr.mxu0 0.0
    %1641 = vmatpush1.msra.mxu0 0.0
    %1642 = vmatprep.subr.mxu0 0.0
    %1643 = vmatpush1.msra.mxu0 0.0
    %1644 = vmatprep.subr.mxu0 0.0
    %1645 = vmatpush1.msra.mxu0 0.0
    %1646 = vmatprep.subr.mxu0 0.0
    %1647 = vmatpush1.msra.mxu0 0.0
    %1648 = vmatprep.subr.mxu0 0.0
    %1649 = vmatpush1.msra.mxu0 0.0
    %1650 = vmatprep.subr.mxu0 0.0
    %1651 = vmatpush1.msra.mxu0 0.0
    %1652 = vmatprep.subr.mxu0 0.0
    %1653 = vmatpush1.msra.mxu0 0.0
    %1654 = vmatprep.subr.mxu0 0.0
    %1655 = vmatpush1.msra.mxu0 0.0
    %1656 = vmatprep.subr.mxu0 0.0
    %1657 = vmatpush1.msra.mxu0 0.0
    %1658 = vmatprep.subr.mxu0 0.0
    %1659 = vmatpush1.msra.mxu0 0.0
    %1660 = vmatprep.subr.mxu0 0.0
    %1661 = vmatpush1.msra.mxu0 0.0
    %1662 = vmatprep.subr.mxu0 0.0
    %1663 = vmatpush1.msra.mxu0 0.0
    %1664 = vmatprep.subr.mxu0 0.0
    %1665 = vmatpush1.msra.mxu0 0.0
    %1666 = vmatprep.subr.mxu0 0.0
    %1667 = vmatpush1.msra.mxu0 0.0
    %1668 = vmatprep.subr.mxu0 0.0
    %1669 = vmatpush1.msra.mxu0 0.0
    %1670 = vmatprep.subr.mxu0 0.0
    %1671 = vmatpush1.msra.mxu0 0.0
    %1672 = vmatprep.subr.mxu0 0.0
    %1673 = vmatpush1.msra.mxu0 0.0
    %1674 = vmatprep.mubr.f32.mxu0 0.0
    %1675 = vmatmul.mubr.f32.gmra.mrb[0].mxu0 %v1599
    %v1676 = vpop.f32.mrb[0].mxu0
    %v1677 = vadd.f32 %v1597, %v1676
    %v1678 = vpop.f32.mrb[0].mxu0
    %1679 = vmatprep.mubr.f32.mxu0 0.0
    %1680 = vmatmul.mubr.f32.gmra.mrb[0].mxu0 %v1602
    %v1681 = vpop.f32.mrb[0].mxu0
    %v1682 = vadd.f32 %v1597, %v1681
    %v1683 = vpop.f32.mrb[0].mxu0
    %1684 = vmatprep.mubr.f32.mxu0 0.0
    %1685 = vmatmul.mubr.f32.gmra.mrb[0].mxu0 %v1605
    %v1686 = vpop.f32.mrb[0].mxu0
    %v1687 = vadd.f32 %v1597, %v1686
    %v1688 = vpop.f32.mrb[0].mxu0
    %1689 = vmatprep.mubr.f32.mxu0 0.0
    %1690 = vmatmul.mubr.f32.gmra.mrb[0].mxu0 %v1608
    %v1691 = vpop.f32.mrb[0].mxu0
    %v1692 = vadd.f32 %v1597, %v1691
    %v1693 = vpop.f32.mrb[0].mxu0
    %1694 = vdwg.mxu0
    %v1695 = vadd.f32 %v264, %v1677
    %v1696 = vadd.f32 %v262, %v1682
    %v1697 = vadd.f32 %v264, %v1687
    %v1698 = vadd.f32 %v263, %v1692
    %v1699 = vsel %vm285, %v1695, 0.0
    %1700 = vadd.xlane.f32.xlu0 %v1699
    %v1701 = vpop.xlane.xlu0 %1700
    %v1702 = vsel %vm285, %v1696, 0.0
    %1703 = vadd.xlane.f32.xlu0 %v1702
    %v1704 = vpop.xlane.xlu0 %1703
    %v1705 = vsel %vm285, %v1697, 0.0
    %1706 = vadd.xlane.f32.xlu0 %v1705
    %v1707 = vpop.xlane.xlu0 %1706
    %v1708 = vsel %vm285, %v1698, 0.0
    %1709 = vadd.xlane.f32.xlu0 %v1708
    %v1710 = vpop.xlane.xlu0 %1709
    %v1711 = vrcp.pop 32.0
    %v1712 = vmul.f32 %v1701, %v1711
    %v1713 = vmul.f32 %v1704, %v1711
    %v1714 = vmul.f32 %v1707, %v1711
    %v1715 = vmul.f32 %v1710, %v1711
    %v1716 = vsub.f32 %v1695, %v1712
    %v1717 = vsub.f32 %v1696, %v1713
    %v1718 = vsub.f32 %v1697, %v1714
    %v1719 = vsub.f32 %v1698, %v1715
    %v1720 = vmul.f32 %v1716, %v1716
    %v1721 = vmul.f32 %v1717, %v1717
    %v1722 = vmul.f32 %v1718, %v1718
    %v1723 = vmul.f32 %v1719, %v1719
    %v1724 = vsel %vm285, %v1720, 0.0
    %1725 = vadd.xlane.f32.xlu0 %v1724
    %v1726 = vpop.xlane.xlu0 %1725
    %v1727 = vsel %vm285, %v1721, 0.0
    %1728 = vadd.xlane.f32.xlu0 %v1727
    %v1729 = vpop.xlane.xlu0 %1728
    %v1730 = vsel %vm285, %v1722, 0.0
    %1731 = vadd.xlane.f32.xlu0 %v1730
    %v1732 = vpop.xlane.xlu0 %1731
    %v1733 = vsel %vm285, %v1723, 0.0
    %1734 = vadd.xlane.f32.xlu0 %v1733
    %v1735 = vpop.xlane.xlu0 %1734
    %v1736 = vmul.f32 %v1726, %v1711
    %v1737 = vmul.f32 %v1729, %v1711
    %v1738 = vmul.f32 %v1732, %v1711
    %v1739 = vmul.f32 %v1735, %v1711
    %v1740 = vadd.f32 %v1736, 1e-05
    %v1741 = vadd.f32 %v1737, 1e-05
    %v1742 = vadd.f32 %v1738, 1e-05
    %v1743 = vadd.f32 %v1739, 1e-05
    %v1744 = vrsqrt.pop %v1740
    %v1745 = vrsqrt.pop %v1741
    %v1746 = vrsqrt.pop %v1742
    %v1747 = vrsqrt.pop %v1743
    %v1748 = vmul.f32 %v1716, %v1744
    %v1749 = vmul.f32 %v1717, %v1745
    %v1750 = vmul.f32 %v1718, %v1746
    %v1751 = vmul.f32 %v1719, %v1747
    %v1752 = vlaneseq
    %v1753 = vshrl.u32 %v1752, 7
    %v1754 = vsub.s32 3, %v1753
    %v1755 = vrot.slane %v22, %v1754
    %v1756 = vmul.f32 %v1748, %v1755
    %v1757 = vmul.f32 %v1749, %v1755
    %v1758 = vmul.f32 %v1750, %v1755
    %v1759 = vmul.f32 %v1751, %v1755
    %v1760 = vlaneseq
    %v1761 = vshrl.u32 %v1760, 7
    %v1762 = vsub.s32 4, %v1761
    %v1763 = vrot.slane %v22, %v1762
    %v1764 = vadd.f32 %v1756, %v1763
    %v1765 = vadd.f32 %v1757, %v1763
    %v1766 = vadd.f32 %v1758, %v1763
    %v1767 = vadd.f32 %v1759, %v1763
    %v1768 = vld [vmem:[%s0 + $0x1f0] sm:$0xff]
    %v1769 = vld [vmem:[%s0 + $0x1f8] sm:$0xff]
    %v1770 = vld [vmem:[%s0 + $0x200] sm:$0xff]
    %v1771 = vld [vmem:[%s0 + $0x208] sm:$0xff]
    %v1772 = vlaneseq
    %v1773 = vshrl.u32 %v1772, 7
    %v1774 = vsub.s32 1, %v1773
    %v1775 = vrot.slane %v22, %v1774
    %v1777 = vsel %vm285, %v1764, 0
    %v1780 = vsel %vm285, %v1765, 0
    %v1783 = vsel %vm285, %v1766, 0
    %v1786 = vsel %vm285, %v1767, 0
    %1788 = vmatprep.subr.mxu0 0.0
    %1789 = vmatpush1.msra.mxu0 %v1768
    %1790 = vmatprep.subr.mxu0 0.0
    %1791 = vmatpush1.msra.mxu0 %v1769
    %1792 = vmatprep.subr.mxu0 0.0
    %1793 = vmatpush1.msra.mxu0 %v1770
    %1794 = vmatprep.subr.mxu0 0.0
    %1795 = vmatpush1.msra.mxu0 %v1771
    %1796 = vmatprep.subr.mxu0 0.0
    %1797 = vmatpush1.msra.mxu0 0.0
    %1798 = vmatprep.subr.mxu0 0.0
    %1799 = vmatpush1.msra.mxu0 0.0
    %1800 = vmatprep.subr.mxu0 0.0
    %1801 = vmatpush1.msra.mxu0 0.0
    %1802 = vmatprep.subr.mxu0 0.0
    %1803 = vmatpush1.msra.mxu0 0.0
    %1804 = vmatprep.subr.mxu0 0.0
    %1805 = vmatpush1.msra.mxu0 0.0
    %1806 = vmatprep.subr.mxu0 0.0
    %1807 = vmatpush1.msra.mxu0 0.0
    %1808 = vmatprep.subr.mxu0 0.0
    %1809 = vmatpush1.msra.mxu0 0.0
    %1810 = vmatprep.subr.mxu0 0.0
    %1811 = vmatpush1.msra.mxu0 0.0
    %1812 = vmatprep.subr.mxu0 0.0
    %1813 = vmatpush1.msra.mxu0 0.0
    %1814 = vmatprep.subr.mxu0 0.0
    %1815 = vmatpush1.msra.mxu0 0.0
    %1816 = vmatprep.subr.mxu0 0.0
    %1817 = vmatpush1.msra.mxu0 0.0
    %1818 = vmatprep.subr.mxu0 0.0
    %1819 = vmatpush1.msra.mxu0 0.0
    %1820 = vmatprep.subr.mxu0 0.0
    %1821 = vmatpush1.msra.mxu0 0.0
    %1822 = vmatprep.subr.mxu0 0.0
    %1823 = vmatpush1.msra.mxu0 0.0
    %1824 = vmatprep.subr.mxu0 0.0
    %1825 = vmatpush1.msra.mxu0 0.0
    %1826 = vmatprep.subr.mxu0 0.0
    %1827 = vmatpush1.msra.mxu0 0.0
    %1828 = vmatprep.subr.mxu0 0.0
    %1829 = vmatpush1.msra.mxu0 0.0
    %1830 = vmatprep.subr.mxu0 0.0
    %1831 = vmatpush1.msra.mxu0 0.0
    %1832 = vmatprep.subr.mxu0 0.0
    %1833 = vmatpush1.msra.mxu0 0.0
    %1834 = vmatprep.subr.mxu0 0.0
    %1835 = vmatpush1.msra.mxu0 0.0
    %1836 = vmatprep.subr.mxu0 0.0
    %1837 = vmatpush1.msra.mxu0 0.0
    %1838 = vmatprep.subr.mxu0 0.0
    %1839 = vmatpush1.msra.mxu0 0.0
    %1840 = vmatprep.subr.mxu0 0.0
    %1841 = vmatpush1.msra.mxu0 0.0
    %1842 = vmatprep.subr.mxu0 0.0
    %1843 = vmatpush1.msra.mxu0 0.0
    %1844 = vmatprep.subr.mxu0 0.0
    %1845 = vmatpush1.msra.mxu0 0.0
    %1846 = vmatprep.subr.mxu0 0.0
    %1847 = vmatpush1.msra.mxu0 0.0
    %1848 = vmatprep.subr.mxu0 0.0
    %1849 = vmatpush1.msra.mxu0 0.0
    %1850 = vmatprep.subr.mxu0 0.0
    %1851 = vmatpush1.msra.mxu0 0.0
    %1852 = vmatprep.mubr.f32.mxu0 0.0
    %1853 = vmatmul.mubr.f32.gmra.mrb[0].mxu0 %v1777
    %v1854 = vpop.f32.mrb[0].mxu0
    %v1855 = vadd.f32 %v1775, %v1854
    %v1856 = vpop.f32.mrb[0].mxu0
    %1857 = vmatprep.mubr.f32.mxu0 0.0
    %1858 = vmatmul.mubr.f32.gmra.mrb[0].mxu0 %v1780
    %v1859 = vpop.f32.mrb[0].mxu0
    %v1860 = vadd.f32 %v1775, %v1859
    %v1861 = vpop.f32.mrb[0].mxu0
    %1862 = vmatprep.mubr.f32.mxu0 0.0
    %1863 = vmatmul.mubr.f32.gmra.mrb[0].mxu0 %v1783
    %v1864 = vpop.f32.mrb[0].mxu0
    %v1865 = vadd.f32 %v1775, %v1864
    %v1866 = vpop.f32.mrb[0].mxu0
    %1867 = vmatprep.mubr.f32.mxu0 0.0
    %1868 = vmatmul.mubr.f32.gmra.mrb[0].mxu0 %v1786
    %v1869 = vpop.f32.mrb[0].mxu0
    %v1870 = vadd.f32 %v1775, %v1869
    %v1871 = vpop.f32.mrb[0].mxu0
    %1872 = vdwg.mxu0
    %v1873 = vmax.f32 %v1855, 0.0
    %v1874 = vmax.f32 %v1860, 0.0
    %v1875 = vmax.f32 %v1865, 0.0
    %v1876 = vmax.f32 %v1870, 0.0
    %v1877 = vld [vmem:[%s0 + $0x210] sm:$0xff]
    %v1878 = vld [vmem:[%s0 + $0x218] sm:$0xff]
    %v1879 = vld [vmem:[%s0 + $0x220] sm:$0xff]
    %v1880 = vld [vmem:[%s0 + $0x228] sm:$0xff]
    %v1881 = vld [vmem:[%s0 + $0x230] sm:$0xff]
    %v1882 = vld [vmem:[%s0 + $0x238] sm:$0xff]
    %v1883 = vld [vmem:[%s0 + $0x240] sm:$0xff]
    %v1884 = vld [vmem:[%s0 + $0x248] sm:$0xff]
    %v1885 = vlaneseq
    %v1886 = vshrl.u32 %v1885, 7
    %v1887 = vsub.s32 2, %v1886
    %v1888 = vrot.slane %v22, %v1887
    %vm1889 = vcmask 523264
    %v1891 = vsel %vm1889, %v1873, 0
    %v1894 = vsel %vm1889, %v1874, 0
    %v1897 = vsel %vm1889, %v1875, 0
    %v1900 = vsel %vm1889, %v1876, 0
    %1902 = vmatprep.subr.mxu0 0.0
    %1903 = vmatpush1.msra.mxu0 %v1877
    %1904 = vmatprep.subr.mxu0 0.0
    %1905 = vmatpush1.msra.mxu0 %v1878
    %1906 = vmatprep.subr.mxu0 0.0
    %1907 = vmatpush1.msra.mxu0 %v1879
    %1908 = vmatprep.subr.mxu0 0.0
    %1909 = vmatpush1.msra.mxu0 %v1880
    %1910 = vmatprep.subr.mxu0 0.0
    %1911 = vmatpush1.msra.mxu0 %v1881
    %1912 = vmatprep.subr.mxu0 0.0
    %1913 = vmatpush1.msra.mxu0 %v1882
    %1914 = vmatprep.subr.mxu0 0.0
    %1915 = vmatpush1.msra.mxu0 %v1883
    %1916 = vmatprep.subr.mxu0 0.0
    %1917 = vmatpush1.msra.mxu0 %v1884
    %1918 = vmatprep.subr.mxu0 0.0
    %1919 = vmatpush1.msra.mxu0 0.0
    %1920 = vmatprep.subr.mxu0 0.0
    %1921 = vmatpush1.msra.mxu0 0.0
    %1922 = vmatprep.subr.mxu0 0.0
    %1923 = vmatpush1.msra.mxu0 0.0
    %1924 = vmatprep.subr.mxu0 0.0
    %1925 = vmatpush1.msra.mxu0 0.0
    %1926 = vmatprep.subr.mxu0 0.0
    %1927 = vmatpush1.msra.mxu0 0.0
    %1928 = vmatprep.subr.mxu0 0.0
    %1929 = vmatpush1.msra.mxu0 0.0
    %1930 = vmatprep.subr.mxu0 0.0
    %1931 = vmatpush1.msra.mxu0 0.0
    %1932 = vmatprep.subr.mxu0 0.0
    %1933 = vmatpush1.msra.mxu0 0.0
    %1934 = vmatprep.subr.mxu0 0.0
    %1935 = vmatpush1.msra.mxu0 0.0
    %1936 = vmatprep.subr.mxu0 0.0
    %1937 = vmatpush1.msra.mxu0 0.0
    %1938 = vmatprep.subr.mxu0 0.0
    %1939 = vmatpush1.msra.mxu0 0.0
    %1940 = vmatprep.subr.mxu0 0.0
    %1941 = vmatpush1.msra.mxu0 0.0
    %1942 = vmatprep.subr.mxu0 0.0
    %1943 = vmatpush1.msra.mxu0 0.0
    %1944 = vmatprep.subr.mxu0 0.0
    %1945 = vmatpush1.msra.mxu0 0.0
    %1946 = vmatprep.subr.mxu0 0.0
    %1947 = vmatpush1.msra.mxu0 0.0
    %1948 = vmatprep.subr.mxu0 0.0
    %1949 = vmatpush1.msra.mxu0 0.0
    %1950 = vmatprep.subr.mxu0 0.0
    %1951 = vmatpush1.msra.mxu0 0.0
    %1952 = vmatprep.subr.mxu0 0.0
    %1953 = vmatpush1.msra.mxu0 0.0
    %1954 = vmatprep.subr.mxu0 0.0
    %1955 = vmatpush1.msra.mxu0 0.0
    %1956 = vmatprep.subr.mxu0 0.0
    %1957 = vmatpush1.msra.mxu0 0.0
    %1958 = vmatprep.subr.mxu0 0.0
    %1959 = vmatpush1.msra.mxu0 0.0
    %1960 = vmatprep.subr.mxu0 0.0
    %1961 = vmatpush1.msra.mxu0 0.0
    %1962 = vmatprep.subr.mxu0 0.0
    %1963 = vmatpush1.msra.mxu0 0.0
    %1964 = vmatprep.subr.mxu0 0.0
    %1965 = vmatpush1.msra.mxu0 0.0
    %1966 = vmatprep.mubr.f32.mxu0 0.0
    %1967 = vmatmul.mubr.f32.gmra.mrb[0].mxu0 %v1891
    %v1968 = vpop.f32.mrb[0].mxu0
    %v1969 = vadd.f32 %v1888, %v1968
    %v1970 = vpop.f32.mrb[0].mxu0
    %1971 = vmatprep.mubr.f32.mxu0 0.0
    %1972 = vmatmul.mubr.f32.gmra.mrb[0].mxu0 %v1894
    %v1973 = vpop.f32.mrb[0].mxu0
    %v1974 = vadd.f32 %v1888, %v1973
    %v1975 = vpop.f32.mrb[0].mxu0
    %1976 = vmatprep.mubr.f32.mxu0 0.0
    %1977 = vmatmul.mubr.f32.gmra.mrb[0].mxu0 %v1897
    %v1978 = vpop.f32.mrb[0].mxu0
    %v1979 = vadd.f32 %v1888, %v1978
    %v1980 = vpop.f32.mrb[0].mxu0
    %1981 = vmatprep.mubr.f32.mxu0 0.0
    %1982 = vmatmul.mubr.f32.gmra.mrb[0].mxu0 %v1900
    %v1983 = vpop.f32.mrb[0].mxu0
    %v1984 = vadd.f32 %v1888, %v1983
    %v1985 = vpop.f32.mrb[0].mxu0
    %1986 = vdwg.mxu0
    %v1987 = vadd.f32 %v1764, %v1969
    %v1988 = vadd.f32 %v1765, %v1974
    %v1989 = vadd.f32 %v1766, %v1979
    %v1990 = vadd.f32 %v1767, %v1984
    %v1991 = vsel %vm285, %v1987, 0.0
    %1992 = vadd.xlane.f32.xlu0 %v1991
    %v1993 = vpop.xlane.xlu0 %1992
    %v1994 = vsel %vm285, %v1988, 0.0
    %1995 = vadd.xlane.f32.xlu0 %v1994
    %v1996 = vpop.xlane.xlu0 %1995
    %v1997 = vsel %vm285, %v1989, 0.0
    %1998 = vadd.xlane.f32.xlu0 %v1997
    %v1999 = vpop.xlane.xlu0 %1998
    %v2000 = vsel %vm285, %v1990, 0.0
    %2001 = vadd.xlane.f32.xlu0 %v2000
    %v2002 = vpop.xlane.xlu0 %2001
    %v2003 = vmul.f32 %v1993, %v1711
    %v2004 = vmul.f32 %v1996, %v1711
    %v2005 = vmul.f32 %v1999, %v1711
    %v2006 = vmul.f32 %v2002, %v1711
    %v2007 = vsub.f32 %v1987, %v2003
    %v2008 = vsub.f32 %v1988, %v2004
    %v2009 = vsub.f32 %v1989, %v2005
    %v2010 = vsub.f32 %v1990, %v2006
    %v2011 = vmul.f32 %v2007, %v2007
    %v2012 = vmul.f32 %v2008, %v2008
    %v2013 = vmul.f32 %v2009, %v2009
    %v2014 = vmul.f32 %v2010, %v2010
    %v2015 = vsel %vm285, %v2011, 0.0
    %2016 = vadd.xlane.f32.xlu0 %v2015
    %v2017 = vpop.xlane.xlu0 %2016
    %v2018 = vsel %vm285, %v2012, 0.0
    %2019 = vadd.xlane.f32.xlu0 %v2018
    %v2020 = vpop.xlane.xlu0 %2019
    %v2021 = vsel %vm285, %v2013, 0.0
    %2022 = vadd.xlane.f32.xlu0 %v2021
    %v2023 = vpop.xlane.xlu0 %2022
    %v2024 = vsel %vm285, %v2014, 0.0
    %2025 = vadd.xlane.f32.xlu0 %v2024
    %v2026 = vpop.xlane.xlu0 %2025
    %v2027 = vmul.f32 %v2017, %v1711
    %v2028 = vmul.f32 %v2020, %v1711
    %v2029 = vmul.f32 %v2023, %v1711
    %v2030 = vmul.f32 %v2026, %v1711
    %v2031 = vadd.f32 %v2027, 1e-05
    %v2032 = vadd.f32 %v2028, 1e-05
    %v2033 = vadd.f32 %v2029, 1e-05
    %v2034 = vadd.f32 %v2030, 1e-05
    %v2035 = vrsqrt.pop %v2031
    %v2036 = vrsqrt.pop %v2032
    %v2037 = vrsqrt.pop %v2033
    %v2038 = vrsqrt.pop %v2034
    %v2039 = vmul.f32 %v2007, %v2035
    %v2040 = vmul.f32 %v2008, %v2036
    %v2041 = vmul.f32 %v2009, %v2037
    %v2042 = vmul.f32 %v2010, %v2038
    %v2043 = vlaneseq
    %v2044 = vshrl.u32 %v2043, 7
    %v2045 = vsub.s32 5, %v2044
    %v2046 = vrot.slane %v22, %v2045
    %v2047 = vmul.f32 %v2039, %v2046
    %v2048 = vmul.f32 %v2040, %v2046
    %v2049 = vmul.f32 %v2041, %v2046
    %v2050 = vmul.f32 %v2042, %v2046
    %v2051 = vlaneseq
    %v2052 = vshrl.u32 %v2051, 7
    %v2053 = vsub.s32 6, %v2052
    %v2054 = vrot.slane %v22, %v2053
    %v2055 = vadd.f32 %v2047, %v2054
    %v2056 = vadd.f32 %v2048, %v2054
    %v2057 = vadd.f32 %v2049, %v2054
    %v2058 = vadd.f32 %v2050, %v2054
    %v2059 = vld [vmem:[%s0 + $0x250] sm:$0xff]
    %v2060 = vld [vmem:[%s0 + $0x258] sm:$0xff]
    %v2061 = vld [vmem:[%s0 + $0x260] sm:$0xff]
    %v2062 = vld [vmem:[%s0 + $0x268] sm:$0xff]
    %v2063 = vld [vmem:[%s0 + $0x270] sm:$0xff]
    %v2064 = vld [vmem:[%s0 + $0x278] sm:$0xff]
    %v2065 = vld [vmem:[%s0 + $0x280] sm:$0xff]
    %v2066 = vld [vmem:[%s0 + $0x288] sm:$0xff]
    %v2067 = vld [vmem:[%s0 + $0x290] sm:$0xff]
    %v2068 = vld [vmem:[%s0 + $0x298] sm:$0xff]
    %v2069 = vld [vmem:[%s0 + $0x2a0] sm:$0xff]
    %v2070 = vld [vmem:[%s0 + $0x2a8] sm:$0xff]
    %v2071 = vld [vmem:[%s0 + $0x2b0] sm:$0xff]
    %v2072 = vld [vmem:[%s0 + $0x2b8] sm:$0xff]
    %v2073 = vld [vmem:[%s0 + $0x2c0] sm:$0xff]
    %v2074 = vld [vmem:[%s0 + $0x2c8] sm:$0xff]
    %v2075 = vlaneseq
    %v2076 = vshrl.u32 %v2075, 7
    %v2077 = vsub.s32 7, %v2076
    %v2078 = vrot.slane %v22, %v2077
    %v2080 = vsel %vm285, %v2055, 0
    %v2083 = vsel %vm285, %v2056, 0
    %v2086 = vsel %vm285, %v2057, 0
    %v2089 = vsel %vm285, %v2058, 0
    %2091 = vmatprep.subr.mxu0 0.0
    %2092 = vmatpush1.msra.mxu0 %v2059
    %2093 = vmatprep.subr.mxu0 0.0
    %2094 = vmatpush1.msra.mxu0 %v2060
    %2095 = vmatprep.subr.mxu0 0.0
    %2096 = vmatpush1.msra.mxu0 %v2061
    %2097 = vmatprep.subr.mxu0 0.0
    %2098 = vmatpush1.msra.mxu0 %v2062
    %2099 = vmatprep.subr.mxu0 0.0
    %2100 = vmatpush1.msra.mxu0 0.0
    %2101 = vmatprep.subr.mxu0 0.0
    %2102 = vmatpush1.msra.mxu0 0.0
    %2103 = vmatprep.subr.mxu0 0.0
    %2104 = vmatpush1.msra.mxu0 0.0
    %2105 = vmatprep.subr.mxu0 0.0
    %2106 = vmatpush1.msra.mxu0 0.0
    %2107 = vmatprep.subr.mxu0 0.0
    %2108 = vmatpush1.msra.mxu0 0.0
    %2109 = vmatprep.subr.mxu0 0.0
    %2110 = vmatpush1.msra.mxu0 0.0
    %2111 = vmatprep.subr.mxu0 0.0
    %2112 = vmatpush1.msra.mxu0 0.0
    %2113 = vmatprep.subr.mxu0 0.0
    %2114 = vmatpush1.msra.mxu0 0.0
    %2115 = vmatprep.subr.mxu0 0.0
    %2116 = vmatpush1.msra.mxu0 0.0
    %2117 = vmatprep.subr.mxu0 0.0
    %2118 = vmatpush1.msra.mxu0 0.0
    %2119 = vmatprep.subr.mxu0 0.0
    %2120 = vmatpush1.msra.mxu0 0.0
    %2121 = vmatprep.subr.mxu0 0.0
    %2122 = vmatpush1.msra.mxu0 0.0
    %2123 = vmatprep.subr.mxu0 0.0
    %2124 = vmatpush1.msra.mxu0 0.0
    %2125 = vmatprep.subr.mxu0 0.0
    %2126 = vmatpush1.msra.mxu0 0.0
    %2127 = vmatprep.subr.mxu0 0.0
    %2128 = vmatpush1.msra.mxu0 0.0
    %2129 = vmatprep.subr.mxu0 0.0
    %2130 = vmatpush1.msra.mxu0 0.0
    %2131 = vmatprep.subr.mxu0 0.0
    %2132 = vmatpush1.msra.mxu0 0.0
    %2133 = vmatprep.subr.mxu0 0.0
    %2134 = vmatpush1.msra.mxu0 0.0
    %2135 = vmatprep.subr.mxu0 0.0
    %2136 = vmatpush1.msra.mxu0 0.0
    %2137 = vmatprep.subr.mxu0 0.0
    %2138 = vmatpush1.msra.mxu0 0.0
    %2139 = vmatprep.subr.mxu0 0.0
    %2140 = vmatpush1.msra.mxu0 0.0
    %2141 = vmatprep.subr.mxu0 0.0
    %2142 = vmatpush1.msra.mxu0 0.0
    %2143 = vmatprep.subr.mxu0 0.0
    %2144 = vmatpush1.msra.mxu0 0.0
    %2145 = vmatprep.subr.mxu0 0.0
    %2146 = vmatpush1.msra.mxu0 0.0
    %2147 = vmatprep.subr.mxu0 0.0
    %2148 = vmatpush1.msra.mxu0 0.0
    %2149 = vmatprep.subr.mxu0 0.0
    %2150 = vmatpush1.msra.mxu0 0.0
    %2151 = vmatprep.subr.mxu0 0.0
    %2152 = vmatpush1.msra.mxu0 0.0
    %2153 = vmatprep.subr.mxu0 0.0
    %2154 = vmatpush1.msra.mxu0 0.0
    %2155 = vmatprep.mubr.f32.mxu0 0.0
    %2156 = vmatmul.mubr.f32.gmra.mrb[0].mxu0 %v2080
    %v2157 = vpop.f32.mrb[0].mxu0
    %v2158 = vadd.f32 %v2078, %v2157
    %v2159 = vpop.f32.mrb[0].mxu0
    %2160 = vmatprep.mubr.f32.mxu0 0.0
    %2161 = vmatmul.mubr.f32.gmra.mrb[0].mxu0 %v2083
    %v2162 = vpop.f32.mrb[0].mxu0
    %v2163 = vadd.f32 %v2078, %v2162
    %v2164 = vpop.f32.mrb[0].mxu0
    %2165 = vmatprep.mubr.f32.mxu0 0.0
    %2166 = vmatmul.mubr.f32.gmra.mrb[0].mxu0 %v2086
    %v2167 = vpop.f32.mrb[0].mxu0
    %v2168 = vadd.f32 %v2078, %v2167
    %v2169 = vpop.f32.mrb[0].mxu0
    %2170 = vmatprep.mubr.f32.mxu0 0.0
    %2171 = vmatmul.mubr.f32.gmra.mrb[0].mxu0 %v2089
    %v2172 = vpop.f32.mrb[0].mxu0
    %v2173 = vadd.f32 %v2078, %v2172
    %v2174 = vpop.f32.mrb[0].mxu0
    %2175 = vdwg.mxu0
    %v2176 = vlaneseq
    %v2177 = vshrl.u32 %v2176, 7
    %v2178 = vsub.s32 0, %v2177
    %v2179 = vrot.slane %v23, %v2178
    %2180 = vmatprep.subr.mxu0 0.0
    %2181 = vmatpush1.msra.mxu0 %v2063
    %2182 = vmatprep.subr.mxu0 0.0
    %2183 = vmatpush1.msra.mxu0 %v2064
    %2184 = vmatprep.subr.mxu0 0.0
    %2185 = vmatpush1.msra.mxu0 %v2065
    %2186 = vmatprep.subr.mxu0 0.0
    %2187 = vmatpush1.msra.mxu0 %v2066
    %2188 = vmatprep.subr.mxu0 0.0
    %2189 = vmatpush1.msra.mxu0 0.0
    %2190 = vmatprep.subr.mxu0 0.0
    %2191 = vmatpush1.msra.mxu0 0.0
    %2192 = vmatprep.subr.mxu0 0.0
    %2193 = vmatpush1.msra.mxu0 0.0
    %2194 = vmatprep.subr.mxu0 0.0
    %2195 = vmatpush1.msra.mxu0 0.0
    %2196 = vmatprep.subr.mxu0 0.0
    %2197 = vmatpush1.msra.mxu0 0.0
    %2198 = vmatprep.subr.mxu0 0.0
    %2199 = vmatpush1.msra.mxu0 0.0
    %2200 = vmatprep.subr.mxu0 0.0
    %2201 = vmatpush1.msra.mxu0 0.0
    %2202 = vmatprep.subr.mxu0 0.0
    %2203 = vmatpush1.msra.mxu0 0.0
    %2204 = vmatprep.subr.mxu0 0.0
    %2205 = vmatpush1.msra.mxu0 0.0
    %2206 = vmatprep.subr.mxu0 0.0
    %2207 = vmatpush1.msra.mxu0 0.0
    %2208 = vmatprep.subr.mxu0 0.0
    %2209 = vmatpush1.msra.mxu0 0.0
    %2210 = vmatprep.subr.mxu0 0.0
    %2211 = vmatpush1.msra.mxu0 0.0
    %2212 = vmatprep.subr.mxu0 0.0
    %2213 = vmatpush1.msra.mxu0 0.0
    %2214 = vmatprep.subr.mxu0 0.0
    %2215 = vmatpush1.msra.mxu0 0.0
    %2216 = vmatprep.subr.mxu0 0.0
    %2217 = vmatpush1.msra.mxu0 0.0
    %2218 = vmatprep.subr.mxu0 0.0
    %2219 = vmatpush1.msra.mxu0 0.0
    %2220 = vmatprep.subr.mxu0 0.0
    %2221 = vmatpush1.msra.mxu0 0.0
    %2222 = vmatprep.subr.mxu0 0.0
    %2223 = vmatpush1.msra.mxu0 0.0
    %2224 = vmatprep.subr.mxu0 0.0
    %2225 = vmatpush1.msra.mxu0 0.0
    %2226 = vmatprep.subr.mxu0 0.0
    %2227 = vmatpush1.msra.mxu0 0.0
    %2228 = vmatprep.subr.mxu0 0.0
    %2229 = vmatpush1.msra.mxu0 0.0
    %2230 = vmatprep.subr.mxu0 0.0
    %2231 = vmatpush1.msra.mxu0 0.0
    %2232 = vmatprep.subr.mxu0 0.0
    %2233 = vmatpush1.msra.mxu0 0.0
    %2234 = vmatprep.subr.mxu0 0.0
    %2235 = vmatpush1.msra.mxu0 0.0
    %2236 = vmatprep.subr.mxu0 0.0
    %2237 = vmatpush1.msra.mxu0 0.0
    %2238 = vmatprep.subr.mxu0 0.0
    %2239 = vmatpush1.msra.mxu0 0.0
    %2240 = vmatprep.subr.mxu0 0.0
    %2241 = vmatpush1.msra.mxu0 0.0
    %2242 = vmatprep.subr.mxu0 0.0
    %2243 = vmatpush1.msra.mxu0 0.0
    %2244 = vmatprep.mubr.f32.mxu0 0.0
    %2245 = vmatmul.mubr.f32.gmra.mrb[0].mxu0 %v2080
    %v2246 = vpop.f32.mrb[0].mxu0
    %v2247 = vadd.f32 %v2179, %v2246
    %v2248 = vpop.f32.mrb[0].mxu0
    %2249 = vmatprep.mubr.f32.mxu0 0.0
    %2250 = vmatmul.mubr.f32.gmra.mrb[0].mxu0 %v2083
    %v2251 = vpop.f32.mrb[0].mxu0
    %v2252 = vadd.f32 %v2179, %v2251
    %v2253 = vpop.f32.mrb[0].mxu0
    %2254 = vmatprep.mubr.f32.mxu0 0.0
    %2255 = vmatmul.mubr.f32.gmra.mrb[0].mxu0 %v2086
    %v2256 = vpop.f32.mrb[0].mxu0
    %v2257 = vadd.f32 %v2179, %v2256
    %v2258 = vpop.f32.mrb[0].mxu0
    %2259 = vmatprep.mubr.f32.mxu0 0.0
    %2260 = vmatmul.mubr.f32.gmra.mrb[0].mxu0 %v2089
    %v2261 = vpop.f32.mrb[0].mxu0
    %v2262 = vadd.f32 %v2179, %v2261
    %v2263 = vpop.f32.mrb[0].mxu0
    %2264 = vdwg.mxu0
    %v2265 = vlaneseq
    %v2266 = vshrl.u32 %v2265, 7
    %v2267 = vsub.s32 1, %v2266
    %v2268 = vrot.slane %v23, %v2267
    %2269 = vmatprep.subr.mxu0 0.0
    %2270 = vmatpush1.msra.mxu0 %v2067
    %2271 = vmatprep.subr.mxu0 0.0
    %2272 = vmatpush1.msra.mxu0 %v2068
    %2273 = vmatprep.subr.mxu0 0.0
    %2274 = vmatpush1.msra.mxu0 %v2069
    %2275 = vmatprep.subr.mxu0 0.0
    %2276 = vmatpush1.msra.mxu0 %v2070
    %2277 = vmatprep.subr.mxu0 0.0
    %2278 = vmatpush1.msra.mxu0 0.0
    %2279 = vmatprep.subr.mxu0 0.0
    %2280 = vmatpush1.msra.mxu0 0.0
    %2281 = vmatprep.subr.mxu0 0.0
    %2282 = vmatpush1.msra.mxu0 0.0
    %2283 = vmatprep.subr.mxu0 0.0
    %2284 = vmatpush1.msra.mxu0 0.0
    %2285 = vmatprep.subr.mxu0 0.0
    %2286 = vmatpush1.msra.mxu0 0.0
    %2287 = vmatprep.subr.mxu0 0.0
    %2288 = vmatpush1.msra.mxu0 0.0
    %2289 = vmatprep.subr.mxu0 0.0
    %2290 = vmatpush1.msra.mxu0 0.0
    %2291 = vmatprep.subr.mxu0 0.0
    %2292 = vmatpush1.msra.mxu0 0.0
    %2293 = vmatprep.subr.mxu0 0.0
    %2294 = vmatpush1.msra.mxu0 0.0
    %2295 = vmatprep.subr.mxu0 0.0
    %2296 = vmatpush1.msra.mxu0 0.0
    %2297 = vmatprep.subr.mxu0 0.0
    %2298 = vmatpush1.msra.mxu0 0.0
    %2299 = vmatprep.subr.mxu0 0.0
    %2300 = vmatpush1.msra.mxu0 0.0
    %2301 = vmatprep.subr.mxu0 0.0
    %2302 = vmatpush1.msra.mxu0 0.0
    %2303 = vmatprep.subr.mxu0 0.0
    %2304 = vmatpush1.msra.mxu0 0.0
    %2305 = vmatprep.subr.mxu0 0.0
    %2306 = vmatpush1.msra.mxu0 0.0
    %2307 = vmatprep.subr.mxu0 0.0
    %2308 = vmatpush1.msra.mxu0 0.0
    %2309 = vmatprep.subr.mxu0 0.0
    %2310 = vmatpush1.msra.mxu0 0.0
    %2311 = vmatprep.subr.mxu0 0.0
    %2312 = vmatpush1.msra.mxu0 0.0
    %2313 = vmatprep.subr.mxu0 0.0
    %2314 = vmatpush1.msra.mxu0 0.0
    %2315 = vmatprep.subr.mxu0 0.0
    %2316 = vmatpush1.msra.mxu0 0.0
    %2317 = vmatprep.subr.mxu0 0.0
    %2318 = vmatpush1.msra.mxu0 0.0
    %2319 = vmatprep.subr.mxu0 0.0
    %2320 = vmatpush1.msra.mxu0 0.0
    %2321 = vmatprep.subr.mxu0 0.0
    %2322 = vmatpush1.msra.mxu0 0.0
    %2323 = vmatprep.subr.mxu0 0.0
    %2324 = vmatpush1.msra.mxu0 0.0
    %2325 = vmatprep.subr.mxu0 0.0
    %2326 = vmatpush1.msra.mxu0 0.0
    %2327 = vmatprep.subr.mxu0 0.0
    %2328 = vmatpush1.msra.mxu0 0.0
    %2329 = vmatprep.subr.mxu0 0.0
    %2330 = vmatpush1.msra.mxu0 0.0
    %2331 = vmatprep.subr.mxu0 0.0
    %2332 = vmatpush1.msra.mxu0 0.0
    %2333 = vmatprep.mubr.f32.mxu0 0.0
    %2334 = vmatmul.mubr.f32.gmra.mrb[0].mxu0 %v2080
    %v2335 = vpop.f32.mrb[0].mxu0
    %v2336 = vadd.f32 %v2268, %v2335
    %v2337 = vpop.f32.mrb[0].mxu0
    %2338 = vmatprep.mubr.f32.mxu0 0.0
    %2339 = vmatmul.mubr.f32.gmra.mrb[0].mxu0 %v2083
    %v2340 = vpop.f32.mrb[0].mxu0
    %v2341 = vadd.f32 %v2268, %v2340
    %v2342 = vpop.f32.mrb[0].mxu0
    %2343 = vmatprep.mubr.f32.mxu0 0.0
    %2344 = vmatmul.mubr.f32.gmra.mrb[0].mxu0 %v2086
    %v2345 = vpop.f32.mrb[0].mxu0
    %v2346 = vadd.f32 %v2268, %v2345
    %v2347 = vpop.f32.mrb[0].mxu0
    %2348 = vmatprep.mubr.f32.mxu0 0.0
    %2349 = vmatmul.mubr.f32.gmra.mrb[0].mxu0 %v2089
    %v2350 = vpop.f32.mrb[0].mxu0
    %v2351 = vadd.f32 %v2268, %v2350
    %v2352 = vpop.f32.mrb[0].mxu0
    %2353 = vdwg.mxu0
    %v2354 = vmul.f32 %v2247, %v34
    %v2355 = vmul.f32 %v2252, %v34
    %v2356 = vmul.f32 %v2257, %v34
    %v2357 = vmul.f32 %v2262, %v34
    %v2359 = vsel %vm285, %v2158, 0
    %v2362 = vsel %vm285, %v2163, 0
    %v2365 = vsel %vm285, %v2168, 0
    %v2368 = vsel %vm285, %v2173, 0
    %v2371 = vsel %vm285, %v2354, 0
    %v2374 = vsel %vm285, %v2355, 0
    %v2377 = vsel %vm285, %v2356, 0
    %v2380 = vsel %vm285, %v2357, 0
    %2382 = vmatprep.subr.mxu0 0.0
    %2383 = vmatpush1.xpose.msra.mxu0 %v2371
    %2384 = vmatprep.subr.mxu0 0.0
    %2385 = vmatpush1.xpose.msra.mxu0 %v2374
    %2386 = vmatprep.subr.mxu0 0.0
    %2387 = vmatpush1.xpose.msra.mxu0 %v2377
    %2388 = vmatprep.subr.mxu0 0.0
    %2389 = vmatpush1.xpose.msra.mxu0 %v2380
    %2390 = vmatprep.subr.mxu0 0.0
    %2391 = vmatpush1.xpose.msra.mxu0 0.0
    %2392 = vmatprep.subr.mxu0 0.0
    %2393 = vmatpush1.xpose.msra.mxu0 0.0
    %2394 = vmatprep.subr.mxu0 0.0
    %2395 = vmatpush1.xpose.msra.mxu0 0.0
    %2396 = vmatprep.subr.mxu0 0.0
    %2397 = vmatpush1.xpose.msra.mxu0 0.0
    %2398 = vmatprep.subr.mxu0 0.0
    %2399 = vmatpush1.xpose.msra.mxu0 0.0
    %2400 = vmatprep.subr.mxu0 0.0
    %2401 = vmatpush1.xpose.msra.mxu0 0.0
    %2402 = vmatprep.subr.mxu0 0.0
    %2403 = vmatpush1.xpose.msra.mxu0 0.0
    %2404 = vmatprep.subr.mxu0 0.0
    %2405 = vmatpush1.xpose.msra.mxu0 0.0
    %2406 = vmatprep.subr.mxu0 0.0
    %2407 = vmatpush1.xpose.msra.mxu0 0.0
    %2408 = vmatprep.subr.mxu0 0.0
    %2409 = vmatpush1.xpose.msra.mxu0 0.0
    %2410 = vmatprep.subr.mxu0 0.0
    %2411 = vmatpush1.xpose.msra.mxu0 0.0
    %2412 = vmatprep.subr.mxu0 0.0
    %2413 = vmatpush1.xpose.msra.mxu0 0.0
    %2414 = vmatprep.subr.mxu0 0.0
    %2415 = vmatpush1.xpose.msra.mxu0 0.0
    %2416 = vmatprep.subr.mxu0 0.0
    %2417 = vmatpush1.xpose.msra.mxu0 0.0
    %2418 = vmatprep.subr.mxu0 0.0
    %2419 = vmatpush1.xpose.msra.mxu0 0.0
    %2420 = vmatprep.subr.mxu0 0.0
    %2421 = vmatpush1.xpose.msra.mxu0 0.0
    %2422 = vmatprep.subr.mxu0 0.0
    %2423 = vmatpush1.xpose.msra.mxu0 0.0
    %2424 = vmatprep.subr.mxu0 0.0
    %2425 = vmatpush1.xpose.msra.mxu0 0.0
    %2426 = vmatprep.subr.mxu0 0.0
    %2427 = vmatpush1.xpose.msra.mxu0 0.0
    %2428 = vmatprep.subr.mxu0 0.0
    %2429 = vmatpush1.xpose.msra.mxu0 0.0
    %2430 = vmatprep.subr.mxu0 0.0
    %2431 = vmatpush1.xpose.msra.mxu0 0.0
    %2432 = vmatprep.subr.mxu0 0.0
    %2433 = vmatpush1.xpose.msra.mxu0 0.0
    %2434 = vmatprep.subr.mxu0 0.0
    %2435 = vmatpush1.xpose.msra.mxu0 0.0
    %2436 = vmatprep.subr.mxu0 0.0
    %2437 = vmatpush1.xpose.msra.mxu0 0.0
    %2438 = vmatprep.subr.mxu0 0.0
    %2439 = vmatpush1.xpose.msra.mxu0 0.0
    %2440 = vmatprep.subr.mxu0 0.0
    %2441 = vmatpush1.xpose.msra.mxu0 0.0
    %2442 = vmatprep.subr.mxu0 0.0
    %2443 = vmatpush1.xpose.msra.mxu0 0.0
    %2444 = vmatprep.subr.mxu0 0.0
    %2445 = vmatpush1.xpose.msra.mxu0 0.0
    %2446 = vmatprep.mubr.f32.mxu0 0.0
    %2447 = vmatmul.mubr.f32.gmra.mrb[0].mxu0 %v2359
    %v2448 = vpop.f32.mrb[0].mxu0
    %v2449 = vadd.f32 0.0, %v2448
    %v2450 = vpop.f32.mrb[0].mxu0
    %2451 = vmatprep.mubr.f32.mxu0 0.0
    %2452 = vmatmul.mubr.f32.gmra.mrb[0].mxu0 %v2362
    %v2453 = vpop.f32.mrb[0].mxu0
    %v2454 = vadd.f32 0.0, %v2453
    %v2455 = vpop.f32.mrb[0].mxu0
    %2456 = vmatprep.mubr.f32.mxu0 0.0
    %2457 = vmatmul.mubr.f32.gmra.mrb[0].mxu0 %v2365
    %v2458 = vpop.f32.mrb[0].mxu0
    %v2459 = vadd.f32 0.0, %v2458
    %v2460 = vpop.f32.mrb[0].mxu0
    %2461 = vmatprep.mubr.f32.mxu0 0.0
    %2462 = vmatmul.mubr.f32.gmra.mrb[0].mxu0 %v2368
    %v2463 = vpop.f32.mrb[0].mxu0
    %v2464 = vadd.f32 0.0, %v2463
    %v2465 = vpop.f32.mrb[0].mxu0
    %2466 = vdwg.mxu0
    %v2467 = vmul.f32 %v2449, 0.35355338
    %v2468 = vmul.f32 %v2454, 0.35355338
    %v2469 = vmul.f32 %v2459, 0.35355338
    %v2470 = vmul.f32 %v2464, 0.35355338
    %v2471 = vadd.f32 %v2467, %v64
    %v2472 = vadd.f32 %v2468, %v65
    %v2473 = vadd.f32 %v2469, %v66
    %v2474 = vadd.f32 %v2470, %v67
    %v2475 = vsel %vm285, %v2471, -inf
    %2476 = vmax.xlane.f32.xlu0 %v2475
    %v2477 = vpop.xlane.xlu0 %2476
    %v2478 = vsel %vm285, %v2472, -inf
    %2479 = vmax.xlane.f32.xlu0 %v2478
    %v2480 = vpop.xlane.xlu0 %2479
    %v2481 = vsel %vm285, %v2473, -inf
    %2482 = vmax.xlane.f32.xlu0 %v2481
    %v2483 = vpop.xlane.xlu0 %2482
    %v2484 = vsel %vm285, %v2474, -inf
    %2485 = vmax.xlane.f32.xlu0 %v2484
    %v2486 = vpop.xlane.xlu0 %2485
    %v2487 = vsub.f32 %v2471, %v2477
    %v2488 = vsub.f32 %v2472, %v2480
    %v2489 = vsub.f32 %v2473, %v2483
    %v2490 = vsub.f32 %v2474, %v2486
    %v2491 = vmul.f32 %v2487, 1.442695
    %v2492 = vpow.pop %v2491
    %v2493 = vmul.f32 %v2488, 1.442695
    %v2494 = vpow.pop %v2493
    %v2495 = vmul.f32 %v2489, 1.442695
    %v2496 = vpow.pop %v2495
    %v2497 = vmul.f32 %v2490, 1.442695
    %v2498 = vpow.pop %v2497
    %v2499 = vsel %vm285, %v2492, 0.0
    %2500 = vadd.xlane.f32.xlu0 %v2499
    %v2501 = vpop.xlane.xlu0 %2500
    %v2502 = vsel %vm285, %v2494, 0.0
    %2503 = vadd.xlane.f32.xlu0 %v2502
    %v2504 = vpop.xlane.xlu0 %2503
    %v2505 = vsel %vm285, %v2496, 0.0
    %2506 = vadd.xlane.f32.xlu0 %v2505
    %v2507 = vpop.xlane.xlu0 %2506
    %v2508 = vsel %vm285, %v2498, 0.0
    %2509 = vadd.xlane.f32.xlu0 %v2508
    %v2510 = vpop.xlane.xlu0 %2509
    %v2511 = vrcp.pop %v2501
    %v2512 = vrcp.pop %v2504
    %v2513 = vrcp.pop %v2507
    %v2514 = vrcp.pop %v2510
    %v2515 = vmul.f32 %v2492, %v2511
    %v2516 = vmul.f32 %v2494, %v2512
    %v2517 = vmul.f32 %v2496, %v2513
    %v2518 = vmul.f32 %v2498, %v2514
    %v2519 = vmul.f32 %v2336, %v34
    %v2520 = vmul.f32 %v2341, %v34
    %v2521 = vmul.f32 %v2346, %v34
    %v2522 = vmul.f32 %v2351, %v34
    %v2523 = vmul.f32 %v2247, %v39
    %v2524 = vmul.f32 %v2252, %v39
    %v2525 = vmul.f32 %v2257, %v39
    %v2526 = vmul.f32 %v2262, %v39
    %v2528 = vsel %vm285, %v2523, 0
    %v2531 = vsel %vm285, %v2524, 0
    %v2534 = vsel %vm285, %v2525, 0
    %v2537 = vsel %vm285, %v2526, 0
    %2539 = vmatprep.subr.mxu0 0.0
    %2540 = vmatpush1.xpose.msra.mxu0 %v2528
    %2541 = vmatprep.subr.mxu0 0.0
    %2542 = vmatpush1.xpose.msra.mxu0 %v2531
    %2543 = vmatprep.subr.mxu0 0.0
    %2544 = vmatpush1.xpose.msra.mxu0 %v2534
    %2545 = vmatprep.subr.mxu0 0.0
    %2546 = vmatpush1.xpose.msra.mxu0 %v2537
    %2547 = vmatprep.subr.mxu0 0.0
    %2548 = vmatpush1.xpose.msra.mxu0 0.0
    %2549 = vmatprep.subr.mxu0 0.0
    %2550 = vmatpush1.xpose.msra.mxu0 0.0
    %2551 = vmatprep.subr.mxu0 0.0
    %2552 = vmatpush1.xpose.msra.mxu0 0.0
    %2553 = vmatprep.subr.mxu0 0.0
    %2554 = vmatpush1.xpose.msra.mxu0 0.0
    %2555 = vmatprep.subr.mxu0 0.0
    %2556 = vmatpush1.xpose.msra.mxu0 0.0
    %2557 = vmatprep.subr.mxu0 0.0
    %2558 = vmatpush1.xpose.msra.mxu0 0.0
    %2559 = vmatprep.subr.mxu0 0.0
    %2560 = vmatpush1.xpose.msra.mxu0 0.0
    %2561 = vmatprep.subr.mxu0 0.0
    %2562 = vmatpush1.xpose.msra.mxu0 0.0
    %2563 = vmatprep.subr.mxu0 0.0
    %2564 = vmatpush1.xpose.msra.mxu0 0.0
    %2565 = vmatprep.subr.mxu0 0.0
    %2566 = vmatpush1.xpose.msra.mxu0 0.0
    %2567 = vmatprep.subr.mxu0 0.0
    %2568 = vmatpush1.xpose.msra.mxu0 0.0
    %2569 = vmatprep.subr.mxu0 0.0
    %2570 = vmatpush1.xpose.msra.mxu0 0.0
    %2571 = vmatprep.subr.mxu0 0.0
    %2572 = vmatpush1.xpose.msra.mxu0 0.0
    %2573 = vmatprep.subr.mxu0 0.0
    %2574 = vmatpush1.xpose.msra.mxu0 0.0
    %2575 = vmatprep.subr.mxu0 0.0
    %2576 = vmatpush1.xpose.msra.mxu0 0.0
    %2577 = vmatprep.subr.mxu0 0.0
    %2578 = vmatpush1.xpose.msra.mxu0 0.0
    %2579 = vmatprep.subr.mxu0 0.0
    %2580 = vmatpush1.xpose.msra.mxu0 0.0
    %2581 = vmatprep.subr.mxu0 0.0
    %2582 = vmatpush1.xpose.msra.mxu0 0.0
    %2583 = vmatprep.subr.mxu0 0.0
    %2584 = vmatpush1.xpose.msra.mxu0 0.0
    %2585 = vmatprep.subr.mxu0 0.0
    %2586 = vmatpush1.xpose.msra.mxu0 0.0
    %2587 = vmatprep.subr.mxu0 0.0
    %2588 = vmatpush1.xpose.msra.mxu0 0.0
    %2589 = vmatprep.subr.mxu0 0.0
    %2590 = vmatpush1.xpose.msra.mxu0 0.0
    %2591 = vmatprep.subr.mxu0 0.0
    %2592 = vmatpush1.xpose.msra.mxu0 0.0
    %2593 = vmatprep.subr.mxu0 0.0
    %2594 = vmatpush1.xpose.msra.mxu0 0.0
    %2595 = vmatprep.subr.mxu0 0.0
    %2596 = vmatpush1.xpose.msra.mxu0 0.0
    %2597 = vmatprep.subr.mxu0 0.0
    %2598 = vmatpush1.xpose.msra.mxu0 0.0
    %2599 = vmatprep.subr.mxu0 0.0
    %2600 = vmatpush1.xpose.msra.mxu0 0.0
    %2601 = vmatprep.subr.mxu0 0.0
    %2602 = vmatpush1.xpose.msra.mxu0 0.0
    %2603 = vmatprep.mubr.f32.mxu0 0.0
    %2604 = vmatmul.mubr.f32.gmra.mrb[0].mxu0 %v2359
    %v2605 = vpop.f32.mrb[0].mxu0
    %v2606 = vadd.f32 0.0, %v2605
    %v2607 = vpop.f32.mrb[0].mxu0
    %2608 = vmatprep.mubr.f32.mxu0 0.0
    %2609 = vmatmul.mubr.f32.gmra.mrb[0].mxu0 %v2362
    %v2610 = vpop.f32.mrb[0].mxu0
    %v2611 = vadd.f32 0.0, %v2610
    %v2612 = vpop.f32.mrb[0].mxu0
    %2613 = vmatprep.mubr.f32.mxu0 0.0
    %2614 = vmatmul.mubr.f32.gmra.mrb[0].mxu0 %v2365
    %v2615 = vpop.f32.mrb[0].mxu0
    %v2616 = vadd.f32 0.0, %v2615
    %v2617 = vpop.f32.mrb[0].mxu0
    %2618 = vmatprep.mubr.f32.mxu0 0.0
    %2619 = vmatmul.mubr.f32.gmra.mrb[0].mxu0 %v2368
    %v2620 = vpop.f32.mrb[0].mxu0
    %v2621 = vadd.f32 0.0, %v2620
    %v2622 = vpop.f32.mrb[0].mxu0
    %2623 = vdwg.mxu0
    %v2624 = vmul.f32 %v2606, 0.35355338
    %v2625 = vmul.f32 %v2611, 0.35355338
    %v2626 = vmul.f32 %v2616, 0.35355338
    %v2627 = vmul.f32 %v2621, 0.35355338
    %v2628 = vadd.f32 %v2624, %v64
    %v2629 = vadd.f32 %v2625, %v65
    %v2630 = vadd.f32 %v2626, %v66
    %v2631 = vadd.f32 %v2627, %v67
    %v2632 = vsel %vm285, %v2628, -inf
    %2633 = vmax.xlane.f32.xlu0 %v2632
    %v2634 = vpop.xlane.xlu0 %2633
    %v2635 = vsel %vm285, %v2629, -inf
    %2636 = vmax.xlane.f32.xlu0 %v2635
    %v2637 = vpop.xlane.xlu0 %2636
    %v2638 = vsel %vm285, %v2630, -inf
    %2639 = vmax.xlane.f32.xlu0 %v2638
    %v2640 = vpop.xlane.xlu0 %2639
    %v2641 = vsel %vm285, %v2631, -inf
    %2642 = vmax.xlane.f32.xlu0 %v2641
    %v2643 = vpop.xlane.xlu0 %2642
    %v2644 = vsub.f32 %v2628, %v2634
    %v2645 = vsub.f32 %v2629, %v2637
    %v2646 = vsub.f32 %v2630, %v2640
    %v2647 = vsub.f32 %v2631, %v2643
    %v2648 = vmul.f32 %v2644, 1.442695
    %v2649 = vpow.pop %v2648
    %v2650 = vmul.f32 %v2645, 1.442695
    %v2651 = vpow.pop %v2650
    %v2652 = vmul.f32 %v2646, 1.442695
    %v2653 = vpow.pop %v2652
    %v2654 = vmul.f32 %v2647, 1.442695
    %v2655 = vpow.pop %v2654
    %v2656 = vsel %vm285, %v2649, 0.0
    %2657 = vadd.xlane.f32.xlu0 %v2656
    %v2658 = vpop.xlane.xlu0 %2657
    %v2659 = vsel %vm285, %v2651, 0.0
    %2660 = vadd.xlane.f32.xlu0 %v2659
    %v2661 = vpop.xlane.xlu0 %2660
    %v2662 = vsel %vm285, %v2653, 0.0
    %2663 = vadd.xlane.f32.xlu0 %v2662
    %v2664 = vpop.xlane.xlu0 %2663
    %v2665 = vsel %vm285, %v2655, 0.0
    %2666 = vadd.xlane.f32.xlu0 %v2665
    %v2667 = vpop.xlane.xlu0 %2666
    %v2668 = vrcp.pop %v2658
    %v2669 = vrcp.pop %v2661
    %v2670 = vrcp.pop %v2664
    %v2671 = vrcp.pop %v2667
    %v2672 = vmul.f32 %v2649, %v2668
    %v2673 = vmul.f32 %v2651, %v2669
    %v2674 = vmul.f32 %v2653, %v2670
    %v2675 = vmul.f32 %v2655, %v2671
    %v2676 = vmul.f32 %v2336, %v39
    %v2677 = vmul.f32 %v2341, %v39
    %v2678 = vmul.f32 %v2346, %v39
    %v2679 = vmul.f32 %v2351, %v39
    %v2681 = vsel %vm285, %v2672, 0
    %v2684 = vsel %vm285, %v2673, 0
    %v2687 = vsel %vm285, %v2674, 0
    %v2690 = vsel %vm285, %v2675, 0
    %2692 = vmatprep.subr.mxu0 0.0
    %2693 = vmatpush1.msra.mxu0 %v2676
    %2694 = vmatprep.subr.mxu0 0.0
    %2695 = vmatpush1.msra.mxu0 %v2677
    %2696 = vmatprep.subr.mxu0 0.0
    %2697 = vmatpush1.msra.mxu0 %v2678
    %2698 = vmatprep.subr.mxu0 0.0
    %2699 = vmatpush1.msra.mxu0 %v2679
    %2700 = vmatprep.subr.mxu0 0.0
    %2701 = vmatpush1.msra.mxu0 0.0
    %2702 = vmatprep.subr.mxu0 0.0
    %2703 = vmatpush1.msra.mxu0 0.0
    %2704 = vmatprep.subr.mxu0 0.0
    %2705 = vmatpush1.msra.mxu0 0.0
    %2706 = vmatprep.subr.mxu0 0.0
    %2707 = vmatpush1.msra.mxu0 0.0
    %2708 = vmatprep.subr.mxu0 0.0
    %2709 = vmatpush1.msra.mxu0 0.0
    %2710 = vmatprep.subr.mxu0 0.0
    %2711 = vmatpush1.msra.mxu0 0.0
    %2712 = vmatprep.subr.mxu0 0.0
    %2713 = vmatpush1.msra.mxu0 0.0
    %2714 = vmatprep.subr.mxu0 0.0
    %2715 = vmatpush1.msra.mxu0 0.0
    %2716 = vmatprep.subr.mxu0 0.0
    %2717 = vmatpush1.msra.mxu0 0.0
    %2718 = vmatprep.subr.mxu0 0.0
    %2719 = vmatpush1.msra.mxu0 0.0
    %2720 = vmatprep.subr.mxu0 0.0
    %2721 = vmatpush1.msra.mxu0 0.0
    %2722 = vmatprep.subr.mxu0 0.0
    %2723 = vmatpush1.msra.mxu0 0.0
    %2724 = vmatprep.subr.mxu0 0.0
    %2725 = vmatpush1.msra.mxu0 0.0
    %2726 = vmatprep.subr.mxu0 0.0
    %2727 = vmatpush1.msra.mxu0 0.0
    %2728 = vmatprep.subr.mxu0 0.0
    %2729 = vmatpush1.msra.mxu0 0.0
    %2730 = vmatprep.subr.mxu0 0.0
    %2731 = vmatpush1.msra.mxu0 0.0
    %2732 = vmatprep.subr.mxu0 0.0
    %2733 = vmatpush1.msra.mxu0 0.0
    %2734 = vmatprep.subr.mxu0 0.0
    %2735 = vmatpush1.msra.mxu0 0.0
    %2736 = vmatprep.subr.mxu0 0.0
    %2737 = vmatpush1.msra.mxu0 0.0
    %2738 = vmatprep.subr.mxu0 0.0
    %2739 = vmatpush1.msra.mxu0 0.0
    %2740 = vmatprep.subr.mxu0 0.0
    %2741 = vmatpush1.msra.mxu0 0.0
    %2742 = vmatprep.subr.mxu0 0.0
    %2743 = vmatpush1.msra.mxu0 0.0
    %2744 = vmatprep.subr.mxu0 0.0
    %2745 = vmatpush1.msra.mxu0 0.0
    %2746 = vmatprep.subr.mxu0 0.0
    %2747 = vmatpush1.msra.mxu0 0.0
    %2748 = vmatprep.subr.mxu0 0.0
    %2749 = vmatpush1.msra.mxu0 0.0
    %2750 = vmatprep.subr.mxu0 0.0
    %2751 = vmatpush1.msra.mxu0 0.0
    %2752 = vmatprep.subr.mxu0 0.0
    %2753 = vmatpush1.msra.mxu0 0.0
    %2754 = vmatprep.subr.mxu0 0.0
    %2755 = vmatpush1.msra.mxu0 0.0
    %2756 = vmatprep.mubr.f32.mxu0 0.0
    %2757 = vmatmul.mubr.f32.gmra.mrb[0].mxu0 %v2681
    %v2758 = vpop.f32.mrb[0].mxu0
    %v2759 = vadd.f32 0.0, %v2758
    %v2760 = vpop.f32.mrb[0].mxu0
    %2761 = vmatprep.mubr.f32.mxu0 0.0
    %2762 = vmatmul.mubr.f32.gmra.mrb[0].mxu0 %v2684
    %v2763 = vpop.f32.mrb[0].mxu0
    %v2764 = vadd.f32 0.0, %v2763
    %v2765 = vpop.f32.mrb[0].mxu0
    %2766 = vmatprep.mubr.f32.mxu0 0.0
    %2767 = vmatmul.mubr.f32.gmra.mrb[0].mxu0 %v2687
    %v2768 = vpop.f32.mrb[0].mxu0
    %v2769 = vadd.f32 0.0, %v2768
    %v2770 = vpop.f32.mrb[0].mxu0
    %2771 = vmatprep.mubr.f32.mxu0 0.0
    %2772 = vmatmul.mubr.f32.gmra.mrb[0].mxu0 %v2690
    %v2773 = vpop.f32.mrb[0].mxu0
    %v2774 = vadd.f32 0.0, %v2773
    %v2775 = vpop.f32.mrb[0].mxu0
    %2776 = vdwg.mxu0
    %v2778 = vsel %vm285, %v2515, 0
    %v2781 = vsel %vm285, %v2516, 0
    %v2784 = vsel %vm285, %v2517, 0
    %v2787 = vsel %vm285, %v2518, 0
    %2789 = vmatprep.subr.mxu0 0.0
    %2790 = vmatpush1.msra.mxu0 %v2519
    %2791 = vmatprep.subr.mxu0 0.0
    %2792 = vmatpush1.msra.mxu0 %v2520
    %2793 = vmatprep.subr.mxu0 0.0
    %2794 = vmatpush1.msra.mxu0 %v2521
    %2795 = vmatprep.subr.mxu0 0.0
    %2796 = vmatpush1.msra.mxu0 %v2522
    %2797 = vmatprep.subr.mxu0 0.0
    %2798 = vmatpush1.msra.mxu0 0.0
    %2799 = vmatprep.subr.mxu0 0.0
    %2800 = vmatpush1.msra.mxu0 0.0
    %2801 = vmatprep.subr.mxu0 0.0
    %2802 = vmatpush1.msra.mxu0 0.0
    %2803 = vmatprep.subr.mxu0 0.0
    %2804 = vmatpush1.msra.mxu0 0.0
    %2805 = vmatprep.subr.mxu0 0.0
    %2806 = vmatpush1.msra.mxu0 0.0
    %2807 = vmatprep.subr.mxu0 0.0
    %2808 = vmatpush1.msra.mxu0 0.0
    %2809 = vmatprep.subr.mxu0 0.0
    %2810 = vmatpush1.msra.mxu0 0.0
    %2811 = vmatprep.subr.mxu0 0.0
    %2812 = vmatpush1.msra.mxu0 0.0
    %2813 = vmatprep.subr.mxu0 0.0
    %2814 = vmatpush1.msra.mxu0 0.0
    %2815 = vmatprep.subr.mxu0 0.0
    %2816 = vmatpush1.msra.mxu0 0.0
    %2817 = vmatprep.subr.mxu0 0.0
    %2818 = vmatpush1.msra.mxu0 0.0
    %2819 = vmatprep.subr.mxu0 0.0
    %2820 = vmatpush1.msra.mxu0 0.0
    %2821 = vmatprep.subr.mxu0 0.0
    %2822 = vmatpush1.msra.mxu0 0.0
    %2823 = vmatprep.subr.mxu0 0.0
    %2824 = vmatpush1.msra.mxu0 0.0
    %2825 = vmatprep.subr.mxu0 0.0
    %2826 = vmatpush1.msra.mxu0 0.0
    %2827 = vmatprep.subr.mxu0 0.0
    %2828 = vmatpush1.msra.mxu0 0.0
    %2829 = vmatprep.subr.mxu0 0.0
    %2830 = vmatpush1.msra.mxu0 0.0
    %2831 = vmatprep.subr.mxu0 0.0
    %2832 = vmatpush1.msra.mxu0 0.0
    %2833 = vmatprep.subr.mxu0 0.0
    %2834 = vmatpush1.msra.mxu0 0.0
    %2835 = vmatprep.subr.mxu0 0.0
    %2836 = vmatpush1.msra.mxu0 0.0
    %2837 = vmatprep.subr.mxu0 0.0
    %2838 = vmatpush1.msra.mxu0 0.0
    %2839 = vmatprep.subr.mxu0 0.0
    %2840 = vmatpush1.msra.mxu0 0.0
    %2841 = vmatprep.subr.mxu0 0.0
    %2842 = vmatpush1.msra.mxu0 0.0
    %2843 = vmatprep.subr.mxu0 0.0
    %2844 = vmatpush1.msra.mxu0 0.0
    %2845 = vmatprep.subr.mxu0 0.0
    %2846 = vmatpush1.msra.mxu0 0.0
    %2847 = vmatprep.subr.mxu0 0.0
    %2848 = vmatpush1.msra.mxu0 0.0
    %2849 = vmatprep.subr.mxu0 0.0
    %2850 = vmatpush1.msra.mxu0 0.0
    %2851 = vmatprep.subr.mxu0 0.0
    %2852 = vmatpush1.msra.mxu0 0.0
    %2853 = vmatprep.mubr.f32.mxu0 0.0
    %2854 = vmatmul.mubr.f32.gmra.mrb[0].mxu0 %v2778
    %v2855 = vpop.f32.mrb[0].mxu0
    %v2856 = vadd.f32 %v2759, %v2855
    %v2857 = vpop.f32.mrb[0].mxu0
    %2858 = vmatprep.mubr.f32.mxu0 0.0
    %2859 = vmatmul.mubr.f32.gmra.mrb[0].mxu0 %v2781
    %v2860 = vpop.f32.mrb[0].mxu0
    %v2861 = vadd.f32 %v2764, %v2860
    %v2862 = vpop.f32.mrb[0].mxu0
    %2863 = vmatprep.mubr.f32.mxu0 0.0
    %2864 = vmatmul.mubr.f32.gmra.mrb[0].mxu0 %v2784
    %v2865 = vpop.f32.mrb[0].mxu0
    %v2866 = vadd.f32 %v2769, %v2865
    %v2867 = vpop.f32.mrb[0].mxu0
    %2868 = vmatprep.mubr.f32.mxu0 0.0
    %2869 = vmatmul.mubr.f32.gmra.mrb[0].mxu0 %v2787
    %v2870 = vpop.f32.mrb[0].mxu0
    %v2871 = vadd.f32 %v2774, %v2870
    %v2872 = vpop.f32.mrb[0].mxu0
    %2873 = vdwg.mxu0
    %v2874 = vmul.f32 %v2247, %v44
    %v2875 = vmul.f32 %v2252, %v44
    %v2876 = vmul.f32 %v2257, %v44
    %v2877 = vmul.f32 %v2262, %v44
    %v2879 = vsel %vm285, %v2874, 0
    %v2882 = vsel %vm285, %v2875, 0
    %v2885 = vsel %vm285, %v2876, 0
    %v2888 = vsel %vm285, %v2877, 0
    %2890 = vmatprep.subr.mxu0 0.0
    %2891 = vmatpush1.xpose.msra.mxu0 %v2879
    %2892 = vmatprep.subr.mxu0 0.0
    %2893 = vmatpush1.xpose.msra.mxu0 %v2882
    %2894 = vmatprep.subr.mxu0 0.0
    %2895 = vmatpush1.xpose.msra.mxu0 %v2885
    %2896 = vmatprep.subr.mxu0 0.0
    %2897 = vmatpush1.xpose.msra.mxu0 %v2888
    %2898 = vmatprep.subr.mxu0 0.0
    %2899 = vmatpush1.xpose.msra.mxu0 0.0
    %2900 = vmatprep.subr.mxu0 0.0
    %2901 = vmatpush1.xpose.msra.mxu0 0.0
    %2902 = vmatprep.subr.mxu0 0.0
    %2903 = vmatpush1.xpose.msra.mxu0 0.0
    %2904 = vmatprep.subr.mxu0 0.0
    %2905 = vmatpush1.xpose.msra.mxu0 0.0
    %2906 = vmatprep.subr.mxu0 0.0
    %2907 = vmatpush1.xpose.msra.mxu0 0.0
    %2908 = vmatprep.subr.mxu0 0.0
    %2909 = vmatpush1.xpose.msra.mxu0 0.0
    %2910 = vmatprep.subr.mxu0 0.0
    %2911 = vmatpush1.xpose.msra.mxu0 0.0
    %2912 = vmatprep.subr.mxu0 0.0
    %2913 = vmatpush1.xpose.msra.mxu0 0.0
    %2914 = vmatprep.subr.mxu0 0.0
    %2915 = vmatpush1.xpose.msra.mxu0 0.0
    %2916 = vmatprep.subr.mxu0 0.0
    %2917 = vmatpush1.xpose.msra.mxu0 0.0
    %2918 = vmatprep.subr.mxu0 0.0
    %2919 = vmatpush1.xpose.msra.mxu0 0.0
    %2920 = vmatprep.subr.mxu0 0.0
    %2921 = vmatpush1.xpose.msra.mxu0 0.0
    %2922 = vmatprep.subr.mxu0 0.0
    %2923 = vmatpush1.xpose.msra.mxu0 0.0
    %2924 = vmatprep.subr.mxu0 0.0
    %2925 = vmatpush1.xpose.msra.mxu0 0.0
    %2926 = vmatprep.subr.mxu0 0.0
    %2927 = vmatpush1.xpose.msra.mxu0 0.0
    %2928 = vmatprep.subr.mxu0 0.0
    %2929 = vmatpush1.xpose.msra.mxu0 0.0
    %2930 = vmatprep.subr.mxu0 0.0
    %2931 = vmatpush1.xpose.msra.mxu0 0.0
    %2932 = vmatprep.subr.mxu0 0.0
    %2933 = vmatpush1.xpose.msra.mxu0 0.0
    %2934 = vmatprep.subr.mxu0 0.0
    %2935 = vmatpush1.xpose.msra.mxu0 0.0
    %2936 = vmatprep.subr.mxu0 0.0
    %2937 = vmatpush1.xpose.msra.mxu0 0.0
    %2938 = vmatprep.subr.mxu0 0.0
    %2939 = vmatpush1.xpose.msra.mxu0 0.0
    %2940 = vmatprep.subr.mxu0 0.0
    %2941 = vmatpush1.xpose.msra.mxu0 0.0
    %2942 = vmatprep.subr.mxu0 0.0
    %2943 = vmatpush1.xpose.msra.mxu0 0.0
    %2944 = vmatprep.subr.mxu0 0.0
    %2945 = vmatpush1.xpose.msra.mxu0 0.0
    %2946 = vmatprep.subr.mxu0 0.0
    %2947 = vmatpush1.xpose.msra.mxu0 0.0
    %2948 = vmatprep.subr.mxu0 0.0
    %2949 = vmatpush1.xpose.msra.mxu0 0.0
    %2950 = vmatprep.subr.mxu0 0.0
    %2951 = vmatpush1.xpose.msra.mxu0 0.0
    %2952 = vmatprep.subr.mxu0 0.0
    %2953 = vmatpush1.xpose.msra.mxu0 0.0
    %2954 = vmatprep.mubr.f32.mxu0 0.0
    %2955 = vmatmul.mubr.f32.gmra.mrb[0].mxu0 %v2359
    %v2956 = vpop.f32.mrb[0].mxu0
    %v2957 = vadd.f32 0.0, %v2956
    %v2958 = vpop.f32.mrb[0].mxu0
    %2959 = vmatprep.mubr.f32.mxu0 0.0
    %2960 = vmatmul.mubr.f32.gmra.mrb[0].mxu0 %v2362
    %v2961 = vpop.f32.mrb[0].mxu0
    %v2962 = vadd.f32 0.0, %v2961
    %v2963 = vpop.f32.mrb[0].mxu0
    %2964 = vmatprep.mubr.f32.mxu0 0.0
    %2965 = vmatmul.mubr.f32.gmra.mrb[0].mxu0 %v2365
    %v2966 = vpop.f32.mrb[0].mxu0
    %v2967 = vadd.f32 0.0, %v2966
    %v2968 = vpop.f32.mrb[0].mxu0
    %2969 = vmatprep.mubr.f32.mxu0 0.0
    %2970 = vmatmul.mubr.f32.gmra.mrb[0].mxu0 %v2368
    %v2971 = vpop.f32.mrb[0].mxu0
    %v2972 = vadd.f32 0.0, %v2971
    %v2973 = vpop.f32.mrb[0].mxu0
    %2974 = vdwg.mxu0
    %v2975 = vmul.f32 %v2957, 0.35355338
    %v2976 = vmul.f32 %v2962, 0.35355338
    %v2977 = vmul.f32 %v2967, 0.35355338
    %v2978 = vmul.f32 %v2972, 0.35355338
    %v2979 = vadd.f32 %v2975, %v64
    %v2980 = vadd.f32 %v2976, %v65
    %v2981 = vadd.f32 %v2977, %v66
    %v2982 = vadd.f32 %v2978, %v67
    %v2983 = vsel %vm285, %v2979, -inf
    %2984 = vmax.xlane.f32.xlu0 %v2983
    %v2985 = vpop.xlane.xlu0 %2984
    %v2986 = vsel %vm285, %v2980, -inf
    %2987 = vmax.xlane.f32.xlu0 %v2986
    %v2988 = vpop.xlane.xlu0 %2987
    %v2989 = vsel %vm285, %v2981, -inf
    %2990 = vmax.xlane.f32.xlu0 %v2989
    %v2991 = vpop.xlane.xlu0 %2990
    %v2992 = vsel %vm285, %v2982, -inf
    %2993 = vmax.xlane.f32.xlu0 %v2992
    %v2994 = vpop.xlane.xlu0 %2993
    %v2995 = vsub.f32 %v2979, %v2985
    %v2996 = vsub.f32 %v2980, %v2988
    %v2997 = vsub.f32 %v2981, %v2991
    %v2998 = vsub.f32 %v2982, %v2994
    %v2999 = vmul.f32 %v2995, 1.442695
    %v3000 = vpow.pop %v2999
    %v3001 = vmul.f32 %v2996, 1.442695
    %v3002 = vpow.pop %v3001
    %v3003 = vmul.f32 %v2997, 1.442695
    %v3004 = vpow.pop %v3003
    %v3005 = vmul.f32 %v2998, 1.442695
    %v3006 = vpow.pop %v3005
    %v3007 = vsel %vm285, %v3000, 0.0
    %3008 = vadd.xlane.f32.xlu0 %v3007
    %v3009 = vpop.xlane.xlu0 %3008
    %v3010 = vsel %vm285, %v3002, 0.0
    %3011 = vadd.xlane.f32.xlu0 %v3010
    %v3012 = vpop.xlane.xlu0 %3011
    %v3013 = vsel %vm285, %v3004, 0.0
    %3014 = vadd.xlane.f32.xlu0 %v3013
    %v3015 = vpop.xlane.xlu0 %3014
    %v3016 = vsel %vm285, %v3006, 0.0
    %3017 = vadd.xlane.f32.xlu0 %v3016
    %v3018 = vpop.xlane.xlu0 %3017
    %v3019 = vrcp.pop %v3009
    %v3020 = vrcp.pop %v3012
    %v3021 = vrcp.pop %v3015
    %v3022 = vrcp.pop %v3018
    %v3023 = vmul.f32 %v3000, %v3019
    %v3024 = vmul.f32 %v3002, %v3020
    %v3025 = vmul.f32 %v3004, %v3021
    %v3026 = vmul.f32 %v3006, %v3022
    %v3027 = vmul.f32 %v2336, %v44
    %v3028 = vmul.f32 %v2341, %v44
    %v3029 = vmul.f32 %v2346, %v44
    %v3030 = vmul.f32 %v2351, %v44
    %v3032 = vsel %vm285, %v3023, 0
    %v3035 = vsel %vm285, %v3024, 0
    %v3038 = vsel %vm285, %v3025, 0
    %v3041 = vsel %vm285, %v3026, 0
    %3043 = vmatprep.subr.mxu0 0.0
    %3044 = vmatpush1.msra.mxu0 %v3027
    %3045 = vmatprep.subr.mxu0 0.0
    %3046 = vmatpush1.msra.mxu0 %v3028
    %3047 = vmatprep.subr.mxu0 0.0
    %3048 = vmatpush1.msra.mxu0 %v3029
    %3049 = vmatprep.subr.mxu0 0.0
    %3050 = vmatpush1.msra.mxu0 %v3030
    %3051 = vmatprep.subr.mxu0 0.0
    %3052 = vmatpush1.msra.mxu0 0.0
    %3053 = vmatprep.subr.mxu0 0.0
    %3054 = vmatpush1.msra.mxu0 0.0
    %3055 = vmatprep.subr.mxu0 0.0
    %3056 = vmatpush1.msra.mxu0 0.0
    %3057 = vmatprep.subr.mxu0 0.0
    %3058 = vmatpush1.msra.mxu0 0.0
    %3059 = vmatprep.subr.mxu0 0.0
    %3060 = vmatpush1.msra.mxu0 0.0
    %3061 = vmatprep.subr.mxu0 0.0
    %3062 = vmatpush1.msra.mxu0 0.0
    %3063 = vmatprep.subr.mxu0 0.0
    %3064 = vmatpush1.msra.mxu0 0.0
    %3065 = vmatprep.subr.mxu0 0.0
    %3066 = vmatpush1.msra.mxu0 0.0
    %3067 = vmatprep.subr.mxu0 0.0
    %3068 = vmatpush1.msra.mxu0 0.0
    %3069 = vmatprep.subr.mxu0 0.0
    %3070 = vmatpush1.msra.mxu0 0.0
    %3071 = vmatprep.subr.mxu0 0.0
    %3072 = vmatpush1.msra.mxu0 0.0
    %3073 = vmatprep.subr.mxu0 0.0
    %3074 = vmatpush1.msra.mxu0 0.0
    %3075 = vmatprep.subr.mxu0 0.0
    %3076 = vmatpush1.msra.mxu0 0.0
    %3077 = vmatprep.subr.mxu0 0.0
    %3078 = vmatpush1.msra.mxu0 0.0
    %3079 = vmatprep.subr.mxu0 0.0
    %3080 = vmatpush1.msra.mxu0 0.0
    %3081 = vmatprep.subr.mxu0 0.0
    %3082 = vmatpush1.msra.mxu0 0.0
    %3083 = vmatprep.subr.mxu0 0.0
    %3084 = vmatpush1.msra.mxu0 0.0
    %3085 = vmatprep.subr.mxu0 0.0
    %3086 = vmatpush1.msra.mxu0 0.0
    %3087 = vmatprep.subr.mxu0 0.0
    %3088 = vmatpush1.msra.mxu0 0.0
    %3089 = vmatprep.subr.mxu0 0.0
    %3090 = vmatpush1.msra.mxu0 0.0
    %3091 = vmatprep.subr.mxu0 0.0
    %3092 = vmatpush1.msra.mxu0 0.0
    %3093 = vmatprep.subr.mxu0 0.0
    %3094 = vmatpush1.msra.mxu0 0.0
    %3095 = vmatprep.subr.mxu0 0.0
    %3096 = vmatpush1.msra.mxu0 0.0
    %3097 = vmatprep.subr.mxu0 0.0
    %3098 = vmatpush1.msra.mxu0 0.0
    %3099 = vmatprep.subr.mxu0 0.0
    %3100 = vmatpush1.msra.mxu0 0.0
    %3101 = vmatprep.subr.mxu0 0.0
    %3102 = vmatpush1.msra.mxu0 0.0
    %3103 = vmatprep.subr.mxu0 0.0
    %3104 = vmatpush1.msra.mxu0 0.0
    %3105 = vmatprep.subr.mxu0 0.0
    %3106 = vmatpush1.msra.mxu0 0.0
    %3107 = vmatprep.mubr.f32.mxu0 0.0
    %3108 = vmatmul.mubr.f32.gmra.mrb[0].mxu0 %v3032
    %v3109 = vpop.f32.mrb[0].mxu0
    %v3110 = vadd.f32 0.0, %v3109
    %v3111 = vpop.f32.mrb[0].mxu0
    %3112 = vmatprep.mubr.f32.mxu0 0.0
    %3113 = vmatmul.mubr.f32.gmra.mrb[0].mxu0 %v3035
    %v3114 = vpop.f32.mrb[0].mxu0
    %v3115 = vadd.f32 0.0, %v3114
    %v3116 = vpop.f32.mrb[0].mxu0
    %3117 = vmatprep.mubr.f32.mxu0 0.0
    %3118 = vmatmul.mubr.f32.gmra.mrb[0].mxu0 %v3038
    %v3119 = vpop.f32.mrb[0].mxu0
    %v3120 = vadd.f32 0.0, %v3119
    %v3121 = vpop.f32.mrb[0].mxu0
    %3122 = vmatprep.mubr.f32.mxu0 0.0
    %3123 = vmatmul.mubr.f32.gmra.mrb[0].mxu0 %v3041
    %v3124 = vpop.f32.mrb[0].mxu0
    %v3125 = vadd.f32 0.0, %v3124
    %v3126 = vpop.f32.mrb[0].mxu0
    %3127 = vdwg.mxu0
    %v3128 = vadd.f32 %v2856, %v3110
    %v3129 = vadd.f32 %v2861, %v3115
    %v3130 = vadd.f32 %v2866, %v3120
    %v3131 = vadd.f32 %v2871, %v3125
    %v3132 = vmul.f32 %v2247, %v49
    %v3133 = vmul.f32 %v2252, %v49
    %v3134 = vmul.f32 %v2257, %v49
    %v3135 = vmul.f32 %v2262, %v49
    %v3137 = vsel %vm285, %v3132, 0
    %v3140 = vsel %vm285, %v3133, 0
    %v3143 = vsel %vm285, %v3134, 0
    %v3146 = vsel %vm285, %v3135, 0
    %3148 = vmatprep.subr.mxu0 0.0
    %3149 = vmatpush1.xpose.msra.mxu0 %v3137
    %3150 = vmatprep.subr.mxu0 0.0
    %3151 = vmatpush1.xpose.msra.mxu0 %v3140
    %3152 = vmatprep.subr.mxu0 0.0
    %3153 = vmatpush1.xpose.msra.mxu0 %v3143
    %3154 = vmatprep.subr.mxu0 0.0
    %3155 = vmatpush1.xpose.msra.mxu0 %v3146
    %3156 = vmatprep.subr.mxu0 0.0
    %3157 = vmatpush1.xpose.msra.mxu0 0.0
    %3158 = vmatprep.subr.mxu0 0.0
    %3159 = vmatpush1.xpose.msra.mxu0 0.0
    %3160 = vmatprep.subr.mxu0 0.0
    %3161 = vmatpush1.xpose.msra.mxu0 0.0
    %3162 = vmatprep.subr.mxu0 0.0
    %3163 = vmatpush1.xpose.msra.mxu0 0.0
    %3164 = vmatprep.subr.mxu0 0.0
    %3165 = vmatpush1.xpose.msra.mxu0 0.0
    %3166 = vmatprep.subr.mxu0 0.0
    %3167 = vmatpush1.xpose.msra.mxu0 0.0
    %3168 = vmatprep.subr.mxu0 0.0
    %3169 = vmatpush1.xpose.msra.mxu0 0.0
    %3170 = vmatprep.subr.mxu0 0.0
    %3171 = vmatpush1.xpose.msra.mxu0 0.0
    %3172 = vmatprep.subr.mxu0 0.0
    %3173 = vmatpush1.xpose.msra.mxu0 0.0
    %3174 = vmatprep.subr.mxu0 0.0
    %3175 = vmatpush1.xpose.msra.mxu0 0.0
    %3176 = vmatprep.subr.mxu0 0.0
    %3177 = vmatpush1.xpose.msra.mxu0 0.0
    %3178 = vmatprep.subr.mxu0 0.0
    %3179 = vmatpush1.xpose.msra.mxu0 0.0
    %3180 = vmatprep.subr.mxu0 0.0
    %3181 = vmatpush1.xpose.msra.mxu0 0.0
    %3182 = vmatprep.subr.mxu0 0.0
    %3183 = vmatpush1.xpose.msra.mxu0 0.0
    %3184 = vmatprep.subr.mxu0 0.0
    %3185 = vmatpush1.xpose.msra.mxu0 0.0
    %3186 = vmatprep.subr.mxu0 0.0
    %3187 = vmatpush1.xpose.msra.mxu0 0.0
    %3188 = vmatprep.subr.mxu0 0.0
    %3189 = vmatpush1.xpose.msra.mxu0 0.0
    %3190 = vmatprep.subr.mxu0 0.0
    %3191 = vmatpush1.xpose.msra.mxu0 0.0
    %3192 = vmatprep.subr.mxu0 0.0
    %3193 = vmatpush1.xpose.msra.mxu0 0.0
    %3194 = vmatprep.subr.mxu0 0.0
    %3195 = vmatpush1.xpose.msra.mxu0 0.0
    %3196 = vmatprep.subr.mxu0 0.0
    %3197 = vmatpush1.xpose.msra.mxu0 0.0
    %3198 = vmatprep.subr.mxu0 0.0
    %3199 = vmatpush1.xpose.msra.mxu0 0.0
    %3200 = vmatprep.subr.mxu0 0.0
    %3201 = vmatpush1.xpose.msra.mxu0 0.0
    %3202 = vmatprep.subr.mxu0 0.0
    %3203 = vmatpush1.xpose.msra.mxu0 0.0
    %3204 = vmatprep.subr.mxu0 0.0
    %3205 = vmatpush1.xpose.msra.mxu0 0.0
    %3206 = vmatprep.subr.mxu0 0.0
    %3207 = vmatpush1.xpose.msra.mxu0 0.0
    %3208 = vmatprep.subr.mxu0 0.0
    %3209 = vmatpush1.xpose.msra.mxu0 0.0
    %3210 = vmatprep.subr.mxu0 0.0
    %3211 = vmatpush1.xpose.msra.mxu0 0.0
    %3212 = vmatprep.mubr.f32.mxu0 0.0
    %3213 = vmatmul.mubr.f32.gmra.mrb[0].mxu0 %v2359
    %v3214 = vpop.f32.mrb[0].mxu0
    %v3215 = vadd.f32 0.0, %v3214
    %v3216 = vpop.f32.mrb[0].mxu0
    %3217 = vmatprep.mubr.f32.mxu0 0.0
    %3218 = vmatmul.mubr.f32.gmra.mrb[0].mxu0 %v2362
    %v3219 = vpop.f32.mrb[0].mxu0
    %v3220 = vadd.f32 0.0, %v3219
    %v3221 = vpop.f32.mrb[0].mxu0
    %3222 = vmatprep.mubr.f32.mxu0 0.0
    %3223 = vmatmul.mubr.f32.gmra.mrb[0].mxu0 %v2365
    %v3224 = vpop.f32.mrb[0].mxu0
    %v3225 = vadd.f32 0.0, %v3224
    %v3226 = vpop.f32.mrb[0].mxu0
    %3227 = vmatprep.mubr.f32.mxu0 0.0
    %3228 = vmatmul.mubr.f32.gmra.mrb[0].mxu0 %v2368
    %v3229 = vpop.f32.mrb[0].mxu0
    %v3230 = vadd.f32 0.0, %v3229
    %v3231 = vpop.f32.mrb[0].mxu0
    %3232 = vdwg.mxu0
    %v3233 = vmul.f32 %v3215, 0.35355338
    %v3234 = vmul.f32 %v3220, 0.35355338
    %v3235 = vmul.f32 %v3225, 0.35355338
    %v3236 = vmul.f32 %v3230, 0.35355338
    %v3237 = vadd.f32 %v3233, %v64
    %v3238 = vadd.f32 %v3234, %v65
    %v3239 = vadd.f32 %v3235, %v66
    %v3240 = vadd.f32 %v3236, %v67
    %v3241 = vsel %vm285, %v3237, -inf
    %3242 = vmax.xlane.f32.xlu0 %v3241
    %v3243 = vpop.xlane.xlu0 %3242
    %v3244 = vsel %vm285, %v3238, -inf
    %3245 = vmax.xlane.f32.xlu0 %v3244
    %v3246 = vpop.xlane.xlu0 %3245
    %v3247 = vsel %vm285, %v3239, -inf
    %3248 = vmax.xlane.f32.xlu0 %v3247
    %v3249 = vpop.xlane.xlu0 %3248
    %v3250 = vsel %vm285, %v3240, -inf
    %3251 = vmax.xlane.f32.xlu0 %v3250
    %v3252 = vpop.xlane.xlu0 %3251
    %v3253 = vsub.f32 %v3237, %v3243
    %v3254 = vsub.f32 %v3238, %v3246
    %v3255 = vsub.f32 %v3239, %v3249
    %v3256 = vsub.f32 %v3240, %v3252
    %v3257 = vmul.f32 %v3253, 1.442695
    %v3258 = vpow.pop %v3257
    %v3259 = vmul.f32 %v3254, 1.442695
    %v3260 = vpow.pop %v3259
    %v3261 = vmul.f32 %v3255, 1.442695
    %v3262 = vpow.pop %v3261
    %v3263 = vmul.f32 %v3256, 1.442695
    %v3264 = vpow.pop %v3263
    %v3265 = vsel %vm285, %v3258, 0.0
    %3266 = vadd.xlane.f32.xlu0 %v3265
    %v3267 = vpop.xlane.xlu0 %3266
    %v3268 = vsel %vm285, %v3260, 0.0
    %3269 = vadd.xlane.f32.xlu0 %v3268
    %v3270 = vpop.xlane.xlu0 %3269
    %v3271 = vsel %vm285, %v3262, 0.0
    %3272 = vadd.xlane.f32.xlu0 %v3271
    %v3273 = vpop.xlane.xlu0 %3272
    %v3274 = vsel %vm285, %v3264, 0.0
    %3275 = vadd.xlane.f32.xlu0 %v3274
    %v3276 = vpop.xlane.xlu0 %3275
    %v3277 = vrcp.pop %v3267
    %v3278 = vrcp.pop %v3270
    %v3279 = vrcp.pop %v3273
    %v3280 = vrcp.pop %v3276
    %v3281 = vmul.f32 %v3258, %v3277
    %v3282 = vmul.f32 %v3260, %v3278
    %v3283 = vmul.f32 %v3262, %v3279
    %v3284 = vmul.f32 %v3264, %v3280
    %v3285 = vmul.f32 %v2336, %v49
    %v3286 = vmul.f32 %v2341, %v49
    %v3287 = vmul.f32 %v2346, %v49
    %v3288 = vmul.f32 %v2351, %v49
    %v3290 = vsel %vm285, %v3281, 0
    %v3293 = vsel %vm285, %v3282, 0
    %v3296 = vsel %vm285, %v3283, 0
    %v3299 = vsel %vm285, %v3284, 0
    %3301 = vmatprep.subr.mxu0 0.0
    %3302 = vmatpush1.msra.mxu0 %v3285
    %3303 = vmatprep.subr.mxu0 0.0
    %3304 = vmatpush1.msra.mxu0 %v3286
    %3305 = vmatprep.subr.mxu0 0.0
    %3306 = vmatpush1.msra.mxu0 %v3287
    %3307 = vmatprep.subr.mxu0 0.0
    %3308 = vmatpush1.msra.mxu0 %v3288
    %3309 = vmatprep.subr.mxu0 0.0
    %3310 = vmatpush1.msra.mxu0 0.0
    %3311 = vmatprep.subr.mxu0 0.0
    %3312 = vmatpush1.msra.mxu0 0.0
    %3313 = vmatprep.subr.mxu0 0.0
    %3314 = vmatpush1.msra.mxu0 0.0
    %3315 = vmatprep.subr.mxu0 0.0
    %3316 = vmatpush1.msra.mxu0 0.0
    %3317 = vmatprep.subr.mxu0 0.0
    %3318 = vmatpush1.msra.mxu0 0.0
    %3319 = vmatprep.subr.mxu0 0.0
    %3320 = vmatpush1.msra.mxu0 0.0
    %3321 = vmatprep.subr.mxu0 0.0
    %3322 = vmatpush1.msra.mxu0 0.0
    %3323 = vmatprep.subr.mxu0 0.0
    %3324 = vmatpush1.msra.mxu0 0.0
    %3325 = vmatprep.subr.mxu0 0.0
    %3326 = vmatpush1.msra.mxu0 0.0
    %3327 = vmatprep.subr.mxu0 0.0
    %3328 = vmatpush1.msra.mxu0 0.0
    %3329 = vmatprep.subr.mxu0 0.0
    %3330 = vmatpush1.msra.mxu0 0.0
    %3331 = vmatprep.subr.mxu0 0.0
    %3332 = vmatpush1.msra.mxu0 0.0
    %3333 = vmatprep.subr.mxu0 0.0
    %3334 = vmatpush1.msra.mxu0 0.0
    %3335 = vmatprep.subr.mxu0 0.0
    %3336 = vmatpush1.msra.mxu0 0.0
    %3337 = vmatprep.subr.mxu0 0.0
    %3338 = vmatpush1.msra.mxu0 0.0
    %3339 = vmatprep.subr.mxu0 0.0
    %3340 = vmatpush1.msra.mxu0 0.0
    %3341 = vmatprep.subr.mxu0 0.0
    %3342 = vmatpush1.msra.mxu0 0.0
    %3343 = vmatprep.subr.mxu0 0.0
    %3344 = vmatpush1.msra.mxu0 0.0
    %3345 = vmatprep.subr.mxu0 0.0
    %3346 = vmatpush1.msra.mxu0 0.0
    %3347 = vmatprep.subr.mxu0 0.0
    %3348 = vmatpush1.msra.mxu0 0.0
    %3349 = vmatprep.subr.mxu0 0.0
    %3350 = vmatpush1.msra.mxu0 0.0
    %3351 = vmatprep.subr.mxu0 0.0
    %3352 = vmatpush1.msra.mxu0 0.0
    %3353 = vmatprep.subr.mxu0 0.0
    %3354 = vmatpush1.msra.mxu0 0.0
    %3355 = vmatprep.subr.mxu0 0.0
    %3356 = vmatpush1.msra.mxu0 0.0
    %3357 = vmatprep.subr.mxu0 0.0
    %3358 = vmatpush1.msra.mxu0 0.0
    %3359 = vmatprep.subr.mxu0 0.0
    %3360 = vmatpush1.msra.mxu0 0.0
    %3361 = vmatprep.subr.mxu0 0.0
    %3362 = vmatpush1.msra.mxu0 0.0
    %3363 = vmatprep.subr.mxu0 0.0
    %3364 = vmatpush1.msra.mxu0 0.0
    %3365 = vmatprep.mubr.f32.mxu0 0.0
    %3366 = vmatmul.mubr.f32.gmra.mrb[0].mxu0 %v3290
    %v3367 = vpop.f32.mrb[0].mxu0
    %v3368 = vadd.f32 0.0, %v3367
    %v3369 = vpop.f32.mrb[0].mxu0
    %3370 = vmatprep.mubr.f32.mxu0 0.0
    %3371 = vmatmul.mubr.f32.gmra.mrb[0].mxu0 %v3293
    %v3372 = vpop.f32.mrb[0].mxu0
    %v3373 = vadd.f32 0.0, %v3372
    %v3374 = vpop.f32.mrb[0].mxu0
    %3375 = vmatprep.mubr.f32.mxu0 0.0
    %3376 = vmatmul.mubr.f32.gmra.mrb[0].mxu0 %v3296
    %v3377 = vpop.f32.mrb[0].mxu0
    %v3378 = vadd.f32 0.0, %v3377
    %v3379 = vpop.f32.mrb[0].mxu0
    %3380 = vmatprep.mubr.f32.mxu0 0.0
    %3381 = vmatmul.mubr.f32.gmra.mrb[0].mxu0 %v3299
    %v3382 = vpop.f32.mrb[0].mxu0
    %v3383 = vadd.f32 0.0, %v3382
    %v3384 = vpop.f32.mrb[0].mxu0
    %3385 = vdwg.mxu0
    %v3386 = vadd.f32 %v3128, %v3368
    %v3387 = vadd.f32 %v3129, %v3373
    %v3388 = vadd.f32 %v3130, %v3378
    %v3389 = vadd.f32 %v3131, %v3383
    %v3390 = vlaneseq
    %v3391 = vshrl.u32 %v3390, 7
    %v3392 = vsub.s32 2, %v3391
    %v3393 = vrot.slane %v23, %v3392
    %v3395 = vsel %vm285, %v3386, 0
    %v3398 = vsel %vm285, %v3387, 0
    %v3401 = vsel %vm285, %v3388, 0
    %v3404 = vsel %vm285, %v3389, 0
    %3406 = vmatprep.subr.mxu0 0.0
    %3407 = vmatpush1.msra.mxu0 %v2071
    %3408 = vmatprep.subr.mxu0 0.0
    %3409 = vmatpush1.msra.mxu0 %v2072
    %3410 = vmatprep.subr.mxu0 0.0
    %3411 = vmatpush1.msra.mxu0 %v2073
    %3412 = vmatprep.subr.mxu0 0.0
    %3413 = vmatpush1.msra.mxu0 %v2074
    %3414 = vmatprep.subr.mxu0 0.0
    %3415 = vmatpush1.msra.mxu0 0.0
    %3416 = vmatprep.subr.mxu0 0.0
    %3417 = vmatpush1.msra.mxu0 0.0
    %3418 = vmatprep.subr.mxu0 0.0
    %3419 = vmatpush1.msra.mxu0 0.0
    %3420 = vmatprep.subr.mxu0 0.0
    %3421 = vmatpush1.msra.mxu0 0.0
    %3422 = vmatprep.subr.mxu0 0.0
    %3423 = vmatpush1.msra.mxu0 0.0
    %3424 = vmatprep.subr.mxu0 0.0
    %3425 = vmatpush1.msra.mxu0 0.0
    %3426 = vmatprep.subr.mxu0 0.0
    %3427 = vmatpush1.msra.mxu0 0.0
    %3428 = vmatprep.subr.mxu0 0.0
    %3429 = vmatpush1.msra.mxu0 0.0
    %3430 = vmatprep.subr.mxu0 0.0
    %3431 = vmatpush1.msra.mxu0 0.0
    %3432 = vmatprep.subr.mxu0 0.0
    %3433 = vmatpush1.msra.mxu0 0.0
    %3434 = vmatprep.subr.mxu0 0.0
    %3435 = vmatpush1.msra.mxu0 0.0
    %3436 = vmatprep.subr.mxu0 0.0
    %3437 = vmatpush1.msra.mxu0 0.0
    %3438 = vmatprep.subr.mxu0 0.0
    %3439 = vmatpush1.msra.mxu0 0.0
    %3440 = vmatprep.subr.mxu0 0.0
    %3441 = vmatpush1.msra.mxu0 0.0
    %3442 = vmatprep.subr.mxu0 0.0
    %3443 = vmatpush1.msra.mxu0 0.0
    %3444 = vmatprep.subr.mxu0 0.0
    %3445 = vmatpush1.msra.mxu0 0.0
    %3446 = vmatprep.subr.mxu0 0.0
    %3447 = vmatpush1.msra.mxu0 0.0
    %3448 = vmatprep.subr.mxu0 0.0
    %3449 = vmatpush1.msra.mxu0 0.0
    %3450 = vmatprep.subr.mxu0 0.0
    %3451 = vmatpush1.msra.mxu0 0.0
    %3452 = vmatprep.subr.mxu0 0.0
    %3453 = vmatpush1.msra.mxu0 0.0
    %3454 = vmatprep.subr.mxu0 0.0
    %3455 = vmatpush1.msra.mxu0 0.0
    %3456 = vmatprep.subr.mxu0 0.0
    %3457 = vmatpush1.msra.mxu0 0.0
    %3458 = vmatprep.subr.mxu0 0.0
    %3459 = vmatpush1.msra.mxu0 0.0
    %3460 = vmatprep.subr.mxu0 0.0
    %3461 = vmatpush1.msra.mxu0 0.0
    %3462 = vmatprep.subr.mxu0 0.0
    %3463 = vmatpush1.msra.mxu0 0.0
    %3464 = vmatprep.subr.mxu0 0.0
    %3465 = vmatpush1.msra.mxu0 0.0
    %3466 = vmatprep.subr.mxu0 0.0
    %3467 = vmatpush1.msra.mxu0 0.0
    %3468 = vmatprep.subr.mxu0 0.0
    %3469 = vmatpush1.msra.mxu0 0.0
    %3470 = vmatprep.mubr.f32.mxu0 0.0
    %3471 = vmatmul.mubr.f32.gmra.mrb[0].mxu0 %v3395
    %v3472 = vpop.f32.mrb[0].mxu0
    %v3473 = vadd.f32 %v3393, %v3472
    %v3474 = vpop.f32.mrb[0].mxu0
    %3475 = vmatprep.mubr.f32.mxu0 0.0
    %3476 = vmatmul.mubr.f32.gmra.mrb[0].mxu0 %v3398
    %v3477 = vpop.f32.mrb[0].mxu0
    %v3478 = vadd.f32 %v3393, %v3477
    %v3479 = vpop.f32.mrb[0].mxu0
    %3480 = vmatprep.mubr.f32.mxu0 0.0
    %3481 = vmatmul.mubr.f32.gmra.mrb[0].mxu0 %v3401
    %v3482 = vpop.f32.mrb[0].mxu0
    %v3483 = vadd.f32 %v3393, %v3482
    %v3484 = vpop.f32.mrb[0].mxu0
    %3485 = vmatprep.mubr.f32.mxu0 0.0
    %3486 = vmatmul.mubr.f32.gmra.mrb[0].mxu0 %v3404
    %v3487 = vpop.f32.mrb[0].mxu0
    %v3488 = vadd.f32 %v3393, %v3487
    %v3489 = vpop.f32.mrb[0].mxu0
    %3490 = vdwg.mxu0
    %v3491 = vadd.f32 %v2055, %v3473
    %v3492 = vadd.f32 %v2056, %v3478
    %v3493 = vadd.f32 %v2057, %v3483
    %v3494 = vadd.f32 %v2058, %v3488
    %v3495 = vsel %vm285, %v3491, 0.0
    %3496 = vadd.xlane.f32.xlu0 %v3495
    %v3497 = vpop.xlane.xlu0 %3496
    %v3498 = vsel %vm285, %v3492, 0.0
    %3499 = vadd.xlane.f32.xlu0 %v3498
    %v3500 = vpop.xlane.xlu0 %3499
    %v3501 = vsel %vm285, %v3493, 0.0
    %3502 = vadd.xlane.f32.xlu0 %v3501
    %v3503 = vpop.xlane.xlu0 %3502
    %v3504 = vsel %vm285, %v3494, 0.0
    %3505 = vadd.xlane.f32.xlu0 %v3504
    %v3506 = vpop.xlane.xlu0 %3505
    %v3507 = vmul.f32 %v3497, %v1711
    %v3508 = vmul.f32 %v3500, %v1711
    %v3509 = vmul.f32 %v3503, %v1711
    %v3510 = vmul.f32 %v3506, %v1711
    %v3511 = vsub.f32 %v3491, %v3507
    %v3512 = vsub.f32 %v3492, %v3508
    %v3513 = vsub.f32 %v3493, %v3509
    %v3514 = vsub.f32 %v3494, %v3510
    %v3515 = vmul.f32 %v3511, %v3511
    %v3516 = vmul.f32 %v3512, %v3512
    %v3517 = vmul.f32 %v3513, %v3513
    %v3518 = vmul.f32 %v3514, %v3514
    %v3519 = vsel %vm285, %v3515, 0.0
    %3520 = vadd.xlane.f32.xlu0 %v3519
    %v3521 = vpop.xlane.xlu0 %3520
    %v3522 = vsel %vm285, %v3516, 0.0
    %3523 = vadd.xlane.f32.xlu0 %v3522
    %v3524 = vpop.xlane.xlu0 %3523
    %v3525 = vsel %vm285, %v3517, 0.0
    %3526 = vadd.xlane.f32.xlu0 %v3525
    %v3527 = vpop.xlane.xlu0 %3526
    %v3528 = vsel %vm285, %v3518, 0.0
    %3529 = vadd.xlane.f32.xlu0 %v3528
    %v3530 = vpop.xlane.xlu0 %3529
    %v3531 = vmul.f32 %v3521, %v1711
    %v3532 = vmul.f32 %v3524, %v1711
    %v3533 = vmul.f32 %v3527, %v1711
    %v3534 = vmul.f32 %v3530, %v1711
    %v3535 = vadd.f32 %v3531, 1e-05
    %v3536 = vadd.f32 %v3532, 1e-05
    %v3537 = vadd.f32 %v3533, 1e-05
    %v3538 = vadd.f32 %v3534, 1e-05
    %v3539 = vrsqrt.pop %v3535
    %v3540 = vrsqrt.pop %v3536
    %v3541 = vrsqrt.pop %v3537
    %v3542 = vrsqrt.pop %v3538
    %v3543 = vmul.f32 %v3511, %v3539
    %v3544 = vmul.f32 %v3512, %v3540
    %v3545 = vmul.f32 %v3513, %v3541
    %v3546 = vmul.f32 %v3514, %v3542
    %v3547 = vlaneseq
    %v3548 = vshrl.u32 %v3547, 7
    %v3549 = vsub.s32 5, %v3548
    %v3550 = vrot.slane %v23, %v3549
    %v3551 = vmul.f32 %v3543, %v3550
    %v3552 = vmul.f32 %v3544, %v3550
    %v3553 = vmul.f32 %v3545, %v3550
    %v3554 = vmul.f32 %v3546, %v3550
    %v3555 = vlaneseq
    %v3556 = vshrl.u32 %v3555, 7
    %v3557 = vsub.s32 6, %v3556
    %v3558 = vrot.slane %v23, %v3557
    %v3559 = vadd.f32 %v3551, %v3558
    %v3560 = vadd.f32 %v3552, %v3558
    %v3561 = vadd.f32 %v3553, %v3558
    %v3562 = vadd.f32 %v3554, %v3558
    %v3563 = vld [vmem:[%s0 + $0x2d0] sm:$0xff]
    %v3564 = vld [vmem:[%s0 + $0x2d8] sm:$0xff]
    %v3565 = vld [vmem:[%s0 + $0x2e0] sm:$0xff]
    %v3566 = vld [vmem:[%s0 + $0x2e8] sm:$0xff]
    %v3567 = vlaneseq
    %v3568 = vshrl.u32 %v3567, 7
    %v3569 = vsub.s32 3, %v3568
    %v3570 = vrot.slane %v23, %v3569
    %v3572 = vsel %vm285, %v3559, 0
    %v3575 = vsel %vm285, %v3560, 0
    %v3578 = vsel %vm285, %v3561, 0
    %v3581 = vsel %vm285, %v3562, 0
    %3583 = vmatprep.subr.mxu0 0.0
    %3584 = vmatpush1.msra.mxu0 %v3563
    %3585 = vmatprep.subr.mxu0 0.0
    %3586 = vmatpush1.msra.mxu0 %v3564
    %3587 = vmatprep.subr.mxu0 0.0
    %3588 = vmatpush1.msra.mxu0 %v3565
    %3589 = vmatprep.subr.mxu0 0.0
    %3590 = vmatpush1.msra.mxu0 %v3566
    %3591 = vmatprep.subr.mxu0 0.0
    %3592 = vmatpush1.msra.mxu0 0.0
    %3593 = vmatprep.subr.mxu0 0.0
    %3594 = vmatpush1.msra.mxu0 0.0
    %3595 = vmatprep.subr.mxu0 0.0
    %3596 = vmatpush1.msra.mxu0 0.0
    %3597 = vmatprep.subr.mxu0 0.0
    %3598 = vmatpush1.msra.mxu0 0.0
    %3599 = vmatprep.subr.mxu0 0.0
    %3600 = vmatpush1.msra.mxu0 0.0
    %3601 = vmatprep.subr.mxu0 0.0
    %3602 = vmatpush1.msra.mxu0 0.0
    %3603 = vmatprep.subr.mxu0 0.0
    %3604 = vmatpush1.msra.mxu0 0.0
    %3605 = vmatprep.subr.mxu0 0.0
    %3606 = vmatpush1.msra.mxu0 0.0
    %3607 = vmatprep.subr.mxu0 0.0
    %3608 = vmatpush1.msra.mxu0 0.0
    %3609 = vmatprep.subr.mxu0 0.0
    %3610 = vmatpush1.msra.mxu0 0.0
    %3611 = vmatprep.subr.mxu0 0.0
    %3612 = vmatpush1.msra.mxu0 0.0
    %3613 = vmatprep.subr.mxu0 0.0
    %3614 = vmatpush1.msra.mxu0 0.0
    %3615 = vmatprep.subr.mxu0 0.0
    %3616 = vmatpush1.msra.mxu0 0.0
    %3617 = vmatprep.subr.mxu0 0.0
    %3618 = vmatpush1.msra.mxu0 0.0
    %3619 = vmatprep.subr.mxu0 0.0
    %3620 = vmatpush1.msra.mxu0 0.0
    %3621 = vmatprep.subr.mxu0 0.0
    %3622 = vmatpush1.msra.mxu0 0.0
    %3623 = vmatprep.subr.mxu0 0.0
    %3624 = vmatpush1.msra.mxu0 0.0
    %3625 = vmatprep.subr.mxu0 0.0
    %3626 = vmatpush1.msra.mxu0 0.0
    %3627 = vmatprep.subr.mxu0 0.0
    %3628 = vmatpush1.msra.mxu0 0.0
    %3629 = vmatprep.subr.mxu0 0.0
    %3630 = vmatpush1.msra.mxu0 0.0
    %3631 = vmatprep.subr.mxu0 0.0
    %3632 = vmatpush1.msra.mxu0 0.0
    %3633 = vmatprep.subr.mxu0 0.0
    %3634 = vmatpush1.msra.mxu0 0.0
    %3635 = vmatprep.subr.mxu0 0.0
    %3636 = vmatpush1.msra.mxu0 0.0
    %3637 = vmatprep.subr.mxu0 0.0
    %3638 = vmatpush1.msra.mxu0 0.0
    %3639 = vmatprep.subr.mxu0 0.0
    %3640 = vmatpush1.msra.mxu0 0.0
    %3641 = vmatprep.subr.mxu0 0.0
    %3642 = vmatpush1.msra.mxu0 0.0
    %3643 = vmatprep.subr.mxu0 0.0
    %3644 = vmatpush1.msra.mxu0 0.0
    %3645 = vmatprep.subr.mxu0 0.0
    %3646 = vmatpush1.msra.mxu0 0.0
    %3647 = vmatprep.mubr.f32.mxu0 0.0
    %3648 = vmatmul.mubr.f32.gmra.mrb[0].mxu0 %v3572
    %v3649 = vpop.f32.mrb[0].mxu0
    %v3650 = vadd.f32 %v3570, %v3649
    %v3651 = vpop.f32.mrb[0].mxu0
    %3652 = vmatprep.mubr.f32.mxu0 0.0
    %3653 = vmatmul.mubr.f32.gmra.mrb[0].mxu0 %v3575
    %v3654 = vpop.f32.mrb[0].mxu0
    %v3655 = vadd.f32 %v3570, %v3654
    %v3656 = vpop.f32.mrb[0].mxu0
    %3657 = vmatprep.mubr.f32.mxu0 0.0
    %3658 = vmatmul.mubr.f32.gmra.mrb[0].mxu0 %v3578
    %v3659 = vpop.f32.mrb[0].mxu0
    %v3660 = vadd.f32 %v3570, %v3659
    %v3661 = vpop.f32.mrb[0].mxu0
    %3662 = vmatprep.mubr.f32.mxu0 0.0
    %3663 = vmatmul.mubr.f32.gmra.mrb[0].mxu0 %v3581
    %v3664 = vpop.f32.mrb[0].mxu0
    %v3665 = vadd.f32 %v3570, %v3664
    %v3666 = vpop.f32.mrb[0].mxu0
    %3667 = vdwg.mxu0
    %v3668 = vmax.f32 %v3650, 0.0
    %v3669 = vmax.f32 %v3655, 0.0
    %v3670 = vmax.f32 %v3660, 0.0
    %v3671 = vmax.f32 %v3665, 0.0
    %v3672 = vld [vmem:[%s0 + $0x2f0] sm:$0xff]
    %v3673 = vld [vmem:[%s0 + $0x2f8] sm:$0xff]
    %v3674 = vld [vmem:[%s0 + $0x300] sm:$0xff]
    %v3675 = vld [vmem:[%s0 + $0x308] sm:$0xff]
    %v3676 = vld [vmem:[%s0 + $0x310] sm:$0xff]
    %v3677 = vld [vmem:[%s0 + $0x318] sm:$0xff]
    %v3678 = vld [vmem:[%s0 + $0x320] sm:$0xff]
    %v3679 = vld [vmem:[%s0 + $0x328] sm:$0xff]
    %v3680 = vlaneseq
    %v3681 = vshrl.u32 %v3680, 7
    %v3682 = vsub.s32 4, %v3681
    %v3683 = vrot.slane %v23, %v3682
    %v3685 = vsel %vm1889, %v3668, 0
    %v3688 = vsel %vm1889, %v3669, 0
    %v3691 = vsel %vm1889, %v3670, 0
    %v3694 = vsel %vm1889, %v3671, 0
    %3696 = vmatprep.subr.mxu0 0.0
    %3697 = vmatpush1.msra.mxu0 %v3672
    %3698 = vmatprep.subr.mxu0 0.0
    %3699 = vmatpush1.msra.mxu0 %v3673
    %3700 = vmatprep.subr.mxu0 0.0
    %3701 = vmatpush1.msra.mxu0 %v3674
    %3702 = vmatprep.subr.mxu0 0.0
    %3703 = vmatpush1.msra.mxu0 %v3675
    %3704 = vmatprep.subr.mxu0 0.0
    %3705 = vmatpush1.msra.mxu0 %v3676
    %3706 = vmatprep.subr.mxu0 0.0
    %3707 = vmatpush1.msra.mxu0 %v3677
    %3708 = vmatprep.subr.mxu0 0.0
    %3709 = vmatpush1.msra.mxu0 %v3678
    %3710 = vmatprep.subr.mxu0 0.0
    %3711 = vmatpush1.msra.mxu0 %v3679
    %3712 = vmatprep.subr.mxu0 0.0
    %3713 = vmatpush1.msra.mxu0 0.0
    %3714 = vmatprep.subr.mxu0 0.0
    %3715 = vmatpush1.msra.mxu0 0.0
    %3716 = vmatprep.subr.mxu0 0.0
    %3717 = vmatpush1.msra.mxu0 0.0
    %3718 = vmatprep.subr.mxu0 0.0
    %3719 = vmatpush1.msra.mxu0 0.0
    %3720 = vmatprep.subr.mxu0 0.0
    %3721 = vmatpush1.msra.mxu0 0.0
    %3722 = vmatprep.subr.mxu0 0.0
    %3723 = vmatpush1.msra.mxu0 0.0
    %3724 = vmatprep.subr.mxu0 0.0
    %3725 = vmatpush1.msra.mxu0 0.0
    %3726 = vmatprep.subr.mxu0 0.0
    %3727 = vmatpush1.msra.mxu0 0.0
    %3728 = vmatprep.subr.mxu0 0.0
    %3729 = vmatpush1.msra.mxu0 0.0
    %3730 = vmatprep.subr.mxu0 0.0
    %3731 = vmatpush1.msra.mxu0 0.0
    %3732 = vmatprep.subr.mxu0 0.0
    %3733 = vmatpush1.msra.mxu0 0.0
    %3734 = vmatprep.subr.mxu0 0.0
    %3735 = vmatpush1.msra.mxu0 0.0
    %3736 = vmatprep.subr.mxu0 0.0
    %3737 = vmatpush1.msra.mxu0 0.0
    %3738 = vmatprep.subr.mxu0 0.0
    %3739 = vmatpush1.msra.mxu0 0.0
    %3740 = vmatprep.subr.mxu0 0.0
    %3741 = vmatpush1.msra.mxu0 0.0
    %3742 = vmatprep.subr.mxu0 0.0
    %3743 = vmatpush1.msra.mxu0 0.0
    %3744 = vmatprep.subr.mxu0 0.0
    %3745 = vmatpush1.msra.mxu0 0.0
    %3746 = vmatprep.subr.mxu0 0.0
    %3747 = vmatpush1.msra.mxu0 0.0
    %3748 = vmatprep.subr.mxu0 0.0
    %3749 = vmatpush1.msra.mxu0 0.0
    %3750 = vmatprep.subr.mxu0 0.0
    %3751 = vmatpush1.msra.mxu0 0.0
    %3752 = vmatprep.subr.mxu0 0.0
    %3753 = vmatpush1.msra.mxu0 0.0
    %3754 = vmatprep.subr.mxu0 0.0
    %3755 = vmatpush1.msra.mxu0 0.0
    %3756 = vmatprep.subr.mxu0 0.0
    %3757 = vmatpush1.msra.mxu0 0.0
    %3758 = vmatprep.subr.mxu0 0.0
    %3759 = vmatpush1.msra.mxu0 0.0
    %3760 = vmatprep.mubr.f32.mxu0 0.0
    %3761 = vmatmul.mubr.f32.gmra.mrb[0].mxu0 %v3685
    %v3762 = vpop.f32.mrb[0].mxu0
    %v3763 = vadd.f32 %v3683, %v3762
    %v3764 = vpop.f32.mrb[0].mxu0
    %3765 = vmatprep.mubr.f32.mxu0 0.0
    %3766 = vmatmul.mubr.f32.gmra.mrb[0].mxu0 %v3688
    %v3767 = vpop.f32.mrb[0].mxu0
    %v3768 = vpop.f32.mrb[0].mxu0
    %3769 = vmatprep.mubr.f32.mxu0 0.0
    %3770 = vmatmul.mubr.f32.gmra.mrb[0].mxu0 %v3691
    %v3771 = vpop.f32.mrb[0].mxu0
    %v3772 = vadd.f32 %v3683, %v3771
    %v3773 = vpop.f32.mrb[0].mxu0
    %3774 = vmatprep.mubr.f32.mxu0 0.0
    %3775 = vmatmul.mubr.f32.gmra.mrb[0].mxu0 %v3694
    %v3776 = vpop.f32.mrb[0].mxu0
    %v3777 = vpop.f32.mrb[0].mxu0
    %3778 = vdwg.mxu0
    %v3779 = vadd.f32 %v3559, %v3763
    %v3780 = vadd.f32 %v3561, %v3772
    %v3781 = vsel %vm285, %v3779, 0.0
    %3782 = vadd.xlane.f32.xlu0 %v3781
    %v3783 = vpop.xlane.xlu0 %3782
    %v3784 = vsel %vm285, %v3780, 0.0
    %3785 = vadd.xlane.f32.xlu0 %v3784
    %v3786 = vpop.xlane.xlu0 %3785
    %v3787 = vmul.f32 %v3783, %v1711
    %v3788 = vmul.f32 %v3786, %v1711
    %v3789 = vsub.f32 %v3779, %v3787
    %v3790 = vsub.f32 %v3780, %v3788
    %v3791 = vmul.f32 %v3789, %v3789
    %v3792 = vmul.f32 %v3790, %v3790
    %v3793 = vsel %vm285, %v3791, 0.0
    %3794 = vadd.xlane.f32.xlu0 %v3793
    %v3795 = vpop.xlane.xlu0 %3794
    %v3796 = vsel %vm285, %v3792, 0.0
    %3797 = vadd.xlane.f32.xlu0 %v3796
    %v3798 = vpop.xlane.xlu0 %3797
    %v3799 = vmul.f32 %v3795, %v1711
    %v3800 = vmul.f32 %v3798, %v1711
    %v3801 = vadd.f32 %v3799, 1e-05
    %v3802 = vadd.f32 %v3800, 1e-05
    %v3803 = vrsqrt.pop %v3801
    %v3804 = vrsqrt.pop %v3802
    %v3805 = vmul.f32 %v3789, %v3803
    %v3806 = vmul.f32 %v3790, %v3804
    %v3807 = vlaneseq
    %v3808 = vshrl.u32 %v3807, 7
    %v3809 = vsub.s32 7, %v3808
    %v3810 = vrot.slane %v23, %v3809
    %v3811 = vmul.f32 %v3805, %v3810
    %v3812 = vmul.f32 %v3806, %v3810
    %v3813 = vlaneseq
    %v3814 = vshrl.u32 %v3813, 7
    %v3815 = vsub.s32 0, %v3814
    %v3816 = vrot.slane %v24, %v3815
    %v3817 = vadd.f32 %v3811, %v3816
    %v3818 = vadd.f32 %v3812, %v3816
    %3819 = vst.msk [vmem:[%s4] sm:$0xff] %vm285, %v3817
    %s3820 = scalar_lea.vmem %s4, 8
    %3821 = vst.msk [vmem:[%s3820] sm:$0xff] %vm285, %v3818
    %v3822 = vld [vmem:[%s0 + $0x30] sm:$0xff]
    %v3823 = vld [vmem:[%s0 + $0x38] sm:$0xff]
    %v3824 = vld [vmem:[%s0 + $0x40] sm:$0xff]
    %v3825 = vld [vmem:[%s0 + $0x48] sm:$0xff]
    %v3826 = vld [vmem:[%s0 + $0x50] sm:$0xff]
    %v3827 = vld [vmem:[%s0 + $0x58] sm:$0xff]
    %v3828 = vld [vmem:[%s0 + $0x60] sm:$0xff]
    %v3829 = vld [vmem:[%s0 + $0x68] sm:$0xff]
    %v3830 = vld [vmem:[%s0 + $0x70] sm:$0xff]
    %v3831 = vld [vmem:[%s0 + $0x78] sm:$0xff]
    %v3832 = vld [vmem:[%s0 + $0x80] sm:$0xff]
    %v3833 = vld [vmem:[%s0 + $0x88] sm:$0xff]
    %v3834 = vld [vmem:[%s0 + $0x90] sm:$0xff]
    %v3835 = vld [vmem:[%s0 + $0x98] sm:$0xff]
    %v3836 = vld [vmem:[%s0 + $0xa0] sm:$0xff]
    %v3837 = vld [vmem:[%s0 + $0xa8] sm:$0xff]
    %v3838 = vld [vmem:[%s0 + $0xb0] sm:$0xff]
    %v3839 = vld [vmem:[%s0 + $0xb8] sm:$0xff]
    %v3840 = vld [vmem:[%s0 + $0xc0] sm:$0xff]
    %v3841 = vld [vmem:[%s0 + $0xc8] sm:$0xff]
    %v3842 = vld [vmem:[%s0 + $0xd0] sm:$0xff]
    %v3843 = vld [vmem:[%s0 + $0xd8] sm:$0xff]
    %v3844 = vld [vmem:[%s0 + $0xe0] sm:$0xff]
    %v3845 = vld [vmem:[%s0 + $0xe8] sm:$0xff]
    %v3846 = vld [vmem:[%s0 + $0xf0] sm:$0xff]
    %v3847 = vld [vmem:[%s0 + $0xf8] sm:$0xff]
    %v3848 = vld [vmem:[%s0 + $0x100] sm:$0xff]
    %v3849 = vld [vmem:[%s0 + $0x108] sm:$0xff]
    %v3850 = vld [vmem:[%s0 + $0x110] sm:$0xff]
    %v3851 = vld [vmem:[%s0 + $0x118] sm:$0xff]
    %v3852 = vld [vmem:[%s0 + $0x120] sm:$0xff]
    %v3853 = vld [vmem:[%s0 + $0x128] sm:$0xff]
    %v3855 = vrot.slane %v3818, 7
    %v3857 = vsel %vm92, %v3817, %v3855
    %v3859 = vrot.slane %v3817, 1
    %v3861 = vsel %vm92, %v3859, %v3818
    %v3863 = vsel %vm285, %v3861, 0
    %3865 = vmatprep.subr.mxu0 0.0
    %3866 = vmatpush1.msra.mxu0 %v3826
    %3867 = vmatprep.subr.mxu0 0.0
    %3868 = vmatpush1.msra.mxu0 %v3827
    %3869 = vmatprep.subr.mxu0 0.0
    %3870 = vmatpush1.msra.mxu0 %v3828
    %3871 = vmatprep.subr.mxu0 0.0
    %3872 = vmatpush1.msra.mxu0 %v3829
    %3873 = vmatprep.subr.mxu0 0.0
    %3874 = vmatpush1.msra.mxu0 0.0
    %3875 = vmatprep.subr.mxu0 0.0
    %3876 = vmatpush1.msra.mxu0 0.0
    %3877 = vmatprep.subr.mxu0 0.0
    %3878 = vmatpush1.msra.mxu0 0.0
    %3879 = vmatprep.subr.mxu0 0.0
    %3880 = vmatpush1.msra.mxu0 0.0
    %3881 = vmatprep.subr.mxu0 0.0
    %3882 = vmatpush1.msra.mxu0 0.0
    %3883 = vmatprep.subr.mxu0 0.0
    %3884 = vmatpush1.msra.mxu0 0.0
    %3885 = vmatprep.subr.mxu0 0.0
    %3886 = vmatpush1.msra.mxu0 0.0
    %3887 = vmatprep.subr.mxu0 0.0
    %3888 = vmatpush1.msra.mxu0 0.0
    %3889 = vmatprep.subr.mxu0 0.0
    %3890 = vmatpush1.msra.mxu0 0.0
    %3891 = vmatprep.subr.mxu0 0.0
    %3892 = vmatpush1.msra.mxu0 0.0
    %3893 = vmatprep.subr.mxu0 0.0
    %3894 = vmatpush1.msra.mxu0 0.0
    %3895 = vmatprep.subr.mxu0 0.0
    %3896 = vmatpush1.msra.mxu0 0.0
    %3897 = vmatprep.subr.mxu0 0.0
    %3898 = vmatpush1.msra.mxu0 0.0
    %3899 = vmatprep.subr.mxu0 0.0
    %3900 = vmatpush1.msra.mxu0 0.0
    %3901 = vmatprep.subr.mxu0 0.0
    %3902 = vmatpush1.msra.mxu0 0.0
    %3903 = vmatprep.subr.mxu0 0.0
    %3904 = vmatpush1.msra.mxu0 0.0
    %3905 = vmatprep.subr.mxu0 0.0
    %3906 = vmatpush1.msra.mxu0 0.0
    %3907 = vmatprep.subr.mxu0 0.0
    %3908 = vmatpush1.msra.mxu0 0.0
    %3909 = vmatprep.subr.mxu0 0.0
    %3910 = vmatpush1.msra.mxu0 0.0
    %3911 = vmatprep.subr.mxu0 0.0
    %3912 = vmatpush1.msra.mxu0 0.0
    %3913 = vmatprep.subr.mxu0 0.0
    %3914 = vmatpush1.msra.mxu0 0.0
    %3915 = vmatprep.subr.mxu0 0.0
    %3916 = vmatpush1.msra.mxu0 0.0
    %3917 = vmatprep.subr.mxu0 0.0
    %3918 = vmatpush1.msra.mxu0 0.0
    %3919 = vmatprep.subr.mxu0 0.0
    %3920 = vmatpush1.msra.mxu0 0.0
    %3921 = vmatprep.subr.mxu0 0.0
    %3922 = vmatpush1.msra.mxu0 0.0
    %3923 = vmatprep.subr.mxu0 0.0
    %3924 = vmatpush1.msra.mxu0 0.0
    %3925 = vmatprep.subr.mxu0 0.0
    %3926 = vmatpush1.msra.mxu0 0.0
    %3927 = vmatprep.subr.mxu0 0.0
    %3928 = vmatpush1.msra.mxu0 0.0
    %3929 = vmatprep.mubr.f32.mxu0 0.0
    %3930 = vmatmul.mubr.f32.gmra.mrb[0].mxu0 %v3863
    %v3931 = vpop.f32.mrb[0].mxu0
    %v3932 = vadd.f32 0.0, %v3931
    %v3933 = vpop.f32.mrb[0].mxu0
    %3934 = vdwg.mxu0
    %v3936 = vsel %vm285, %v3857, 0
    %3938 = vmatprep.subr.mxu0 0.0
    %3939 = vmatpush1.msra.mxu0 %v3822
    %3940 = vmatprep.subr.mxu0 0.0
    %3941 = vmatpush1.msra.mxu0 %v3823
    %3942 = vmatprep.subr.mxu0 0.0
    %3943 = vmatpush1.msra.mxu0 %v3824
    %3944 = vmatprep.subr.mxu0 0.0
    %3945 = vmatpush1.msra.mxu0 %v3825
    %3946 = vmatprep.subr.mxu0 0.0
    %3947 = vmatpush1.msra.mxu0 0.0
    %3948 = vmatprep.subr.mxu0 0.0
    %3949 = vmatpush1.msra.mxu0 0.0
    %3950 = vmatprep.subr.mxu0 0.0
    %3951 = vmatpush1.msra.mxu0 0.0
    %3952 = vmatprep.subr.mxu0 0.0
    %3953 = vmatpush1.msra.mxu0 0.0
    %3954 = vmatprep.subr.mxu0 0.0
    %3955 = vmatpush1.msra.mxu0 0.0
    %3956 = vmatprep.subr.mxu0 0.0
    %3957 = vmatpush1.msra.mxu0 0.0
    %3958 = vmatprep.subr.mxu0 0.0
    %3959 = vmatpush1.msra.mxu0 0.0
    %3960 = vmatprep.subr.mxu0 0.0
    %3961 = vmatpush1.msra.mxu0 0.0
    %3962 = vmatprep.subr.mxu0 0.0
    %3963 = vmatpush1.msra.mxu0 0.0
    %3964 = vmatprep.subr.mxu0 0.0
    %3965 = vmatpush1.msra.mxu0 0.0
    %3966 = vmatprep.subr.mxu0 0.0
    %3967 = vmatpush1.msra.mxu0 0.0
    %3968 = vmatprep.subr.mxu0 0.0
    %3969 = vmatpush1.msra.mxu0 0.0
    %3970 = vmatprep.subr.mxu0 0.0
    %3971 = vmatpush1.msra.mxu0 0.0
    %3972 = vmatprep.subr.mxu0 0.0
    %3973 = vmatpush1.msra.mxu0 0.0
    %3974 = vmatprep.subr.mxu0 0.0
    %3975 = vmatpush1.msra.mxu0 0.0
    %3976 = vmatprep.subr.mxu0 0.0
    %3977 = vmatpush1.msra.mxu0 0.0
    %3978 = vmatprep.subr.mxu0 0.0
    %3979 = vmatpush1.msra.mxu0 0.0
    %3980 = vmatprep.subr.mxu0 0.0
    %3981 = vmatpush1.msra.mxu0 0.0
    %3982 = vmatprep.subr.mxu0 0.0
    %3983 = vmatpush1.msra.mxu0 0.0
    %3984 = vmatprep.subr.mxu0 0.0
    %3985 = vmatpush1.msra.mxu0 0.0
    %3986 = vmatprep.subr.mxu0 0.0
    %3987 = vmatpush1.msra.mxu0 0.0
    %3988 = vmatprep.subr.mxu0 0.0
    %3989 = vmatpush1.msra.mxu0 0.0
    %3990 = vmatprep.subr.mxu0 0.0
    %3991 = vmatpush1.msra.mxu0 0.0
    %3992 = vmatprep.subr.mxu0 0.0
    %3993 = vmatpush1.msra.mxu0 0.0
    %3994 = vmatprep.subr.mxu0 0.0
    %3995 = vmatpush1.msra.mxu0 0.0
    %3996 = vmatprep.subr.mxu0 0.0
    %3997 = vmatpush1.msra.mxu0 0.0
    %3998 = vmatprep.subr.mxu0 0.0
    %3999 = vmatpush1.msra.mxu0 0.0
    %4000 = vmatprep.subr.mxu0 0.0
    %4001 = vmatpush1.msra.mxu0 0.0
    %4002 = vmatprep.mubr.f32.mxu0 0.0
    %4003 = vmatmul.mubr.f32.gmra.mrb[0].mxu0 %v3936
    %v4004 = vpop.f32.mrb[0].mxu0
    %v4005 = vadd.f32 %v3932, %v4004
    %v4006 = vpop.f32.mrb[0].mxu0
    %4007 = vdwg.mxu0
    %v4008 = vrot.slane %v3817, 2
    %v4010 = vrot.slane %v3818, 1
    %v4012 = vsel %vm92, %v4008, %v4010
    %v4014 = vsel %vm285, %v4012, 0
    %4016 = vmatprep.subr.mxu0 0.0
    %4017 = vmatpush1.msra.mxu0 %v3830
    %4018 = vmatprep.subr.mxu0 0.0
    %4019 = vmatpush1.msra.mxu0 %v3831
    %4020 = vmatprep.subr.mxu0 0.0
    %4021 = vmatpush1.msra.mxu0 %v3832
    %4022 = vmatprep.subr.mxu0 0.0
    %4023 = vmatpush1.msra.mxu0 %v3833
    %4024 = vmatprep.subr.mxu0 0.0
    %4025 = vmatpush1.msra.mxu0 0.0
    %4026 = vmatprep.subr.mxu0 0.0
    %4027 = vmatpush1.msra.mxu0 0.0
    %4028 = vmatprep.subr.mxu0 0.0
    %4029 = vmatpush1.msra.mxu0 0.0
    %4030 = vmatprep.subr.mxu0 0.0
    %4031 = vmatpush1.msra.mxu0 0.0
    %4032 = vmatprep.subr.mxu0 0.0
    %4033 = vmatpush1.msra.mxu0 0.0
    %4034 = vmatprep.subr.mxu0 0.0
    %4035 = vmatpush1.msra.mxu0 0.0
    %4036 = vmatprep.subr.mxu0 0.0
    %4037 = vmatpush1.msra.mxu0 0.0
    %4038 = vmatprep.subr.mxu0 0.0
    %4039 = vmatpush1.msra.mxu0 0.0
    %4040 = vmatprep.subr.mxu0 0.0
    %4041 = vmatpush1.msra.mxu0 0.0
    %4042 = vmatprep.subr.mxu0 0.0
    %4043 = vmatpush1.msra.mxu0 0.0
    %4044 = vmatprep.subr.mxu0 0.0
    %4045 = vmatpush1.msra.mxu0 0.0
    %4046 = vmatprep.subr.mxu0 0.0
    %4047 = vmatpush1.msra.mxu0 0.0
    %4048 = vmatprep.subr.mxu0 0.0
    %4049 = vmatpush1.msra.mxu0 0.0
    %4050 = vmatprep.subr.mxu0 0.0
    %4051 = vmatpush1.msra.mxu0 0.0
    %4052 = vmatprep.subr.mxu0 0.0
    %4053 = vmatpush1.msra.mxu0 0.0
    %4054 = vmatprep.subr.mxu0 0.0
    %4055 = vmatpush1.msra.mxu0 0.0
    %4056 = vmatprep.subr.mxu0 0.0
    %4057 = vmatpush1.msra.mxu0 0.0
    %4058 = vmatprep.subr.mxu0 0.0
    %4059 = vmatpush1.msra.mxu0 0.0
    %4060 = vmatprep.subr.mxu0 0.0
    %4061 = vmatpush1.msra.mxu0 0.0
    %4062 = vmatprep.subr.mxu0 0.0
    %4063 = vmatpush1.msra.mxu0 0.0
    %4064 = vmatprep.subr.mxu0 0.0
    %4065 = vmatpush1.msra.mxu0 0.0
    %4066 = vmatprep.subr.mxu0 0.0
    %4067 = vmatpush1.msra.mxu0 0.0
    %4068 = vmatprep.subr.mxu0 0.0
    %4069 = vmatpush1.msra.mxu0 0.0
    %4070 = vmatprep.subr.mxu0 0.0
    %4071 = vmatpush1.msra.mxu0 0.0
    %4072 = vmatprep.subr.mxu0 0.0
    %4073 = vmatpush1.msra.mxu0 0.0
    %4074 = vmatprep.subr.mxu0 0.0
    %4075 = vmatpush1.msra.mxu0 0.0
    %4076 = vmatprep.subr.mxu0 0.0
    %4077 = vmatpush1.msra.mxu0 0.0
    %4078 = vmatprep.subr.mxu0 0.0
    %4079 = vmatpush1.msra.mxu0 0.0
    %4080 = vmatprep.mubr.f32.mxu0 0.0
    %4081 = vmatmul.mubr.f32.gmra.mrb[0].mxu0 %v4014
    %v4082 = vpop.f32.mrb[0].mxu0
    %v4083 = vadd.f32 0.0, %v4082
    %v4084 = vpop.f32.mrb[0].mxu0
    %4085 = vdwg.mxu0
    %v4086 = vadd.f32 %v4005, %v4083
    %v4087 = vrot.slane %v3817, 3
    %v4089 = vrot.slane %v3818, 2
    %v4091 = vsel %vm92, %v4087, %v4089
    %v4093 = vsel %vm285, %v4091, 0
    %4095 = vmatprep.subr.mxu0 0.0
    %4096 = vmatpush1.msra.mxu0 %v3834
    %4097 = vmatprep.subr.mxu0 0.0
    %4098 = vmatpush1.msra.mxu0 %v3835
    %4099 = vmatprep.subr.mxu0 0.0
    %4100 = vmatpush1.msra.mxu0 %v3836
    %4101 = vmatprep.subr.mxu0 0.0
    %4102 = vmatpush1.msra.mxu0 %v3837
    %4103 = vmatprep.subr.mxu0 0.0
    %4104 = vmatpush1.msra.mxu0 0.0
    %4105 = vmatprep.subr.mxu0 0.0
    %4106 = vmatpush1.msra.mxu0 0.0
    %4107 = vmatprep.subr.mxu0 0.0
    %4108 = vmatpush1.msra.mxu0 0.0
    %4109 = vmatprep.subr.mxu0 0.0
    %4110 = vmatpush1.msra.mxu0 0.0
    %4111 = vmatprep.subr.mxu0 0.0
    %4112 = vmatpush1.msra.mxu0 0.0
    %4113 = vmatprep.subr.mxu0 0.0
    %4114 = vmatpush1.msra.mxu0 0.0
    %4115 = vmatprep.subr.mxu0 0.0
    %4116 = vmatpush1.msra.mxu0 0.0
    %4117 = vmatprep.subr.mxu0 0.0
    %4118 = vmatpush1.msra.mxu0 0.0
    %4119 = vmatprep.subr.mxu0 0.0
    %4120 = vmatpush1.msra.mxu0 0.0
    %4121 = vmatprep.subr.mxu0 0.0
    %4122 = vmatpush1.msra.mxu0 0.0
    %4123 = vmatprep.subr.mxu0 0.0
    %4124 = vmatpush1.msra.mxu0 0.0
    %4125 = vmatprep.subr.mxu0 0.0
    %4126 = vmatpush1.msra.mxu0 0.0
    %4127 = vmatprep.subr.mxu0 0.0
    %4128 = vmatpush1.msra.mxu0 0.0
    %4129 = vmatprep.subr.mxu0 0.0
    %4130 = vmatpush1.msra.mxu0 0.0
    %4131 = vmatprep.subr.mxu0 0.0
    %4132 = vmatpush1.msra.mxu0 0.0
    %4133 = vmatprep.subr.mxu0 0.0
    %4134 = vmatpush1.msra.mxu0 0.0
    %4135 = vmatprep.subr.mxu0 0.0
    %4136 = vmatpush1.msra.mxu0 0.0
    %4137 = vmatprep.subr.mxu0 0.0
    %4138 = vmatpush1.msra.mxu0 0.0
    %4139 = vmatprep.subr.mxu0 0.0
    %4140 = vmatpush1.msra.mxu0 0.0
    %4141 = vmatprep.subr.mxu0 0.0
    %4142 = vmatpush1.msra.mxu0 0.0
    %4143 = vmatprep.subr.mxu0 0.0
    %4144 = vmatpush1.msra.mxu0 0.0
    %4145 = vmatprep.subr.mxu0 0.0
    %4146 = vmatpush1.msra.mxu0 0.0
    %4147 = vmatprep.subr.mxu0 0.0
    %4148 = vmatpush1.msra.mxu0 0.0
    %4149 = vmatprep.subr.mxu0 0.0
    %4150 = vmatpush1.msra.mxu0 0.0
    %4151 = vmatprep.subr.mxu0 0.0
    %4152 = vmatpush1.msra.mxu0 0.0
    %4153 = vmatprep.subr.mxu0 0.0
    %4154 = vmatpush1.msra.mxu0 0.0
    %4155 = vmatprep.subr.mxu0 0.0
    %4156 = vmatpush1.msra.mxu0 0.0
    %4157 = vmatprep.subr.mxu0 0.0
    %4158 = vmatpush1.msra.mxu0 0.0
    %4159 = vmatprep.mubr.f32.mxu0 0.0
    %4160 = vmatmul.mubr.f32.gmra.mrb[0].mxu0 %v4093
    %v4161 = vpop.f32.mrb[0].mxu0
    %v4162 = vadd.f32 0.0, %v4161
    %v4163 = vpop.f32.mrb[0].mxu0
    %4164 = vdwg.mxu0
    %v4165 = vadd.f32 %v4086, %v4162
    %v4166 = vrot.slane %v3817, 4
    %v4168 = vrot.slane %v3818, 3
    %v4170 = vsel %vm92, %v4166, %v4168
    %v4172 = vsel %vm285, %v4170, 0
    %4174 = vmatprep.subr.mxu0 0.0
    %4175 = vmatpush1.msra.mxu0 %v3838
    %4176 = vmatprep.subr.mxu0 0.0
    %4177 = vmatpush1.msra.mxu0 %v3839
    %4178 = vmatprep.subr.mxu0 0.0
    %4179 = vmatpush1.msra.mxu0 %v3840
    %4180 = vmatprep.subr.mxu0 0.0
    %4181 = vmatpush1.msra.mxu0 %v3841
    %4182 = vmatprep.subr.mxu0 0.0
    %4183 = vmatpush1.msra.mxu0 0.0
    %4184 = vmatprep.subr.mxu0 0.0
    %4185 = vmatpush1.msra.mxu0 0.0
    %4186 = vmatprep.subr.mxu0 0.0
    %4187 = vmatpush1.msra.mxu0 0.0
    %4188 = vmatprep.subr.mxu0 0.0
    %4189 = vmatpush1.msra.mxu0 0.0
    %4190 = vmatprep.subr.mxu0 0.0
    %4191 = vmatpush1.msra.mxu0 0.0
    %4192 = vmatprep.subr.mxu0 0.0
    %4193 = vmatpush1.msra.mxu0 0.0
    %4194 = vmatprep.subr.mxu0 0.0
    %4195 = vmatpush1.msra.mxu0 0.0
    %4196 = vmatprep.subr.mxu0 0.0
    %4197 = vmatpush1.msra.mxu0 0.0
    %4198 = vmatprep.subr.mxu0 0.0
    %4199 = vmatpush1.msra.mxu0 0.0
    %4200 = vmatprep.subr.mxu0 0.0
    %4201 = vmatpush1.msra.mxu0 0.0
    %4202 = vmatprep.subr.mxu0 0.0
    %4203 = vmatpush1.msra.mxu0 0.0
    %4204 = vmatprep.subr.mxu0 0.0
    %4205 = vmatpush1.msra.mxu0 0.0
    %4206 = vmatprep.subr.mxu0 0.0
    %4207 = vmatpush1.msra.mxu0 0.0
    %4208 = vmatprep.subr.mxu0 0.0
    %4209 = vmatpush1.msra.mxu0 0.0
    %4210 = vmatprep.subr.mxu0 0.0
    %4211 = vmatpush1.msra.mxu0 0.0
    %4212 = vmatprep.subr.mxu0 0.0
    %4213 = vmatpush1.msra.mxu0 0.0
    %4214 = vmatprep.subr.mxu0 0.0
    %4215 = vmatpush1.msra.mxu0 0.0
    %4216 = vmatprep.subr.mxu0 0.0
    %4217 = vmatpush1.msra.mxu0 0.0
    %4218 = vmatprep.subr.mxu0 0.0
    %4219 = vmatpush1.msra.mxu0 0.0
    %4220 = vmatprep.subr.mxu0 0.0
    %4221 = vmatpush1.msra.mxu0 0.0
    %4222 = vmatprep.subr.mxu0 0.0
    %4223 = vmatpush1.msra.mxu0 0.0
    %4224 = vmatprep.subr.mxu0 0.0
    %4225 = vmatpush1.msra.mxu0 0.0
    %4226 = vmatprep.subr.mxu0 0.0
    %4227 = vmatpush1.msra.mxu0 0.0
    %4228 = vmatprep.subr.mxu0 0.0
    %4229 = vmatpush1.msra.mxu0 0.0
    %4230 = vmatprep.subr.mxu0 0.0
    %4231 = vmatpush1.msra.mxu0 0.0
    %4232 = vmatprep.subr.mxu0 0.0
    %4233 = vmatpush1.msra.mxu0 0.0
    %4234 = vmatprep.subr.mxu0 0.0
    %4235 = vmatpush1.msra.mxu0 0.0
    %4236 = vmatprep.subr.mxu0 0.0
    %4237 = vmatpush1.msra.mxu0 0.0
    %4238 = vmatprep.mubr.f32.mxu0 0.0
    %4239 = vmatmul.mubr.f32.gmra.mrb[0].mxu0 %v4172
    %v4240 = vpop.f32.mrb[0].mxu0
    %v4241 = vadd.f32 0.0, %v4240
    %v4242 = vpop.f32.mrb[0].mxu0
    %4243 = vdwg.mxu0
    %v4244 = vadd.f32 %v4165, %v4241
    %v4245 = vrot.slane %v3817, 5
    %v4247 = vrot.slane %v3818, 4
    %v4249 = vsel %vm92, %v4245, %v4247
    %v4251 = vsel %vm285, %v4249, 0
    %4253 = vmatprep.subr.mxu0 0.0
    %4254 = vmatpush1.msra.mxu0 %v3842
    %4255 = vmatprep.subr.mxu0 0.0
    %4256 = vmatpush1.msra.mxu0 %v3843
    %4257 = vmatprep.subr.mxu0 0.0
    %4258 = vmatpush1.msra.mxu0 %v3844
    %4259 = vmatprep.subr.mxu0 0.0
    %4260 = vmatpush1.msra.mxu0 %v3845
    %4261 = vmatprep.subr.mxu0 0.0
    %4262 = vmatpush1.msra.mxu0 0.0
    %4263 = vmatprep.subr.mxu0 0.0
    %4264 = vmatpush1.msra.mxu0 0.0
    %4265 = vmatprep.subr.mxu0 0.0
    %4266 = vmatpush1.msra.mxu0 0.0
    %4267 = vmatprep.subr.mxu0 0.0
    %4268 = vmatpush1.msra.mxu0 0.0
    %4269 = vmatprep.subr.mxu0 0.0
    %4270 = vmatpush1.msra.mxu0 0.0
    %4271 = vmatprep.subr.mxu0 0.0
    %4272 = vmatpush1.msra.mxu0 0.0
    %4273 = vmatprep.subr.mxu0 0.0
    %4274 = vmatpush1.msra.mxu0 0.0
    %4275 = vmatprep.subr.mxu0 0.0
    %4276 = vmatpush1.msra.mxu0 0.0
    %4277 = vmatprep.subr.mxu0 0.0
    %4278 = vmatpush1.msra.mxu0 0.0
    %4279 = vmatprep.subr.mxu0 0.0
    %4280 = vmatpush1.msra.mxu0 0.0
    %4281 = vmatprep.subr.mxu0 0.0
    %4282 = vmatpush1.msra.mxu0 0.0
    %4283 = vmatprep.subr.mxu0 0.0
    %4284 = vmatpush1.msra.mxu0 0.0
    %4285 = vmatprep.subr.mxu0 0.0
    %4286 = vmatpush1.msra.mxu0 0.0
    %4287 = vmatprep.subr.mxu0 0.0
    %4288 = vmatpush1.msra.mxu0 0.0
    %4289 = vmatprep.subr.mxu0 0.0
    %4290 = vmatpush1.msra.mxu0 0.0
    %4291 = vmatprep.subr.mxu0 0.0
    %4292 = vmatpush1.msra.mxu0 0.0
    %4293 = vmatprep.subr.mxu0 0.0
    %4294 = vmatpush1.msra.mxu0 0.0
    %4295 = vmatprep.subr.mxu0 0.0
    %4296 = vmatpush1.msra.mxu0 0.0
    %4297 = vmatprep.subr.mxu0 0.0
    %4298 = vmatpush1.msra.mxu0 0.0
    %4299 = vmatprep.subr.mxu0 0.0
    %4300 = vmatpush1.msra.mxu0 0.0
    %4301 = vmatprep.subr.mxu0 0.0
    %4302 = vmatpush1.msra.mxu0 0.0
    %4303 = vmatprep.subr.mxu0 0.0
    %4304 = vmatpush1.msra.mxu0 0.0
    %4305 = vmatprep.subr.mxu0 0.0
    %4306 = vmatpush1.msra.mxu0 0.0
    %4307 = vmatprep.subr.mxu0 0.0
    %4308 = vmatpush1.msra.mxu0 0.0
    %4309 = vmatprep.subr.mxu0 0.0
    %4310 = vmatpush1.msra.mxu0 0.0
    %4311 = vmatprep.subr.mxu0 0.0
    %4312 = vmatpush1.msra.mxu0 0.0
    %4313 = vmatprep.subr.mxu0 0.0
    %4314 = vmatpush1.msra.mxu0 0.0
    %4315 = vmatprep.subr.mxu0 0.0
    %4316 = vmatpush1.msra.mxu0 0.0
    %4317 = vmatprep.mubr.f32.mxu0 0.0
    %4318 = vmatmul.mubr.f32.gmra.mrb[0].mxu0 %v4251
    %v4319 = vpop.f32.mrb[0].mxu0
    %v4320 = vadd.f32 0.0, %v4319
    %v4321 = vpop.f32.mrb[0].mxu0
    %4322 = vdwg.mxu0
    %v4323 = vadd.f32 %v4244, %v4320
    %v4324 = vrot.slane %v3817, 6
    %v4326 = vrot.slane %v3818, 5
    %v4328 = vsel %vm92, %v4324, %v4326
    %v4330 = vsel %vm285, %v4328, 0
    %4332 = vmatprep.subr.mxu0 0.0
    %4333 = vmatpush1.msra.mxu0 %v3846
    %4334 = vmatprep.subr.mxu0 0.0
    %4335 = vmatpush1.msra.mxu0 %v3847
    %4336 = vmatprep.subr.mxu0 0.0
    %4337 = vmatpush1.msra.mxu0 %v3848
    %4338 = vmatprep.subr.mxu0 0.0
    %4339 = vmatpush1.msra.mxu0 %v3849
    %4340 = vmatprep.subr.mxu0 0.0
    %4341 = vmatpush1.msra.mxu0 0.0
    %4342 = vmatprep.subr.mxu0 0.0
    %4343 = vmatpush1.msra.mxu0 0.0
    %4344 = vmatprep.subr.mxu0 0.0
    %4345 = vmatpush1.msra.mxu0 0.0
    %4346 = vmatprep.subr.mxu0 0.0
    %4347 = vmatpush1.msra.mxu0 0.0
    %4348 = vmatprep.subr.mxu0 0.0
    %4349 = vmatpush1.msra.mxu0 0.0
    %4350 = vmatprep.subr.mxu0 0.0
    %4351 = vmatpush1.msra.mxu0 0.0
    %4352 = vmatprep.subr.mxu0 0.0
    %4353 = vmatpush1.msra.mxu0 0.0
    %4354 = vmatprep.subr.mxu0 0.0
    %4355 = vmatpush1.msra.mxu0 0.0
    %4356 = vmatprep.subr.mxu0 0.0
    %4357 = vmatpush1.msra.mxu0 0.0
    %4358 = vmatprep.subr.mxu0 0.0
    %4359 = vmatpush1.msra.mxu0 0.0
    %4360 = vmatprep.subr.mxu0 0.0
    %4361 = vmatpush1.msra.mxu0 0.0
    %4362 = vmatprep.subr.mxu0 0.0
    %4363 = vmatpush1.msra.mxu0 0.0
    %4364 = vmatprep.subr.mxu0 0.0
    %4365 = vmatpush1.msra.mxu0 0.0
    %4366 = vmatprep.subr.mxu0 0.0
    %4367 = vmatpush1.msra.mxu0 0.0
    %4368 = vmatprep.subr.mxu0 0.0
    %4369 = vmatpush1.msra.mxu0 0.0
    %4370 = vmatprep.subr.mxu0 0.0
    %4371 = vmatpush1.msra.mxu0 0.0
    %4372 = vmatprep.subr.mxu0 0.0
    %4373 = vmatpush1.msra.mxu0 0.0
    %4374 = vmatprep.subr.mxu0 0.0
    %4375 = vmatpush1.msra.mxu0 0.0
    %4376 = vmatprep.subr.mxu0 0.0
    %4377 = vmatpush1.msra.mxu0 0.0
    %4378 = vmatprep.subr.mxu0 0.0
    %4379 = vmatpush1.msra.mxu0 0.0
    %4380 = vmatprep.subr.mxu0 0.0
    %4381 = vmatpush1.msra.mxu0 0.0
    %4382 = vmatprep.subr.mxu0 0.0
    %4383 = vmatpush1.msra.mxu0 0.0
    %4384 = vmatprep.subr.mxu0 0.0
    %4385 = vmatpush1.msra.mxu0 0.0
    %4386 = vmatprep.subr.mxu0 0.0
    %4387 = vmatpush1.msra.mxu0 0.0
    %4388 = vmatprep.subr.mxu0 0.0
    %4389 = vmatpush1.msra.mxu0 0.0
    %4390 = vmatprep.subr.mxu0 0.0
    %4391 = vmatpush1.msra.mxu0 0.0
    %4392 = vmatprep.subr.mxu0 0.0
    %4393 = vmatpush1.msra.mxu0 0.0
    %4394 = vmatprep.subr.mxu0 0.0
    %4395 = vmatpush1.msra.mxu0 0.0
    %4396 = vmatprep.mubr.f32.mxu0 0.0
    %4397 = vmatmul.mubr.f32.gmra.mrb[0].mxu0 %v4330
    %v4398 = vpop.f32.mrb[0].mxu0
    %v4399 = vadd.f32 0.0, %v4398
    %v4400 = vpop.f32.mrb[0].mxu0
    %4401 = vdwg.mxu0
    %v4402 = vadd.f32 %v4323, %v4399
    %v4403 = vrot.slane %v3817, 7
    %v4405 = vrot.slane %v3818, 6
    %v4407 = vsel %vm92, %v4403, %v4405
    %v4409 = vsel %vm285, %v4407, 0
    %4411 = vmatprep.subr.mxu0 0.0
    %4412 = vmatpush1.msra.mxu0 %v3850
    %4413 = vmatprep.subr.mxu0 0.0
    %4414 = vmatpush1.msra.mxu0 %v3851
    %4415 = vmatprep.subr.mxu0 0.0
    %4416 = vmatpush1.msra.mxu0 %v3852
    %4417 = vmatprep.subr.mxu0 0.0
    %4418 = vmatpush1.msra.mxu0 %v3853
    %4419 = vmatprep.subr.mxu0 0.0
    %4420 = vmatpush1.msra.mxu0 0.0
    %4421 = vmatprep.subr.mxu0 0.0
    %4422 = vmatpush1.msra.mxu0 0.0
    %4423 = vmatprep.subr.mxu0 0.0
    %4424 = vmatpush1.msra.mxu0 0.0
    %4425 = vmatprep.subr.mxu0 0.0
    %4426 = vmatpush1.msra.mxu0 0.0
    %4427 = vmatprep.subr.mxu0 0.0
    %4428 = vmatpush1.msra.mxu0 0.0
    %4429 = vmatprep.subr.mxu0 0.0
    %4430 = vmatpush1.msra.mxu0 0.0
    %4431 = vmatprep.subr.mxu0 0.0
    %4432 = vmatpush1.msra.mxu0 0.0
    %4433 = vmatprep.subr.mxu0 0.0
    %4434 = vmatpush1.msra.mxu0 0.0
    %4435 = vmatprep.subr.mxu0 0.0
    %4436 = vmatpush1.msra.mxu0 0.0
    %4437 = vmatprep.subr.mxu0 0.0
    %4438 = vmatpush1.msra.mxu0 0.0
    %4439 = vmatprep.subr.mxu0 0.0
    %4440 = vmatpush1.msra.mxu0 0.0
    %4441 = vmatprep.subr.mxu0 0.0
    %4442 = vmatpush1.msra.mxu0 0.0
    %4443 = vmatprep.subr.mxu0 0.0
    %4444 = vmatpush1.msra.mxu0 0.0
    %4445 = vmatprep.subr.mxu0 0.0
    %4446 = vmatpush1.msra.mxu0 0.0
    %4447 = vmatprep.subr.mxu0 0.0
    %4448 = vmatpush1.msra.mxu0 0.0
    %4449 = vmatprep.subr.mxu0 0.0
    %4450 = vmatpush1.msra.mxu0 0.0
    %4451 = vmatprep.subr.mxu0 0.0
    %4452 = vmatpush1.msra.mxu0 0.0
    %4453 = vmatprep.subr.mxu0 0.0
    %4454 = vmatpush1.msra.mxu0 0.0
    %4455 = vmatprep.subr.mxu0 0.0
    %4456 = vmatpush1.msra.mxu0 0.0
    %4457 = vmatprep.subr.mxu0 0.0
    %4458 = vmatpush1.msra.mxu0 0.0
    %4459 = vmatprep.subr.mxu0 0.0
    %4460 = vmatpush1.msra.mxu0 0.0
    %4461 = vmatprep.subr.mxu0 0.0
    %4462 = vmatpush1.msra.mxu0 0.0
    %4463 = vmatprep.subr.mxu0 0.0
    %4464 = vmatpush1.msra.mxu0 0.0
    %4465 = vmatprep.subr.mxu0 0.0
    %4466 = vmatpush1.msra.mxu0 0.0
    %4467 = vmatprep.subr.mxu0 0.0
    %4468 = vmatpush1.msra.mxu0 0.0
    %4469 = vmatprep.subr.mxu0 0.0
    %4470 = vmatpush1.msra.mxu0 0.0
    %4471 = vmatprep.subr.mxu0 0.0
    %4472 = vmatpush1.msra.mxu0 0.0
    %4473 = vmatprep.subr.mxu0 0.0
    %4474 = vmatpush1.msra.mxu0 0.0
    %4475 = vmatprep.mubr.f32.mxu0 0.0
    %4476 = vmatmul.mubr.f32.gmra.mrb[0].mxu0 %v4409
    %v4477 = vpop.f32.mrb[0].mxu0
    %v4478 = vadd.f32 0.0, %v4477
    %v4479 = vpop.f32.mrb[0].mxu0
    %4480 = vdwg.mxu0
    %v4481 = vadd.f32 %v4402, %v4478
    %v4482 = vlaneseq
    %v4483 = vshrl.u32 %v4482, 7
    %v4484 = vsub.s32 2, %v4483
    %v4485 = vrot.slane %v21, %v4484
    %v4486 = vadd.f32 %v4481, %v4485
    %v4487 = vmax.f32 %v4486, 0.0
    %v4488 = vld [vmem:[%s0 + $0x130] sm:$0xff]
    %v4489 = vld [vmem:[%s0 + $0x138] sm:$0xff]
    %v4490 = vld [vmem:[%s0 + $0x140] sm:$0xff]
    %v4491 = vld [vmem:[%s0 + $0x148] sm:$0xff]
    %v4492 = vlaneseq
    %v4493 = vshrl.u32 %v4492, 7
    %v4494 = vsub.s32 3, %v4493
    %v4495 = vrot.slane %v21, %v4494
    %v4497 = vsel %vm285, %v4487, 0
    %4499 = vmatprep.subr.mxu0 0.0
    %4500 = vmatpush1.msra.mxu0 %v4488
    %4501 = vmatprep.subr.mxu0 0.0
    %4502 = vmatpush1.msra.mxu0 %v4489
    %4503 = vmatprep.subr.mxu0 0.0
    %4504 = vmatpush1.msra.mxu0 %v4490
    %4505 = vmatprep.subr.mxu0 0.0
    %4506 = vmatpush1.msra.mxu0 %v4491
    %4507 = vmatprep.subr.mxu0 0.0
    %4508 = vmatpush1.msra.mxu0 0.0
    %4509 = vmatprep.subr.mxu0 0.0
    %4510 = vmatpush1.msra.mxu0 0.0
    %4511 = vmatprep.subr.mxu0 0.0
    %4512 = vmatpush1.msra.mxu0 0.0
    %4513 = vmatprep.subr.mxu0 0.0
    %4514 = vmatpush1.msra.mxu0 0.0
    %4515 = vmatprep.subr.mxu0 0.0
    %4516 = vmatpush1.msra.mxu0 0.0
    %4517 = vmatprep.subr.mxu0 0.0
    %4518 = vmatpush1.msra.mxu0 0.0
    %4519 = vmatprep.subr.mxu0 0.0
    %4520 = vmatpush1.msra.mxu0 0.0
    %4521 = vmatprep.subr.mxu0 0.0
    %4522 = vmatpush1.msra.mxu0 0.0
    %4523 = vmatprep.subr.mxu0 0.0
    %4524 = vmatpush1.msra.mxu0 0.0
    %4525 = vmatprep.subr.mxu0 0.0
    %4526 = vmatpush1.msra.mxu0 0.0
    %4527 = vmatprep.subr.mxu0 0.0
    %4528 = vmatpush1.msra.mxu0 0.0
    %4529 = vmatprep.subr.mxu0 0.0
    %4530 = vmatpush1.msra.mxu0 0.0
    %4531 = vmatprep.subr.mxu0 0.0
    %4532 = vmatpush1.msra.mxu0 0.0
    %4533 = vmatprep.subr.mxu0 0.0
    %4534 = vmatpush1.msra.mxu0 0.0
    %4535 = vmatprep.subr.mxu0 0.0
    %4536 = vmatpush1.msra.mxu0 0.0
    %4537 = vmatprep.subr.mxu0 0.0
    %4538 = vmatpush1.msra.mxu0 0.0
    %4539 = vmatprep.subr.mxu0 0.0
    %4540 = vmatpush1.msra.mxu0 0.0
    %4541 = vmatprep.subr.mxu0 0.0
    %4542 = vmatpush1.msra.mxu0 0.0
    %4543 = vmatprep.subr.mxu0 0.0
    %4544 = vmatpush1.msra.mxu0 0.0
    %4545 = vmatprep.subr.mxu0 0.0
    %4546 = vmatpush1.msra.mxu0 0.0
    %4547 = vmatprep.subr.mxu0 0.0
    %4548 = vmatpush1.msra.mxu0 0.0
    %4549 = vmatprep.subr.mxu0 0.0
    %4550 = vmatpush1.msra.mxu0 0.0
    %4551 = vmatprep.subr.mxu0 0.0
    %4552 = vmatpush1.msra.mxu0 0.0
    %4553 = vmatprep.subr.mxu0 0.0
    %4554 = vmatpush1.msra.mxu0 0.0
    %4555 = vmatprep.subr.mxu0 0.0
    %4556 = vmatpush1.msra.mxu0 0.0
    %4557 = vmatprep.subr.mxu0 0.0
    %4558 = vmatpush1.msra.mxu0 0.0
    %4559 = vmatprep.subr.mxu0 0.0
    %4560 = vmatpush1.msra.mxu0 0.0
    %4561 = vmatprep.subr.mxu0 0.0
    %4562 = vmatpush1.msra.mxu0 0.0
    %4563 = vmatprep.mubr.f32.mxu0 0.0
    %4564 = vmatmul.mubr.f32.gmra.mrb[0].mxu0 %v4497
    %v4565 = vpop.f32.mrb[0].mxu0
    %v4566 = vadd.f32 %v4495, %v4565
    %v4567 = vpop.f32.mrb[0].mxu0
    %4568 = vdwg.mxu0
    %vm4569 = vcmask 254976
    %4570 = vst.msk [vmem:[#allocation2] sm:$0x3] %vm4569, %v4566
    %v4571 = vld [vmem:[%s0 + $0x20] sm:$0xff]
    %v4572 = vld [vmem:[%s0 + $0x28] sm:$0xff]
    %v4573 = vadd.f32 %v4571, %v163
    %v4574 = vadd.f32 %v4572, %v168
    %v4575 = vld [vmem:[%s0 + $0x330] sm:$0xff]
    %v4576 = vld [vmem:[%s0 + $0x338] sm:$0xff]
    %v4577 = vld [vmem:[%s0 + $0x340] sm:$0xff]
    %v4578 = vld [vmem:[%s0 + $0x348] sm:$0xff]
    %v4579 = vld [vmem:[%s0 + $0x350] sm:$0xff]
    %v4580 = vld [vmem:[%s0 + $0x358] sm:$0xff]
    %v4581 = vld [vmem:[%s0 + $0x360] sm:$0xff]
    %v4582 = vld [vmem:[%s0 + $0x368] sm:$0xff]
    %v4583 = vld [vmem:[%s0 + $0x370] sm:$0xff]
    %v4584 = vld [vmem:[%s0 + $0x378] sm:$0xff]
    %v4585 = vld [vmem:[%s0 + $0x380] sm:$0xff]
    %v4586 = vld [vmem:[%s0 + $0x388] sm:$0xff]
    %v4587 = vld [vmem:[%s0 + $0x390] sm:$0xff]
    %v4588 = vld [vmem:[%s0 + $0x398] sm:$0xff]
    %v4589 = vld [vmem:[%s0 + $0x3a0] sm:$0xff]
    %v4590 = vld [vmem:[%s0 + $0x3a8] sm:$0xff]
    %v4591 = vlaneseq
    %v4592 = vshrl.u32 %v4591, 7
    %v4593 = vsub.s32 1, %v4592
    %v4594 = vrot.slane %v24, %v4593
    %v4596 = vsel %vm285, %v4573, 0
    %v4599 = vsel %vm285, %v4574, 0
    %4601 = vmatprep.subr.mxu0 0.0
    %4602 = vmatpush1.msra.mxu0 %v4575
    %4603 = vmatprep.subr.mxu0 0.0
    %4604 = vmatpush1.msra.mxu0 %v4576
    %4605 = vmatprep.subr.mxu0 0.0
    %4606 = vmatpush1.msra.mxu0 %v4577
    %4607 = vmatprep.subr.mxu0 0.0
    %4608 = vmatpush1.msra.mxu0 %v4578
    %4609 = vmatprep.subr.mxu0 0.0
    %4610 = vmatpush1.msra.mxu0 0.0
    %4611 = vmatprep.subr.mxu0 0.0
    %4612 = vmatpush1.msra.mxu0 0.0
    %4613 = vmatprep.subr.mxu0 0.0
    %4614 = vmatpush1.msra.mxu0 0.0
    %4615 = vmatprep.subr.mxu0 0.0
    %4616 = vmatpush1.msra.mxu0 0.0
    %4617 = vmatprep.subr.mxu0 0.0
    %4618 = vmatpush1.msra.mxu0 0.0
    %4619 = vmatprep.subr.mxu0 0.0
    %4620 = vmatpush1.msra.mxu0 0.0
    %4621 = vmatprep.subr.mxu0 0.0
    %4622 = vmatpush1.msra.mxu0 0.0
    %4623 = vmatprep.subr.mxu0 0.0
    %4624 = vmatpush1.msra.mxu0 0.0
    %4625 = vmatprep.subr.mxu0 0.0
    %4626 = vmatpush1.msra.mxu0 0.0
    %4627 = vmatprep.subr.mxu0 0.0
    %4628 = vmatpush1.msra.mxu0 0.0
    %4629 = vmatprep.subr.mxu0 0.0
    %4630 = vmatpush1.msra.mxu0 0.0
    %4631 = vmatprep.subr.mxu0 0.0
    %4632 = vmatpush1.msra.mxu0 0.0
    %4633 = vmatprep.subr.mxu0 0.0
    %4634 = vmatpush1.msra.mxu0 0.0
    %4635 = vmatprep.subr.mxu0 0.0
    %4636 = vmatpush1.msra.mxu0 0.0
    %4637 = vmatprep.subr.mxu0 0.0
    %4638 = vmatpush1.msra.mxu0 0.0
    %4639 = vmatprep.subr.mxu0 0.0
    %4640 = vmatpush1.msra.mxu0 0.0
    %4641 = vmatprep.subr.mxu0 0.0
    %4642 = vmatpush1.msra.mxu0 0.0
    %4643 = vmatprep.subr.mxu0 0.0
    %4644 = vmatpush1.msra.mxu0 0.0
    %4645 = vmatprep.subr.mxu0 0.0
    %4646 = vmatpush1.msra.mxu0 0.0
    %4647 = vmatprep.subr.mxu0 0.0
    %4648 = vmatpush1.msra.mxu0 0.0
    %4649 = vmatprep.subr.mxu0 0.0
    %4650 = vmatpush1.msra.mxu0 0.0
    %4651 = vmatprep.subr.mxu0 0.0
    %4652 = vmatpush1.msra.mxu0 0.0
    %4653 = vmatprep.subr.mxu0 0.0
    %4654 = vmatpush1.msra.mxu0 0.0
    %4655 = vmatprep.subr.mxu0 0.0
    %4656 = vmatpush1.msra.mxu0 0.0
    %4657 = vmatprep.subr.mxu0 0.0
    %4658 = vmatpush1.msra.mxu0 0.0
    %4659 = vmatprep.subr.mxu0 0.0
    %4660 = vmatpush1.msra.mxu0 0.0
    %4661 = vmatprep.subr.mxu0 0.0
    %4662 = vmatpush1.msra.mxu0 0.0
    %4663 = vmatprep.subr.mxu0 0.0
    %4664 = vmatpush1.msra.mxu0 0.0
    %4665 = vmatprep.mubr.f32.mxu0 0.0
    %4666 = vmatmul.mubr.f32.gmra.mrb[0].mxu0 %v4596
    %v4667 = vpop.f32.mrb[0].mxu0
    %v4668 = vadd.f32 %v4594, %v4667
    %v4669 = vpop.f32.mrb[0].mxu0
    %4670 = vmatprep.mubr.f32.mxu0 0.0
    %4671 = vmatmul.mubr.f32.gmra.mrb[0].mxu0 %v4599
    %v4672 = vpop.f32.mrb[0].mxu0
    %v4673 = vadd.f32 %v4594, %v4672
    %v4674 = vpop.f32.mrb[0].mxu0
    %4675 = vdwg.mxu0
    %v4676 = vlaneseq
    %v4677 = vshrl.u32 %v4676, 7
    %v4678 = vsub.s32 2, %v4677
    %v4679 = vrot.slane %v24, %v4678
    %4680 = vmatprep.subr.mxu0 0.0
    %4681 = vmatpush1.msra.mxu0 %v4579
    %4682 = vmatprep.subr.mxu0 0.0
    %4683 = vmatpush1.msra.mxu0 %v4580
    %4684 = vmatprep.subr.mxu0 0.0
    %4685 = vmatpush1.msra.mxu0 %v4581
    %4686 = vmatprep.subr.mxu0 0.0
    %4687 = vmatpush1.msra.mxu0 %v4582
    %4688 = vmatprep.subr.mxu0 0.0
    %4689 = vmatpush1.msra.mxu0 0.0
    %4690 = vmatprep.subr.mxu0 0.0
    %4691 = vmatpush1.msra.mxu0 0.0
    %4692 = vmatprep.subr.mxu0 0.0
    %4693 = vmatpush1.msra.mxu0 0.0
    %4694 = vmatprep.subr.mxu0 0.0
    %4695 = vmatpush1.msra.mxu0 0.0
    %4696 = vmatprep.subr.mxu0 0.0
    %4697 = vmatpush1.msra.mxu0 0.0
    %4698 = vmatprep.subr.mxu0 0.0
    %4699 = vmatpush1.msra.mxu0 0.0
    %4700 = vmatprep.subr.mxu0 0.0
    %4701 = vmatpush1.msra.mxu0 0.0
    %4702 = vmatprep.subr.mxu0 0.0
    %4703 = vmatpush1.msra.mxu0 0.0
    %4704 = vmatprep.subr.mxu0 0.0
    %4705 = vmatpush1.msra.mxu0 0.0
    %4706 = vmatprep.subr.mxu0 0.0
    %4707 = vmatpush1.msra.mxu0 0.0
    %4708 = vmatprep.subr.mxu0 0.0
    %4709 = vmatpush1.msra.mxu0 0.0
    %4710 = vmatprep.subr.mxu0 0.0
    %4711 = vmatpush1.msra.mxu0 0.0
    %4712 = vmatprep.subr.mxu0 0.0
    %4713 = vmatpush1.msra.mxu0 0.0
    %4714 = vmatprep.subr.mxu0 0.0
    %4715 = vmatpush1.msra.mxu0 0.0
    %4716 = vmatprep.subr.mxu0 0.0
    %4717 = vmatpush1.msra.mxu0 0.0
    %4718 = vmatprep.subr.mxu0 0.0
    %4719 = vmatpush1.msra.mxu0 0.0
    %4720 = vmatprep.subr.mxu0 0.0
    %4721 = vmatpush1.msra.mxu0 0.0
    %4722 = vmatprep.subr.mxu0 0.0
    %4723 = vmatpush1.msra.mxu0 0.0
    %4724 = vmatprep.subr.mxu0 0.0
    %4725 = vmatpush1.msra.mxu0 0.0
    %4726 = vmatprep.subr.mxu0 0.0
    %4727 = vmatpush1.msra.mxu0 0.0
    %4728 = vmatprep.subr.mxu0 0.0
    %4729 = vmatpush1.msra.mxu0 0.0
    %4730 = vmatprep.subr.mxu0 0.0
    %4731 = vmatpush1.msra.mxu0 0.0
    %4732 = vmatprep.subr.mxu0 0.0
    %4733 = vmatpush1.msra.mxu0 0.0
    %4734 = vmatprep.subr.mxu0 0.0
    %4735 = vmatpush1.msra.mxu0 0.0
    %4736 = vmatprep.subr.mxu0 0.0
    %4737 = vmatpush1.msra.mxu0 0.0
    %4738 = vmatprep.subr.mxu0 0.0
    %4739 = vmatpush1.msra.mxu0 0.0
    %4740 = vmatprep.subr.mxu0 0.0
    %4741 = vmatpush1.msra.mxu0 0.0
    %4742 = vmatprep.subr.mxu0 0.0
    %4743 = vmatpush1.msra.mxu0 0.0
    %4744 = vmatprep.mubr.f32.mxu0 0.0
    %4745 = vmatmul.mubr.f32.gmra.mrb[0].mxu0 %v4596
    %v4746 = vpop.f32.mrb[0].mxu0
    %v4747 = vadd.f32 %v4679, %v4746
    %v4748 = vpop.f32.mrb[0].mxu0
    %4749 = vmatprep.mubr.f32.mxu0 0.0
    %4750 = vmatmul.mubr.f32.gmra.mrb[0].mxu0 %v4599
    %v4751 = vpop.f32.mrb[0].mxu0
    %v4752 = vadd.f32 %v4679, %v4751
    %v4753 = vpop.f32.mrb[0].mxu0
    %4754 = vdwg.mxu0
    %v4755 = vlaneseq
    %v4756 = vshrl.u32 %v4755, 7
    %v4757 = vsub.s32 3, %v4756
    %v4758 = vrot.slane %v24, %v4757
    %4759 = vmatprep.subr.mxu0 0.0
    %4760 = vmatpush1.msra.mxu0 %v4583
    %4761 = vmatprep.subr.mxu0 0.0
    %4762 = vmatpush1.msra.mxu0 %v4584
    %4763 = vmatprep.subr.mxu0 0.0
    %4764 = vmatpush1.msra.mxu0 %v4585
    %4765 = vmatprep.subr.mxu0 0.0
    %4766 = vmatpush1.msra.mxu0 %v4586
    %4767 = vmatprep.subr.mxu0 0.0
    %4768 = vmatpush1.msra.mxu0 0.0
    %4769 = vmatprep.subr.mxu0 0.0
    %4770 = vmatpush1.msra.mxu0 0.0
    %4771 = vmatprep.subr.mxu0 0.0
    %4772 = vmatpush1.msra.mxu0 0.0
    %4773 = vmatprep.subr.mxu0 0.0
    %4774 = vmatpush1.msra.mxu0 0.0
    %4775 = vmatprep.subr.mxu0 0.0
    %4776 = vmatpush1.msra.mxu0 0.0
    %4777 = vmatprep.subr.mxu0 0.0
    %4778 = vmatpush1.msra.mxu0 0.0
    %4779 = vmatprep.subr.mxu0 0.0
    %4780 = vmatpush1.msra.mxu0 0.0
    %4781 = vmatprep.subr.mxu0 0.0
    %4782 = vmatpush1.msra.mxu0 0.0
    %4783 = vmatprep.subr.mxu0 0.0
    %4784 = vmatpush1.msra.mxu0 0.0
    %4785 = vmatprep.subr.mxu0 0.0
    %4786 = vmatpush1.msra.mxu0 0.0
    %4787 = vmatprep.subr.mxu0 0.0
    %4788 = vmatpush1.msra.mxu0 0.0
    %4789 = vmatprep.subr.mxu0 0.0
    %4790 = vmatpush1.msra.mxu0 0.0
    %4791 = vmatprep.subr.mxu0 0.0
    %4792 = vmatpush1.msra.mxu0 0.0
    %4793 = vmatprep.subr.mxu0 0.0
    %4794 = vmatpush1.msra.mxu0 0.0
    %4795 = vmatprep.subr.mxu0 0.0
    %4796 = vmatpush1.msra.mxu0 0.0
    %4797 = vmatprep.subr.mxu0 0.0
    %4798 = vmatpush1.msra.mxu0 0.0
    %4799 = vmatprep.subr.mxu0 0.0
    %4800 = vmatpush1.msra.mxu0 0.0
    %4801 = vmatprep.subr.mxu0 0.0
    %4802 = vmatpush1.msra.mxu0 0.0
    %4803 = vmatprep.subr.mxu0 0.0
    %4804 = vmatpush1.msra.mxu0 0.0
    %4805 = vmatprep.subr.mxu0 0.0
    %4806 = vmatpush1.msra.mxu0 0.0
    %4807 = vmatprep.subr.mxu0 0.0
    %4808 = vmatpush1.msra.mxu0 0.0
    %4809 = vmatprep.subr.mxu0 0.0
    %4810 = vmatpush1.msra.mxu0 0.0
    %4811 = vmatprep.subr.mxu0 0.0
    %4812 = vmatpush1.msra.mxu0 0.0
    %4813 = vmatprep.subr.mxu0 0.0
    %4814 = vmatpush1.msra.mxu0 0.0
    %4815 = vmatprep.subr.mxu0 0.0
    %4816 = vmatpush1.msra.mxu0 0.0
    %4817 = vmatprep.subr.mxu0 0.0
    %4818 = vmatpush1.msra.mxu0 0.0
    %4819 = vmatprep.subr.mxu0 0.0
    %4820 = vmatpush1.msra.mxu0 0.0
    %4821 = vmatprep.subr.mxu0 0.0
    %4822 = vmatpush1.msra.mxu0 0.0
    %4823 = vmatprep.mubr.f32.mxu0 0.0
    %4824 = vmatmul.mubr.f32.gmra.mrb[0].mxu0 %v4596
    %v4825 = vpop.f32.mrb[0].mxu0
    %v4826 = vadd.f32 %v4758, %v4825
    %v4827 = vpop.f32.mrb[0].mxu0
    %4828 = vmatprep.mubr.f32.mxu0 0.0
    %4829 = vmatmul.mubr.f32.gmra.mrb[0].mxu0 %v4599
    %v4830 = vpop.f32.mrb[0].mxu0
    %v4831 = vadd.f32 %v4758, %v4830
    %v4832 = vpop.f32.mrb[0].mxu0
    %4833 = vdwg.mxu0
    %v4834 = vmul.f32 %v4747, %v34
    %v4835 = vmul.f32 %v4752, %v34
    %v4837 = vsel %vm285, %v4668, 0
    %v4840 = vsel %vm285, %v4673, 0
    %v4843 = vsel %vm285, %v4834, 0
    %v4846 = vsel %vm285, %v4835, 0
    %4848 = vmatprep.subr.mxu0 0.0
    %4849 = vmatpush1.xpose.msra.mxu0 %v4843
    %4850 = vmatprep.subr.mxu0 0.0
    %4851 = vmatpush1.xpose.msra.mxu0 %v4846
    %4852 = vmatprep.subr.mxu0 0.0
    %4853 = vmatpush1.xpose.msra.mxu0 0.0
    %4854 = vmatprep.subr.mxu0 0.0
    %4855 = vmatpush1.xpose.msra.mxu0 0.0
    %4856 = vmatprep.subr.mxu0 0.0
    %4857 = vmatpush1.xpose.msra.mxu0 0.0
    %4858 = vmatprep.subr.mxu0 0.0
    %4859 = vmatpush1.xpose.msra.mxu0 0.0
    %4860 = vmatprep.subr.mxu0 0.0
    %4861 = vmatpush1.xpose.msra.mxu0 0.0
    %4862 = vmatprep.subr.mxu0 0.0
    %4863 = vmatpush1.xpose.msra.mxu0 0.0
    %4864 = vmatprep.subr.mxu0 0.0
    %4865 = vmatpush1.xpose.msra.mxu0 0.0
    %4866 = vmatprep.subr.mxu0 0.0
    %4867 = vmatpush1.xpose.msra.mxu0 0.0
    %4868 = vmatprep.subr.mxu0 0.0
    %4869 = vmatpush1.xpose.msra.mxu0 0.0
    %4870 = vmatprep.subr.mxu0 0.0
    %4871 = vmatpush1.xpose.msra.mxu0 0.0
    %4872 = vmatprep.subr.mxu0 0.0
    %4873 = vmatpush1.xpose.msra.mxu0 0.0
    %4874 = vmatprep.subr.mxu0 0.0
    %4875 = vmatpush1.xpose.msra.mxu0 0.0
    %4876 = vmatprep.subr.mxu0 0.0
    %4877 = vmatpush1.xpose.msra.mxu0 0.0
    %4878 = vmatprep.subr.mxu0 0.0
    %4879 = vmatpush1.xpose.msra.mxu0 0.0
    %4880 = vmatprep.subr.mxu0 0.0
    %4881 = vmatpush1.xpose.msra.mxu0 0.0
    %4882 = vmatprep.subr.mxu0 0.0
    %4883 = vmatpush1.xpose.msra.mxu0 0.0
    %4884 = vmatprep.subr.mxu0 0.0
    %4885 = vmatpush1.xpose.msra.mxu0 0.0
    %4886 = vmatprep.subr.mxu0 0.0
    %4887 = vmatpush1.xpose.msra.mxu0 0.0
    %4888 = vmatprep.subr.mxu0 0.0
    %4889 = vmatpush1.xpose.msra.mxu0 0.0
    %4890 = vmatprep.subr.mxu0 0.0
    %4891 = vmatpush1.xpose.msra.mxu0 0.0
    %4892 = vmatprep.subr.mxu0 0.0
    %4893 = vmatpush1.xpose.msra.mxu0 0.0
    %4894 = vmatprep.subr.mxu0 0.0
    %4895 = vmatpush1.xpose.msra.mxu0 0.0
    %4896 = vmatprep.subr.mxu0 0.0
    %4897 = vmatpush1.xpose.msra.mxu0 0.0
    %4898 = vmatprep.subr.mxu0 0.0
    %4899 = vmatpush1.xpose.msra.mxu0 0.0
    %4900 = vmatprep.subr.mxu0 0.0
    %4901 = vmatpush1.xpose.msra.mxu0 0.0
    %4902 = vmatprep.subr.mxu0 0.0
    %4903 = vmatpush1.xpose.msra.mxu0 0.0
    %4904 = vmatprep.subr.mxu0 0.0
    %4905 = vmatpush1.xpose.msra.mxu0 0.0
    %4906 = vmatprep.subr.mxu0 0.0
    %4907 = vmatpush1.xpose.msra.mxu0 0.0
    %4908 = vmatprep.subr.mxu0 0.0
    %4909 = vmatpush1.xpose.msra.mxu0 0.0
    %4910 = vmatprep.subr.mxu0 0.0
    %4911 = vmatpush1.xpose.msra.mxu0 0.0
    %4912 = vmatprep.mubr.f32.mxu0 0.0
    %4913 = vmatmul.mubr.f32.gmra.mrb[0].mxu0 %v4837
    %v4914 = vpop.f32.mrb[0].mxu0
    %v4915 = vadd.f32 0.0, %v4914
    %v4916 = vpop.f32.mrb[0].mxu0
    %4917 = vmatprep.mubr.f32.mxu0 0.0
    %4918 = vmatmul.mubr.f32.gmra.mrb[0].mxu0 %v4840
    %v4919 = vpop.f32.mrb[0].mxu0
    %v4920 = vadd.f32 0.0, %v4919
    %v4921 = vpop.f32.mrb[0].mxu0
    %4922 = vdwg.mxu0
    %v4923 = vmul.f32 %v4915, 0.35355338
    %v4924 = vmul.f32 %v4920, 0.35355338
    %v4925 = vadd.f32 %v4923, %v73
    %v4926 = vadd.f32 %v4924, %v74
    %vm4927 = vcmask 130048
    %v4928 = vsel %vm4927, %v4925, -inf
    %4929 = vmax.xlane.f32.xlu0 %v4928
    %v4930 = vpop.xlane.xlu0 %4929
    %v4931 = vsel %vm4927, %v4926, -inf
    %4932 = vmax.xlane.f32.xlu0 %v4931
    %v4933 = vpop.xlane.xlu0 %4932
    %v4934 = vsub.f32 %v4925, %v4930
    %v4935 = vsub.f32 %v4926, %v4933
    %v4936 = vmul.f32 %v4934, 1.442695
    %v4937 = vpow.pop %v4936
    %v4938 = vmul.f32 %v4935, 1.442695
    %v4939 = vpow.pop %v4938
    %v4940 = vsel %vm4927, %v4937, 0.0
    %4941 = vadd.xlane.f32.xlu0 %v4940
    %v4942 = vpop.xlane.xlu0 %4941
    %v4943 = vsel %vm4927, %v4939, 0.0
    %4944 = vadd.xlane.f32.xlu0 %v4943
    %v4945 = vpop.xlane.xlu0 %4944
    %v4946 = vrcp.pop %v4942
    %v4947 = vrcp.pop %v4945
    %v4948 = vmul.f32 %v4937, %v4946
    %v4949 = vmul.f32 %v4939, %v4947
    %v4950 = vmul.f32 %v4826, %v34
    %v4951 = vmul.f32 %v4831, %v34
    %v4952 = vmul.f32 %v4747, %v39
    %v4953 = vmul.f32 %v4752, %v39
    %v4955 = vsel %vm285, %v4952, 0
    %v4958 = vsel %vm285, %v4953, 0
    %4960 = vmatprep.subr.mxu0 0.0
    %4961 = vmatpush1.xpose.msra.mxu0 %v4955
    %4962 = vmatprep.subr.mxu0 0.0
    %4963 = vmatpush1.xpose.msra.mxu0 %v4958
    %4964 = vmatprep.subr.mxu0 0.0
    %4965 = vmatpush1.xpose.msra.mxu0 0.0
    %4966 = vmatprep.subr.mxu0 0.0
    %4967 = vmatpush1.xpose.msra.mxu0 0.0
    %4968 = vmatprep.subr.mxu0 0.0
    %4969 = vmatpush1.xpose.msra.mxu0 0.0
    %4970 = vmatprep.subr.mxu0 0.0
    %4971 = vmatpush1.xpose.msra.mxu0 0.0
    %4972 = vmatprep.subr.mxu0 0.0
    %4973 = vmatpush1.xpose.msra.mxu0 0.0
    %4974 = vmatprep.subr.mxu0 0.0
    %4975 = vmatpush1.xpose.msra.mxu0 0.0
    %4976 = vmatprep.subr.mxu0 0.0
    %4977 = vmatpush1.xpose.msra.mxu0 0.0
    %4978 = vmatprep.subr.mxu0 0.0
    %4979 = vmatpush1.xpose.msra.mxu0 0.0
    %4980 = vmatprep.subr.mxu0 0.0
    %4981 = vmatpush1.xpose.msra.mxu0 0.0
    %4982 = vmatprep.subr.mxu0 0.0
    %4983 = vmatpush1.xpose.msra.mxu0 0.0
    %4984 = vmatprep.subr.mxu0 0.0
    %4985 = vmatpush1.xpose.msra.mxu0 0.0
    %4986 = vmatprep.subr.mxu0 0.0
    %4987 = vmatpush1.xpose.msra.mxu0 0.0
    %4988 = vmatprep.subr.mxu0 0.0
    %4989 = vmatpush1.xpose.msra.mxu0 0.0
    %4990 = vmatprep.subr.mxu0 0.0
    %4991 = vmatpush1.xpose.msra.mxu0 0.0
    %4992 = vmatprep.subr.mxu0 0.0
    %4993 = vmatpush1.xpose.msra.mxu0 0.0
    %4994 = vmatprep.subr.mxu0 0.0
    %4995 = vmatpush1.xpose.msra.mxu0 0.0
    %4996 = vmatprep.subr.mxu0 0.0
    %4997 = vmatpush1.xpose.msra.mxu0 0.0
    %4998 = vmatprep.subr.mxu0 0.0
    %4999 = vmatpush1.xpose.msra.mxu0 0.0
    %5000 = vmatprep.subr.mxu0 0.0
    %5001 = vmatpush1.xpose.msra.mxu0 0.0
    %5002 = vmatprep.subr.mxu0 0.0
    %5003 = vmatpush1.xpose.msra.mxu0 0.0
    %5004 = vmatprep.subr.mxu0 0.0
    %5005 = vmatpush1.xpose.msra.mxu0 0.0
    %5006 = vmatprep.subr.mxu0 0.0
    %5007 = vmatpush1.xpose.msra.mxu0 0.0
    %5008 = vmatprep.subr.mxu0 0.0
    %5009 = vmatpush1.xpose.msra.mxu0 0.0
    %5010 = vmatprep.subr.mxu0 0.0
    %5011 = vmatpush1.xpose.msra.mxu0 0.0
    %5012 = vmatprep.subr.mxu0 0.0
    %5013 = vmatpush1.xpose.msra.mxu0 0.0
    %5014 = vmatprep.subr.mxu0 0.0
    %5015 = vmatpush1.xpose.msra.mxu0 0.0
    %5016 = vmatprep.subr.mxu0 0.0
    %5017 = vmatpush1.xpose.msra.mxu0 0.0
    %5018 = vmatprep.subr.mxu0 0.0
    %5019 = vmatpush1.xpose.msra.mxu0 0.0
    %5020 = vmatprep.subr.mxu0 0.0
    %5021 = vmatpush1.xpose.msra.mxu0 0.0
    %5022 = vmatprep.subr.mxu0 0.0
    %5023 = vmatpush1.xpose.msra.mxu0 0.0
    %5024 = vmatprep.mubr.f32.mxu0 0.0
    %5025 = vmatmul.mubr.f32.gmra.mrb[0].mxu0 %v4837
    %v5026 = vpop.f32.mrb[0].mxu0
    %v5027 = vadd.f32 0.0, %v5026
    %v5028 = vpop.f32.mrb[0].mxu0
    %5029 = vmatprep.mubr.f32.mxu0 0.0
    %5030 = vmatmul.mubr.f32.gmra.mrb[0].mxu0 %v4840
    %v5031 = vpop.f32.mrb[0].mxu0
    %v5032 = vadd.f32 0.0, %v5031
    %v5033 = vpop.f32.mrb[0].mxu0
    %5034 = vdwg.mxu0
    %v5035 = vmul.f32 %v5027, 0.35355338
    %v5036 = vmul.f32 %v5032, 0.35355338
    %v5037 = vadd.f32 %v5035, %v73
    %v5038 = vadd.f32 %v5036, %v74
    %v5039 = vsel %vm4927, %v5037, -inf
    %5040 = vmax.xlane.f32.xlu0 %v5039
    %v5041 = vpop.xlane.xlu0 %5040
    %v5042 = vsel %vm4927, %v5038, -inf
    %5043 = vmax.xlane.f32.xlu0 %v5042
    %v5044 = vpop.xlane.xlu0 %5043
    %v5045 = vsub.f32 %v5037, %v5041
    %v5046 = vsub.f32 %v5038, %v5044
    %v5047 = vmul.f32 %v5045, 1.442695
    %v5048 = vpow.pop %v5047
    %v5049 = vmul.f32 %v5046, 1.442695
    %v5050 = vpow.pop %v5049
    %v5051 = vsel %vm4927, %v5048, 0.0
    %5052 = vadd.xlane.f32.xlu0 %v5051
    %v5053 = vpop.xlane.xlu0 %5052
    %v5054 = vsel %vm4927, %v5050, 0.0
    %5055 = vadd.xlane.f32.xlu0 %v5054
    %v5056 = vpop.xlane.xlu0 %5055
    %v5057 = vrcp.pop %v5053
    %v5058 = vrcp.pop %v5056
    %v5059 = vmul.f32 %v5048, %v5057
    %v5060 = vmul.f32 %v5050, %v5058
    %v5061 = vmul.f32 %v4826, %v39
    %v5062 = vmul.f32 %v4831, %v39
    %v5064 = vsel %vm4927, %v5059, 0
    %v5067 = vsel %vm4927, %v5060, 0
    %5069 = vmatprep.subr.mxu0 0.0
    %5070 = vmatpush1.msra.mxu0 %v5061
    %5071 = vmatprep.subr.mxu0 0.0
    %5072 = vmatpush1.msra.mxu0 %v5062
    %5073 = vmatprep.subr.mxu0 0.0
    %5074 = vmatpush1.msra.mxu0 0.0
    %5075 = vmatprep.subr.mxu0 0.0
    %5076 = vmatpush1.msra.mxu0 0.0
    %5077 = vmatprep.subr.mxu0 0.0
    %5078 = vmatpush1.msra.mxu0 0.0
    %5079 = vmatprep.subr.mxu0 0.0
    %5080 = vmatpush1.msra.mxu0 0.0
    %5081 = vmatprep.subr.mxu0 0.0
    %5082 = vmatpush1.msra.mxu0 0.0
    %5083 = vmatprep.subr.mxu0 0.0
    %5084 = vmatpush1.msra.mxu0 0.0
    %5085 = vmatprep.subr.mxu0 0.0
    %5086 = vmatpush1.msra.mxu0 0.0
    %5087 = vmatprep.subr.mxu0 0.0
    %5088 = vmatpush1.msra.mxu0 0.0
    %5089 = vmatprep.subr.mxu0 0.0
    %5090 = vmatpush1.msra.mxu0 0.0
    %5091 = vmatprep.subr.mxu0 0.0
    %5092 = vmatpush1.msra.mxu0 0.0
    %5093 = vmatprep.subr.mxu0 0.0
    %5094 = vmatpush1.msra.mxu0 0.0
    %5095 = vmatprep.subr.mxu0 0.0
    %5096 = vmatpush1.msra.mxu0 0.0
    %5097 = vmatprep.subr.mxu0 0.0
    %5098 = vmatpush1.msra.mxu0 0.0
    %5099 = vmatprep.subr.mxu0 0.0
    %5100 = vmatpush1.msra.mxu0 0.0
    %5101 = vmatprep.subr.mxu0 0.0
    %5102 = vmatpush1.msra.mxu0 0.0
    %5103 = vmatprep.subr.mxu0 0.0
    %5104 = vmatpush1.msra.mxu0 0.0
    %5105 = vmatprep.subr.mxu0 0.0
    %5106 = vmatpush1.msra.mxu0 0.0
    %5107 = vmatprep.subr.mxu0 0.0
    %5108 = vmatpush1.msra.mxu0 0.0
    %5109 = vmatprep.subr.mxu0 0.0
    %5110 = vmatpush1.msra.mxu0 0.0
    %5111 = vmatprep.subr.mxu0 0.0
    %5112 = vmatpush1.msra.mxu0 0.0
    %5113 = vmatprep.subr.mxu0 0.0
    %5114 = vmatpush1.msra.mxu0 0.0
    %5115 = vmatprep.subr.mxu0 0.0
    %5116 = vmatpush1.msra.mxu0 0.0
    %5117 = vmatprep.subr.mxu0 0.0
    %5118 = vmatpush1.msra.mxu0 0.0
    %5119 = vmatprep.subr.mxu0 0.0
    %5120 = vmatpush1.msra.mxu0 0.0
    %5121 = vmatprep.subr.mxu0 0.0
    %5122 = vmatpush1.msra.mxu0 0.0
    %5123 = vmatprep.subr.mxu0 0.0
    %5124 = vmatpush1.msra.mxu0 0.0
    %5125 = vmatprep.subr.mxu0 0.0
    %5126 = vmatpush1.msra.mxu0 0.0
    %5127 = vmatprep.subr.mxu0 0.0
    %5128 = vmatpush1.msra.mxu0 0.0
    %5129 = vmatprep.subr.mxu0 0.0
    %5130 = vmatpush1.msra.mxu0 0.0
    %5131 = vmatprep.subr.mxu0 0.0
    %5132 = vmatpush1.msra.mxu0 0.0
    %5133 = vmatprep.mubr.f32.mxu0 0.0
    %5134 = vmatmul.mubr.f32.gmra.mrb[0].mxu0 %v5064
    %v5135 = vpop.f32.mrb[0].mxu0
    %v5136 = vadd.f32 0.0, %v5135
    %v5137 = vpop.f32.mrb[0].mxu0
    %5138 = vmatprep.mubr.f32.mxu0 0.0
    %5139 = vmatmul.mubr.f32.gmra.mrb[0].mxu0 %v5067
    %v5140 = vpop.f32.mrb[0].mxu0
    %v5141 = vadd.f32 0.0, %v5140
    %v5142 = vpop.f32.mrb[0].mxu0
    %5143 = vdwg.mxu0
    %v5145 = vsel %vm4927, %v4948, 0
    %v5148 = vsel %vm4927, %v4949, 0
    %5150 = vmatprep.subr.mxu0 0.0
    %5151 = vmatpush1.msra.mxu0 %v4950
    %5152 = vmatprep.subr.mxu0 0.0
    %5153 = vmatpush1.msra.mxu0 %v4951
    %5154 = vmatprep.subr.mxu0 0.0
    %5155 = vmatpush1.msra.mxu0 0.0
    %5156 = vmatprep.subr.mxu0 0.0
    %5157 = vmatpush1.msra.mxu0 0.0
    %5158 = vmatprep.subr.mxu0 0.0
    %5159 = vmatpush1.msra.mxu0 0.0
    %5160 = vmatprep.subr.mxu0 0.0
    %5161 = vmatpush1.msra.mxu0 0.0
    %5162 = vmatprep.subr.mxu0 0.0
    %5163 = vmatpush1.msra.mxu0 0.0
    %5164 = vmatprep.subr.mxu0 0.0
    %5165 = vmatpush1.msra.mxu0 0.0
    %5166 = vmatprep.subr.mxu0 0.0
    %5167 = vmatpush1.msra.mxu0 0.0
    %5168 = vmatprep.subr.mxu0 0.0
    %5169 = vmatpush1.msra.mxu0 0.0
    %5170 = vmatprep.subr.mxu0 0.0
    %5171 = vmatpush1.msra.mxu0 0.0
    %5172 = vmatprep.subr.mxu0 0.0
    %5173 = vmatpush1.msra.mxu0 0.0
    %5174 = vmatprep.subr.mxu0 0.0
    %5175 = vmatpush1.msra.mxu0 0.0
    %5176 = vmatprep.subr.mxu0 0.0
    %5177 = vmatpush1.msra.mxu0 0.0
    %5178 = vmatprep.subr.mxu0 0.0
    %5179 = vmatpush1.msra.mxu0 0.0
    %5180 = vmatprep.subr.mxu0 0.0
    %5181 = vmatpush1.msra.mxu0 0.0
    %5182 = vmatprep.subr.mxu0 0.0
    %5183 = vmatpush1.msra.mxu0 0.0
    %5184 = vmatprep.subr.mxu0 0.0
    %5185 = vmatpush1.msra.mxu0 0.0
    %5186 = vmatprep.subr.mxu0 0.0
    %5187 = vmatpush1.msra.mxu0 0.0
    %5188 = vmatprep.subr.mxu0 0.0
    %5189 = vmatpush1.msra.mxu0 0.0
    %5190 = vmatprep.subr.mxu0 0.0
    %5191 = vmatpush1.msra.mxu0 0.0
    %5192 = vmatprep.subr.mxu0 0.0
    %5193 = vmatpush1.msra.mxu0 0.0
    %5194 = vmatprep.subr.mxu0 0.0
    %5195 = vmatpush1.msra.mxu0 0.0
    %5196 = vmatprep.subr.mxu0 0.0
    %5197 = vmatpush1.msra.mxu0 0.0
    %5198 = vmatprep.subr.mxu0 0.0
    %5199 = vmatpush1.msra.mxu0 0.0
    %5200 = vmatprep.subr.mxu0 0.0
    %5201 = vmatpush1.msra.mxu0 0.0
    %5202 = vmatprep.subr.mxu0 0.0
    %5203 = vmatpush1.msra.mxu0 0.0
    %5204 = vmatprep.subr.mxu0 0.0
    %5205 = vmatpush1.msra.mxu0 0.0
    %5206 = vmatprep.subr.mxu0 0.0
    %5207 = vmatpush1.msra.mxu0 0.0
    %5208 = vmatprep.subr.mxu0 0.0
    %5209 = vmatpush1.msra.mxu0 0.0
    %5210 = vmatprep.subr.mxu0 0.0
    %5211 = vmatpush1.msra.mxu0 0.0
    %5212 = vmatprep.subr.mxu0 0.0
    %5213 = vmatpush1.msra.mxu0 0.0
    %5214 = vmatprep.mubr.f32.mxu0 0.0
    %5215 = vmatmul.mubr.f32.gmra.mrb[0].mxu0 %v5145
    %v5216 = vpop.f32.mrb[0].mxu0
    %v5217 = vadd.f32 %v5136, %v5216
    %v5218 = vpop.f32.mrb[0].mxu0
    %5219 = vmatprep.mubr.f32.mxu0 0.0
    %5220 = vmatmul.mubr.f32.gmra.mrb[0].mxu0 %v5148
    %v5221 = vpop.f32.mrb[0].mxu0
    %v5222 = vadd.f32 %v5141, %v5221
    %v5223 = vpop.f32.mrb[0].mxu0
    %5224 = vdwg.mxu0
    %v5225 = vmul.f32 %v4747, %v44
    %v5226 = vmul.f32 %v4752, %v44
    %v5228 = vsel %vm285, %v5225, 0
    %v5231 = vsel %vm285, %v5226, 0
    %5233 = vmatprep.subr.mxu0 0.0
    %5234 = vmatpush1.xpose.msra.mxu0 %v5228
    %5235 = vmatprep.subr.mxu0 0.0
    %5236 = vmatpush1.xpose.msra.mxu0 %v5231
    %5237 = vmatprep.subr.mxu0 0.0
    %5238 = vmatpush1.xpose.msra.mxu0 0.0
    %5239 = vmatprep.subr.mxu0 0.0
    %5240 = vmatpush1.xpose.msra.mxu0 0.0
    %5241 = vmatprep.subr.mxu0 0.0
    %5242 = vmatpush1.xpose.msra.mxu0 0.0
    %5243 = vmatprep.subr.mxu0 0.0
    %5244 = vmatpush1.xpose.msra.mxu0 0.0
    %5245 = vmatprep.subr.mxu0 0.0
    %5246 = vmatpush1.xpose.msra.mxu0 0.0
    %5247 = vmatprep.subr.mxu0 0.0
    %5248 = vmatpush1.xpose.msra.mxu0 0.0
    %5249 = vmatprep.subr.mxu0 0.0
    %5250 = vmatpush1.xpose.msra.mxu0 0.0
    %5251 = vmatprep.subr.mxu0 0.0
    %5252 = vmatpush1.xpose.msra.mxu0 0.0
    %5253 = vmatprep.subr.mxu0 0.0
    %5254 = vmatpush1.xpose.msra.mxu0 0.0
    %5255 = vmatprep.subr.mxu0 0.0
    %5256 = vmatpush1.xpose.msra.mxu0 0.0
    %5257 = vmatprep.subr.mxu0 0.0
    %5258 = vmatpush1.xpose.msra.mxu0 0.0
    %5259 = vmatprep.subr.mxu0 0.0
    %5260 = vmatpush1.xpose.msra.mxu0 0.0
    %5261 = vmatprep.subr.mxu0 0.0
    %5262 = vmatpush1.xpose.msra.mxu0 0.0
    %5263 = vmatprep.subr.mxu0 0.0
    %5264 = vmatpush1.xpose.msra.mxu0 0.0
    %5265 = vmatprep.subr.mxu0 0.0
    %5266 = vmatpush1.xpose.msra.mxu0 0.0
    %5267 = vmatprep.subr.mxu0 0.0
    %5268 = vmatpush1.xpose.msra.mxu0 0.0
    %5269 = vmatprep.subr.mxu0 0.0
    %5270 = vmatpush1.xpose.msra.mxu0 0.0
    %5271 = vmatprep.subr.mxu0 0.0
    %5272 = vmatpush1.xpose.msra.mxu0 0.0
    %5273 = vmatprep.subr.mxu0 0.0
    %5274 = vmatpush1.xpose.msra.mxu0 0.0
    %5275 = vmatprep.subr.mxu0 0.0
    %5276 = vmatpush1.xpose.msra.mxu0 0.0
    %5277 = vmatprep.subr.mxu0 0.0
    %5278 = vmatpush1.xpose.msra.mxu0 0.0
    %5279 = vmatprep.subr.mxu0 0.0
    %5280 = vmatpush1.xpose.msra.mxu0 0.0
    %5281 = vmatprep.subr.mxu0 0.0
    %5282 = vmatpush1.xpose.msra.mxu0 0.0
    %5283 = vmatprep.subr.mxu0 0.0
    %5284 = vmatpush1.xpose.msra.mxu0 0.0
    %5285 = vmatprep.subr.mxu0 0.0
    %5286 = vmatpush1.xpose.msra.mxu0 0.0
    %5287 = vmatprep.subr.mxu0 0.0
    %5288 = vmatpush1.xpose.msra.mxu0 0.0
    %5289 = vmatprep.subr.mxu0 0.0
    %5290 = vmatpush1.xpose.msra.mxu0 0.0
    %5291 = vmatprep.subr.mxu0 0.0
    %5292 = vmatpush1.xpose.msra.mxu0 0.0
    %5293 = vmatprep.subr.mxu0 0.0
    %5294 = vmatpush1.xpose.msra.mxu0 0.0
    %5295 = vmatprep.subr.mxu0 0.0
    %5296 = vmatpush1.xpose.msra.mxu0 0.0
    %5297 = vmatprep.mubr.f32.mxu0 0.0
    %5298 = vmatmul.mubr.f32.gmra.mrb[0].mxu0 %v4837
    %v5299 = vpop.f32.mrb[0].mxu0
    %v5300 = vadd.f32 0.0, %v5299
    %v5301 = vpop.f32.mrb[0].mxu0
    %5302 = vmatprep.mubr.f32.mxu0 0.0
    %5303 = vmatmul.mubr.f32.gmra.mrb[0].mxu0 %v4840
    %v5304 = vpop.f32.mrb[0].mxu0
    %v5305 = vadd.f32 0.0, %v5304
    %v5306 = vpop.f32.mrb[0].mxu0
    %5307 = vdwg.mxu0
    %v5308 = vmul.f32 %v5300, 0.35355338
    %v5309 = vmul.f32 %v5305, 0.35355338
    %v5310 = vadd.f32 %v5308, %v73
    %v5311 = vadd.f32 %v5309, %v74
    %v5312 = vsel %vm4927, %v5310, -inf
    %5313 = vmax.xlane.f32.xlu0 %v5312
    %v5314 = vpop.xlane.xlu0 %5313
    %v5315 = vsel %vm4927, %v5311, -inf
    %5316 = vmax.xlane.f32.xlu0 %v5315
    %v5317 = vpop.xlane.xlu0 %5316
    %v5318 = vsub.f32 %v5310, %v5314
    %v5319 = vsub.f32 %v5311, %v5317
    %v5320 = vmul.f32 %v5318, 1.442695
    %v5321 = vpow.pop %v5320
    %v5322 = vmul.f32 %v5319, 1.442695
    %v5323 = vpow.pop %v5322
    %v5324 = vsel %vm4927, %v5321, 0.0
    %5325 = vadd.xlane.f32.xlu0 %v5324
    %v5326 = vpop.xlane.xlu0 %5325
    %v5327 = vsel %vm4927, %v5323, 0.0
    %5328 = vadd.xlane.f32.xlu0 %v5327
    %v5329 = vpop.xlane.xlu0 %5328
    %v5330 = vrcp.pop %v5326
    %v5331 = vrcp.pop %v5329
    %v5332 = vmul.f32 %v5321, %v5330
    %v5333 = vmul.f32 %v5323, %v5331
    %v5334 = vmul.f32 %v4826, %v44
    %v5335 = vmul.f32 %v4831, %v44
    %v5337 = vsel %vm4927, %v5332, 0
    %v5340 = vsel %vm4927, %v5333, 0
    %5342 = vmatprep.subr.mxu0 0.0
    %5343 = vmatpush1.msra.mxu0 %v5334
    %5344 = vmatprep.subr.mxu0 0.0
    %5345 = vmatpush1.msra.mxu0 %v5335
    %5346 = vmatprep.subr.mxu0 0.0
    %5347 = vmatpush1.msra.mxu0 0.0
    %5348 = vmatprep.subr.mxu0 0.0
    %5349 = vmatpush1.msra.mxu0 0.0
    %5350 = vmatprep.subr.mxu0 0.0
    %5351 = vmatpush1.msra.mxu0 0.0
    %5352 = vmatprep.subr.mxu0 0.0
    %5353 = vmatpush1.msra.mxu0 0.0
    %5354 = vmatprep.subr.mxu0 0.0
    %5355 = vmatpush1.msra.mxu0 0.0
    %5356 = vmatprep.subr.mxu0 0.0
    %5357 = vmatpush1.msra.mxu0 0.0
    %5358 = vmatprep.subr.mxu0 0.0
    %5359 = vmatpush1.msra.mxu0 0.0
    %5360 = vmatprep.subr.mxu0 0.0
    %5361 = vmatpush1.msra.mxu0 0.0
    %5362 = vmatprep.subr.mxu0 0.0
    %5363 = vmatpush1.msra.mxu0 0.0
    %5364 = vmatprep.subr.mxu0 0.0
    %5365 = vmatpush1.msra.mxu0 0.0
    %5366 = vmatprep.subr.mxu0 0.0
    %5367 = vmatpush1.msra.mxu0 0.0
    %5368 = vmatprep.subr.mxu0 0.0
    %5369 = vmatpush1.msra.mxu0 0.0
    %5370 = vmatprep.subr.mxu0 0.0
    %5371 = vmatpush1.msra.mxu0 0.0
    %5372 = vmatprep.subr.mxu0 0.0
    %5373 = vmatpush1.msra.mxu0 0.0
    %5374 = vmatprep.subr.mxu0 0.0
    %5375 = vmatpush1.msra.mxu0 0.0
    %5376 = vmatprep.subr.mxu0 0.0
    %5377 = vmatpush1.msra.mxu0 0.0
    %5378 = vmatprep.subr.mxu0 0.0
    %5379 = vmatpush1.msra.mxu0 0.0
    %5380 = vmatprep.subr.mxu0 0.0
    %5381 = vmatpush1.msra.mxu0 0.0
    %5382 = vmatprep.subr.mxu0 0.0
    %5383 = vmatpush1.msra.mxu0 0.0
    %5384 = vmatprep.subr.mxu0 0.0
    %5385 = vmatpush1.msra.mxu0 0.0
    %5386 = vmatprep.subr.mxu0 0.0
    %5387 = vmatpush1.msra.mxu0 0.0
    %5388 = vmatprep.subr.mxu0 0.0
    %5389 = vmatpush1.msra.mxu0 0.0
    %5390 = vmatprep.subr.mxu0 0.0
    %5391 = vmatpush1.msra.mxu0 0.0
    %5392 = vmatprep.subr.mxu0 0.0
    %5393 = vmatpush1.msra.mxu0 0.0
    %5394 = vmatprep.subr.mxu0 0.0
    %5395 = vmatpush1.msra.mxu0 0.0
    %5396 = vmatprep.subr.mxu0 0.0
    %5397 = vmatpush1.msra.mxu0 0.0
    %5398 = vmatprep.subr.mxu0 0.0
    %5399 = vmatpush1.msra.mxu0 0.0
    %5400 = vmatprep.subr.mxu0 0.0
    %5401 = vmatpush1.msra.mxu0 0.0
    %5402 = vmatprep.subr.mxu0 0.0
    %5403 = vmatpush1.msra.mxu0 0.0
    %5404 = vmatprep.subr.mxu0 0.0
    %5405 = vmatpush1.msra.mxu0 0.0
    %5406 = vmatprep.mubr.f32.mxu0 0.0
    %5407 = vmatmul.mubr.f32.gmra.mrb[0].mxu0 %v5337
    %v5408 = vpop.f32.mrb[0].mxu0
    %v5409 = vadd.f32 0.0, %v5408
    %v5410 = vpop.f32.mrb[0].mxu0
    %5411 = vmatprep.mubr.f32.mxu0 0.0
    %5412 = vmatmul.mubr.f32.gmra.mrb[0].mxu0 %v5340
    %v5413 = vpop.f32.mrb[0].mxu0
    %v5414 = vadd.f32 0.0, %v5413
    %v5415 = vpop.f32.mrb[0].mxu0
    %5416 = vdwg.mxu0
    %v5417 = vadd.f32 %v5217, %v5409
    %v5418 = vadd.f32 %v5222, %v5414
    %v5419 = vmul.f32 %v4747, %v49
    %v5420 = vmul.f32 %v4752, %v49
    %v5422 = vsel %vm285, %v5419, 0
    %v5425 = vsel %vm285, %v5420, 0
    %5427 = vmatprep.subr.mxu0 0.0
    %5428 = vmatpush1.xpose.msra.mxu0 %v5422
    %5429 = vmatprep.subr.mxu0 0.0
    %5430 = vmatpush1.xpose.msra.mxu0 %v5425
    %5431 = vmatprep.subr.mxu0 0.0
    %5432 = vmatpush1.xpose.msra.mxu0 0.0
    %5433 = vmatprep.subr.mxu0 0.0
    %5434 = vmatpush1.xpose.msra.mxu0 0.0
    %5435 = vmatprep.subr.mxu0 0.0
    %5436 = vmatpush1.xpose.msra.mxu0 0.0
    %5437 = vmatprep.subr.mxu0 0.0
    %5438 = vmatpush1.xpose.msra.mxu0 0.0
    %5439 = vmatprep.subr.mxu0 0.0
    %5440 = vmatpush1.xpose.msra.mxu0 0.0
    %5441 = vmatprep.subr.mxu0 0.0
    %5442 = vmatpush1.xpose.msra.mxu0 0.0
    %5443 = vmatprep.subr.mxu0 0.0
    %5444 = vmatpush1.xpose.msra.mxu0 0.0
    %5445 = vmatprep.subr.mxu0 0.0
    %5446 = vmatpush1.xpose.msra.mxu0 0.0
    %5447 = vmatprep.subr.mxu0 0.0
    %5448 = vmatpush1.xpose.msra.mxu0 0.0
    %5449 = vmatprep.subr.mxu0 0.0
    %5450 = vmatpush1.xpose.msra.mxu0 0.0
    %5451 = vmatprep.subr.mxu0 0.0
    %5452 = vmatpush1.xpose.msra.mxu0 0.0
    %5453 = vmatprep.subr.mxu0 0.0
    %5454 = vmatpush1.xpose.msra.mxu0 0.0
    %5455 = vmatprep.subr.mxu0 0.0
    %5456 = vmatpush1.xpose.msra.mxu0 0.0
    %5457 = vmatprep.subr.mxu0 0.0
    %5458 = vmatpush1.xpose.msra.mxu0 0.0
    %5459 = vmatprep.subr.mxu0 0.0
    %5460 = vmatpush1.xpose.msra.mxu0 0.0
    %5461 = vmatprep.subr.mxu0 0.0
    %5462 = vmatpush1.xpose.msra.mxu0 0.0
    %5463 = vmatprep.subr.mxu0 0.0
    %5464 = vmatpush1.xpose.msra.mxu0 0.0
    %5465 = vmatprep.subr.mxu0 0.0
    %5466 = vmatpush1.xpose.msra.mxu0 0.0
    %5467 = vmatprep.subr.mxu0 0.0
    %5468 = vmatpush1.xpose.msra.mxu0 0.0
    %5469 = vmatprep.subr.mxu0 0.0
    %5470 = vmatpush1.xpose.msra.mxu0 0.0
    %5471 = vmatprep.subr.mxu0 0.0
    %5472 = vmatpush1.xpose.msra.mxu0 0.0
    %5473 = vmatprep.subr.mxu0 0.0
    %5474 = vmatpush1.xpose.msra.mxu0 0.0
    %5475 = vmatprep.subr.mxu0 0.0
    %5476 = vmatpush1.xpose.msra.mxu0 0.0
    %5477 = vmatprep.subr.mxu0 0.0
    %5478 = vmatpush1.xpose.msra.mxu0 0.0
    %5479 = vmatprep.subr.mxu0 0.0
    %5480 = vmatpush1.xpose.msra.mxu0 0.0
    %5481 = vmatprep.subr.mxu0 0.0
    %5482 = vmatpush1.xpose.msra.mxu0 0.0
    %5483 = vmatprep.subr.mxu0 0.0
    %5484 = vmatpush1.xpose.msra.mxu0 0.0
    %5485 = vmatprep.subr.mxu0 0.0
    %5486 = vmatpush1.xpose.msra.mxu0 0.0
    %5487 = vmatprep.subr.mxu0 0.0
    %5488 = vmatpush1.xpose.msra.mxu0 0.0
    %5489 = vmatprep.subr.mxu0 0.0
    %5490 = vmatpush1.xpose.msra.mxu0 0.0
    %5491 = vmatprep.mubr.f32.mxu0 0.0
    %5492 = vmatmul.mubr.f32.gmra.mrb[0].mxu0 %v4837
    %v5493 = vpop.f32.mrb[0].mxu0
    %v5494 = vadd.f32 0.0, %v5493
    %v5495 = vpop.f32.mrb[0].mxu0
    %5496 = vmatprep.mubr.f32.mxu0 0.0
    %5497 = vmatmul.mubr.f32.gmra.mrb[0].mxu0 %v4840
    %v5498 = vpop.f32.mrb[0].mxu0
    %v5499 = vadd.f32 0.0, %v5498
    %v5500 = vpop.f32.mrb[0].mxu0
    %5501 = vdwg.mxu0
    %v5502 = vmul.f32 %v5494, 0.35355338
    %v5503 = vmul.f32 %v5499, 0.35355338
    %v5504 = vadd.f32 %v5502, %v73
    %v5505 = vadd.f32 %v5503, %v74
    %v5506 = vsel %vm4927, %v5504, -inf
    %5507 = vmax.xlane.f32.xlu0 %v5506
    %v5508 = vpop.xlane.xlu0 %5507
    %v5509 = vsel %vm4927, %v5505, -inf
    %5510 = vmax.xlane.f32.xlu0 %v5509
    %v5511 = vpop.xlane.xlu0 %5510
    %v5512 = vsub.f32 %v5504, %v5508
    %v5513 = vsub.f32 %v5505, %v5511
    %v5514 = vmul.f32 %v5512, 1.442695
    %v5515 = vpow.pop %v5514
    %v5516 = vmul.f32 %v5513, 1.442695
    %v5517 = vpow.pop %v5516
    %v5518 = vsel %vm4927, %v5515, 0.0
    %5519 = vadd.xlane.f32.xlu0 %v5518
    %v5520 = vpop.xlane.xlu0 %5519
    %v5521 = vsel %vm4927, %v5517, 0.0
    %5522 = vadd.xlane.f32.xlu0 %v5521
    %v5523 = vpop.xlane.xlu0 %5522
    %v5524 = vrcp.pop %v5520
    %v5525 = vrcp.pop %v5523
    %v5526 = vmul.f32 %v5515, %v5524
    %v5527 = vmul.f32 %v5517, %v5525
    %v5528 = vmul.f32 %v4826, %v49
    %v5529 = vmul.f32 %v4831, %v49
    %v5531 = vsel %vm4927, %v5526, 0
    %v5534 = vsel %vm4927, %v5527, 0
    %5536 = vmatprep.subr.mxu0 0.0
    %5537 = vmatpush1.msra.mxu0 %v5528
    %5538 = vmatprep.subr.mxu0 0.0
    %5539 = vmatpush1.msra.mxu0 %v5529
    %5540 = vmatprep.subr.mxu0 0.0
    %5541 = vmatpush1.msra.mxu0 0.0
    %5542 = vmatprep.subr.mxu0 0.0
    %5543 = vmatpush1.msra.mxu0 0.0
    %5544 = vmatprep.subr.mxu0 0.0
    %5545 = vmatpush1.msra.mxu0 0.0
    %5546 = vmatprep.subr.mxu0 0.0
    %5547 = vmatpush1.msra.mxu0 0.0
    %5548 = vmatprep.subr.mxu0 0.0
    %5549 = vmatpush1.msra.mxu0 0.0
    %5550 = vmatprep.subr.mxu0 0.0
    %5551 = vmatpush1.msra.mxu0 0.0
    %5552 = vmatprep.subr.mxu0 0.0
    %5553 = vmatpush1.msra.mxu0 0.0
    %5554 = vmatprep.subr.mxu0 0.0
    %5555 = vmatpush1.msra.mxu0 0.0
    %5556 = vmatprep.subr.mxu0 0.0
    %5557 = vmatpush1.msra.mxu0 0.0
    %5558 = vmatprep.subr.mxu0 0.0
    %5559 = vmatpush1.msra.mxu0 0.0
    %5560 = vmatprep.subr.mxu0 0.0
    %5561 = vmatpush1.msra.mxu0 0.0
    %5562 = vmatprep.subr.mxu0 0.0
    %5563 = vmatpush1.msra.mxu0 0.0
    %5564 = vmatprep.subr.mxu0 0.0
    %5565 = vmatpush1.msra.mxu0 0.0
    %5566 = vmatprep.subr.mxu0 0.0
    %5567 = vmatpush1.msra.mxu0 0.0
    %5568 = vmatprep.subr.mxu0 0.0
    %5569 = vmatpush1.msra.mxu0 0.0
    %5570 = vmatprep.subr.mxu0 0.0
    %5571 = vmatpush1.msra.mxu0 0.0
    %5572 = vmatprep.subr.mxu0 0.0
    %5573 = vmatpush1.msra.mxu0 0.0
    %5574 = vmatprep.subr.mxu0 0.0
    %5575 = vmatpush1.msra.mxu0 0.0
    %5576 = vmatprep.subr.mxu0 0.0
    %5577 = vmatpush1.msra.mxu0 0.0
    %5578 = vmatprep.subr.mxu0 0.0
    %5579 = vmatpush1.msra.mxu0 0.0
    %5580 = vmatprep.subr.mxu0 0.0
    %5581 = vmatpush1.msra.mxu0 0.0
    %5582 = vmatprep.subr.mxu0 0.0
    %5583 = vmatpush1.msra.mxu0 0.0
    %5584 = vmatprep.subr.mxu0 0.0
    %5585 = vmatpush1.msra.mxu0 0.0
    %5586 = vmatprep.subr.mxu0 0.0
    %5587 = vmatpush1.msra.mxu0 0.0
    %5588 = vmatprep.subr.mxu0 0.0
    %5589 = vmatpush1.msra.mxu0 0.0
    %5590 = vmatprep.subr.mxu0 0.0
    %5591 = vmatpush1.msra.mxu0 0.0
    %5592 = vmatprep.subr.mxu0 0.0
    %5593 = vmatpush1.msra.mxu0 0.0
    %5594 = vmatprep.subr.mxu0 0.0
    %5595 = vmatpush1.msra.mxu0 0.0
    %5596 = vmatprep.subr.mxu0 0.0
    %5597 = vmatpush1.msra.mxu0 0.0
    %5598 = vmatprep.subr.mxu0 0.0
    %5599 = vmatpush1.msra.mxu0 0.0
    %5600 = vmatprep.mubr.f32.mxu0 0.0
    %5601 = vmatmul.mubr.f32.gmra.mrb[0].mxu0 %v5531
    %v5602 = vpop.f32.mrb[0].mxu0
    %v5603 = vadd.f32 0.0, %v5602
    %v5604 = vpop.f32.mrb[0].mxu0
    %5605 = vmatprep.mubr.f32.mxu0 0.0
    %5606 = vmatmul.mubr.f32.gmra.mrb[0].mxu0 %v5534
    %v5607 = vpop.f32.mrb[0].mxu0
    %v5608 = vadd.f32 0.0, %v5607
    %v5609 = vpop.f32.mrb[0].mxu0
    %5610 = vdwg.mxu0
    %v5611 = vadd.f32 %v5417, %v5603
    %v5612 = vadd.f32 %v5418, %v5608
    %v5613 = vlaneseq
    %v5614 = vshrl.u32 %v5613, 7
    %v5615 = vsub.s32 4, %v5614
    %v5616 = vrot.slane %v24, %v5615
    %v5618 = vsel %vm285, %v5611, 0
    %v5621 = vsel %vm285, %v5612, 0
    %5623 = vmatprep.subr.mxu0 0.0
    %5624 = vmatpush1.msra.mxu0 %v4587
    %5625 = vmatprep.subr.mxu0 0.0
    %5626 = vmatpush1.msra.mxu0 %v4588
    %5627 = vmatprep.subr.mxu0 0.0
    %5628 = vmatpush1.msra.mxu0 %v4589
    %5629 = vmatprep.subr.mxu0 0.0
    %5630 = vmatpush1.msra.mxu0 %v4590
    %5631 = vmatprep.subr.mxu0 0.0
    %5632 = vmatpush1.msra.mxu0 0.0
    %5633 = vmatprep.subr.mxu0 0.0
    %5634 = vmatpush1.msra.mxu0 0.0
    %5635 = vmatprep.subr.mxu0 0.0
    %5636 = vmatpush1.msra.mxu0 0.0
    %5637 = vmatprep.subr.mxu0 0.0
    %5638 = vmatpush1.msra.mxu0 0.0
    %5639 = vmatprep.subr.mxu0 0.0
    %5640 = vmatpush1.msra.mxu0 0.0
    %5641 = vmatprep.subr.mxu0 0.0
    %5642 = vmatpush1.msra.mxu0 0.0
    %5643 = vmatprep.subr.mxu0 0.0
    %5644 = vmatpush1.msra.mxu0 0.0
    %5645 = vmatprep.subr.mxu0 0.0
    %5646 = vmatpush1.msra.mxu0 0.0
    %5647 = vmatprep.subr.mxu0 0.0
    %5648 = vmatpush1.msra.mxu0 0.0
    %5649 = vmatprep.subr.mxu0 0.0
    %5650 = vmatpush1.msra.mxu0 0.0
    %5651 = vmatprep.subr.mxu0 0.0
    %5652 = vmatpush1.msra.mxu0 0.0
    %5653 = vmatprep.subr.mxu0 0.0
    %5654 = vmatpush1.msra.mxu0 0.0
    %5655 = vmatprep.subr.mxu0 0.0
    %5656 = vmatpush1.msra.mxu0 0.0
    %5657 = vmatprep.subr.mxu0 0.0
    %5658 = vmatpush1.msra.mxu0 0.0
    %5659 = vmatprep.subr.mxu0 0.0
    %5660 = vmatpush1.msra.mxu0 0.0
    %5661 = vmatprep.subr.mxu0 0.0
    %5662 = vmatpush1.msra.mxu0 0.0
    %5663 = vmatprep.subr.mxu0 0.0
    %5664 = vmatpush1.msra.mxu0 0.0
    %5665 = vmatprep.subr.mxu0 0.0
    %5666 = vmatpush1.msra.mxu0 0.0
    %5667 = vmatprep.subr.mxu0 0.0
    %5668 = vmatpush1.msra.mxu0 0.0
    %5669 = vmatprep.subr.mxu0 0.0
    %5670 = vmatpush1.msra.mxu0 0.0
    %5671 = vmatprep.subr.mxu0 0.0
    %5672 = vmatpush1.msra.mxu0 0.0
    %5673 = vmatprep.subr.mxu0 0.0
    %5674 = vmatpush1.msra.mxu0 0.0
    %5675 = vmatprep.subr.mxu0 0.0
    %5676 = vmatpush1.msra.mxu0 0.0
    %5677 = vmatprep.subr.mxu0 0.0
    %5678 = vmatpush1.msra.mxu0 0.0
    %5679 = vmatprep.subr.mxu0 0.0
    %5680 = vmatpush1.msra.mxu0 0.0
    %5681 = vmatprep.subr.mxu0 0.0
    %5682 = vmatpush1.msra.mxu0 0.0
    %5683 = vmatprep.subr.mxu0 0.0
    %5684 = vmatpush1.msra.mxu0 0.0
    %5685 = vmatprep.subr.mxu0 0.0
    %5686 = vmatpush1.msra.mxu0 0.0
    %5687 = vmatprep.mubr.f32.mxu0 0.0
    %5688 = vmatmul.mubr.f32.gmra.mrb[0].mxu0 %v5618
    %v5689 = vpop.f32.mrb[0].mxu0
    %v5690 = vadd.f32 %v5616, %v5689
    %v5691 = vpop.f32.mrb[0].mxu0
    %5692 = vmatprep.mubr.f32.mxu0 0.0
    %5693 = vmatmul.mubr.f32.gmra.mrb[0].mxu0 %v5621
    %v5694 = vpop.f32.mrb[0].mxu0
    %v5695 = vadd.f32 %v5616, %v5694
    %v5696 = vpop.f32.mrb[0].mxu0
    %5697 = vdwg.mxu0
    %v5698 = vadd.f32 %v4573, %v5690
    %v5699 = vadd.f32 %v4574, %v5695
    %v5700 = vsel %vm285, %v5698, 0.0
    %5701 = vadd.xlane.f32.xlu0 %v5700
    %v5702 = vpop.xlane.xlu0 %5701
    %v5703 = vsel %vm285, %v5699, 0.0
    %5704 = vadd.xlane.f32.xlu0 %v5703
    %v5705 = vpop.xlane.xlu0 %5704
    %v5706 = vmul.f32 %v5702, %v1711
    %v5707 = vmul.f32 %v5705, %v1711
    %v5708 = vsub.f32 %v5698, %v5706
    %v5709 = vsub.f32 %v5699, %v5707
    %v5710 = vmul.f32 %v5708, %v5708
    %v5711 = vmul.f32 %v5709, %v5709
    %v5712 = vsel %vm285, %v5710, 0.0
    %5713 = vadd.xlane.f32.xlu0 %v5712
    %v5714 = vpop.xlane.xlu0 %5713
    %v5715 = vsel %vm285, %v5711, 0.0
    %5716 = vadd.xlane.f32.xlu0 %v5715
    %v5717 = vpop.xlane.xlu0 %5716
    %v5718 = vmul.f32 %v5714, %v1711
    %v5719 = vmul.f32 %v5717, %v1711
    %v5720 = vadd.f32 %v5718, 1e-05
    %v5721 = vadd.f32 %v5719, 1e-05
    %v5722 = vrsqrt.pop %v5720
    %v5723 = vrsqrt.pop %v5721
    %v5724 = vmul.f32 %v5708, %v5722
    %v5725 = vmul.f32 %v5709, %v5723
    %v5726 = vlaneseq
    %v5727 = vshrl.u32 %v5726, 7
    %v5728 = vsub.s32 1, %v5727
    %v5729 = vrot.slane %v25, %v5728
    %v5730 = vmul.f32 %v5724, %v5729
    %v5731 = vmul.f32 %v5725, %v5729
    %v5732 = vlaneseq
    %v5733 = vshrl.u32 %v5732, 7
    %v5734 = vsub.s32 2, %v5733
    %v5735 = vrot.slane %v25, %v5734
    %v5736 = vadd.f32 %v5730, %v5735
    %v5737 = vadd.f32 %v5731, %v5735
    %v5738 = vld [vmem:[%s0 + $0x3f0] sm:$0xff]
    %v5739 = vld [vmem:[%s0 + $0x3f8] sm:$0xff]
    %v5740 = vld [vmem:[%s0 + $0x400] sm:$0xff]
    %v5741 = vld [vmem:[%s0 + $0x408] sm:$0xff]
    %v5742 = vlaneseq
    %v5743 = vshrl.u32 %v5742, 7
    %v5744 = vsub.s32 5, %v5743
    %v5745 = vrot.slane %v24, %v5744
    %v5747 = vsel %vm285, %v4566, 0
    %5749 = vmatprep.subr.mxu0 0.0
    %5750 = vmatpush1.msra.mxu0 %v5738
    %5751 = vmatprep.subr.mxu0 0.0
    %5752 = vmatpush1.msra.mxu0 %v5739
    %5753 = vmatprep.subr.mxu0 0.0
    %5754 = vmatpush1.msra.mxu0 %v5740
    %5755 = vmatprep.subr.mxu0 0.0
    %5756 = vmatpush1.msra.mxu0 %v5741
    %5757 = vmatprep.subr.mxu0 0.0
    %5758 = vmatpush1.msra.mxu0 0.0
    %5759 = vmatprep.subr.mxu0 0.0
    %5760 = vmatpush1.msra.mxu0 0.0
    %5761 = vmatprep.subr.mxu0 0.0
    %5762 = vmatpush1.msra.mxu0 0.0
    %5763 = vmatprep.subr.mxu0 0.0
    %5764 = vmatpush1.msra.mxu0 0.0
    %5765 = vmatprep.subr.mxu0 0.0
    %5766 = vmatpush1.msra.mxu0 0.0
    %5767 = vmatprep.subr.mxu0 0.0
    %5768 = vmatpush1.msra.mxu0 0.0
    %5769 = vmatprep.subr.mxu0 0.0
    %5770 = vmatpush1.msra.mxu0 0.0
    %5771 = vmatprep.subr.mxu0 0.0
    %5772 = vmatpush1.msra.mxu0 0.0
    %5773 = vmatprep.subr.mxu0 0.0
    %5774 = vmatpush1.msra.mxu0 0.0
    %5775 = vmatprep.subr.mxu0 0.0
    %5776 = vmatpush1.msra.mxu0 0.0
    %5777 = vmatprep.subr.mxu0 0.0
    %5778 = vmatpush1.msra.mxu0 0.0
    %5779 = vmatprep.subr.mxu0 0.0
    %5780 = vmatpush1.msra.mxu0 0.0
    %5781 = vmatprep.subr.mxu0 0.0
    %5782 = vmatpush1.msra.mxu0 0.0
    %5783 = vmatprep.subr.mxu0 0.0
    %5784 = vmatpush1.msra.mxu0 0.0
    %5785 = vmatprep.subr.mxu0 0.0
    %5786 = vmatpush1.msra.mxu0 0.0
    %5787 = vmatprep.subr.mxu0 0.0
    %5788 = vmatpush1.msra.mxu0 0.0
    %5789 = vmatprep.subr.mxu0 0.0
    %5790 = vmatpush1.msra.mxu0 0.0
    %5791 = vmatprep.subr.mxu0 0.0
    %5792 = vmatpush1.msra.mxu0 0.0
    %5793 = vmatprep.subr.mxu0 0.0
    %5794 = vmatpush1.msra.mxu0 0.0
    %5795 = vmatprep.subr.mxu0 0.0
    %5796 = vmatpush1.msra.mxu0 0.0
    %5797 = vmatprep.subr.mxu0 0.0
    %5798 = vmatpush1.msra.mxu0 0.0
    %5799 = vmatprep.subr.mxu0 0.0
    %5800 = vmatpush1.msra.mxu0 0.0
    %5801 = vmatprep.subr.mxu0 0.0
    %5802 = vmatpush1.msra.mxu0 0.0
    %5803 = vmatprep.subr.mxu0 0.0
    %5804 = vmatpush1.msra.mxu0 0.0
    %5805 = vmatprep.subr.mxu0 0.0
    %5806 = vmatpush1.msra.mxu0 0.0
    %5807 = vmatprep.subr.mxu0 0.0
    %5808 = vmatpush1.msra.mxu0 0.0
    %5809 = vmatprep.subr.mxu0 0.0
    %5810 = vmatpush1.msra.mxu0 0.0
    %5811 = vmatprep.subr.mxu0 0.0
    %5812 = vmatpush1.msra.mxu0 0.0
    %5813 = vmatprep.mubr.f32.mxu0 0.0
    %5814 = vmatmul.mubr.f32.gmra.mrb[0].mxu0 %v5747
    %v5815 = vpop.f32.mrb[0].mxu0
    %v5816 = vadd.f32 %v5745, %v5815
    %v5817 = vpop.f32.mrb[0].mxu0
    %5818 = vdwg.mxu0
    %v5819 = vld [vmem:[%s0 + $0x410] sm:$0xff]
    %v5820 = vld [vmem:[%s0 + $0x418] sm:$0xff]
    %v5821 = vld [vmem:[%s0 + $0x420] sm:$0xff]
    %v5822 = vld [vmem:[%s0 + $0x428] sm:$0xff]
    %v5823 = vlaneseq
    %v5824 = vshrl.u32 %v5823, 7
    %v5825 = vsub.s32 6, %v5824
    %v5826 = vrot.slane %v24, %v5825
    %v5828 = vsel %vm285, %v5816, 0
    %5830 = vmatprep.subr.mxu0 0.0
    %5831 = vmatpush1.msra.mxu0 %v5819
    %5832 = vmatprep.subr.mxu0 0.0
    %5833 = vmatpush1.msra.mxu0 %v5820
    %5834 = vmatprep.subr.mxu0 0.0
    %5835 = vmatpush1.msra.mxu0 %v5821
    %5836 = vmatprep.subr.mxu0 0.0
    %5837 = vmatpush1.msra.mxu0 %v5822
    %5838 = vmatprep.subr.mxu0 0.0
    %5839 = vmatpush1.msra.mxu0 0.0
    %5840 = vmatprep.subr.mxu0 0.0
    %5841 = vmatpush1.msra.mxu0 0.0
    %5842 = vmatprep.subr.mxu0 0.0
    %5843 = vmatpush1.msra.mxu0 0.0
    %5844 = vmatprep.subr.mxu0 0.0
    %5845 = vmatpush1.msra.mxu0 0.0
    %5846 = vmatprep.subr.mxu0 0.0
    %5847 = vmatpush1.msra.mxu0 0.0
    %5848 = vmatprep.subr.mxu0 0.0
    %5849 = vmatpush1.msra.mxu0 0.0
    %5850 = vmatprep.subr.mxu0 0.0
    %5851 = vmatpush1.msra.mxu0 0.0
    %5852 = vmatprep.subr.mxu0 0.0
    %5853 = vmatpush1.msra.mxu0 0.0
    %5854 = vmatprep.subr.mxu0 0.0
    %5855 = vmatpush1.msra.mxu0 0.0
    %5856 = vmatprep.subr.mxu0 0.0
    %5857 = vmatpush1.msra.mxu0 0.0
    %5858 = vmatprep.subr.mxu0 0.0
    %5859 = vmatpush1.msra.mxu0 0.0
    %5860 = vmatprep.subr.mxu0 0.0
    %5861 = vmatpush1.msra.mxu0 0.0
    %5862 = vmatprep.subr.mxu0 0.0
    %5863 = vmatpush1.msra.mxu0 0.0
    %5864 = vmatprep.subr.mxu0 0.0
    %5865 = vmatpush1.msra.mxu0 0.0
    %5866 = vmatprep.subr.mxu0 0.0
    %5867 = vmatpush1.msra.mxu0 0.0
    %5868 = vmatprep.subr.mxu0 0.0
    %5869 = vmatpush1.msra.mxu0 0.0
    %5870 = vmatprep.subr.mxu0 0.0
    %5871 = vmatpush1.msra.mxu0 0.0
    %5872 = vmatprep.subr.mxu0 0.0
    %5873 = vmatpush1.msra.mxu0 0.0
    %5874 = vmatprep.subr.mxu0 0.0
    %5875 = vmatpush1.msra.mxu0 0.0
    %5876 = vmatprep.subr.mxu0 0.0
    %5877 = vmatpush1.msra.mxu0 0.0
    %5878 = vmatprep.subr.mxu0 0.0
    %5879 = vmatpush1.msra.mxu0 0.0
    %5880 = vmatprep.subr.mxu0 0.0
    %5881 = vmatpush1.msra.mxu0 0.0
    %5882 = vmatprep.subr.mxu0 0.0
    %5883 = vmatpush1.msra.mxu0 0.0
    %5884 = vmatprep.subr.mxu0 0.0
    %5885 = vmatpush1.msra.mxu0 0.0
    %5886 = vmatprep.subr.mxu0 0.0
    %5887 = vmatpush1.msra.mxu0 0.0
    %5888 = vmatprep.subr.mxu0 0.0
    %5889 = vmatpush1.msra.mxu0 0.0
    %5890 = vmatprep.subr.mxu0 0.0
    %5891 = vmatpush1.msra.mxu0 0.0
    %5892 = vmatprep.subr.mxu0 0.0
    %5893 = vmatpush1.msra.mxu0 0.0
    %5894 = vmatprep.mubr.f32.mxu0 0.0
    %5895 = vmatmul.mubr.f32.gmra.mrb[0].mxu0 %v5828
    %v5896 = vpop.f32.mrb[0].mxu0
    %v5897 = vadd.f32 %v5826, %v5896
    %v5898 = vpop.f32.mrb[0].mxu0
    %5899 = vdwg.mxu0
    %v5900 = vlaneseq
    %v5901 = vshrl.u32 %v5900, 7
    %v5902 = vsub.s32 0, %v5901
    %v5903 = vrot.slane %v5897, %v5902
    %v5904 = vlaneseq
    %v5905 = vshrl.u32 %v5904, 7
    %v5906 = vsub.s32 1, %v5905
    %v5907 = vrot.slane %v5897, %v5906
    %v5908 = vadd.f32 %v5736, %v5903
    %v5909 = vadd.f32 %v5737, %v5907
    %v5910 = vsel %vm285, %v5908, 0.0
    %5911 = vadd.xlane.f32.xlu0 %v5910
    %v5912 = vpop.xlane.xlu0 %5911
    %v5913 = vsel %vm285, %v5909, 0.0
    %5914 = vadd.xlane.f32.xlu0 %v5913
    %v5915 = vpop.xlane.xlu0 %5914
    %v5916 = vmul.f32 %v5912, %v1711
    %v5917 = vmul.f32 %v5915, %v1711
    %v5918 = vsub.f32 %v5908, %v5916
    %v5919 = vsub.f32 %v5909, %v5917
    %v5920 = vmul.f32 %v5918, %v5918
    %v5921 = vmul.f32 %v5919, %v5919
    %v5922 = vsel %vm285, %v5920, 0.0
    %5923 = vadd.xlane.f32.xlu0 %v5922
    %v5924 = vpop.xlane.xlu0 %5923
    %v5925 = vsel %vm285, %v5921, 0.0
    %5926 = vadd.xlane.f32.xlu0 %v5925
    %v5927 = vpop.xlane.xlu0 %5926
    %v5928 = vmul.f32 %v5924, %v1711
    %v5929 = vmul.f32 %v5927, %v1711
    %v5930 = vadd.f32 %v5928, 1e-05
    %v5931 = vadd.f32 %v5929, 1e-05
    %v5932 = vrsqrt.pop %v5930
    %v5933 = vrsqrt.pop %v5931
    %v5934 = vmul.f32 %v5918, %v5932
    %v5935 = vmul.f32 %v5919, %v5933
    %v5936 = vlaneseq
    %v5937 = vshrl.u32 %v5936, 7
    %v5938 = vsub.s32 3, %v5937
    %v5939 = vrot.slane %v25, %v5938
    %v5940 = vmul.f32 %v5934, %v5939
    %v5941 = vmul.f32 %v5935, %v5939
    %v5942 = vlaneseq
    %v5943 = vshrl.u32 %v5942, 7
    %v5944 = vsub.s32 4, %v5943
    %v5945 = vrot.slane %v25, %v5944
    %v5946 = vadd.f32 %v5940, %v5945
    %v5947 = vadd.f32 %v5941, %v5945
    %v5948 = vld [vmem:[%s0 + $0x430] sm:$0xff]
    %v5949 = vld [vmem:[%s0 + $0x438] sm:$0xff]
    %v5950 = vld [vmem:[%s0 + $0x440] sm:$0xff]
    %v5951 = vld [vmem:[%s0 + $0x448] sm:$0xff]
    %v5952 = vlaneseq
    %v5953 = vshrl.u32 %v5952, 7
    %v5954 = vsub.s32 7, %v5953
    %v5955 = vrot.slane %v24, %v5954
    %v5957 = vsel %vm285, %v5946, 0
    %v5960 = vsel %vm285, %v5947, 0
    %5962 = vmatprep.subr.mxu0 0.0
    %5963 = vmatpush1.msra.mxu0 %v5948
    %5964 = vmatprep.subr.mxu0 0.0
    %5965 = vmatpush1.msra.mxu0 %v5949
    %5966 = vmatprep.subr.mxu0 0.0
    %5967 = vmatpush1.msra.mxu0 %v5950
    %5968 = vmatprep.subr.mxu0 0.0
    %5969 = vmatpush1.msra.mxu0 %v5951
    %5970 = vmatprep.subr.mxu0 0.0
    %5971 = vmatpush1.msra.mxu0 0.0
    %5972 = vmatprep.subr.mxu0 0.0
    %5973 = vmatpush1.msra.mxu0 0.0
    %5974 = vmatprep.subr.mxu0 0.0
    %5975 = vmatpush1.msra.mxu0 0.0
    %5976 = vmatprep.subr.mxu0 0.0
    %5977 = vmatpush1.msra.mxu0 0.0
    %5978 = vmatprep.subr.mxu0 0.0
    %5979 = vmatpush1.msra.mxu0 0.0
    %5980 = vmatprep.subr.mxu0 0.0
    %5981 = vmatpush1.msra.mxu0 0.0
    %5982 = vmatprep.subr.mxu0 0.0
    %5983 = vmatpush1.msra.mxu0 0.0
    %5984 = vmatprep.subr.mxu0 0.0
    %5985 = vmatpush1.msra.mxu0 0.0
    %5986 = vmatprep.subr.mxu0 0.0
    %5987 = vmatpush1.msra.mxu0 0.0
    %5988 = vmatprep.subr.mxu0 0.0
    %5989 = vmatpush1.msra.mxu0 0.0
    %5990 = vmatprep.subr.mxu0 0.0
    %5991 = vmatpush1.msra.mxu0 0.0
    %5992 = vmatprep.subr.mxu0 0.0
    %5993 = vmatpush1.msra.mxu0 0.0
    %5994 = vmatprep.subr.mxu0 0.0
    %5995 = vmatpush1.msra.mxu0 0.0
    %5996 = vmatprep.subr.mxu0 0.0
    %5997 = vmatpush1.msra.mxu0 0.0
    %5998 = vmatprep.subr.mxu0 0.0
    %5999 = vmatpush1.msra.mxu0 0.0
    %6000 = vmatprep.subr.mxu0 0.0
    %6001 = vmatpush1.msra.mxu0 0.0
    %6002 = vmatprep.subr.mxu0 0.0
    %6003 = vmatpush1.msra.mxu0 0.0
    %6004 = vmatprep.subr.mxu0 0.0
    %6005 = vmatpush1.msra.mxu0 0.0
    %6006 = vmatprep.subr.mxu0 0.0
    %6007 = vmatpush1.msra.mxu0 0.0
    %6008 = vmatprep.subr.mxu0 0.0
    %6009 = vmatpush1.msra.mxu0 0.0
    %6010 = vmatprep.subr.mxu0 0.0
    %6011 = vmatpush1.msra.mxu0 0.0
    %6012 = vmatprep.subr.mxu0 0.0
    %6013 = vmatpush1.msra.mxu0 0.0
    %6014 = vmatprep.subr.mxu0 0.0
    %6015 = vmatpush1.msra.mxu0 0.0
    %6016 = vmatprep.subr.mxu0 0.0
    %6017 = vmatpush1.msra.mxu0 0.0
    %6018 = vmatprep.subr.mxu0 0.0
    %6019 = vmatpush1.msra.mxu0 0.0
    %6020 = vmatprep.subr.mxu0 0.0
    %6021 = vmatpush1.msra.mxu0 0.0
    %6022 = vmatprep.subr.mxu0 0.0
    %6023 = vmatpush1.msra.mxu0 0.0
    %6024 = vmatprep.subr.mxu0 0.0
    %6025 = vmatpush1.msra.mxu0 0.0
    %6026 = vmatprep.mubr.f32.mxu0 0.0
    %6027 = vmatmul.mubr.f32.gmra.mrb[0].mxu0 %v5957
    %v6028 = vpop.f32.mrb[0].mxu0
    %v6029 = vadd.f32 %v5955, %v6028
    %v6030 = vpop.f32.mrb[0].mxu0
    %6031 = vmatprep.mubr.f32.mxu0 0.0
    %6032 = vmatmul.mubr.f32.gmra.mrb[0].mxu0 %v5960
    %v6033 = vpop.f32.mrb[0].mxu0
    %v6034 = vadd.f32 %v5955, %v6033
    %v6035 = vpop.f32.mrb[0].mxu0
    %6036 = vdwg.mxu0
    %v6037 = vmax.f32 %v6029, 0.0
    %v6038 = vmax.f32 %v6034, 0.0
    %v6039 = vld [vmem:[%s0 + $0x450] sm:$0xff]
    %v6040 = vld [vmem:[%s0 + $0x458] sm:$0xff]
    %v6041 = vld [vmem:[%s0 + $0x460] sm:$0xff]
    %v6042 = vld [vmem:[%s0 + $0x468] sm:$0xff]
    %v6043 = vld [vmem:[%s0 + $0x470] sm:$0xff]
    %v6044 = vld [vmem:[%s0 + $0x478] sm:$0xff]
    %v6045 = vld [vmem:[%s0 + $0x480] sm:$0xff]
    %v6046 = vld [vmem:[%s0 + $0x488] sm:$0xff]
    %v6047 = vlaneseq
    %v6048 = vshrl.u32 %v6047, 7
    %v6049 = vsub.s32 0, %v6048
    %v6050 = vrot.slane %v25, %v6049
    %v6052 = vsel %vm1889, %v6037, 0
    %v6055 = vsel %vm1889, %v6038, 0
    %6057 = vmatprep.subr.mxu0 0.0
    %6058 = vmatpush1.msra.mxu0 %v6039
    %6059 = vmatprep.subr.mxu0 0.0
    %6060 = vmatpush1.msra.mxu0 %v6040
    %6061 = vmatprep.subr.mxu0 0.0
    %6062 = vmatpush1.msra.mxu0 %v6041
    %6063 = vmatprep.subr.mxu0 0.0
    %6064 = vmatpush1.msra.mxu0 %v6042
    %6065 = vmatprep.subr.mxu0 0.0
    %6066 = vmatpush1.msra.mxu0 %v6043
    %6067 = vmatprep.subr.mxu0 0.0
    %6068 = vmatpush1.msra.mxu0 %v6044
    %6069 = vmatprep.subr.mxu0 0.0
    %6070 = vmatpush1.msra.mxu0 %v6045
    %6071 = vmatprep.subr.mxu0 0.0
    %6072 = vmatpush1.msra.mxu0 %v6046
    %6073 = vmatprep.subr.mxu0 0.0
    %6074 = vmatpush1.msra.mxu0 0.0
    %6075 = vmatprep.subr.mxu0 0.0
    %6076 = vmatpush1.msra.mxu0 0.0
    %6077 = vmatprep.subr.mxu0 0.0
    %6078 = vmatpush1.msra.mxu0 0.0
    %6079 = vmatprep.subr.mxu0 0.0
    %6080 = vmatpush1.msra.mxu0 0.0
    %6081 = vmatprep.subr.mxu0 0.0
    %6082 = vmatpush1.msra.mxu0 0.0
    %6083 = vmatprep.subr.mxu0 0.0
    %6084 = vmatpush1.msra.mxu0 0.0
    %6085 = vmatprep.subr.mxu0 0.0
    %6086 = vmatpush1.msra.mxu0 0.0
    %6087 = vmatprep.subr.mxu0 0.0
    %6088 = vmatpush1.msra.mxu0 0.0
    %6089 = vmatprep.subr.mxu0 0.0
    %6090 = vmatpush1.msra.mxu0 0.0
    %6091 = vmatprep.subr.mxu0 0.0
    %6092 = vmatpush1.msra.mxu0 0.0
    %6093 = vmatprep.subr.mxu0 0.0
    %6094 = vmatpush1.msra.mxu0 0.0
    %6095 = vmatprep.subr.mxu0 0.0
    %6096 = vmatpush1.msra.mxu0 0.0
    %6097 = vmatprep.subr.mxu0 0.0
    %6098 = vmatpush1.msra.mxu0 0.0
    %6099 = vmatprep.subr.mxu0 0.0
    %6100 = vmatpush1.msra.mxu0 0.0
    %6101 = vmatprep.subr.mxu0 0.0
    %6102 = vmatpush1.msra.mxu0 0.0
    %6103 = vmatprep.subr.mxu0 0.0
    %6104 = vmatpush1.msra.mxu0 0.0
    %6105 = vmatprep.subr.mxu0 0.0
    %6106 = vmatpush1.msra.mxu0 0.0
    %6107 = vmatprep.subr.mxu0 0.0
    %6108 = vmatpush1.msra.mxu0 0.0
    %6109 = vmatprep.subr.mxu0 0.0
    %6110 = vmatpush1.msra.mxu0 0.0
    %6111 = vmatprep.subr.mxu0 0.0
    %6112 = vmatpush1.msra.mxu0 0.0
    %6113 = vmatprep.subr.mxu0 0.0
    %6114 = vmatpush1.msra.mxu0 0.0
    %6115 = vmatprep.subr.mxu0 0.0
    %6116 = vmatpush1.msra.mxu0 0.0
    %6117 = vmatprep.subr.mxu0 0.0
    %6118 = vmatpush1.msra.mxu0 0.0
    %6119 = vmatprep.subr.mxu0 0.0
    %6120 = vmatpush1.msra.mxu0 0.0
    %6121 = vmatprep.mubr.f32.mxu0 0.0
    %6122 = vmatmul.mubr.f32.gmra.mrb[0].mxu0 %v6052
    %v6123 = vpop.f32.mrb[0].mxu0
    %v6124 = vadd.f32 %v6050, %v6123
    %v6125 = vpop.f32.mrb[0].mxu0
    %6126 = vmatprep.mubr.f32.mxu0 0.0
    %6127 = vmatmul.mubr.f32.gmra.mrb[0].mxu0 %v6055
    %v6128 = vpop.f32.mrb[0].mxu0
    %v6129 = vadd.f32 %v6050, %v6128
    %v6130 = vpop.f32.mrb[0].mxu0
    %6131 = vdwg.mxu0
    %v6132 = vadd.f32 %v5946, %v6124
    %v6133 = vadd.f32 %v5947, %v6129
    %v6134 = vsel %vm285, %v6132, 0.0
    %6135 = vadd.xlane.f32.xlu0 %v6134
    %v6136 = vpop.xlane.xlu0 %6135
    %v6137 = vsel %vm285, %v6133, 0.0
    %6138 = vadd.xlane.f32.xlu0 %v6137
    %v6139 = vpop.xlane.xlu0 %6138
    %v6140 = vmul.f32 %v6136, %v1711
    %v6141 = vmul.f32 %v6139, %v1711
    %v6142 = vsub.f32 %v6132, %v6140
    %v6143 = vsub.f32 %v6133, %v6141
    %v6144 = vmul.f32 %v6142, %v6142
    %v6145 = vmul.f32 %v6143, %v6143
    %v6146 = vsel %vm285, %v6144, 0.0
    %6147 = vadd.xlane.f32.xlu0 %v6146
    %v6148 = vpop.xlane.xlu0 %6147
    %v6149 = vsel %vm285, %v6145, 0.0
    %6150 = vadd.xlane.f32.xlu0 %v6149
    %v6151 = vpop.xlane.xlu0 %6150
    %v6152 = vmul.f32 %v6148, %v1711
    %v6153 = vmul.f32 %v6151, %v1711
    %v6154 = vadd.f32 %v6152, 1e-05
    %v6155 = vadd.f32 %v6153, 1e-05
    %v6156 = vrsqrt.pop %v6154
    %v6157 = vrsqrt.pop %v6155
    %v6158 = vmul.f32 %v6142, %v6156
    %v6159 = vmul.f32 %v6143, %v6157
    %v6160 = vlaneseq
    %v6161 = vshrl.u32 %v6160, 7
    %v6162 = vsub.s32 5, %v6161
    %v6163 = vrot.slane %v25, %v6162
    %v6164 = vmul.f32 %v6158, %v6163
    %v6165 = vmul.f32 %v6159, %v6163
    %v6166 = vlaneseq
    %v6167 = vshrl.u32 %v6166, 7
    %v6168 = vsub.s32 6, %v6167
    %v6169 = vrot.slane %v25, %v6168
    %v6170 = vadd.f32 %v6164, %v6169
    %v6171 = vadd.f32 %v6165, %v6169
    %v6172 = vld [vmem:[%s0 + $0x490] sm:$0xff]
    %v6173 = vld [vmem:[%s0 + $0x498] sm:$0xff]
    %v6174 = vld [vmem:[%s0 + $0x4a0] sm:$0xff]
    %v6175 = vld [vmem:[%s0 + $0x4a8] sm:$0xff]
    %v6176 = vld [vmem:[%s0 + $0x4b0] sm:$0xff]
    %v6177 = vld [vmem:[%s0 + $0x4b8] sm:$0xff]
    %v6178 = vld [vmem:[%s0 + $0x4c0] sm:$0xff]
    %v6179 = vld [vmem:[%s0 + $0x4c8] sm:$0xff]
    %v6180 = vld [vmem:[%s0 + $0x4d0] sm:$0xff]
    %v6181 = vld [vmem:[%s0 + $0x4d8] sm:$0xff]
    %v6182 = vld [vmem:[%s0 + $0x4e0] sm:$0xff]
    %v6183 = vld [vmem:[%s0 + $0x4e8] sm:$0xff]
    %v6184 = vld [vmem:[%s0 + $0x4f0] sm:$0xff]
    %v6185 = vld [vmem:[%s0 + $0x4f8] sm:$0xff]
    %v6186 = vld [vmem:[%s0 + $0x500] sm:$0xff]
    %v6187 = vld [vmem:[%s0 + $0x508] sm:$0xff]
    %v6188 = vlaneseq
    %v6189 = vshrl.u32 %v6188, 7
    %v6190 = vsub.s32 7, %v6189
    %v6191 = vrot.slane %v25, %v6190
    %v6193 = vsel %vm285, %v6170, 0
    %v6196 = vsel %vm285, %v6171, 0
    %6198 = vmatprep.subr.mxu0 0.0
    %6199 = vmatpush1.msra.mxu0 %v6172
    %6200 = vmatprep.subr.mxu0 0.0
    %6201 = vmatpush1.msra.mxu0 %v6173
    %6202 = vmatprep.subr.mxu0 0.0
    %6203 = vmatpush1.msra.mxu0 %v6174
    %6204 = vmatprep.subr.mxu0 0.0
    %6205 = vmatpush1.msra.mxu0 %v6175
    %6206 = vmatprep.subr.mxu0 0.0
    %6207 = vmatpush1.msra.mxu0 0.0
    %6208 = vmatprep.subr.mxu0 0.0
    %6209 = vmatpush1.msra.mxu0 0.0
    %6210 = vmatprep.subr.mxu0 0.0
    %6211 = vmatpush1.msra.mxu0 0.0
    %6212 = vmatprep.subr.mxu0 0.0
    %6213 = vmatpush1.msra.mxu0 0.0
    %6214 = vmatprep.subr.mxu0 0.0
    %6215 = vmatpush1.msra.mxu0 0.0
    %6216 = vmatprep.subr.mxu0 0.0
    %6217 = vmatpush1.msra.mxu0 0.0
    %6218 = vmatprep.subr.mxu0 0.0
    %6219 = vmatpush1.msra.mxu0 0.0
    %6220 = vmatprep.subr.mxu0 0.0
    %6221 = vmatpush1.msra.mxu0 0.0
    %6222 = vmatprep.subr.mxu0 0.0
    %6223 = vmatpush1.msra.mxu0 0.0
    %6224 = vmatprep.subr.mxu0 0.0
    %6225 = vmatpush1.msra.mxu0 0.0
    %6226 = vmatprep.subr.mxu0 0.0
    %6227 = vmatpush1.msra.mxu0 0.0
    %6228 = vmatprep.subr.mxu0 0.0
    %6229 = vmatpush1.msra.mxu0 0.0
    %6230 = vmatprep.subr.mxu0 0.0
    %6231 = vmatpush1.msra.mxu0 0.0
    %6232 = vmatprep.subr.mxu0 0.0
    %6233 = vmatpush1.msra.mxu0 0.0
    %6234 = vmatprep.subr.mxu0 0.0
    %6235 = vmatpush1.msra.mxu0 0.0
    %6236 = vmatprep.subr.mxu0 0.0
    %6237 = vmatpush1.msra.mxu0 0.0
    %6238 = vmatprep.subr.mxu0 0.0
    %6239 = vmatpush1.msra.mxu0 0.0
    %6240 = vmatprep.subr.mxu0 0.0
    %6241 = vmatpush1.msra.mxu0 0.0
    %6242 = vmatprep.subr.mxu0 0.0
    %6243 = vmatpush1.msra.mxu0 0.0
    %6244 = vmatprep.subr.mxu0 0.0
    %6245 = vmatpush1.msra.mxu0 0.0
    %6246 = vmatprep.subr.mxu0 0.0
    %6247 = vmatpush1.msra.mxu0 0.0
    %6248 = vmatprep.subr.mxu0 0.0
    %6249 = vmatpush1.msra.mxu0 0.0
    %6250 = vmatprep.subr.mxu0 0.0
    %6251 = vmatpush1.msra.mxu0 0.0
    %6252 = vmatprep.subr.mxu0 0.0
    %6253 = vmatpush1.msra.mxu0 0.0
    %6254 = vmatprep.subr.mxu0 0.0
    %6255 = vmatpush1.msra.mxu0 0.0
    %6256 = vmatprep.subr.mxu0 0.0
    %6257 = vmatpush1.msra.mxu0 0.0
    %6258 = vmatprep.subr.mxu0 0.0
    %6259 = vmatpush1.msra.mxu0 0.0
    %6260 = vmatprep.subr.mxu0 0.0
    %6261 = vmatpush1.msra.mxu0 0.0
    %6262 = vmatprep.mubr.f32.mxu0 0.0
    %6263 = vmatmul.mubr.f32.gmra.mrb[0].mxu0 %v6193
    %v6264 = vpop.f32.mrb[0].mxu0
    %v6265 = vadd.f32 %v6191, %v6264
    %v6266 = vpop.f32.mrb[0].mxu0
    %6267 = vmatprep.mubr.f32.mxu0 0.0
    %6268 = vmatmul.mubr.f32.gmra.mrb[0].mxu0 %v6196
    %v6269 = vpop.f32.mrb[0].mxu0
    %v6270 = vadd.f32 %v6191, %v6269
    %v6271 = vpop.f32.mrb[0].mxu0
    %6272 = vdwg.mxu0
    %v6273 = vlaneseq
    %v6274 = vshrl.u32 %v6273, 7
    %v6275 = vsub.s32 0, %v6274
    %v6276 = vrot.slane %v26, %v6275
    %6277 = vmatprep.subr.mxu0 0.0
    %6278 = vmatpush1.msra.mxu0 %v6176
    %6279 = vmatprep.subr.mxu0 0.0
    %6280 = vmatpush1.msra.mxu0 %v6177
    %6281 = vmatprep.subr.mxu0 0.0
    %6282 = vmatpush1.msra.mxu0 %v6178
    %6283 = vmatprep.subr.mxu0 0.0
    %6284 = vmatpush1.msra.mxu0 %v6179
    %6285 = vmatprep.subr.mxu0 0.0
    %6286 = vmatpush1.msra.mxu0 0.0
    %6287 = vmatprep.subr.mxu0 0.0
    %6288 = vmatpush1.msra.mxu0 0.0
    %6289 = vmatprep.subr.mxu0 0.0
    %6290 = vmatpush1.msra.mxu0 0.0
    %6291 = vmatprep.subr.mxu0 0.0
    %6292 = vmatpush1.msra.mxu0 0.0
    %6293 = vmatprep.subr.mxu0 0.0
    %6294 = vmatpush1.msra.mxu0 0.0
    %6295 = vmatprep.subr.mxu0 0.0
    %6296 = vmatpush1.msra.mxu0 0.0
    %6297 = vmatprep.subr.mxu0 0.0
    %6298 = vmatpush1.msra.mxu0 0.0
    %6299 = vmatprep.subr.mxu0 0.0
    %6300 = vmatpush1.msra.mxu0 0.0
    %6301 = vmatprep.subr.mxu0 0.0
    %6302 = vmatpush1.msra.mxu0 0.0
    %6303 = vmatprep.subr.mxu0 0.0
    %6304 = vmatpush1.msra.mxu0 0.0
    %6305 = vmatprep.subr.mxu0 0.0
    %6306 = vmatpush1.msra.mxu0 0.0
    %6307 = vmatprep.subr.mxu0 0.0
    %6308 = vmatpush1.msra.mxu0 0.0
    %6309 = vmatprep.subr.mxu0 0.0
    %6310 = vmatpush1.msra.mxu0 0.0
    %6311 = vmatprep.subr.mxu0 0.0
    %6312 = vmatpush1.msra.mxu0 0.0
    %6313 = vmatprep.subr.mxu0 0.0
    %6314 = vmatpush1.msra.mxu0 0.0
    %6315 = vmatprep.subr.mxu0 0.0
    %6316 = vmatpush1.msra.mxu0 0.0
    %6317 = vmatprep.subr.mxu0 0.0
    %6318 = vmatpush1.msra.mxu0 0.0
    %6319 = vmatprep.subr.mxu0 0.0
    %6320 = vmatpush1.msra.mxu0 0.0
    %6321 = vmatprep.subr.mxu0 0.0
    %6322 = vmatpush1.msra.mxu0 0.0
    %6323 = vmatprep.subr.mxu0 0.0
    %6324 = vmatpush1.msra.mxu0 0.0
    %6325 = vmatprep.subr.mxu0 0.0
    %6326 = vmatpush1.msra.mxu0 0.0
    %6327 = vmatprep.subr.mxu0 0.0
    %6328 = vmatpush1.msra.mxu0 0.0
    %6329 = vmatprep.subr.mxu0 0.0
    %6330 = vmatpush1.msra.mxu0 0.0
    %6331 = vmatprep.subr.mxu0 0.0
    %6332 = vmatpush1.msra.mxu0 0.0
    %6333 = vmatprep.subr.mxu0 0.0
    %6334 = vmatpush1.msra.mxu0 0.0
    %6335 = vmatprep.subr.mxu0 0.0
    %6336 = vmatpush1.msra.mxu0 0.0
    %6337 = vmatprep.subr.mxu0 0.0
    %6338 = vmatpush1.msra.mxu0 0.0
    %6339 = vmatprep.subr.mxu0 0.0
    %6340 = vmatpush1.msra.mxu0 0.0
    %6341 = vmatprep.mubr.f32.mxu0 0.0
    %6342 = vmatmul.mubr.f32.gmra.mrb[0].mxu0 %v6193
    %v6343 = vpop.f32.mrb[0].mxu0
    %v6344 = vadd.f32 %v6276, %v6343
    %v6345 = vpop.f32.mrb[0].mxu0
    %6346 = vmatprep.mubr.f32.mxu0 0.0
    %6347 = vmatmul.mubr.f32.gmra.mrb[0].mxu0 %v6196
    %v6348 = vpop.f32.mrb[0].mxu0
    %v6349 = vadd.f32 %v6276, %v6348
    %v6350 = vpop.f32.mrb[0].mxu0
    %6351 = vdwg.mxu0
    %v6352 = vlaneseq
    %v6353 = vshrl.u32 %v6352, 7
    %v6354 = vsub.s32 1, %v6353
    %v6355 = vrot.slane %v26, %v6354
    %6356 = vmatprep.subr.mxu0 0.0
    %6357 = vmatpush1.msra.mxu0 %v6180
    %6358 = vmatprep.subr.mxu0 0.0
    %6359 = vmatpush1.msra.mxu0 %v6181
    %6360 = vmatprep.subr.mxu0 0.0
    %6361 = vmatpush1.msra.mxu0 %v6182
    %6362 = vmatprep.subr.mxu0 0.0
    %6363 = vmatpush1.msra.mxu0 %v6183
    %6364 = vmatprep.subr.mxu0 0.0
    %6365 = vmatpush1.msra.mxu0 0.0
    %6366 = vmatprep.subr.mxu0 0.0
    %6367 = vmatpush1.msra.mxu0 0.0
    %6368 = vmatprep.subr.mxu0 0.0
    %6369 = vmatpush1.msra.mxu0 0.0
    %6370 = vmatprep.subr.mxu0 0.0
    %6371 = vmatpush1.msra.mxu0 0.0
    %6372 = vmatprep.subr.mxu0 0.0
    %6373 = vmatpush1.msra.mxu0 0.0
    %6374 = vmatprep.subr.mxu0 0.0
    %6375 = vmatpush1.msra.mxu0 0.0
    %6376 = vmatprep.subr.mxu0 0.0
    %6377 = vmatpush1.msra.mxu0 0.0
    %6378 = vmatprep.subr.mxu0 0.0
    %6379 = vmatpush1.msra.mxu0 0.0
    %6380 = vmatprep.subr.mxu0 0.0
    %6381 = vmatpush1.msra.mxu0 0.0
    %6382 = vmatprep.subr.mxu0 0.0
    %6383 = vmatpush1.msra.mxu0 0.0
    %6384 = vmatprep.subr.mxu0 0.0
    %6385 = vmatpush1.msra.mxu0 0.0
    %6386 = vmatprep.subr.mxu0 0.0
    %6387 = vmatpush1.msra.mxu0 0.0
    %6388 = vmatprep.subr.mxu0 0.0
    %6389 = vmatpush1.msra.mxu0 0.0
    %6390 = vmatprep.subr.mxu0 0.0
    %6391 = vmatpush1.msra.mxu0 0.0
    %6392 = vmatprep.subr.mxu0 0.0
    %6393 = vmatpush1.msra.mxu0 0.0
    %6394 = vmatprep.subr.mxu0 0.0
    %6395 = vmatpush1.msra.mxu0 0.0
    %6396 = vmatprep.subr.mxu0 0.0
    %6397 = vmatpush1.msra.mxu0 0.0
    %6398 = vmatprep.subr.mxu0 0.0
    %6399 = vmatpush1.msra.mxu0 0.0
    %6400 = vmatprep.subr.mxu0 0.0
    %6401 = vmatpush1.msra.mxu0 0.0
    %6402 = vmatprep.subr.mxu0 0.0
    %6403 = vmatpush1.msra.mxu0 0.0
    %6404 = vmatprep.subr.mxu0 0.0
    %6405 = vmatpush1.msra.mxu0 0.0
    %6406 = vmatprep.subr.mxu0 0.0
    %6407 = vmatpush1.msra.mxu0 0.0
    %6408 = vmatprep.subr.mxu0 0.0
    %6409 = vmatpush1.msra.mxu0 0.0
    %6410 = vmatprep.subr.mxu0 0.0
    %6411 = vmatpush1.msra.mxu0 0.0
    %6412 = vmatprep.subr.mxu0 0.0
    %6413 = vmatpush1.msra.mxu0 0.0
    %6414 = vmatprep.subr.mxu0 0.0
    %6415 = vmatpush1.msra.mxu0 0.0
    %6416 = vmatprep.subr.mxu0 0.0
    %6417 = vmatpush1.msra.mxu0 0.0
    %6418 = vmatprep.subr.mxu0 0.0
    %6419 = vmatpush1.msra.mxu0 0.0
    %6420 = vmatprep.mubr.f32.mxu0 0.0
    %6421 = vmatmul.mubr.f32.gmra.mrb[0].mxu0 %v6193
    %v6422 = vpop.f32.mrb[0].mxu0
    %v6423 = vadd.f32 %v6355, %v6422
    %v6424 = vpop.f32.mrb[0].mxu0
    %6425 = vmatprep.mubr.f32.mxu0 0.0
    %6426 = vmatmul.mubr.f32.gmra.mrb[0].mxu0 %v6196
    %v6427 = vpop.f32.mrb[0].mxu0
    %v6428 = vadd.f32 %v6355, %v6427
    %v6429 = vpop.f32.mrb[0].mxu0
    %6430 = vdwg.mxu0
    %v6431 = vmul.f32 %v6344, %v34
    %v6432 = vmul.f32 %v6349, %v34
    %v6434 = vsel %vm285, %v6265, 0
    %v6437 = vsel %vm285, %v6270, 0
    %v6440 = vsel %vm285, %v6431, 0
    %v6443 = vsel %vm285, %v6432, 0
    %6445 = vmatprep.subr.mxu0 0.0
    %6446 = vmatpush1.xpose.msra.mxu0 %v6440
    %6447 = vmatprep.subr.mxu0 0.0
    %6448 = vmatpush1.xpose.msra.mxu0 %v6443
    %6449 = vmatprep.subr.mxu0 0.0
    %6450 = vmatpush1.xpose.msra.mxu0 0.0
    %6451 = vmatprep.subr.mxu0 0.0
    %6452 = vmatpush1.xpose.msra.mxu0 0.0
    %6453 = vmatprep.subr.mxu0 0.0
    %6454 = vmatpush1.xpose.msra.mxu0 0.0
    %6455 = vmatprep.subr.mxu0 0.0
    %6456 = vmatpush1.xpose.msra.mxu0 0.0
    %6457 = vmatprep.subr.mxu0 0.0
    %6458 = vmatpush1.xpose.msra.mxu0 0.0
    %6459 = vmatprep.subr.mxu0 0.0
    %6460 = vmatpush1.xpose.msra.mxu0 0.0
    %6461 = vmatprep.subr.mxu0 0.0
    %6462 = vmatpush1.xpose.msra.mxu0 0.0
    %6463 = vmatprep.subr.mxu0 0.0
    %6464 = vmatpush1.xpose.msra.mxu0 0.0
    %6465 = vmatprep.subr.mxu0 0.0
    %6466 = vmatpush1.xpose.msra.mxu0 0.0
    %6467 = vmatprep.subr.mxu0 0.0
    %6468 = vmatpush1.xpose.msra.mxu0 0.0
    %6469 = vmatprep.subr.mxu0 0.0
    %6470 = vmatpush1.xpose.msra.mxu0 0.0
    %6471 = vmatprep.subr.mxu0 0.0
    %6472 = vmatpush1.xpose.msra.mxu0 0.0
    %6473 = vmatprep.subr.mxu0 0.0
    %6474 = vmatpush1.xpose.msra.mxu0 0.0
    %6475 = vmatprep.subr.mxu0 0.0
    %6476 = vmatpush1.xpose.msra.mxu0 0.0
    %6477 = vmatprep.subr.mxu0 0.0
    %6478 = vmatpush1.xpose.msra.mxu0 0.0
    %6479 = vmatprep.subr.mxu0 0.0
    %6480 = vmatpush1.xpose.msra.mxu0 0.0
    %6481 = vmatprep.subr.mxu0 0.0
    %6482 = vmatpush1.xpose.msra.mxu0 0.0
    %6483 = vmatprep.subr.mxu0 0.0
    %6484 = vmatpush1.xpose.msra.mxu0 0.0
    %6485 = vmatprep.subr.mxu0 0.0
    %6486 = vmatpush1.xpose.msra.mxu0 0.0
    %6487 = vmatprep.subr.mxu0 0.0
    %6488 = vmatpush1.xpose.msra.mxu0 0.0
    %6489 = vmatprep.subr.mxu0 0.0
    %6490 = vmatpush1.xpose.msra.mxu0 0.0
    %6491 = vmatprep.subr.mxu0 0.0
    %6492 = vmatpush1.xpose.msra.mxu0 0.0
    %6493 = vmatprep.subr.mxu0 0.0
    %6494 = vmatpush1.xpose.msra.mxu0 0.0
    %6495 = vmatprep.subr.mxu0 0.0
    %6496 = vmatpush1.xpose.msra.mxu0 0.0
    %6497 = vmatprep.subr.mxu0 0.0
    %6498 = vmatpush1.xpose.msra.mxu0 0.0
    %6499 = vmatprep.subr.mxu0 0.0
    %6500 = vmatpush1.xpose.msra.mxu0 0.0
    %6501 = vmatprep.subr.mxu0 0.0
    %6502 = vmatpush1.xpose.msra.mxu0 0.0
    %6503 = vmatprep.subr.mxu0 0.0
    %6504 = vmatpush1.xpose.msra.mxu0 0.0
    %6505 = vmatprep.subr.mxu0 0.0
    %6506 = vmatpush1.xpose.msra.mxu0 0.0
    %6507 = vmatprep.subr.mxu0 0.0
    %6508 = vmatpush1.xpose.msra.mxu0 0.0
    %6509 = vmatprep.mubr.f32.mxu0 0.0
    %6510 = vmatmul.mubr.f32.gmra.mrb[0].mxu0 %v6434
    %v6511 = vpop.f32.mrb[0].mxu0
    %v6512 = vadd.f32 0.0, %v6511
    %v6513 = vpop.f32.mrb[0].mxu0
    %6514 = vmatprep.mubr.f32.mxu0 0.0
    %6515 = vmatmul.mubr.f32.gmra.mrb[0].mxu0 %v6437
    %v6516 = vpop.f32.mrb[0].mxu0
    %v6517 = vadd.f32 0.0, %v6516
    %v6518 = vpop.f32.mrb[0].mxu0
    %6519 = vdwg.mxu0
    %v6520 = vmul.f32 %v6512, 0.35355338
    %v6521 = vmul.f32 %v6517, 0.35355338
    %v6522 = vadd.f32 %v6520, %v73
    %v6523 = vadd.f32 %v6521, %v74
    %v6524 = vsel %vm4927, %v6522, -inf
    %6525 = vmax.xlane.f32.xlu0 %v6524
    %v6526 = vpop.xlane.xlu0 %6525
    %v6527 = vsel %vm4927, %v6523, -inf
    %6528 = vmax.xlane.f32.xlu0 %v6527
    %v6529 = vpop.xlane.xlu0 %6528
    %v6530 = vsub.f32 %v6522, %v6526
    %v6531 = vsub.f32 %v6523, %v6529
    %v6532 = vmul.f32 %v6530, 1.442695
    %v6533 = vpow.pop %v6532
    %v6534 = vmul.f32 %v6531, 1.442695
    %v6535 = vpow.pop %v6534
    %v6536 = vsel %vm4927, %v6533, 0.0
    %6537 = vadd.xlane.f32.xlu0 %v6536
    %v6538 = vpop.xlane.xlu0 %6537
    %v6539 = vsel %vm4927, %v6535, 0.0
    %6540 = vadd.xlane.f32.xlu0 %v6539
    %v6541 = vpop.xlane.xlu0 %6540
    %v6542 = vrcp.pop %v6538
    %v6543 = vrcp.pop %v6541
    %v6544 = vmul.f32 %v6533, %v6542
    %v6545 = vmul.f32 %v6535, %v6543
    %v6546 = vmul.f32 %v6423, %v34
    %v6547 = vmul.f32 %v6428, %v34
    %v6548 = vmul.f32 %v6344, %v39
    %v6549 = vmul.f32 %v6349, %v39
    %v6551 = vsel %vm285, %v6548, 0
    %v6554 = vsel %vm285, %v6549, 0
    %6556 = vmatprep.subr.mxu0 0.0
    %6557 = vmatpush1.xpose.msra.mxu0 %v6551
    %6558 = vmatprep.subr.mxu0 0.0
    %6559 = vmatpush1.xpose.msra.mxu0 %v6554
    %6560 = vmatprep.subr.mxu0 0.0
    %6561 = vmatpush1.xpose.msra.mxu0 0.0
    %6562 = vmatprep.subr.mxu0 0.0
    %6563 = vmatpush1.xpose.msra.mxu0 0.0
    %6564 = vmatprep.subr.mxu0 0.0
    %6565 = vmatpush1.xpose.msra.mxu0 0.0
    %6566 = vmatprep.subr.mxu0 0.0
    %6567 = vmatpush1.xpose.msra.mxu0 0.0
    %6568 = vmatprep.subr.mxu0 0.0
    %6569 = vmatpush1.xpose.msra.mxu0 0.0
    %6570 = vmatprep.subr.mxu0 0.0
    %6571 = vmatpush1.xpose.msra.mxu0 0.0
    %6572 = vmatprep.subr.mxu0 0.0
    %6573 = vmatpush1.xpose.msra.mxu0 0.0
    %6574 = vmatprep.subr.mxu0 0.0
    %6575 = vmatpush1.xpose.msra.mxu0 0.0
    %6576 = vmatprep.subr.mxu0 0.0
    %6577 = vmatpush1.xpose.msra.mxu0 0.0
    %6578 = vmatprep.subr.mxu0 0.0
    %6579 = vmatpush1.xpose.msra.mxu0 0.0
    %6580 = vmatprep.subr.mxu0 0.0
    %6581 = vmatpush1.xpose.msra.mxu0 0.0
    %6582 = vmatprep.subr.mxu0 0.0
    %6583 = vmatpush1.xpose.msra.mxu0 0.0
    %6584 = vmatprep.subr.mxu0 0.0
    %6585 = vmatpush1.xpose.msra.mxu0 0.0
    %6586 = vmatprep.subr.mxu0 0.0
    %6587 = vmatpush1.xpose.msra.mxu0 0.0
    %6588 = vmatprep.subr.mxu0 0.0
    %6589 = vmatpush1.xpose.msra.mxu0 0.0
    %6590 = vmatprep.subr.mxu0 0.0
    %6591 = vmatpush1.xpose.msra.mxu0 0.0
    %6592 = vmatprep.subr.mxu0 0.0
    %6593 = vmatpush1.xpose.msra.mxu0 0.0
    %6594 = vmatprep.subr.mxu0 0.0
    %6595 = vmatpush1.xpose.msra.mxu0 0.0
    %6596 = vmatprep.subr.mxu0 0.0
    %6597 = vmatpush1.xpose.msra.mxu0 0.0
    %6598 = vmatprep.subr.mxu0 0.0
    %6599 = vmatpush1.xpose.msra.mxu0 0.0
    %6600 = vmatprep.subr.mxu0 0.0
    %6601 = vmatpush1.xpose.msra.mxu0 0.0
    %6602 = vmatprep.subr.mxu0 0.0
    %6603 = vmatpush1.xpose.msra.mxu0 0.0
    %6604 = vmatprep.subr.mxu0 0.0
    %6605 = vmatpush1.xpose.msra.mxu0 0.0
    %6606 = vmatprep.subr.mxu0 0.0
    %6607 = vmatpush1.xpose.msra.mxu0 0.0
    %6608 = vmatprep.subr.mxu0 0.0
    %6609 = vmatpush1.xpose.msra.mxu0 0.0
    %6610 = vmatprep.subr.mxu0 0.0
    %6611 = vmatpush1.xpose.msra.mxu0 0.0
    %6612 = vmatprep.subr.mxu0 0.0
    %6613 = vmatpush1.xpose.msra.mxu0 0.0
    %6614 = vmatprep.subr.mxu0 0.0
    %6615 = vmatpush1.xpose.msra.mxu0 0.0
    %6616 = vmatprep.subr.mxu0 0.0
    %6617 = vmatpush1.xpose.msra.mxu0 0.0
    %6618 = vmatprep.subr.mxu0 0.0
    %6619 = vmatpush1.xpose.msra.mxu0 0.0
    %6620 = vmatprep.mubr.f32.mxu0 0.0
    %6621 = vmatmul.mubr.f32.gmra.mrb[0].mxu0 %v6434
    %v6622 = vpop.f32.mrb[0].mxu0
    %v6623 = vadd.f32 0.0, %v6622
    %v6624 = vpop.f32.mrb[0].mxu0
    %6625 = vmatprep.mubr.f32.mxu0 0.0
    %6626 = vmatmul.mubr.f32.gmra.mrb[0].mxu0 %v6437
    %v6627 = vpop.f32.mrb[0].mxu0
    %v6628 = vadd.f32 0.0, %v6627
    %v6629 = vpop.f32.mrb[0].mxu0
    %6630 = vdwg.mxu0
    %v6631 = vmul.f32 %v6623, 0.35355338
    %v6632 = vmul.f32 %v6628, 0.35355338
    %v6633 = vadd.f32 %v6631, %v73
    %v6634 = vadd.f32 %v6632, %v74
    %v6635 = vsel %vm4927, %v6633, -inf
    %6636 = vmax.xlane.f32.xlu0 %v6635
    %v6637 = vpop.xlane.xlu0 %6636
    %v6638 = vsel %vm4927, %v6634, -inf
    %6639 = vmax.xlane.f32.xlu0 %v6638
    %v6640 = vpop.xlane.xlu0 %6639
    %v6641 = vsub.f32 %v6633, %v6637
    %v6642 = vsub.f32 %v6634, %v6640
    %v6643 = vmul.f32 %v6641, 1.442695
    %v6644 = vpow.pop %v6643
    %v6645 = vmul.f32 %v6642, 1.442695
    %v6646 = vpow.pop %v6645
    %v6647 = vsel %vm4927, %v6644, 0.0
    %6648 = vadd.xlane.f32.xlu0 %v6647
    %v6649 = vpop.xlane.xlu0 %6648
    %v6650 = vsel %vm4927, %v6646, 0.0
    %6651 = vadd.xlane.f32.xlu0 %v6650
    %v6652 = vpop.xlane.xlu0 %6651
    %v6653 = vrcp.pop %v6649
    %v6654 = vrcp.pop %v6652
    %v6655 = vmul.f32 %v6644, %v6653
    %v6656 = vmul.f32 %v6646, %v6654
    %v6657 = vmul.f32 %v6423, %v39
    %v6658 = vmul.f32 %v6428, %v39
    %v6660 = vsel %vm4927, %v6655, 0
    %v6663 = vsel %vm4927, %v6656, 0
    %6665 = vmatprep.subr.mxu0 0.0
    %6666 = vmatpush1.msra.mxu0 %v6657
    %6667 = vmatprep.subr.mxu0 0.0
    %6668 = vmatpush1.msra.mxu0 %v6658
    %6669 = vmatprep.subr.mxu0 0.0
    %6670 = vmatpush1.msra.mxu0 0.0
    %6671 = vmatprep.subr.mxu0 0.0
    %6672 = vmatpush1.msra.mxu0 0.0
    %6673 = vmatprep.subr.mxu0 0.0
    %6674 = vmatpush1.msra.mxu0 0.0
    %6675 = vmatprep.subr.mxu0 0.0
    %6676 = vmatpush1.msra.mxu0 0.0
    %6677 = vmatprep.subr.mxu0 0.0
    %6678 = vmatpush1.msra.mxu0 0.0
    %6679 = vmatprep.subr.mxu0 0.0
    %6680 = vmatpush1.msra.mxu0 0.0
    %6681 = vmatprep.subr.mxu0 0.0
    %6682 = vmatpush1.msra.mxu0 0.0
    %6683 = vmatprep.subr.mxu0 0.0
    %6684 = vmatpush1.msra.mxu0 0.0
    %6685 = vmatprep.subr.mxu0 0.0
    %6686 = vmatpush1.msra.mxu0 0.0
    %6687 = vmatprep.subr.mxu0 0.0
    %6688 = vmatpush1.msra.mxu0 0.0
    %6689 = vmatprep.subr.mxu0 0.0
    %6690 = vmatpush1.msra.mxu0 0.0
    %6691 = vmatprep.subr.mxu0 0.0
    %6692 = vmatpush1.msra.mxu0 0.0
    %6693 = vmatprep.subr.mxu0 0.0
    %6694 = vmatpush1.msra.mxu0 0.0
    %6695 = vmatprep.subr.mxu0 0.0
    %6696 = vmatpush1.msra.mxu0 0.0
    %6697 = vmatprep.subr.mxu0 0.0
    %6698 = vmatpush1.msra.mxu0 0.0
    %6699 = vmatprep.subr.mxu0 0.0
    %6700 = vmatpush1.msra.mxu0 0.0
    %6701 = vmatprep.subr.mxu0 0.0
    %6702 = vmatpush1.msra.mxu0 0.0
    %6703 = vmatprep.subr.mxu0 0.0
    %6704 = vmatpush1.msra.mxu0 0.0
    %6705 = vmatprep.subr.mxu0 0.0
    %6706 = vmatpush1.msra.mxu0 0.0
    %6707 = vmatprep.subr.mxu0 0.0
    %6708 = vmatpush1.msra.mxu0 0.0
    %6709 = vmatprep.subr.mxu0 0.0
    %6710 = vmatpush1.msra.mxu0 0.0
    %6711 = vmatprep.subr.mxu0 0.0
    %6712 = vmatpush1.msra.mxu0 0.0
    %6713 = vmatprep.subr.mxu0 0.0
    %6714 = vmatpush1.msra.mxu0 0.0
    %6715 = vmatprep.subr.mxu0 0.0
    %6716 = vmatpush1.msra.mxu0 0.0
    %6717 = vmatprep.subr.mxu0 0.0
    %6718 = vmatpush1.msra.mxu0 0.0
    %6719 = vmatprep.subr.mxu0 0.0
    %6720 = vmatpush1.msra.mxu0 0.0
    %6721 = vmatprep.subr.mxu0 0.0
    %6722 = vmatpush1.msra.mxu0 0.0
    %6723 = vmatprep.subr.mxu0 0.0
    %6724 = vmatpush1.msra.mxu0 0.0
    %6725 = vmatprep.subr.mxu0 0.0
    %6726 = vmatpush1.msra.mxu0 0.0
    %6727 = vmatprep.subr.mxu0 0.0
    %6728 = vmatpush1.msra.mxu0 0.0
    %6729 = vmatprep.mubr.f32.mxu0 0.0
    %6730 = vmatmul.mubr.f32.gmra.mrb[0].mxu0 %v6660
    %v6731 = vpop.f32.mrb[0].mxu0
    %v6732 = vadd.f32 0.0, %v6731
    %v6733 = vpop.f32.mrb[0].mxu0
    %6734 = vmatprep.mubr.f32.mxu0 0.0
    %6735 = vmatmul.mubr.f32.gmra.mrb[0].mxu0 %v6663
    %v6736 = vpop.f32.mrb[0].mxu0
    %v6737 = vadd.f32 0.0, %v6736
    %v6738 = vpop.f32.mrb[0].mxu0
    %6739 = vdwg.mxu0
    %v6741 = vsel %vm4927, %v6544, 0
    %v6744 = vsel %vm4927, %v6545, 0
    %6746 = vmatprep.subr.mxu0 0.0
    %6747 = vmatpush1.msra.mxu0 %v6546
    %6748 = vmatprep.subr.mxu0 0.0
    %6749 = vmatpush1.msra.mxu0 %v6547
    %6750 = vmatprep.subr.mxu0 0.0
    %6751 = vmatpush1.msra.mxu0 0.0
    %6752 = vmatprep.subr.mxu0 0.0
    %6753 = vmatpush1.msra.mxu0 0.0
    %6754 = vmatprep.subr.mxu0 0.0
    %6755 = vmatpush1.msra.mxu0 0.0
    %6756 = vmatprep.subr.mxu0 0.0
    %6757 = vmatpush1.msra.mxu0 0.0
    %6758 = vmatprep.subr.mxu0 0.0
    %6759 = vmatpush1.msra.mxu0 0.0
    %6760 = vmatprep.subr.mxu0 0.0
    %6761 = vmatpush1.msra.mxu0 0.0
    %6762 = vmatprep.subr.mxu0 0.0
    %6763 = vmatpush1.msra.mxu0 0.0
    %6764 = vmatprep.subr.mxu0 0.0
    %6765 = vmatpush1.msra.mxu0 0.0
    %6766 = vmatprep.subr.mxu0 0.0
    %6767 = vmatpush1.msra.mxu0 0.0
    %6768 = vmatprep.subr.mxu0 0.0
    %6769 = vmatpush1.msra.mxu0 0.0
    %6770 = vmatprep.subr.mxu0 0.0
    %6771 = vmatpush1.msra.mxu0 0.0
    %6772 = vmatprep.subr.mxu0 0.0
    %6773 = vmatpush1.msra.mxu0 0.0
    %6774 = vmatprep.subr.mxu0 0.0
    %6775 = vmatpush1.msra.mxu0 0.0
    %6776 = vmatprep.subr.mxu0 0.0
    %6777 = vmatpush1.msra.mxu0 0.0
    %6778 = vmatprep.subr.mxu0 0.0
    %6779 = vmatpush1.msra.mxu0 0.0
    %6780 = vmatprep.subr.mxu0 0.0
    %6781 = vmatpush1.msra.mxu0 0.0
    %6782 = vmatprep.subr.mxu0 0.0
    %6783 = vmatpush1.msra.mxu0 0.0
    %6784 = vmatprep.subr.mxu0 0.0
    %6785 = vmatpush1.msra.mxu0 0.0
    %6786 = vmatprep.subr.mxu0 0.0
    %6787 = vmatpush1.msra.mxu0 0.0
    %6788 = vmatprep.subr.mxu0 0.0
    %6789 = vmatpush1.msra.mxu0 0.0
    %6790 = vmatprep.subr.mxu0 0.0
    %6791 = vmatpush1.msra.mxu0 0.0
    %6792 = vmatprep.subr.mxu0 0.0
    %6793 = vmatpush1.msra.mxu0 0.0
    %6794 = vmatprep.subr.mxu0 0.0
    %6795 = vmatpush1.msra.mxu0 0.0
    %6796 = vmatprep.subr.mxu0 0.0
    %6797 = vmatpush1.msra.mxu0 0.0
    %6798 = vmatprep.subr.mxu0 0.0
    %6799 = vmatpush1.msra.mxu0 0.0
    %6800 = vmatprep.subr.mxu0 0.0
    %6801 = vmatpush1.msra.mxu0 0.0
    %6802 = vmatprep.subr.mxu0 0.0
    %6803 = vmatpush1.msra.mxu0 0.0
    %6804 = vmatprep.subr.mxu0 0.0
    %6805 = vmatpush1.msra.mxu0 0.0
    %6806 = vmatprep.subr.mxu0 0.0
    %6807 = vmatpush1.msra.mxu0 0.0
    %6808 = vmatprep.subr.mxu0 0.0
    %6809 = vmatpush1.msra.mxu0 0.0
    %6810 = vmatprep.mubr.f32.mxu0 0.0
    %6811 = vmatmul.mubr.f32.gmra.mrb[0].mxu0 %v6741
    %v6812 = vpop.f32.mrb[0].mxu0
    %v6813 = vadd.f32 %v6732, %v6812
    %v6814 = vpop.f32.mrb[0].mxu0
    %6815 = vmatprep.mubr.f32.mxu0 0.0
    %6816 = vmatmul.mubr.f32.gmra.mrb[0].mxu0 %v6744
    %v6817 = vpop.f32.mrb[0].mxu0
    %v6818 = vadd.f32 %v6737, %v6817
    %v6819 = vpop.f32.mrb[0].mxu0
    %6820 = vdwg.mxu0
    %v6821 = vmul.f32 %v6344, %v44
    %v6822 = vmul.f32 %v6349, %v44
    %v6824 = vsel %vm285, %v6821, 0
    %v6827 = vsel %vm285, %v6822, 0
    %6829 = vmatprep.subr.mxu0 0.0
    %6830 = vmatpush1.xpose.msra.mxu0 %v6824
    %6831 = vmatprep.subr.mxu0 0.0
    %6832 = vmatpush1.xpose.msra.mxu0 %v6827
    %6833 = vmatprep.subr.mxu0 0.0
    %6834 = vmatpush1.xpose.msra.mxu0 0.0
    %6835 = vmatprep.subr.mxu0 0.0
    %6836 = vmatpush1.xpose.msra.mxu0 0.0
    %6837 = vmatprep.subr.mxu0 0.0
    %6838 = vmatpush1.xpose.msra.mxu0 0.0
    %6839 = vmatprep.subr.mxu0 0.0
    %6840 = vmatpush1.xpose.msra.mxu0 0.0
    %6841 = vmatprep.subr.mxu0 0.0
    %6842 = vmatpush1.xpose.msra.mxu0 0.0
    %6843 = vmatprep.subr.mxu0 0.0
    %6844 = vmatpush1.xpose.msra.mxu0 0.0
    %6845 = vmatprep.subr.mxu0 0.0
    %6846 = vmatpush1.xpose.msra.mxu0 0.0
    %6847 = vmatprep.subr.mxu0 0.0
    %6848 = vmatpush1.xpose.msra.mxu0 0.0
    %6849 = vmatprep.subr.mxu0 0.0
    %6850 = vmatpush1.xpose.msra.mxu0 0.0
    %6851 = vmatprep.subr.mxu0 0.0
    %6852 = vmatpush1.xpose.msra.mxu0 0.0
    %6853 = vmatprep.subr.mxu0 0.0
    %6854 = vmatpush1.xpose.msra.mxu0 0.0
    %6855 = vmatprep.subr.mxu0 0.0
    %6856 = vmatpush1.xpose.msra.mxu0 0.0
    %6857 = vmatprep.subr.mxu0 0.0
    %6858 = vmatpush1.xpose.msra.mxu0 0.0
    %6859 = vmatprep.subr.mxu0 0.0
    %6860 = vmatpush1.xpose.msra.mxu0 0.0
    %6861 = vmatprep.subr.mxu0 0.0
    %6862 = vmatpush1.xpose.msra.mxu0 0.0
    %6863 = vmatprep.subr.mxu0 0.0
    %6864 = vmatpush1.xpose.msra.mxu0 0.0
    %6865 = vmatprep.subr.mxu0 0.0
    %6866 = vmatpush1.xpose.msra.mxu0 0.0
    %6867 = vmatprep.subr.mxu0 0.0
    %6868 = vmatpush1.xpose.msra.mxu0 0.0
    %6869 = vmatprep.subr.mxu0 0.0
    %6870 = vmatpush1.xpose.msra.mxu0 0.0
    %6871 = vmatprep.subr.mxu0 0.0
    %6872 = vmatpush1.xpose.msra.mxu0 0.0
    %6873 = vmatprep.subr.mxu0 0.0
    %6874 = vmatpush1.xpose.msra.mxu0 0.0
    %6875 = vmatprep.subr.mxu0 0.0
    %6876 = vmatpush1.xpose.msra.mxu0 0.0
    %6877 = vmatprep.subr.mxu0 0.0
    %6878 = vmatpush1.xpose.msra.mxu0 0.0
    %6879 = vmatprep.subr.mxu0 0.0
    %6880 = vmatpush1.xpose.msra.mxu0 0.0
    %6881 = vmatprep.subr.mxu0 0.0
    %6882 = vmatpush1.xpose.msra.mxu0 0.0
    %6883 = vmatprep.subr.mxu0 0.0
    %6884 = vmatpush1.xpose.msra.mxu0 0.0
    %6885 = vmatprep.subr.mxu0 0.0
    %6886 = vmatpush1.xpose.msra.mxu0 0.0
    %6887 = vmatprep.subr.mxu0 0.0
    %6888 = vmatpush1.xpose.msra.mxu0 0.0
    %6889 = vmatprep.subr.mxu0 0.0
    %6890 = vmatpush1.xpose.msra.mxu0 0.0
    %6891 = vmatprep.subr.mxu0 0.0
    %6892 = vmatpush1.xpose.msra.mxu0 0.0
    %6893 = vmatprep.mubr.f32.mxu0 0.0
    %6894 = vmatmul.mubr.f32.gmra.mrb[0].mxu0 %v6434
    %v6895 = vpop.f32.mrb[0].mxu0
    %v6896 = vadd.f32 0.0, %v6895
    %v6897 = vpop.f32.mrb[0].mxu0
    %6898 = vmatprep.mubr.f32.mxu0 0.0
    %6899 = vmatmul.mubr.f32.gmra.mrb[0].mxu0 %v6437
    %v6900 = vpop.f32.mrb[0].mxu0
    %v6901 = vadd.f32 0.0, %v6900
    %v6902 = vpop.f32.mrb[0].mxu0
    %6903 = vdwg.mxu0
    %v6904 = vmul.f32 %v6896, 0.35355338
    %v6905 = vmul.f32 %v6901, 0.35355338
    %v6906 = vadd.f32 %v6904, %v73
    %v6907 = vadd.f32 %v6905, %v74
    %v6908 = vsel %vm4927, %v6906, -inf
    %6909 = vmax.xlane.f32.xlu0 %v6908
    %v6910 = vpop.xlane.xlu0 %6909
    %v6911 = vsel %vm4927, %v6907, -inf
    %6912 = vmax.xlane.f32.xlu0 %v6911
    %v6913 = vpop.xlane.xlu0 %6912
    %v6914 = vsub.f32 %v6906, %v6910
    %v6915 = vsub.f32 %v6907, %v6913
    %v6916 = vmul.f32 %v6914, 1.442695
    %v6917 = vpow.pop %v6916
    %v6918 = vmul.f32 %v6915, 1.442695
    %v6919 = vpow.pop %v6918
    %v6920 = vsel %vm4927, %v6917, 0.0
    %6921 = vadd.xlane.f32.xlu0 %v6920
    %v6922 = vpop.xlane.xlu0 %6921
    %v6923 = vsel %vm4927, %v6919, 0.0
    %6924 = vadd.xlane.f32.xlu0 %v6923
    %v6925 = vpop.xlane.xlu0 %6924
    %v6926 = vrcp.pop %v6922
    %v6927 = vrcp.pop %v6925
    %v6928 = vmul.f32 %v6917, %v6926
    %v6929 = vmul.f32 %v6919, %v6927
    %v6930 = vmul.f32 %v6423, %v44
    %v6931 = vmul.f32 %v6428, %v44
    %v6933 = vsel %vm4927, %v6928, 0
    %v6936 = vsel %vm4927, %v6929, 0
    %6938 = vmatprep.subr.mxu0 0.0
    %6939 = vmatpush1.msra.mxu0 %v6930
    %6940 = vmatprep.subr.mxu0 0.0
    %6941 = vmatpush1.msra.mxu0 %v6931
    %6942 = vmatprep.subr.mxu0 0.0
    %6943 = vmatpush1.msra.mxu0 0.0
    %6944 = vmatprep.subr.mxu0 0.0
    %6945 = vmatpush1.msra.mxu0 0.0
    %6946 = vmatprep.subr.mxu0 0.0
    %6947 = vmatpush1.msra.mxu0 0.0
    %6948 = vmatprep.subr.mxu0 0.0
    %6949 = vmatpush1.msra.mxu0 0.0
    %6950 = vmatprep.subr.mxu0 0.0
    %6951 = vmatpush1.msra.mxu0 0.0
    %6952 = vmatprep.subr.mxu0 0.0
    %6953 = vmatpush1.msra.mxu0 0.0
    %6954 = vmatprep.subr.mxu0 0.0
    %6955 = vmatpush1.msra.mxu0 0.0
    %6956 = vmatprep.subr.mxu0 0.0
    %6957 = vmatpush1.msra.mxu0 0.0
    %6958 = vmatprep.subr.mxu0 0.0
    %6959 = vmatpush1.msra.mxu0 0.0
    %6960 = vmatprep.subr.mxu0 0.0
    %6961 = vmatpush1.msra.mxu0 0.0
    %6962 = vmatprep.subr.mxu0 0.0
    %6963 = vmatpush1.msra.mxu0 0.0
    %6964 = vmatprep.subr.mxu0 0.0
    %6965 = vmatpush1.msra.mxu0 0.0
    %6966 = vmatprep.subr.mxu0 0.0
    %6967 = vmatpush1.msra.mxu0 0.0
    %6968 = vmatprep.subr.mxu0 0.0
    %6969 = vmatpush1.msra.mxu0 0.0
    %6970 = vmatprep.subr.mxu0 0.0
    %6971 = vmatpush1.msra.mxu0 0.0
    %6972 = vmatprep.subr.mxu0 0.0
    %6973 = vmatpush1.msra.mxu0 0.0
    %6974 = vmatprep.subr.mxu0 0.0
    %6975 = vmatpush1.msra.mxu0 0.0
    %6976 = vmatprep.subr.mxu0 0.0
    %6977 = vmatpush1.msra.mxu0 0.0
    %6978 = vmatprep.subr.mxu0 0.0
    %6979 = vmatpush1.msra.mxu0 0.0
    %6980 = vmatprep.subr.mxu0 0.0
    %6981 = vmatpush1.msra.mxu0 0.0
    %6982 = vmatprep.subr.mxu0 0.0
    %6983 = vmatpush1.msra.mxu0 0.0
    %6984 = vmatprep.subr.mxu0 0.0
    %6985 = vmatpush1.msra.mxu0 0.0
    %6986 = vmatprep.subr.mxu0 0.0
    %6987 = vmatpush1.msra.mxu0 0.0
    %6988 = vmatprep.subr.mxu0 0.0
    %6989 = vmatpush1.msra.mxu0 0.0
    %6990 = vmatprep.subr.mxu0 0.0
    %6991 = vmatpush1.msra.mxu0 0.0
    %6992 = vmatprep.subr.mxu0 0.0
    %6993 = vmatpush1.msra.mxu0 0.0
    %6994 = vmatprep.subr.mxu0 0.0
    %6995 = vmatpush1.msra.mxu0 0.0
    %6996 = vmatprep.subr.mxu0 0.0
    %6997 = vmatpush1.msra.mxu0 0.0
    %6998 = vmatprep.subr.mxu0 0.0
    %6999 = vmatpush1.msra.mxu0 0.0
    %7000 = vmatprep.subr.mxu0 0.0
    %7001 = vmatpush1.msra.mxu0 0.0
    %7002 = vmatprep.mubr.f32.mxu0 0.0
    %7003 = vmatmul.mubr.f32.gmra.mrb[0].mxu0 %v6933
    %v7004 = vpop.f32.mrb[0].mxu0
    %v7005 = vadd.f32 0.0, %v7004
    %v7006 = vpop.f32.mrb[0].mxu0
    %7007 = vmatprep.mubr.f32.mxu0 0.0
    %7008 = vmatmul.mubr.f32.gmra.mrb[0].mxu0 %v6936
    %v7009 = vpop.f32.mrb[0].mxu0
    %v7010 = vadd.f32 0.0, %v7009
    %v7011 = vpop.f32.mrb[0].mxu0
    %7012 = vdwg.mxu0
    %v7013 = vadd.f32 %v6813, %v7005
    %v7014 = vadd.f32 %v6818, %v7010
    %v7015 = vmul.f32 %v6344, %v49
    %v7016 = vmul.f32 %v6349, %v49
    %v7018 = vsel %vm285, %v7015, 0
    %v7021 = vsel %vm285, %v7016, 0
    %7023 = vmatprep.subr.mxu0 0.0
    %7024 = vmatpush1.xpose.msra.mxu0 %v7018
    %7025 = vmatprep.subr.mxu0 0.0
    %7026 = vmatpush1.xpose.msra.mxu0 %v7021
    %7027 = vmatprep.subr.mxu0 0.0
    %7028 = vmatpush1.xpose.msra.mxu0 0.0
    %7029 = vmatprep.subr.mxu0 0.0
    %7030 = vmatpush1.xpose.msra.mxu0 0.0
    %7031 = vmatprep.subr.mxu0 0.0
    %7032 = vmatpush1.xpose.msra.mxu0 0.0
    %7033 = vmatprep.subr.mxu0 0.0
    %7034 = vmatpush1.xpose.msra.mxu0 0.0
    %7035 = vmatprep.subr.mxu0 0.0
    %7036 = vmatpush1.xpose.msra.mxu0 0.0
    %7037 = vmatprep.subr.mxu0 0.0
    %7038 = vmatpush1.xpose.msra.mxu0 0.0
    %7039 = vmatprep.subr.mxu0 0.0
    %7040 = vmatpush1.xpose.msra.mxu0 0.0
    %7041 = vmatprep.subr.mxu0 0.0
    %7042 = vmatpush1.xpose.msra.mxu0 0.0
    %7043 = vmatprep.subr.mxu0 0.0
    %7044 = vmatpush1.xpose.msra.mxu0 0.0
    %7045 = vmatprep.subr.mxu0 0.0
    %7046 = vmatpush1.xpose.msra.mxu0 0.0
    %7047 = vmatprep.subr.mxu0 0.0
    %7048 = vmatpush1.xpose.msra.mxu0 0.0
    %7049 = vmatprep.subr.mxu0 0.0
    %7050 = vmatpush1.xpose.msra.mxu0 0.0
    %7051 = vmatprep.subr.mxu0 0.0
    %7052 = vmatpush1.xpose.msra.mxu0 0.0
    %7053 = vmatprep.subr.mxu0 0.0
    %7054 = vmatpush1.xpose.msra.mxu0 0.0
    %7055 = vmatprep.subr.mxu0 0.0
    %7056 = vmatpush1.xpose.msra.mxu0 0.0
    %7057 = vmatprep.subr.mxu0 0.0
    %7058 = vmatpush1.xpose.msra.mxu0 0.0
    %7059 = vmatprep.subr.mxu0 0.0
    %7060 = vmatpush1.xpose.msra.mxu0 0.0
    %7061 = vmatprep.subr.mxu0 0.0
    %7062 = vmatpush1.xpose.msra.mxu0 0.0
    %7063 = vmatprep.subr.mxu0 0.0
    %7064 = vmatpush1.xpose.msra.mxu0 0.0
    %7065 = vmatprep.subr.mxu0 0.0
    %7066 = vmatpush1.xpose.msra.mxu0 0.0
    %7067 = vmatprep.subr.mxu0 0.0
    %7068 = vmatpush1.xpose.msra.mxu0 0.0
    %7069 = vmatprep.subr.mxu0 0.0
    %7070 = vmatpush1.xpose.msra.mxu0 0.0
    %7071 = vmatprep.subr.mxu0 0.0
    %7072 = vmatpush1.xpose.msra.mxu0 0.0
    %7073 = vmatprep.subr.mxu0 0.0
    %7074 = vmatpush1.xpose.msra.mxu0 0.0
    %7075 = vmatprep.subr.mxu0 0.0
    %7076 = vmatpush1.xpose.msra.mxu0 0.0
    %7077 = vmatprep.subr.mxu0 0.0
    %7078 = vmatpush1.xpose.msra.mxu0 0.0
    %7079 = vmatprep.subr.mxu0 0.0
    %7080 = vmatpush1.xpose.msra.mxu0 0.0
    %7081 = vmatprep.subr.mxu0 0.0
    %7082 = vmatpush1.xpose.msra.mxu0 0.0
    %7083 = vmatprep.subr.mxu0 0.0
    %7084 = vmatpush1.xpose.msra.mxu0 0.0
    %7085 = vmatprep.subr.mxu0 0.0
    %7086 = vmatpush1.xpose.msra.mxu0 0.0
    %7087 = vmatprep.mubr.f32.mxu0 0.0
    %7088 = vmatmul.mubr.f32.gmra.mrb[0].mxu0 %v6434
    %v7089 = vpop.f32.mrb[0].mxu0
    %v7090 = vadd.f32 0.0, %v7089
    %v7091 = vpop.f32.mrb[0].mxu0
    %7092 = vmatprep.mubr.f32.mxu0 0.0
    %7093 = vmatmul.mubr.f32.gmra.mrb[0].mxu0 %v6437
    %v7094 = vpop.f32.mrb[0].mxu0
    %v7095 = vadd.f32 0.0, %v7094
    %v7096 = vpop.f32.mrb[0].mxu0
    %7097 = vdwg.mxu0
    %v7098 = vmul.f32 %v7090, 0.35355338
    %v7099 = vmul.f32 %v7095, 0.35355338
    %v7100 = vadd.f32 %v7098, %v73
    %v7101 = vadd.f32 %v7099, %v74
    %v7102 = vsel %vm4927, %v7100, -inf
    %7103 = vmax.xlane.f32.xlu0 %v7102
    %v7104 = vpop.xlane.xlu0 %7103
    %v7105 = vsel %vm4927, %v7101, -inf
    %7106 = vmax.xlane.f32.xlu0 %v7105
    %v7107 = vpop.xlane.xlu0 %7106
    %v7108 = vsub.f32 %v7100, %v7104
    %v7109 = vsub.f32 %v7101, %v7107
    %v7110 = vmul.f32 %v7108, 1.442695
    %v7111 = vpow.pop %v7110
    %v7112 = vmul.f32 %v7109, 1.442695
    %v7113 = vpow.pop %v7112
    %v7114 = vsel %vm4927, %v7111, 0.0
    %7115 = vadd.xlane.f32.xlu0 %v7114
    %v7116 = vpop.xlane.xlu0 %7115
    %v7117 = vsel %vm4927, %v7113, 0.0
    %7118 = vadd.xlane.f32.xlu0 %v7117
    %v7119 = vpop.xlane.xlu0 %7118
    %v7120 = vrcp.pop %v7116
    %v7121 = vrcp.pop %v7119
    %v7122 = vmul.f32 %v7111, %v7120
    %v7123 = vmul.f32 %v7113, %v7121
    %v7124 = vmul.f32 %v6423, %v49
    %v7125 = vmul.f32 %v6428, %v49
    %v7127 = vsel %vm4927, %v7122, 0
    %v7130 = vsel %vm4927, %v7123, 0
    %7132 = vmatprep.subr.mxu0 0.0
    %7133 = vmatpush1.msra.mxu0 %v7124
    %7134 = vmatprep.subr.mxu0 0.0
    %7135 = vmatpush1.msra.mxu0 %v7125
    %7136 = vmatprep.subr.mxu0 0.0
    %7137 = vmatpush1.msra.mxu0 0.0
    %7138 = vmatprep.subr.mxu0 0.0
    %7139 = vmatpush1.msra.mxu0 0.0
    %7140 = vmatprep.subr.mxu0 0.0
    %7141 = vmatpush1.msra.mxu0 0.0
    %7142 = vmatprep.subr.mxu0 0.0
    %7143 = vmatpush1.msra.mxu0 0.0
    %7144 = vmatprep.subr.mxu0 0.0
    %7145 = vmatpush1.msra.mxu0 0.0
    %7146 = vmatprep.subr.mxu0 0.0
    %7147 = vmatpush1.msra.mxu0 0.0
    %7148 = vmatprep.subr.mxu0 0.0
    %7149 = vmatpush1.msra.mxu0 0.0
    %7150 = vmatprep.subr.mxu0 0.0
    %7151 = vmatpush1.msra.mxu0 0.0
    %7152 = vmatprep.subr.mxu0 0.0
    %7153 = vmatpush1.msra.mxu0 0.0
    %7154 = vmatprep.subr.mxu0 0.0
    %7155 = vmatpush1.msra.mxu0 0.0
    %7156 = vmatprep.subr.mxu0 0.0
    %7157 = vmatpush1.msra.mxu0 0.0
    %7158 = vmatprep.subr.mxu0 0.0
    %7159 = vmatpush1.msra.mxu0 0.0
    %7160 = vmatprep.subr.mxu0 0.0
    %7161 = vmatpush1.msra.mxu0 0.0
    %7162 = vmatprep.subr.mxu0 0.0
    %7163 = vmatpush1.msra.mxu0 0.0
    %7164 = vmatprep.subr.mxu0 0.0
    %7165 = vmatpush1.msra.mxu0 0.0
    %7166 = vmatprep.subr.mxu0 0.0
    %7167 = vmatpush1.msra.mxu0 0.0
    %7168 = vmatprep.subr.mxu0 0.0
    %7169 = vmatpush1.msra.mxu0 0.0
    %7170 = vmatprep.subr.mxu0 0.0
    %7171 = vmatpush1.msra.mxu0 0.0
    %7172 = vmatprep.subr.mxu0 0.0
    %7173 = vmatpush1.msra.mxu0 0.0
    %7174 = vmatprep.subr.mxu0 0.0
    %7175 = vmatpush1.msra.mxu0 0.0
    %7176 = vmatprep.subr.mxu0 0.0
    %7177 = vmatpush1.msra.mxu0 0.0
    %7178 = vmatprep.subr.mxu0 0.0
    %7179 = vmatpush1.msra.mxu0 0.0
    %7180 = vmatprep.subr.mxu0 0.0
    %7181 = vmatpush1.msra.mxu0 0.0
    %7182 = vmatprep.subr.mxu0 0.0
    %7183 = vmatpush1.msra.mxu0 0.0
    %7184 = vmatprep.subr.mxu0 0.0
    %7185 = vmatpush1.msra.mxu0 0.0
    %7186 = vmatprep.subr.mxu0 0.0
    %7187 = vmatpush1.msra.mxu0 0.0
    %7188 = vmatprep.subr.mxu0 0.0
    %7189 = vmatpush1.msra.mxu0 0.0
    %7190 = vmatprep.subr.mxu0 0.0
    %7191 = vmatpush1.msra.mxu0 0.0
    %7192 = vmatprep.subr.mxu0 0.0
    %7193 = vmatpush1.msra.mxu0 0.0
    %7194 = vmatprep.subr.mxu0 0.0
    %7195 = vmatpush1.msra.mxu0 0.0
    %7196 = vmatprep.mubr.f32.mxu0 0.0
    %7197 = vmatmul.mubr.f32.gmra.mrb[0].mxu0 %v7127
    %v7198 = vpop.f32.mrb[0].mxu0
    %v7199 = vadd.f32 0.0, %v7198
    %v7200 = vpop.f32.mrb[0].mxu0
    %7201 = vmatprep.mubr.f32.mxu0 0.0
    %7202 = vmatmul.mubr.f32.gmra.mrb[0].mxu0 %v7130
    %v7203 = vpop.f32.mrb[0].mxu0
    %v7204 = vadd.f32 0.0, %v7203
    %v7205 = vpop.f32.mrb[0].mxu0
    %7206 = vdwg.mxu0
    %v7207 = vadd.f32 %v7013, %v7199
    %v7208 = vadd.f32 %v7014, %v7204
    %v7209 = vlaneseq
    %v7210 = vshrl.u32 %v7209, 7
    %v7211 = vsub.s32 2, %v7210
    %v7212 = vrot.slane %v26, %v7211
    %v7214 = vsel %vm285, %v7207, 0
    %v7217 = vsel %vm285, %v7208, 0
    %7219 = vmatprep.subr.mxu0 0.0
    %7220 = vmatpush1.msra.mxu0 %v6184
    %7221 = vmatprep.subr.mxu0 0.0
    %7222 = vmatpush1.msra.mxu0 %v6185
    %7223 = vmatprep.subr.mxu0 0.0
    %7224 = vmatpush1.msra.mxu0 %v6186
    %7225 = vmatprep.subr.mxu0 0.0
    %7226 = vmatpush1.msra.mxu0 %v6187
    %7227 = vmatprep.subr.mxu0 0.0
    %7228 = vmatpush1.msra.mxu0 0.0
    %7229 = vmatprep.subr.mxu0 0.0
    %7230 = vmatpush1.msra.mxu0 0.0
    %7231 = vmatprep.subr.mxu0 0.0
    %7232 = vmatpush1.msra.mxu0 0.0
    %7233 = vmatprep.subr.mxu0 0.0
    %7234 = vmatpush1.msra.mxu0 0.0
    %7235 = vmatprep.subr.mxu0 0.0
    %7236 = vmatpush1.msra.mxu0 0.0
    %7237 = vmatprep.subr.mxu0 0.0
    %7238 = vmatpush1.msra.mxu0 0.0
    %7239 = vmatprep.subr.mxu0 0.0
    %7240 = vmatpush1.msra.mxu0 0.0
    %7241 = vmatprep.subr.mxu0 0.0
    %7242 = vmatpush1.msra.mxu0 0.0
    %7243 = vmatprep.subr.mxu0 0.0
    %7244 = vmatpush1.msra.mxu0 0.0
    %7245 = vmatprep.subr.mxu0 0.0
    %7246 = vmatpush1.msra.mxu0 0.0
    %7247 = vmatprep.subr.mxu0 0.0
    %7248 = vmatpush1.msra.mxu0 0.0
    %7249 = vmatprep.subr.mxu0 0.0
    %7250 = vmatpush1.msra.mxu0 0.0
    %7251 = vmatprep.subr.mxu0 0.0
    %7252 = vmatpush1.msra.mxu0 0.0
    %7253 = vmatprep.subr.mxu0 0.0
    %7254 = vmatpush1.msra.mxu0 0.0
    %7255 = vmatprep.subr.mxu0 0.0
    %7256 = vmatpush1.msra.mxu0 0.0
    %7257 = vmatprep.subr.mxu0 0.0
    %7258 = vmatpush1.msra.mxu0 0.0
    %7259 = vmatprep.subr.mxu0 0.0
    %7260 = vmatpush1.msra.mxu0 0.0
    %7261 = vmatprep.subr.mxu0 0.0
    %7262 = vmatpush1.msra.mxu0 0.0
    %7263 = vmatprep.subr.mxu0 0.0
    %7264 = vmatpush1.msra.mxu0 0.0
    %7265 = vmatprep.subr.mxu0 0.0
    %7266 = vmatpush1.msra.mxu0 0.0
    %7267 = vmatprep.subr.mxu0 0.0
    %7268 = vmatpush1.msra.mxu0 0.0
    %7269 = vmatprep.subr.mxu0 0.0
    %7270 = vmatpush1.msra.mxu0 0.0
    %7271 = vmatprep.subr.mxu0 0.0
    %7272 = vmatpush1.msra.mxu0 0.0
    %7273 = vmatprep.subr.mxu0 0.0
    %7274 = vmatpush1.msra.mxu0 0.0
    %7275 = vmatprep.subr.mxu0 0.0
    %7276 = vmatpush1.msra.mxu0 0.0
    %7277 = vmatprep.subr.mxu0 0.0
    %7278 = vmatpush1.msra.mxu0 0.0
    %7279 = vmatprep.subr.mxu0 0.0
    %7280 = vmatpush1.msra.mxu0 0.0
    %7281 = vmatprep.subr.mxu0 0.0
    %7282 = vmatpush1.msra.mxu0 0.0
    %7283 = vmatprep.mubr.f32.mxu0 0.0
    %7284 = vmatmul.mubr.f32.gmra.mrb[0].mxu0 %v7214
    %v7285 = vpop.f32.mrb[0].mxu0
    %v7286 = vadd.f32 %v7212, %v7285
    %v7287 = vpop.f32.mrb[0].mxu0
    %7288 = vmatprep.mubr.f32.mxu0 0.0
    %7289 = vmatmul.mubr.f32.gmra.mrb[0].mxu0 %v7217
    %v7290 = vpop.f32.mrb[0].mxu0
    %v7291 = vadd.f32 %v7212, %v7290
    %v7292 = vpop.f32.mrb[0].mxu0
    %7293 = vdwg.mxu0
    %v7294 = vadd.f32 %v6170, %v7286
    %v7295 = vadd.f32 %v6171, %v7291
    %v7296 = vsel %vm285, %v7294, 0.0
    %7297 = vadd.xlane.f32.xlu0 %v7296
    %v7298 = vpop.xlane.xlu0 %7297
    %v7299 = vsel %vm285, %v7295, 0.0
    %7300 = vadd.xlane.f32.xlu0 %v7299
    %v7301 = vpop.xlane.xlu0 %7300
    %v7302 = vmul.f32 %v7298, %v1711
    %v7303 = vmul.f32 %v7301, %v1711
    %v7304 = vsub.f32 %v7294, %v7302
    %v7305 = vsub.f32 %v7295, %v7303
    %v7306 = vmul.f32 %v7304, %v7304
    %v7307 = vmul.f32 %v7305, %v7305
    %v7308 = vsel %vm285, %v7306, 0.0
    %7309 = vadd.xlane.f32.xlu0 %v7308
    %v7310 = vpop.xlane.xlu0 %7309
    %v7311 = vsel %vm285, %v7307, 0.0
    %7312 = vadd.xlane.f32.xlu0 %v7311
    %v7313 = vpop.xlane.xlu0 %7312
    %v7314 = vmul.f32 %v7310, %v1711
    %v7315 = vmul.f32 %v7313, %v1711
    %v7316 = vadd.f32 %v7314, 1e-05
    %v7317 = vadd.f32 %v7315, 1e-05
    %v7318 = vrsqrt.pop %v7316
    %v7319 = vrsqrt.pop %v7317
    %v7320 = vmul.f32 %v7304, %v7318
    %v7321 = vmul.f32 %v7305, %v7319
    %v7322 = vlaneseq
    %v7323 = vshrl.u32 %v7322, 7
    %v7324 = vsub.s32 7, %v7323
    %v7325 = vrot.slane %v26, %v7324
    %v7326 = vmul.f32 %v7320, %v7325
    %v7327 = vmul.f32 %v7321, %v7325
    %v7328 = vlaneseq
    %v7329 = vshrl.u32 %v7328, 7
    %v7330 = vsub.s32 0, %v7329
    %v7331 = vrot.slane %v27, %v7330
    %v7332 = vadd.f32 %v7326, %v7331
    %v7333 = vadd.f32 %v7327, %v7331
    %v7334 = vld [vmem:[%s0 + $0x550] sm:$0xff]
    %v7335 = vld [vmem:[%s0 + $0x558] sm:$0xff]
    %v7336 = vld [vmem:[%s0 + $0x560] sm:$0xff]
    %v7337 = vld [vmem:[%s0 + $0x568] sm:$0xff]
    %v7338 = vlaneseq
    %v7339 = vshrl.u32 %v7338, 7
    %v7340 = vsub.s32 3, %v7339
    %v7341 = vrot.slane %v26, %v7340
    %7342 = vmatprep.subr.mxu0 0.0
    %7343 = vmatpush1.msra.mxu0 %v7334
    %7344 = vmatprep.subr.mxu0 0.0
    %7345 = vmatpush1.msra.mxu0 %v7335
    %7346 = vmatprep.subr.mxu0 0.0
    %7347 = vmatpush1.msra.mxu0 %v7336
    %7348 = vmatprep.subr.mxu0 0.0
    %7349 = vmatpush1.msra.mxu0 %v7337
    %7350 = vmatprep.subr.mxu0 0.0
    %7351 = vmatpush1.msra.mxu0 0.0
    %7352 = vmatprep.subr.mxu0 0.0
    %7353 = vmatpush1.msra.mxu0 0.0
    %7354 = vmatprep.subr.mxu0 0.0
    %7355 = vmatpush1.msra.mxu0 0.0
    %7356 = vmatprep.subr.mxu0 0.0
    %7357 = vmatpush1.msra.mxu0 0.0
    %7358 = vmatprep.subr.mxu0 0.0
    %7359 = vmatpush1.msra.mxu0 0.0
    %7360 = vmatprep.subr.mxu0 0.0
    %7361 = vmatpush1.msra.mxu0 0.0
    %7362 = vmatprep.subr.mxu0 0.0
    %7363 = vmatpush1.msra.mxu0 0.0
    %7364 = vmatprep.subr.mxu0 0.0
    %7365 = vmatpush1.msra.mxu0 0.0
    %7366 = vmatprep.subr.mxu0 0.0
    %7367 = vmatpush1.msra.mxu0 0.0
    %7368 = vmatprep.subr.mxu0 0.0
    %7369 = vmatpush1.msra.mxu0 0.0
    %7370 = vmatprep.subr.mxu0 0.0
    %7371 = vmatpush1.msra.mxu0 0.0
    %7372 = vmatprep.subr.mxu0 0.0
    %7373 = vmatpush1.msra.mxu0 0.0
    %7374 = vmatprep.subr.mxu0 0.0
    %7375 = vmatpush1.msra.mxu0 0.0
    %7376 = vmatprep.subr.mxu0 0.0
    %7377 = vmatpush1.msra.mxu0 0.0
    %7378 = vmatprep.subr.mxu0 0.0
    %7379 = vmatpush1.msra.mxu0 0.0
    %7380 = vmatprep.subr.mxu0 0.0
    %7381 = vmatpush1.msra.mxu0 0.0
    %7382 = vmatprep.subr.mxu0 0.0
    %7383 = vmatpush1.msra.mxu0 0.0
    %7384 = vmatprep.subr.mxu0 0.0
    %7385 = vmatpush1.msra.mxu0 0.0
    %7386 = vmatprep.subr.mxu0 0.0
    %7387 = vmatpush1.msra.mxu0 0.0
    %7388 = vmatprep.subr.mxu0 0.0
    %7389 = vmatpush1.msra.mxu0 0.0
    %7390 = vmatprep.subr.mxu0 0.0
    %7391 = vmatpush1.msra.mxu0 0.0
    %7392 = vmatprep.subr.mxu0 0.0
    %7393 = vmatpush1.msra.mxu0 0.0
    %7394 = vmatprep.subr.mxu0 0.0
    %7395 = vmatpush1.msra.mxu0 0.0
    %7396 = vmatprep.subr.mxu0 0.0
    %7397 = vmatpush1.msra.mxu0 0.0
    %7398 = vmatprep.subr.mxu0 0.0
    %7399 = vmatpush1.msra.mxu0 0.0
    %7400 = vmatprep.subr.mxu0 0.0
    %7401 = vmatpush1.msra.mxu0 0.0
    %7402 = vmatprep.subr.mxu0 0.0
    %7403 = vmatpush1.msra.mxu0 0.0
    %7404 = vmatprep.subr.mxu0 0.0
    %7405 = vmatpush1.msra.mxu0 0.0
    %7406 = vmatprep.mubr.f32.mxu0 0.0
    %7407 = vmatmul.mubr.f32.gmra.mrb[0].mxu0 %v5747
    %v7408 = vpop.f32.mrb[0].mxu0
    %v7409 = vadd.f32 %v7341, %v7408
    %v7410 = vpop.f32.mrb[0].mxu0
    %7411 = vdwg.mxu0
    %v7412 = vld [vmem:[%s0 + $0x570] sm:$0xff]
    %v7413 = vld [vmem:[%s0 + $0x578] sm:$0xff]
    %v7414 = vld [vmem:[%s0 + $0x580] sm:$0xff]
    %v7415 = vld [vmem:[%s0 + $0x588] sm:$0xff]
    %v7416 = vlaneseq
    %v7417 = vshrl.u32 %v7416, 7
    %v7418 = vsub.s32 4, %v7417
    %v7419 = vrot.slane %v26, %v7418
    %v7421 = vsel %vm285, %v7409, 0
    %7423 = vmatprep.subr.mxu0 0.0
    %7424 = vmatpush1.msra.mxu0 %v7412
    %7425 = vmatprep.subr.mxu0 0.0
    %7426 = vmatpush1.msra.mxu0 %v7413
    %7427 = vmatprep.subr.mxu0 0.0
    %7428 = vmatpush1.msra.mxu0 %v7414
    %7429 = vmatprep.subr.mxu0 0.0
    %7430 = vmatpush1.msra.mxu0 %v7415
    %7431 = vmatprep.subr.mxu0 0.0
    %7432 = vmatpush1.msra.mxu0 0.0
    %7433 = vmatprep.subr.mxu0 0.0
    %7434 = vmatpush1.msra.mxu0 0.0
    %7435 = vmatprep.subr.mxu0 0.0
    %7436 = vmatpush1.msra.mxu0 0.0
    %7437 = vmatprep.subr.mxu0 0.0
    %7438 = vmatpush1.msra.mxu0 0.0
    %7439 = vmatprep.subr.mxu0 0.0
    %7440 = vmatpush1.msra.mxu0 0.0
    %7441 = vmatprep.subr.mxu0 0.0
    %7442 = vmatpush1.msra.mxu0 0.0
    %7443 = vmatprep.subr.mxu0 0.0
    %7444 = vmatpush1.msra.mxu0 0.0
    %7445 = vmatprep.subr.mxu0 0.0
    %7446 = vmatpush1.msra.mxu0 0.0
    %7447 = vmatprep.subr.mxu0 0.0
    %7448 = vmatpush1.msra.mxu0 0.0
    %7449 = vmatprep.subr.mxu0 0.0
    %7450 = vmatpush1.msra.mxu0 0.0
    %7451 = vmatprep.subr.mxu0 0.0
    %7452 = vmatpush1.msra.mxu0 0.0
    %7453 = vmatprep.subr.mxu0 0.0
    %7454 = vmatpush1.msra.mxu0 0.0
    %7455 = vmatprep.subr.mxu0 0.0
    %7456 = vmatpush1.msra.mxu0 0.0
    %7457 = vmatprep.subr.mxu0 0.0
    %7458 = vmatpush1.msra.mxu0 0.0
    %7459 = vmatprep.subr.mxu0 0.0
    %7460 = vmatpush1.msra.mxu0 0.0
    %7461 = vmatprep.subr.mxu0 0.0
    %7462 = vmatpush1.msra.mxu0 0.0
    %7463 = vmatprep.subr.mxu0 0.0
    %7464 = vmatpush1.msra.mxu0 0.0
    %7465 = vmatprep.subr.mxu0 0.0
    %7466 = vmatpush1.msra.mxu0 0.0
    %7467 = vmatprep.subr.mxu0 0.0
    %7468 = vmatpush1.msra.mxu0 0.0
    %7469 = vmatprep.subr.mxu0 0.0
    %7470 = vmatpush1.msra.mxu0 0.0
    %7471 = vmatprep.subr.mxu0 0.0
    %7472 = vmatpush1.msra.mxu0 0.0
    %7473 = vmatprep.subr.mxu0 0.0
    %7474 = vmatpush1.msra.mxu0 0.0
    %7475 = vmatprep.subr.mxu0 0.0
    %7476 = vmatpush1.msra.mxu0 0.0
    %7477 = vmatprep.subr.mxu0 0.0
    %7478 = vmatpush1.msra.mxu0 0.0
    %7479 = vmatprep.subr.mxu0 0.0
    %7480 = vmatpush1.msra.mxu0 0.0
    %7481 = vmatprep.subr.mxu0 0.0
    %7482 = vmatpush1.msra.mxu0 0.0
    %7483 = vmatprep.subr.mxu0 0.0
    %7484 = vmatpush1.msra.mxu0 0.0
    %7485 = vmatprep.subr.mxu0 0.0
    %7486 = vmatpush1.msra.mxu0 0.0
    %7487 = vmatprep.mubr.f32.mxu0 0.0
    %7488 = vmatmul.mubr.f32.gmra.mrb[0].mxu0 %v7421
    %v7489 = vpop.f32.mrb[0].mxu0
    %v7490 = vadd.f32 %v7419, %v7489
    %v7491 = vpop.f32.mrb[0].mxu0
    %7492 = vdwg.mxu0
    %v7493 = vlaneseq
    %v7494 = vshrl.u32 %v7493, 7
    %v7495 = vsub.s32 0, %v7494
    %v7496 = vrot.slane %v7490, %v7495
    %v7497 = vlaneseq
    %v7498 = vshrl.u32 %v7497, 7
    %v7499 = vsub.s32 1, %v7498
    %v7500 = vrot.slane %v7490, %v7499
    %v7501 = vadd.f32 %v7332, %v7496
    %v7502 = vadd.f32 %v7333, %v7500
    %v7503 = vsel %vm285, %v7501, 0.0
    %7504 = vadd.xlane.f32.xlu0 %v7503
    %v7505 = vpop.xlane.xlu0 %7504
    %v7506 = vsel %vm285, %v7502, 0.0
    %7507 = vadd.xlane.f32.xlu0 %v7506
    %v7508 = vpop.xlane.xlu0 %7507
    %v7509 = vmul.f32 %v7505, %v1711
    %v7510 = vmul.f32 %v7508, %v1711
    %v7511 = vsub.f32 %v7501, %v7509
    %v7512 = vsub.f32 %v7502, %v7510
    %v7513 = vmul.f32 %v7511, %v7511
    %v7514 = vmul.f32 %v7512, %v7512
    %v7515 = vsel %vm285, %v7513, 0.0
    %7516 = vadd.xlane.f32.xlu0 %v7515
    %v7517 = vpop.xlane.xlu0 %7516
    %v7518 = vsel %vm285, %v7514, 0.0
    %7519 = vadd.xlane.f32.xlu0 %v7518
    %v7520 = vpop.xlane.xlu0 %7519
    %v7521 = vmul.f32 %v7517, %v1711
    %v7522 = vmul.f32 %v7520, %v1711
    %v7523 = vadd.f32 %v7521, 1e-05
    %v7524 = vadd.f32 %v7522, 1e-05
    %v7525 = vrsqrt.pop %v7523
    %v7526 = vrsqrt.pop %v7524
    %v7527 = vmul.f32 %v7511, %v7525
    %v7528 = vmul.f32 %v7512, %v7526
    %v7529 = vlaneseq
    %v7530 = vshrl.u32 %v7529, 7
    %v7531 = vsub.s32 1, %v7530
    %v7532 = vrot.slane %v27, %v7531
    %v7533 = vmul.f32 %v7527, %v7532
    %v7534 = vmul.f32 %v7528, %v7532
    %v7535 = vlaneseq
    %v7536 = vshrl.u32 %v7535, 7
    %v7537 = vsub.s32 2, %v7536
    %v7538 = vrot.slane %v27, %v7537
    %v7539 = vadd.f32 %v7533, %v7538
    %v7540 = vadd.f32 %v7534, %v7538
    %v7541 = vld [vmem:[%s0 + $0x590] sm:$0xff]
    %v7542 = vld [vmem:[%s0 + $0x598] sm:$0xff]
    %v7543 = vld [vmem:[%s0 + $0x5a0] sm:$0xff]
    %v7544 = vld [vmem:[%s0 + $0x5a8] sm:$0xff]
    %v7545 = vlaneseq
    %v7546 = vshrl.u32 %v7545, 7
    %v7547 = vsub.s32 5, %v7546
    %v7548 = vrot.slane %v26, %v7547
    %v7550 = vsel %vm285, %v7539, 0
    %v7553 = vsel %vm285, %v7540, 0
    %7555 = vmatprep.subr.mxu0 0.0
    %7556 = vmatpush1.msra.mxu0 %v7541
    %7557 = vmatprep.subr.mxu0 0.0
    %7558 = vmatpush1.msra.mxu0 %v7542
    %7559 = vmatprep.subr.mxu0 0.0
    %7560 = vmatpush1.msra.mxu0 %v7543
    %7561 = vmatprep.subr.mxu0 0.0
    %7562 = vmatpush1.msra.mxu0 %v7544
    %7563 = vmatprep.subr.mxu0 0.0
    %7564 = vmatpush1.msra.mxu0 0.0
    %7565 = vmatprep.subr.mxu0 0.0
    %7566 = vmatpush1.msra.mxu0 0.0
    %7567 = vmatprep.subr.mxu0 0.0
    %7568 = vmatpush1.msra.mxu0 0.0
    %7569 = vmatprep.subr.mxu0 0.0
    %7570 = vmatpush1.msra.mxu0 0.0
    %7571 = vmatprep.subr.mxu0 0.0
    %7572 = vmatpush1.msra.mxu0 0.0
    %7573 = vmatprep.subr.mxu0 0.0
    %7574 = vmatpush1.msra.mxu0 0.0
    %7575 = vmatprep.subr.mxu0 0.0
    %7576 = vmatpush1.msra.mxu0 0.0
    %7577 = vmatprep.subr.mxu0 0.0
    %7578 = vmatpush1.msra.mxu0 0.0
    %7579 = vmatprep.subr.mxu0 0.0
    %7580 = vmatpush1.msra.mxu0 0.0
    %7581 = vmatprep.subr.mxu0 0.0
    %7582 = vmatpush1.msra.mxu0 0.0
    %7583 = vmatprep.subr.mxu0 0.0
    %7584 = vmatpush1.msra.mxu0 0.0
    %7585 = vmatprep.subr.mxu0 0.0
    %7586 = vmatpush1.msra.mxu0 0.0
    %7587 = vmatprep.subr.mxu0 0.0
    %7588 = vmatpush1.msra.mxu0 0.0
    %7589 = vmatprep.subr.mxu0 0.0
    %7590 = vmatpush1.msra.mxu0 0.0
    %7591 = vmatprep.subr.mxu0 0.0
    %7592 = vmatpush1.msra.mxu0 0.0
    %7593 = vmatprep.subr.mxu0 0.0
    %7594 = vmatpush1.msra.mxu0 0.0
    %7595 = vmatprep.subr.mxu0 0.0
    %7596 = vmatpush1.msra.mxu0 0.0
    %7597 = vmatprep.subr.mxu0 0.0
    %7598 = vmatpush1.msra.mxu0 0.0
    %7599 = vmatprep.subr.mxu0 0.0
    %7600 = vmatpush1.msra.mxu0 0.0
    %7601 = vmatprep.subr.mxu0 0.0
    %7602 = vmatpush1.msra.mxu0 0.0
    %7603 = vmatprep.subr.mxu0 0.0
    %7604 = vmatpush1.msra.mxu0 0.0
    %7605 = vmatprep.subr.mxu0 0.0
    %7606 = vmatpush1.msra.mxu0 0.0
    %7607 = vmatprep.subr.mxu0 0.0
    %7608 = vmatpush1.msra.mxu0 0.0
    %7609 = vmatprep.subr.mxu0 0.0
    %7610 = vmatpush1.msra.mxu0 0.0
    %7611 = vmatprep.subr.mxu0 0.0
    %7612 = vmatpush1.msra.mxu0 0.0
    %7613 = vmatprep.subr.mxu0 0.0
    %7614 = vmatpush1.msra.mxu0 0.0
    %7615 = vmatprep.subr.mxu0 0.0
    %7616 = vmatpush1.msra.mxu0 0.0
    %7617 = vmatprep.subr.mxu0 0.0
    %7618 = vmatpush1.msra.mxu0 0.0
    %7619 = vmatprep.mubr.f32.mxu0 0.0
    %7620 = vmatmul.mubr.f32.gmra.mrb[0].mxu0 %v7550
    %v7621 = vpop.f32.mrb[0].mxu0
    %v7622 = vadd.f32 %v7548, %v7621
    %v7623 = vpop.f32.mrb[0].mxu0
    %7624 = vmatprep.mubr.f32.mxu0 0.0
    %7625 = vmatmul.mubr.f32.gmra.mrb[0].mxu0 %v7553
    %v7626 = vpop.f32.mrb[0].mxu0
    %v7627 = vadd.f32 %v7548, %v7626
    %v7628 = vpop.f32.mrb[0].mxu0
    %7629 = vdwg.mxu0
    %v7630 = vmax.f32 %v7622, 0.0
    %v7631 = vmax.f32 %v7627, 0.0
    %v7632 = vld [vmem:[%s0 + $0x5b0] sm:$0xff]
    %v7633 = vld [vmem:[%s0 + $0x5b8] sm:$0xff]
    %v7634 = vld [vmem:[%s0 + $0x5c0] sm:$0xff]
    %v7635 = vld [vmem:[%s0 + $0x5c8] sm:$0xff]
    %v7636 = vld [vmem:[%s0 + $0x5d0] sm:$0xff]
    %v7637 = vld [vmem:[%s0 + $0x5d8] sm:$0xff]
    %v7638 = vld [vmem:[%s0 + $0x5e0] sm:$0xff]
    %v7639 = vld [vmem:[%s0 + $0x5e8] sm:$0xff]
    %v7640 = vlaneseq
    %v7641 = vshrl.u32 %v7640, 7
    %v7642 = vsub.s32 6, %v7641
    %v7643 = vrot.slane %v26, %v7642
    %v7645 = vsel %vm1889, %v7630, 0
    %v7648 = vsel %vm1889, %v7631, 0
    %7650 = vmatprep.subr.mxu0 0.0
    %7651 = vmatpush1.msra.mxu0 %v7632
    %7652 = vmatprep.subr.mxu0 0.0
    %7653 = vmatpush1.msra.mxu0 %v7633
    %7654 = vmatprep.subr.mxu0 0.0
    %7655 = vmatpush1.msra.mxu0 %v7634
    %7656 = vmatprep.subr.mxu0 0.0
    %7657 = vmatpush1.msra.mxu0 %v7635
    %7658 = vmatprep.subr.mxu0 0.0
    %7659 = vmatpush1.msra.mxu0 %v7636
    %7660 = vmatprep.subr.mxu0 0.0
    %7661 = vmatpush1.msra.mxu0 %v7637
    %7662 = vmatprep.subr.mxu0 0.0
    %7663 = vmatpush1.msra.mxu0 %v7638
    %7664 = vmatprep.subr.mxu0 0.0
    %7665 = vmatpush1.msra.mxu0 %v7639
    %7666 = vmatprep.subr.mxu0 0.0
    %7667 = vmatpush1.msra.mxu0 0.0
    %7668 = vmatprep.subr.mxu0 0.0
    %7669 = vmatpush1.msra.mxu0 0.0
    %7670 = vmatprep.subr.mxu0 0.0
    %7671 = vmatpush1.msra.mxu0 0.0
    %7672 = vmatprep.subr.mxu0 0.0
    %7673 = vmatpush1.msra.mxu0 0.0
    %7674 = vmatprep.subr.mxu0 0.0
    %7675 = vmatpush1.msra.mxu0 0.0
    %7676 = vmatprep.subr.mxu0 0.0
    %7677 = vmatpush1.msra.mxu0 0.0
    %7678 = vmatprep.subr.mxu0 0.0
    %7679 = vmatpush1.msra.mxu0 0.0
    %7680 = vmatprep.subr.mxu0 0.0
    %7681 = vmatpush1.msra.mxu0 0.0
    %7682 = vmatprep.subr.mxu0 0.0
    %7683 = vmatpush1.msra.mxu0 0.0
    %7684 = vmatprep.subr.mxu0 0.0
    %7685 = vmatpush1.msra.mxu0 0.0
    %7686 = vmatprep.subr.mxu0 0.0
    %7687 = vmatpush1.msra.mxu0 0.0
    %7688 = vmatprep.subr.mxu0 0.0
    %7689 = vmatpush1.msra.mxu0 0.0
    %7690 = vmatprep.subr.mxu0 0.0
    %7691 = vmatpush1.msra.mxu0 0.0
    %7692 = vmatprep.subr.mxu0 0.0
    %7693 = vmatpush1.msra.mxu0 0.0
    %7694 = vmatprep.subr.mxu0 0.0
    %7695 = vmatpush1.msra.mxu0 0.0
    %7696 = vmatprep.subr.mxu0 0.0
    %7697 = vmatpush1.msra.mxu0 0.0
    %7698 = vmatprep.subr.mxu0 0.0
    %7699 = vmatpush1.msra.mxu0 0.0
    %7700 = vmatprep.subr.mxu0 0.0
    %7701 = vmatpush1.msra.mxu0 0.0
    %7702 = vmatprep.subr.mxu0 0.0
    %7703 = vmatpush1.msra.mxu0 0.0
    %7704 = vmatprep.subr.mxu0 0.0
    %7705 = vmatpush1.msra.mxu0 0.0
    %7706 = vmatprep.subr.mxu0 0.0
    %7707 = vmatpush1.msra.mxu0 0.0
    %7708 = vmatprep.subr.mxu0 0.0
    %7709 = vmatpush1.msra.mxu0 0.0
    %7710 = vmatprep.subr.mxu0 0.0
    %7711 = vmatpush1.msra.mxu0 0.0
    %7712 = vmatprep.subr.mxu0 0.0
    %7713 = vmatpush1.msra.mxu0 0.0
    %7714 = vmatprep.mubr.f32.mxu0 0.0
    %7715 = vmatmul.mubr.f32.gmra.mrb[0].mxu0 %v7645
    %v7716 = vpop.f32.mrb[0].mxu0
    %v7717 = vadd.f32 %v7643, %v7716
    %v7718 = vpop.f32.mrb[0].mxu0
    %7719 = vmatprep.mubr.f32.mxu0 0.0
    %7720 = vmatmul.mubr.f32.gmra.mrb[0].mxu0 %v7648
    %v7721 = vpop.f32.mrb[0].mxu0
    %v7722 = vadd.f32 %v7643, %v7721
    %v7723 = vpop.f32.mrb[0].mxu0
    %7724 = vdwg.mxu0
    %v7725 = vadd.f32 %v7539, %v7717
    %v7726 = vadd.f32 %v7540, %v7722
    %v7727 = vsel %vm285, %v7725, 0.0
    %7728 = vadd.xlane.f32.xlu0 %v7727
    %v7729 = vpop.xlane.xlu0 %7728
    %v7730 = vsel %vm285, %v7726, 0.0
    %7731 = vadd.xlane.f32.xlu0 %v7730
    %v7732 = vpop.xlane.xlu0 %7731
    %v7733 = vmul.f32 %v7729, %v1711
    %v7734 = vmul.f32 %v7732, %v1711
    %v7735 = vsub.f32 %v7725, %v7733
    %v7736 = vsub.f32 %v7726, %v7734
    %v7737 = vmul.f32 %v7735, %v7735
    %v7738 = vmul.f32 %v7736, %v7736
    %v7739 = vsel %vm285, %v7737, 0.0
    %7740 = vadd.xlane.f32.xlu0 %v7739
    %v7741 = vpop.xlane.xlu0 %7740
    %v7742 = vsel %vm285, %v7738, 0.0
    %7743 = vadd.xlane.f32.xlu0 %v7742
    %v7744 = vpop.xlane.xlu0 %7743
    %v7745 = vmul.f32 %v7741, %v1711
    %v7746 = vmul.f32 %v7744, %v1711
    %v7747 = vadd.f32 %v7745, 1e-05
    %v7748 = vadd.f32 %v7746, 1e-05
    %v7749 = vrsqrt.pop %v7747
    %v7750 = vrsqrt.pop %v7748
    %v7751 = vmul.f32 %v7735, %v7749
    %v7752 = vmul.f32 %v7736, %v7750
    %v7753 = vlaneseq
    %v7754 = vshrl.u32 %v7753, 7
    %v7755 = vsub.s32 3, %v7754
    %v7756 = vrot.slane %v27, %v7755
    %v7757 = vmul.f32 %v7751, %v7756
    %v7758 = vmul.f32 %v7752, %v7756
    %v7759 = vlaneseq
    %v7760 = vshrl.u32 %v7759, 7
    %v7761 = vsub.s32 4, %v7760
    %v7762 = vrot.slane %v27, %v7761
    %v7763 = vadd.f32 %v7757, %v7762
    %v7764 = vadd.f32 %v7758, %v7762
    %v7765 = vld [vmem:[%s0 + $0x150] sm:$0xff]
    %v7766 = vld [vmem:[%s0 + $0x158] sm:$0xff]
    %v7767 = vld [vmem:[%s0 + $0x160] sm:$0xff]
    %v7768 = vld [vmem:[%s0 + $0x168] sm:$0xff]
    %v7769 = vlaneseq
    %v7770 = vshrl.u32 %v7769, 7
    %v7771 = vsub.s32 4, %v7770
    %v7772 = vrot.slane %v21, %v7771
    %v7774 = vsel %vm285, %v7763, 0
    %v7777 = vsel %vm285, %v7764, 0
    %7779 = vmatprep.subr.mxu0 0.0
    %7780 = vmatpush1.msra.mxu0 %v7765
    %7781 = vmatprep.subr.mxu0 0.0
    %7782 = vmatpush1.msra.mxu0 %v7766
    %7783 = vmatprep.subr.mxu0 0.0
    %7784 = vmatpush1.msra.mxu0 %v7767
    %7785 = vmatprep.subr.mxu0 0.0
    %7786 = vmatpush1.msra.mxu0 %v7768
    %7787 = vmatprep.subr.mxu0 0.0
    %7788 = vmatpush1.msra.mxu0 0.0
    %7789 = vmatprep.subr.mxu0 0.0
    %7790 = vmatpush1.msra.mxu0 0.0
    %7791 = vmatprep.subr.mxu0 0.0
    %7792 = vmatpush1.msra.mxu0 0.0
    %7793 = vmatprep.subr.mxu0 0.0
    %7794 = vmatpush1.msra.mxu0 0.0
    %7795 = vmatprep.subr.mxu0 0.0
    %7796 = vmatpush1.msra.mxu0 0.0
    %7797 = vmatprep.subr.mxu0 0.0
    %7798 = vmatpush1.msra.mxu0 0.0
    %7799 = vmatprep.subr.mxu0 0.0
    %7800 = vmatpush1.msra.mxu0 0.0
    %7801 = vmatprep.subr.mxu0 0.0
    %7802 = vmatpush1.msra.mxu0 0.0
    %7803 = vmatprep.subr.mxu0 0.0
    %7804 = vmatpush1.msra.mxu0 0.0
    %7805 = vmatprep.subr.mxu0 0.0
    %7806 = vmatpush1.msra.mxu0 0.0
    %7807 = vmatprep.subr.mxu0 0.0
    %7808 = vmatpush1.msra.mxu0 0.0
    %7809 = vmatprep.subr.mxu0 0.0
    %7810 = vmatpush1.msra.mxu0 0.0
    %7811 = vmatprep.subr.mxu0 0.0
    %7812 = vmatpush1.msra.mxu0 0.0
    %7813 = vmatprep.subr.mxu0 0.0
    %7814 = vmatpush1.msra.mxu0 0.0
    %7815 = vmatprep.subr.mxu0 0.0
    %7816 = vmatpush1.msra.mxu0 0.0
    %7817 = vmatprep.subr.mxu0 0.0
    %7818 = vmatpush1.msra.mxu0 0.0
    %7819 = vmatprep.subr.mxu0 0.0
    %7820 = vmatpush1.msra.mxu0 0.0
    %7821 = vmatprep.subr.mxu0 0.0
    %7822 = vmatpush1.msra.mxu0 0.0
    %7823 = vmatprep.subr.mxu0 0.0
    %7824 = vmatpush1.msra.mxu0 0.0
    %7825 = vmatprep.subr.mxu0 0.0
    %7826 = vmatpush1.msra.mxu0 0.0
    %7827 = vmatprep.subr.mxu0 0.0
    %7828 = vmatpush1.msra.mxu0 0.0
    %7829 = vmatprep.subr.mxu0 0.0
    %7830 = vmatpush1.msra.mxu0 0.0
    %7831 = vmatprep.subr.mxu0 0.0
    %7832 = vmatpush1.msra.mxu0 0.0
    %7833 = vmatprep.subr.mxu0 0.0
    %7834 = vmatpush1.msra.mxu0 0.0
    %7835 = vmatprep.subr.mxu0 0.0
    %7836 = vmatpush1.msra.mxu0 0.0
    %7837 = vmatprep.subr.mxu0 0.0
    %7838 = vmatpush1.msra.mxu0 0.0
    %7839 = vmatprep.subr.mxu0 0.0
    %7840 = vmatpush1.msra.mxu0 0.0
    %7841 = vmatprep.subr.mxu0 0.0
    %7842 = vmatpush1.msra.mxu0 0.0
    %7843 = vmatprep.mubr.f32.mxu0 0.0
    %7844 = vmatmul.mubr.f32.gmra.mrb[0].mxu0 %v7774
    %v7845 = vpop.f32.mrb[0].mxu0
    %v7846 = vadd.f32 %v7772, %v7845
    %v7847 = vpop.f32.mrb[0].mxu0
    %7848 = vmatprep.mubr.f32.mxu0 0.0
    %7849 = vmatmul.mubr.f32.gmra.mrb[0].mxu0 %v7777
    %v7850 = vpop.f32.mrb[0].mxu0
    %v7851 = vadd.f32 %v7772, %v7850
    %v7852 = vpop.f32.mrb[0].mxu0
    %7853 = vdwg.mxu0
    %7854 = vst.msk [vmem:[%s5] sm:$0xff] %vm176, %v7846
    %s7855 = scalar_lea.vmem %s5, 8
    %7856 = vst.msk [vmem:[%s7855] sm:$0xff] %vm176, %v7851
    // Predicated region
    $region18: #{multitask_autoencoder_forward.1} parent=1 // pred_check
      _
    $region19: #{multitask_autoencoder_forward.1} parent=1 // pred_check_branch
      %7858 = sbr.rel (0) target = $region21
    $region20: #{multitask_autoencoder_forward.1} parent=1 // pred_region
      _
    $region21: #{multitask_autoencoder_forward.1} parent=1 // pred_fallthru
      _
    // Predicated region
    $region22: #{multitask_autoencoder_forward.1} parent=1 // pred_check
      _
    $region23: #{multitask_autoencoder_forward.1} parent=1 // pred_check_branch
      %7860 = sbr.rel (0) target = $region25
    $region24: #{multitask_autoencoder_forward.1} parent=1 // pred_region
      _
    $region25: #{multitask_autoencoder_forward.1} parent=1 // pred_fallthru
      _
    // Predicated region
    $region26: #{multitask_autoencoder_forward.1} parent=1 // pred_check
      _
    $region27: #{multitask_autoencoder_forward.1} parent=1 // pred_check_branch
      %7862 = sbr.rel (0) target = $region29
    $region28: #{multitask_autoencoder_forward.1} parent=1 // pred_region
      %s7864 = ssub.s32 32, 32
      %7865 = vsyncadd [#allocation3], %s7864
      %s7867 = sshll.u32 [#allocation2], 4
      %s7868 = int_to_ptr.vmem [resolvable:$true] %s7867
      %7870 = dma.vmem_to_hbm [thread:$0]  %s7868, 32, %s6, [#allocation3]
    $region29: #{multitask_autoencoder_forward.1} parent=1 // pred_fallthru
      _
    // Predicated region
    $region30: #{multitask_autoencoder_forward.1} parent=1 // pred_check
      _
    $region31: #{multitask_autoencoder_forward.1} parent=1 // pred_check_branch
      %7872 = sbr.rel (0) target = $region33
    $region32: #{multitask_autoencoder_forward.1} parent=1 // pred_region
      _
    $region33: #{multitask_autoencoder_forward.1} parent=1 // pred_fallthru
      _
    // Predicated region
    $region34: #{multitask_autoencoder_forward.1} parent=1 // pred_check
      _
    $region35: #{multitask_autoencoder_forward.1} parent=1 // pred_check_branch
      %7874 = sbr.rel (0) target = $region37
    $region36: #{multitask_autoencoder_forward.1} parent=1 // pred_region
      _
    $region37: #{multitask_autoencoder_forward.1} parent=1 // pred_fallthru
      _
    // Predicated region
    $region38: #{multitask_autoencoder_forward.1} parent=1 // pred_check
      _
    $region39: #{multitask_autoencoder_forward.1} parent=1 // pred_check_branch
      %7876 = sbr.rel (0) target = $region41
    $region40: #{multitask_autoencoder_forward.1} parent=1 // pred_region
      %7877 = dma.done [#allocation3], 32
    $region41: #{multitask_autoencoder_forward.1} parent=1 // pred_fallthru
      _
    %7878 = vsyncpa [#allocation3], 1

</llo_original>
